<compile_context>
chip_gen: v7x
topology: tpu7x:2x2x1
jax: 0.10.0
libtpu: 0.0.40
codegen_flags: <defaults>
</compile_context>

<pallas_src>
import numpy as np
import jax
import jax.numpy as jnp
from jax import lax
from jax.experimental import pallas as pl
from jax.experimental.pallas import tpu as pltpu


_C3, _C1, _C2 = 384, 64, 96   # channels of branch3x3 / dbl_1 / dbl_2 & dbl_3
_C2P = 128                    # dbl branch padded to 128 for lane alignment


# ---------------------------------------------------------------------------
# Fused per-image kernel
# ---------------------------------------------------------------------------
def _make_kernel(Wcp, MD, MO, Cin, R1, R2):
    """All slab geometry is static / closed over.

    Wcp : padded half-res row width (Wc + 2 sentinel cols)
    MD  : flattened full-res slab rows  (Hc * Wcp)
    MO  : flattened output slab rows    (Ho * Wcp)
    R1  : rows of packed h1 buffer      (MD + 4*Wcp, 2*Wcp zero rows top+tail)
    R2  : rows of packed h2 buffer      (MD + Wcp, Wcp zero slack rows)
    """
    f32, bf16 = jnp.float32, jnp.bfloat16

    # dbl_2 (3x3, pad 1, stride 1): per output parity rs = 2*r+s the 9 taps
    # collapse onto 4 coarse (half-res) offsets.  starts2[rs][ci] is the flat
    # row offset of coarse tap ci into the packed h1 buffer (2 zero rows on
    # top).  ci ordering must match _pack_w2.
    starts2 = []
    for r in (0, 1):
        for s in (0, 1):
            da_list = (-1, 0) if r == 0 else (0, 1)
            db_list = (-1, 0) if s == 0 else (0, 1)
            starts2.append([(da + 2) * Wcp + db
                            for da in da_list for db in db_list])
    # stride-2 convs: 4 coarse offsets, ci = (dh//2)*2 + (dw//2) (matches
    # _pack_w3b).
    starts3 = [ch * Wcp + cw for ch in (0, 1) for cw in (0, 1)]

    def kernel(x4_ref, msk_ref, w3_ref, b3_ref, w1_ref, b1_ref,
               w2p_ref, b2p_ref, w3bp_ref, b3bp_ref,
               out_ref, h1p_ref, h2p_ref):
        # ---- zero only the pad / slack border rows (interior is fully -------
        # ---- overwritten below every grid step) -----------------------------
        h1p_ref[0:2 * Wcp, :] = jnp.zeros((2 * Wcp, 4 * _C1), bf16)
        h1p_ref[2 * Wcp + MD:R1, :] = jnp.zeros((R1 - 2 * Wcp - MD, 4 * _C1), bf16)
        h2p_ref[MD:R2, :] = jnp.zeros((R2 - MD, 4 * _C2P), bf16)

        # ---- branch3x3dbl_1 : 1x1 conv + BN + ReLU on each parity slab; -----
        # ---- pack the four 64-ch results into one lane-dense (MD,256) slab --
        w1 = w1_ref[...]
        b1 = b1_ref[...]
        h1_parts = []
        for pq in range(4):
            xs = x4_ref[0, pq, 0:MD, :]                          # (MD, Cin) bf16
            h1 = jnp.dot(xs, w1, preferred_element_type=f32) + b1
            h1 = jnp.maximum(h1, 0.0) * msk_ref[pq]              # zero sentinels
            h1_parts.append(h1.astype(bf16))
        h1p_ref[2 * Wcp:2 * Wcp + MD, :] = jnp.concatenate(h1_parts, axis=-1)

        # ---- branch3x3dbl_2 : 3x3 conv, stride 1, pad 1, K-packed form ------
        # 4 matmuls (MD,256)x(256,128) per output parity instead of 9 K=64.
        b2 = b2p_ref[...]
        for rs in range(4):
            acc = jnp.zeros((MD, _C2P), f32)
            for ci in range(4):
                st = starts2[rs][ci]
                tap = h1p_ref[st:st + MD, :]                     # (MD, 256) bf16
                acc = acc + jnp.dot(tap, w2p_ref[rs, ci],
                                    preferred_element_type=f32)
            h2 = jnp.maximum(acc + b2, 0.0)                      # pad cols stay 0
            h2p_ref[0:MD, _C2P * rs:_C2P * (rs + 1)] = h2.astype(bf16)

        # ---- branch3x3 (3x3, stride 2) + max-pool: 9 contiguous taps --------
        # Only one matmul accumulator in this loop; the pool max is VPU work.
        acc3 = jnp.zeros((MO, _C3), f32)
        pool = None
        for dh in range(3):
            for dw in range(3):
                pq = 2 * (dh % 2) + (dw % 2)
                st = (dh // 2) * Wcp + (dw // 2)
                xt = x4_ref[0, pq, st:st + MO, :]                # (MO, Cin) bf16
                acc3 = acc3 + jnp.dot(xt, w3_ref[dh, dw],
                                      preferred_element_type=f32)
                pool = xt if pool is None else jnp.maximum(pool, xt)  # bf16 max

        # ---- branch3x3dbl_3 (3x3, stride 2), K-packed: 4 matmuls ------------
        acc4 = jnp.zeros((MO, _C2P), f32)
        for ci in range(4):
            st = starts3[ci]
            tap = h2p_ref[st:st + MO, :]                         # (MO, 512) bf16
            acc4 = acc4 + jnp.dot(tap, w3bp_ref[ci],
                                  preferred_element_type=f32)

        br3 = jnp.maximum(acc3 + b3_ref[...], 0.0)
        brd = jnp.maximum(acc4 + b3bp_ref[...], 0.0)

        # lane-aligned bf16 concatenated output: offsets 0 / 384 / 512
        out_ref[0, :, 0:_C3] = br3.astype(bf16)
        out_ref[0, :, _C3:_C3 + _C2P] = brd.astype(bf16)
        out_ref[0, :, _C3 + _C2P:_C3 + _C2P + Cin] = pool

    return kernel


# ---------------------------------------------------------------------------
# Host-side glue
# ---------------------------------------------------------------------------
def _fold_bn(params, name, eps=1e-3):
    """conv(bias=False) -> BN(eval) folded: scale into weights, bias separate."""
    scale = params[name + "_g"] / jnp.sqrt(params[name + "_v"] + eps)
    bias = params[name + "_b"] - params[name + "_m"] * scale
    w_hwio = jnp.transpose(params[name + "_w"], (2, 3, 1, 0)) * scale
    return w_hwio.astype(jnp.bfloat16), bias.reshape(1, -1).astype(jnp.float32)


def _h1_masks(H, W, Hc, Wcp):
    """Per-parity validity mask (zeroes sentinel cols + odd-size padding)."""
    masks = np.zeros((4, Hc, Wcp), np.float32)
    for p in (0, 1):
        for q in (0, 1):
            hv = (H - p + 1) // 2
            wv = (W - q + 1) // 2
            masks[2 * p + q, :hv, 1:1 + wv] = 1.0
    return jnp.asarray(masks.reshape(4, Hc * Wcp, 1), dtype=jnp.bfloat16)


def _pack_w2(w2):
    """K-pack the dbl_2 weights: (3,3,64,96) -> (4 out-parity, 4 coarse, 256, 128).

    Block [rs, ci, 64*src:64*(src+1), :96] holds the tap weight that, for
    output parity rs, reads parity slab src at coarse offset ci.  Unused
    parity slots and the 32 output-pad columns stay zero.
    """
    out = jnp.zeros((4, 4, 4 * _C1, _C2P), jnp.float32)
    for r in (0, 1):
        for s in (0, 1):
            rs = 2 * r + s
            da_list = (-1, 0) if r == 0 else (0, 1)
            db_list = (-1, 0) if s == 0 else (0, 1)
            for dh in range(3):
                for dw in range(3):
                    a, b = r + dh - 1, s + dw - 1
                    src = 2 * (a % 2) + (b % 2)
                    ci = da_list.index(a // 2) * 2 + db_list.index(b // 2)
                    out = out.at[rs, ci, _C1 * src:_C1 * (src + 1), :_C2].add(
                        w2[dh, dw].astype(jnp.float32))
    return out.astype(jnp.bfloat16)


def _pack_w3b(w3b):
    """K-pack the dbl_3 weights: (3,3,96,96) -> (4 coarse, 512, 128)."""
    out = jnp.zeros((4, 4 * _C2P, _C2P), jnp.float32)
    for dh in range(3):
        for dw in range(3):
            src = 2 * (dh % 2) + (dw % 2)
            ci = (dh // 2) * 2 + (dw // 2)
            out = out.at[ci, _C2P * src:_C2P * src + _C2, :_C2].add(
                w3b[dh, dw].astype(jnp.float32))
    return out.astype(jnp.bfloat16)


def inception_b(x_nchw, params):
    N, Cin, H, W = x_nchw.shape
    Ho, Wo = (H - 3) // 2 + 1, (W - 3) // 2 + 1     # stride-2 "valid" output size
    Hp, Wp = H + (H % 2), W + (W % 2)               # pad spatial dims to even
    Hc, Wc = Hp // 2, Wp // 2
    Wcp = Wc + 2                                    # one zero sentinel col per side
    MD = Hc * Wcp                                   # flattened full-res slab rows
    MO = Ho * Wcp                                   # flattened output slab rows
    MX = (Hc + 1) * Wcp                             # x-slab rows (+1 slack row)
    R1 = MD + 4 * Wcp                               # packed-h1 rows (2*Wcp pad each end)
    R2 = MD + Wcp                                   # packed-h2 rows (Wcp slack)
    Ctot = _C3 + _C2P + Cin                         # 384 | 128 | Cin  (lane-aligned)

    # NCHW -> NHWC bf16, pad once, then 4 strided parity gathers + stack.
    x = jnp.transpose(x_nchw, (0, 2, 3, 1)).astype(jnp.bfloat16)
    xp = jnp.pad(x, ((0, 0), (0, Hp - H + 2), (2, Wp - W + 2), (0, 0)))
    slabs = [xp[:, p:p + 2 * (Hc + 1):2, q:q + 2 * Wcp:2, :].reshape(N, MX, Cin)
             for p in (0, 1) for q in (0, 1)]
    x4 = jnp.stack(slabs, axis=1)                                  # (N, 4, MX, Cin)

    msk = _h1_masks(H, W, Hc, Wcp)

    w3, b3 = _fold_bn(params, "b3")          # (3, 3, Cin, 384)
    w1, b1 = _fold_bn(params, "d1")
    w1 = w1[0, 0]                            # (Cin, 64)
    w2, b2 = _fold_bn(params, "d2")          # (3, 3, 64, 96)
    w3b, b3b = _fold_bn(params, "d3")        # (3, 3, 96, 96)

    w2p = _pack_w2(w2)                                             # (4,4,256,128)
    b2p = jnp.pad(b2, ((0, 0), (0, _C2P - _C2)))                   # (1,128)
    w3bp = _pack_w3b(w3b)                                          # (4,512,128)
    b3bp = jnp.pad(b3b, ((0, 0), (0, _C2P - _C2)))                 # (1,128)

    kernel = _make_kernel(Wcp, MD, MO, Cin, R1, R2)

    out_flat = pl.pallas_call(
        kernel,
        out_shape=jax.ShapeDtypeStruct((N, MO, Ctot), jnp.bfloat16),
        grid_spec=pltpu.PrefetchScalarGridSpec(
            num_scalar_prefetch=0,
            grid=(N,),
            in_specs=[
                pl.BlockSpec((1, 4, MX, Cin), lambda n: (n, 0, 0, 0)),    # x slabs
                pl.BlockSpec((4, MD, 1), lambda n: (0, 0, 0)),            # h1 mask
                pl.BlockSpec((3, 3, Cin, _C3), lambda n: (0, 0, 0, 0)),   # w3x3
                pl.BlockSpec((1, _C3), lambda n: (0, 0)),
                pl.BlockSpec((Cin, _C1), lambda n: (0, 0)),               # w dbl_1
                pl.BlockSpec((1, _C1), lambda n: (0, 0)),
                pl.BlockSpec((4, 4, 4 * _C1, _C2P), lambda n: (0, 0, 0, 0)),  # w dbl_2 (K-packed)
                pl.BlockSpec((1, _C2P), lambda n: (0, 0)),
                pl.BlockSpec((4, 4 * _C2P, _C2P), lambda n: (0, 0, 0)),   # w dbl_3 (K-packed)
                pl.BlockSpec((1, _C2P), lambda n: (0, 0)),
            ],
            out_specs=pl.BlockSpec((1, MO, Ctot), lambda n: (n, 0, 0)),
            scratch_shapes=[
                pltpu.VMEM((R1, 4 * _C1), jnp.bfloat16),   # packed h1 (rows, 256)
                pltpu.VMEM((R2, 4 * _C2P), jnp.bfloat16),  # packed h2 (rows, 512)
            ],
        ),
        compiler_params=pltpu.CompilerParams(
            dimension_semantics=("parallel",),
            vmem_limit_bytes=24 * 1024 * 1024,
        ),
    )(x4, msk, w3, b3, w1, b1, w2p, b2p, w3bp, b3bp)

    # Drop sentinel cols + the 32 dbl pad channels; return NCHW f32 (module API).
    out = out_flat.reshape(N, Ho, Wcp, Ctot)[:, :, 1:1 + Wo, :]
    out = jnp.concatenate(
        [out[..., 0:_C3], out[..., _C3:_C3 + _C2],
         out[..., _C3 + _C2P:_C3 + _C2P + Cin]], axis=-1)
    return jnp.transpose(out, (0, 3, 1, 2)).astype(jnp.float32)


# ---------------------------------------------------------------------------
# Pure-JAX reference (same bf16 operand rounding, f32 accumulation)
# ---------------------------------------------------------------------------
def _r(a):
    return a.astype(jnp.bfloat16).astype(jnp.float32)


def _ref_conv(x_nhwc, params, name, stride, pad, eps=1e-3):
    scale = params[name + "_g"] / jnp.sqrt(params[name + "_v"] + eps)
    bias = params[name + "_b"] - params[name + "_m"] * scale
    w = _r(jnp.transpose(params[name + "_w"], (2, 3, 1, 0)) * scale)
    y = lax.conv_general_dilated(
        x_nhwc, w, (stride, stride), [(pad, pad), (pad, pad)],
        dimension_numbers=("NHWC", "HWIO", "NHWC"),
        precision=lax.Precision.HIGHEST)
    return jnp.maximum(y + bias, 0.0)


def inception_b_ref(x_nchw, params):
    x = _r(jnp.transpose(x_nchw, (0, 2, 3, 1)))
    br3 = _ref_conv(x, params, "b3", 2, 0)
    h1 = _r(_ref_conv(x, params, "d1", 1, 0))
    h2 = _r(_ref_conv(h1, params, "d2", 1, 1))
    brd = _ref_conv(h2, params, "d3", 2, 0)
    pool = lax.reduce_window(x, -jnp.inf, lax.max,
                             (1, 3, 3, 1), (1, 2, 2, 1), "VALID")
    out = jnp.concatenate([br3, brd, pool], axis=-1)
    return jnp.transpose(out, (0, 3, 1, 2))


# ---------------------------------------------------------------------------
# Deterministic parameter init (shapes per InceptionB.__init__)
# ---------------------------------------------------------------------------
def init_params(key, in_channels):
    specs = {
        "b3": (384, in_channels, 3),   # branch3x3:      3x3 stride 2
        "d1": (64, in_channels, 1),    # branch3x3dbl_1: 1x1
        "d2": (96, 64, 3),             # branch3x3dbl_2: 3x3 pad 1
        "d3": (96, 96, 3),             # branch3x3dbl_3: 3x3 stride 2
    }
    p = {}
    keys = jax.random.split(key, len(specs))
    for sub, (name, (co, ci, k)) in zip(keys, specs.items()):
        kw, kg, kb, km, kv = jax.random.split(sub, 5)
        fan_in = ci * k * k
        p[name + "_w"] = jax.random.normal(kw, (co, ci, k, k), jnp.float32) / np.sqrt(fan_in)
        p[name + "_g"] = 1.0 + 0.1 * jax.random.normal(kg, (co,), jnp.float32)
        p[name + "_b"] = 0.1 * jax.random.normal(kb, (co,), jnp.float32)
        p[name + "_m"] = 0.1 * jax.random.normal(km, (co,), jnp.float32)
        p[name + "_v"] = jax.random.uniform(kv, (co,), jnp.float32,
                                            minval=0.5, maxval=1.5)
    return p


if __name__ == "__main__":
    in_channels = 4
    N, H, W = 2, 16, 16

    root = jax.random.PRNGKey(0)
    k_params, k_x = jax.random.split(root)
    params = init_params(k_params, in_channels)
    x = jax.random.normal(k_x, (N, in_channels, H, W), jnp.float32)

    out = jax.block_until_ready(inception_b(x, params))
    Ho = (H - 3) // 2 + 1
    assert out.shape == (N, 384 + 96 + in_channels, Ho, Ho), out.shape

    ref = jax.block_until_ready(inception_b_ref(x, params))
    # 3e-2 allows the intentional bf16 output rounding (~2^-9 relative) on top
    # of the bf16 operand/intermediate rounding shared with the reference.
    # TODO(synk): re-validate tolerance at real InceptionB shapes (Cin=288, 35x35).
    max_err = float(jnp.max(jnp.abs(out - ref)))
    assert max_err < 3e-2, f"mismatch vs reference: {max_err}"

    print("KERNEL_OK")
</pallas_src>

<mosaic_0001>
module attributes {stable_mosaic.version = 11 : i64} {
  func.func @kernel(%arg0: i32, %arg1: memref<1x4x90x4xbf16, #tpu.memory_space<vmem>>, %arg2: memref<4x80x1xbf16, #tpu.memory_space<vmem>>, %arg3: memref<3x3x4x384xbf16, #tpu.memory_space<vmem>>, %arg4: memref<1x384xf32, #tpu.memory_space<vmem>>, %arg5: memref<4x64xbf16, #tpu.memory_space<vmem>>, %arg6: memref<1x64xf32, #tpu.memory_space<vmem>>, %arg7: memref<4x4x256x128xbf16, #tpu.memory_space<vmem>>, %arg8: memref<1x128xf32, #tpu.memory_space<vmem>>, %arg9: memref<4x512x128xbf16, #tpu.memory_space<vmem>>, %arg10: memref<1x128xf32, #tpu.memory_space<vmem>>, %arg11: memref<1x70x516xbf16, #tpu.memory_space<vmem>>, %arg12: memref<120x256xbf16, #tpu.memory_space<vmem>>, %arg13: memref<90x512xbf16, #tpu.memory_space<vmem>>) attributes {dimension_semantics = [#tpu.dimension_semantics<parallel>], iteration_bounds = array<i64: 2>, scalar_prefetch = 0 : i64, scratch_operands = 2 : i64, tpu.core_type = #tpu.core_type<tc>, window_params = [{transform_indices = @transform_0, window_bounds = array<i64: 1, 4, 90, 4>}, {pipeline_mode = #tpu.pipeline_mode<synchronous>, transform_indices = @transform_1, window_bounds = array<i64: 4, 80, 1>}, {pipeline_mode = #tpu.pipeline_mode<synchronous>, transform_indices = @transform_2, window_bounds = array<i64: 3, 3, 4, 384>}, {pipeline_mode = #tpu.pipeline_mode<synchronous>, transform_indices = @transform_3, window_bounds = array<i64: 1, 384>}, {pipeline_mode = #tpu.pipeline_mode<synchronous>, transform_indices = @transform_4, window_bounds = array<i64: 4, 64>}, {pipeline_mode = #tpu.pipeline_mode<synchronous>, transform_indices = @transform_5, window_bounds = array<i64: 1, 64>}, {pipeline_mode = #tpu.pipeline_mode<synchronous>, transform_indices = @transform_6, window_bounds = array<i64: 4, 4, 256, 128>}, {pipeline_mode = #tpu.pipeline_mode<synchronous>, transform_indices = @transform_7, window_bounds = array<i64: 1, 128>}, {pipeline_mode = #tpu.pipeline_mode<synchronous>, transform_indices = @transform_8, window_bounds = array<i64: 4, 512, 128>}, {pipeline_mode = #tpu.pipeline_mode<synchronous>, transform_indices = @transform_9, window_bounds = array<i64: 1, 128>}, {transform_indices = @transform_10, window_bounds = array<i64: 1, 70, 516>}]} {
    %cst = arith.constant 0.000000e+00 : bf16
    %0 = vector.broadcast %cst : bf16 to vector<20x256xbf16>
    %c0 = arith.constant 0 : index
    %c0_0 = arith.constant 0 : index
    %1 = vector.load %arg12[%c0, %c0_0] : memref<120x256xbf16, #tpu.memory_space<vmem>>, vector<20x256xbf16>
    tpu.vector_store %arg12[%c0, %c0_0], %0 {strides = array<i32>} : memref<120x256xbf16, #tpu.memory_space<vmem>>, vector<20x256xbf16>,
    %cst_1 = arith.constant 0.000000e+00 : bf16
    %2 = vector.broadcast %cst_1 : bf16 to vector<20x256xbf16>
    %c100 = arith.constant 100 : index
    %c0_2 = arith.constant 0 : index
    %3 = vector.load %arg12[%c100, %c0_2] : memref<120x256xbf16, #tpu.memory_space<vmem>>, vector<20x256xbf16>
    tpu.vector_store %arg12[%c100, %c0_2], %2 {strides = array<i32>} : memref<120x256xbf16, #tpu.memory_space<vmem>>, vector<20x256xbf16>,
    %cst_3 = arith.constant 0.000000e+00 : bf16
    %4 = vector.broadcast %cst_3 : bf16 to vector<10x512xbf16>
    %c80 = arith.constant 80 : index
    %c0_4 = arith.constant 0 : index
    %5 = vector.load %arg13[%c80, %c0_4] : memref<90x512xbf16, #tpu.memory_space<vmem>>, vector<10x512xbf16>
    tpu.vector_store %arg13[%c80, %c0_4], %4 {strides = array<i32>} : memref<90x512xbf16, #tpu.memory_space<vmem>>, vector<10x512xbf16>,
    %c0_5 = arith.constant 0 : index
    %c0_6 = arith.constant 0 : index
    %6 = vector.load %arg5[%c0_5, %c0_6] : memref<4x64xbf16, #tpu.memory_space<vmem>>, vector<4x64xbf16>
    %c0_7 = arith.constant 0 : index
    %c0_8 = arith.constant 0 : index
    %7 = vector.load %arg6[%c0_7, %c0_8] : memref<1x64xf32, #tpu.memory_space<vmem>>, vector<1x64xf32>
    %c0_9 = arith.constant 0 : index
    %c0_10 = arith.constant 0 : index
    %c0_11 = arith.constant 0 : index
    %c0_12 = arith.constant 0 : index
    %8 = vector.load %arg1[%c0_9, %c0_10, %c0_11, %c0_12] : memref<1x4x90x4xbf16, #tpu.memory_space<vmem>>, vector<1x1x80x4xbf16>
    %9 = vector.shape_cast %8 : vector<1x1x80x4xbf16> to vector<80x4xbf16>
    %cst_13 = arith.constant dense<0.000000e+00> : vector<80x64xf32>
    %10 = tpu.matmul %9, %6, %cst_13 {dimension_numbers = #tpu.dot_dimension_numbers<[1], [0], [0], [1], [0, 0, 1, 1], [], []>} : vector<80x4xbf16>, vector<4x64xbf16>, vector<80x64xf32> -> vector<80x64xf32>
    %11 = vector.broadcast %7 : vector<1x64xf32> to vector<80x64xf32>
    %12 = arith.addf %10, %11 : vector<80x64xf32>
    %cst_14 = arith.constant 0.000000e+00 : f32
    %13 = vector.broadcast %cst_14 : f32 to vector<80x64xf32>
    %14 = arith.maximumf %12, %13 : vector<80x64xf32>
    %c0_15 = arith.constant 0 : index
    %c0_16 = arith.constant 0 : index
    %c0_17 = arith.constant 0 : index
    %15 = vector.load %arg2[%c0_15, %c0_16, %c0_17] : memref<4x80x1xbf16, #tpu.memory_space<vmem>>, vector<1x80x1xbf16>
    %16 = vector.shape_cast %15 : vector<1x80x1xbf16> to vector<80x1xbf16>
    %17 = arith.extf %16 : vector<80x1xbf16> to vector<80x1xf32>
    %18 = vector.broadcast %17 : vector<80x1xf32> to vector<80x64xf32>
    %19 = arith.mulf %14, %18 : vector<80x64xf32>
    %20 = arith.truncf %19 : vector<80x64xf32> to vector<80x64xbf16>
    %c0_18 = arith.constant 0 : index
    %c1 = arith.constant 1 : index
    %c0_19 = arith.constant 0 : index
    %c0_20 = arith.constant 0 : index
    %21 = vector.load %arg1[%c0_18, %c1, %c0_19, %c0_20] : memref<1x4x90x4xbf16, #tpu.memory_space<vmem>>, vector<1x1x80x4xbf16>
    %22 = vector.shape_cast %21 : vector<1x1x80x4xbf16> to vector<80x4xbf16>
    %cst_21 = arith.constant dense<0.000000e+00> : vector<80x64xf32>
    %23 = tpu.matmul %22, %6, %cst_21 {dimension_numbers = #tpu.dot_dimension_numbers<[1], [0], [0], [1], [0, 0, 1, 1], [], []>} : vector<80x4xbf16>, vector<4x64xbf16>, vector<80x64xf32> -> vector<80x64xf32>
    %24 = vector.broadcast %7 : vector<1x64xf32> to vector<80x64xf32>
    %25 = arith.addf %23, %24 : vector<80x64xf32>
    %cst_22 = arith.constant 0.000000e+00 : f32
    %26 = vector.broadcast %cst_22 : f32 to vector<80x64xf32>
    %27 = arith.maximumf %25, %26 : vector<80x64xf32>
    %c1_23 = arith.constant 1 : index
    %c0_24 = arith.constant 0 : index
    %c0_25 = arith.constant 0 : index
    %28 = vector.load %arg2[%c1_23, %c0_24, %c0_25] : memref<4x80x1xbf16, #tpu.memory_space<vmem>>, vector<1x80x1xbf16>
    %29 = vector.shape_cast %28 : vector<1x80x1xbf16> to vector<80x1xbf16>
    %30 = arith.extf %29 : vector<80x1xbf16> to vector<80x1xf32>
    %31 = vector.broadcast %30 : vector<80x1xf32> to vector<80x64xf32>
    %32 = arith.mulf %27, %31 : vector<80x64xf32>
    %33 = arith.truncf %32 : vector<80x64xf32> to vector<80x64xbf16>
    %c0_26 = arith.constant 0 : index
    %c2 = arith.constant 2 : index
    %c0_27 = arith.constant 0 : index
    %c0_28 = arith.constant 0 : index
    %34 = vector.load %arg1[%c0_26, %c2, %c0_27, %c0_28] : memref<1x4x90x4xbf16, #tpu.memory_space<vmem>>, vector<1x1x80x4xbf16>
    %35 = vector.shape_cast %34 : vector<1x1x80x4xbf16> to vector<80x4xbf16>
    %cst_29 = arith.constant dense<0.000000e+00> : vector<80x64xf32>
    %36 = tpu.matmul %35, %6, %cst_29 {dimension_numbers = #tpu.dot_dimension_numbers<[1], [0], [0], [1], [0, 0, 1, 1], [], []>} : vector<80x4xbf16>, vector<4x64xbf16>, vector<80x64xf32> -> vector<80x64xf32>
    %37 = vector.broadcast %7 : vector<1x64xf32> to vector<80x64xf32>
    %38 = arith.addf %36, %37 : vector<80x64xf32>
    %cst_30 = arith.constant 0.000000e+00 : f32
    %39 = vector.broadcast %cst_30 : f32 to vector<80x64xf32>
    %40 = arith.maximumf %38, %39 : vector<80x64xf32>
    %c2_31 = arith.constant 2 : index
    %c0_32 = arith.constant 0 : index
    %c0_33 = arith.constant 0 : index
    %41 = vector.load %arg2[%c2_31, %c0_32, %c0_33] : memref<4x80x1xbf16, #tpu.memory_space<vmem>>, vector<1x80x1xbf16>
    %42 = vector.shape_cast %41 : vector<1x80x1xbf16> to vector<80x1xbf16>
    %43 = arith.extf %42 : vector<80x1xbf16> to vector<80x1xf32>
    %44 = vector.broadcast %43 : vector<80x1xf32> to vector<80x64xf32>
    %45 = arith.mulf %40, %44 : vector<80x64xf32>
    %46 = arith.truncf %45 : vector<80x64xf32> to vector<80x64xbf16>
    %c0_34 = arith.constant 0 : index
    %c3 = arith.constant 3 : index
    %c0_35 = arith.constant 0 : index
    %c0_36 = arith.constant 0 : index
    %47 = vector.load %arg1[%c0_34, %c3, %c0_35, %c0_36] : memref<1x4x90x4xbf16, #tpu.memory_space<vmem>>, vector<1x1x80x4xbf16>
    %48 = vector.shape_cast %47 : vector<1x1x80x4xbf16> to vector<80x4xbf16>
    %cst_37 = arith.constant dense<0.000000e+00> : vector<80x64xf32>
    %49 = tpu.matmul %48, %6, %cst_37 {dimension_numbers = #tpu.dot_dimension_numbers<[1], [0], [0], [1], [0, 0, 1, 1], [], []>} : vector<80x4xbf16>, vector<4x64xbf16>, vector<80x64xf32> -> vector<80x64xf32>
    %50 = vector.broadcast %7 : vector<1x64xf32> to vector<80x64xf32>
    %51 = arith.addf %49, %50 : vector<80x64xf32>
    %cst_38 = arith.constant 0.000000e+00 : f32
    %52 = vector.broadcast %cst_38 : f32 to vector<80x64xf32>
    %53 = arith.maximumf %51, %52 : vector<80x64xf32>
    %c3_39 = arith.constant 3 : index
    %c0_40 = arith.constant 0 : index
    %c0_41 = arith.constant 0 : index
    %54 = vector.load %arg2[%c3_39, %c0_40, %c0_41] : memref<4x80x1xbf16, #tpu.memory_space<vmem>>, vector<1x80x1xbf16>
    %55 = vector.shape_cast %54 : vector<1x80x1xbf16> to vector<80x1xbf16>
    %56 = arith.extf %55 : vector<80x1xbf16> to vector<80x1xf32>
    %57 = vector.broadcast %56 : vector<80x1xf32> to vector<80x64xf32>
    %58 = arith.mulf %53, %57 : vector<80x64xf32>
    %59 = arith.truncf %58 : vector<80x64xf32> to vector<80x64xbf16>
    %60 = tpu.concatenate %20, %33, %46, %59 in 1 : vector<80x64xbf16>, vector<80x64xbf16>, vector<80x64xbf16>, vector<80x64xbf16> -> vector<80x256xbf16>
    %c20 = arith.constant 20 : index
    %c0_42 = arith.constant 0 : index
    %61 = vector.load %arg12[%c20, %c0_42] : memref<120x256xbf16, #tpu.memory_space<vmem>>, vector<80x256xbf16>
    tpu.vector_store %arg12[%c20, %c0_42], %60 {strides = array<i32>} : memref<120x256xbf16, #tpu.memory_space<vmem>>, vector<80x256xbf16>,
    %c0_43 = arith.constant 0 : index
    %c0_44 = arith.constant 0 : index
    %62 = vector.load %arg8[%c0_43, %c0_44] : memref<1x128xf32, #tpu.memory_space<vmem>>, vector<1x128xf32>
    %cst_45 = arith.constant 0.000000e+00 : f32
    %63 = vector.broadcast %cst_45 : f32 to vector<80x128xf32>
    %c9 = arith.constant 9 : index
    %c0_46 = arith.constant 0 : index
    %64 = vector.load %arg12[%c9, %c0_46] : memref<120x256xbf16, #tpu.memory_space<vmem>>, vector<80x256xbf16>
    %c0_47 = arith.constant 0 : index
    %c0_48 = arith.constant 0 : index
    %c0_49 = arith.constant 0 : index
    %c0_50 = arith.constant 0 : index
    %65 = vector.load %arg7[%c0_47, %c0_48, %c0_49, %c0_50] : memref<4x4x256x128xbf16, #tpu.memory_space<vmem>>, vector<1x1x256x128xbf16>
    %66 = vector.shape_cast %65 : vector<1x1x256x128xbf16> to vector<256x128xbf16>
    %cst_51 = arith.constant dense<0.000000e+00> : vector<80x128xf32>
    %67 = tpu.matmul %64, %66, %cst_51 {dimension_numbers = #tpu.dot_dimension_numbers<[1], [0], [0], [1], [0, 0, 1, 1], [], []>} : vector<80x256xbf16>, vector<256x128xbf16>, vector<80x128xf32> -> vector<80x128xf32>
    %68 = arith.addf %63, %67 : vector<80x128xf32>
    %c10 = arith.constant 10 : index
    %c0_52 = arith.constant 0 : index
    %69 = vector.load %arg12[%c10, %c0_52] : memref<120x256xbf16, #tpu.memory_space<vmem>>, vector<80x256xbf16>
    %c0_53 = arith.constant 0 : index
    %c1_54 = arith.constant 1 : index
    %c0_55 = arith.constant 0 : index
    %c0_56 = arith.constant 0 : index
    %70 = vector.load %arg7[%c0_53, %c1_54, %c0_55, %c0_56] : memref<4x4x256x128xbf16, #tpu.memory_space<vmem>>, vector<1x1x256x128xbf16>
    %71 = vector.shape_cast %70 : vector<1x1x256x128xbf16> to vector<256x128xbf16>
    %cst_57 = arith.constant dense<0.000000e+00> : vector<80x128xf32>
    %72 = tpu.matmul %69, %71, %cst_57 {dimension_numbers = #tpu.dot_dimension_numbers<[1], [0], [0], [1], [0, 0, 1, 1], [], []>} : vector<80x256xbf16>, vector<256x128xbf16>, vector<80x128xf32> -> vector<80x128xf32>
    %73 = arith.addf %68, %72 : vector<80x128xf32>
    %c19 = arith.constant 19 : index
    %c0_58 = arith.constant 0 : index
    %74 = vector.load %arg12[%c19, %c0_58] : memref<120x256xbf16, #tpu.memory_space<vmem>>, vector<80x256xbf16>
    %c0_59 = arith.constant 0 : index
    %c2_60 = arith.constant 2 : index
    %c0_61 = arith.constant 0 : index
    %c0_62 = arith.constant 0 : index
    %75 = vector.load %arg7[%c0_59, %c2_60, %c0_61, %c0_62] : memref<4x4x256x128xbf16, #tpu.memory_space<vmem>>, vector<1x1x256x128xbf16>
    %76 = vector.shape_cast %75 : vector<1x1x256x128xbf16> to vector<256x128xbf16>
    %cst_63 = arith.constant dense<0.000000e+00> : vector<80x128xf32>
    %77 = tpu.matmul %74, %76, %cst_63 {dimension_numbers = #tpu.dot_dimension_numbers<[1], [0], [0], [1], [0, 0, 1, 1], [], []>} : vector<80x256xbf16>, vector<256x128xbf16>, vector<80x128xf32> -> vector<80x128xf32>
    %78 = arith.addf %73, %77 : vector<80x128xf32>
    %c20_64 = arith.constant 20 : index
    %c0_65 = arith.constant 0 : index
    %79 = vector.load %arg12[%c20_64, %c0_65] : memref<120x256xbf16, #tpu.memory_space<vmem>>, vector<80x256xbf16>
    %c0_66 = arith.constant 0 : index
    %c3_67 = arith.constant 3 : index
    %c0_68 = arith.constant 0 : index
    %c0_69 = arith.constant 0 : index
    %80 = vector.load %arg7[%c0_66, %c3_67, %c0_68, %c0_69] : memref<4x4x256x128xbf16, #tpu.memory_space<vmem>>, vector<1x1x256x128xbf16>
    %81 = vector.shape_cast %80 : vector<1x1x256x128xbf16> to vector<256x128xbf16>
    %cst_70 = arith.constant dense<0.000000e+00> : vector<80x128xf32>
    %82 = tpu.matmul %79, %81, %cst_70 {dimension_numbers = #tpu.dot_dimension_numbers<[1], [0], [0], [1], [0, 0, 1, 1], [], []>} : vector<80x256xbf16>, vector<256x128xbf16>, vector<80x128xf32> -> vector<80x128xf32>
    %83 = arith.addf %78, %82 : vector<80x128xf32>
    %84 = vector.broadcast %62 : vector<1x128xf32> to vector<80x128xf32>
    %85 = arith.addf %83, %84 : vector<80x128xf32>
    %cst_71 = arith.constant 0.000000e+00 : f32
    %86 = vector.broadcast %cst_71 : f32 to vector<80x128xf32>
    %87 = arith.maximumf %85, %86 : vector<80x128xf32>
    %88 = arith.truncf %87 : vector<80x128xf32> to vector<80x128xbf16>
    %c0_72 = arith.constant 0 : index
    %c0_73 = arith.constant 0 : index
    %89 = vector.load %arg13[%c0_72, %c0_73] : memref<90x512xbf16, #tpu.memory_space<vmem>>, vector<80x128xbf16>
    tpu.vector_store %arg13[%c0_72, %c0_73], %88 {strides = array<i32>} : memref<90x512xbf16, #tpu.memory_space<vmem>>, vector<80x128xbf16>,
    %cst_74 = arith.constant 0.000000e+00 : f32
    %90 = vector.broadcast %cst_74 : f32 to vector<80x128xf32>
    %c10_75 = arith.constant 10 : index
    %c0_76 = arith.constant 0 : index
    %91 = vector.load %arg12[%c10_75, %c0_76] : memref<120x256xbf16, #tpu.memory_space<vmem>>, vector<80x256xbf16>
    %c1_77 = arith.constant 1 : index
    %c0_78 = arith.constant 0 : index
    %c0_79 = arith.constant 0 : index
    %c0_80 = arith.constant 0 : index
    %92 = vector.load %arg7[%c1_77, %c0_78, %c0_79, %c0_80] : memref<4x4x256x128xbf16, #tpu.memory_space<vmem>>, vector<1x1x256x128xbf16>
    %93 = vector.shape_cast %92 : vector<1x1x256x128xbf16> to vector<256x128xbf16>
    %cst_81 = arith.constant dense<0.000000e+00> : vector<80x128xf32>
    %94 = tpu.matmul %91, %93, %cst_81 {dimension_numbers = #tpu.dot_dimension_numbers<[1], [0], [0], [1], [0, 0, 1, 1], [], []>} : vector<80x256xbf16>, vector<256x128xbf16>, vector<80x128xf32> -> vector<80x128xf32>
    %95 = arith.addf %90, %94 : vector<80x128xf32>
    %c11 = arith.constant 11 : index
    %c0_82 = arith.constant 0 : index
    %96 = vector.load %arg12[%c11, %c0_82] : memref<120x256xbf16, #tpu.memory_space<vmem>>, vector<80x256xbf16>
    %c1_83 = arith.constant 1 : index
    %c1_84 = arith.constant 1 : index
    %c0_85 = arith.constant 0 : index
    %c0_86 = arith.constant 0 : index
    %97 = vector.load %arg7[%c1_83, %c1_84, %c0_85, %c0_86] : memref<4x4x256x128xbf16, #tpu.memory_space<vmem>>, vector<1x1x256x128xbf16>
    %98 = vector.shape_cast %97 : vector<1x1x256x128xbf16> to vector<256x128xbf16>
    %cst_87 = arith.constant dense<0.000000e+00> : vector<80x128xf32>
    %99 = tpu.matmul %96, %98, %cst_87 {dimension_numbers = #tpu.dot_dimension_numbers<[1], [0], [0], [1], [0, 0, 1, 1], [], []>} : vector<80x256xbf16>, vector<256x128xbf16>, vector<80x128xf32> -> vector<80x128xf32>
    %100 = arith.addf %95, %99 : vector<80x128xf32>
    %c20_88 = arith.constant 20 : index
    %c0_89 = arith.constant 0 : index
    %101 = vector.load %arg12[%c20_88, %c0_89] : memref<120x256xbf16, #tpu.memory_space<vmem>>, vector<80x256xbf16>
    %c1_90 = arith.constant 1 : index
    %c2_91 = arith.constant 2 : index
    %c0_92 = arith.constant 0 : index
    %c0_93 = arith.constant 0 : index
    %102 = vector.load %arg7[%c1_90, %c2_91, %c0_92, %c0_93] : memref<4x4x256x128xbf16, #tpu.memory_space<vmem>>, vector<1x1x256x128xbf16>
    %103 = vector.shape_cast %102 : vector<1x1x256x128xbf16> to vector<256x128xbf16>
    %cst_94 = arith.constant dense<0.000000e+00> : vector<80x128xf32>
    %104 = tpu.matmul %101, %103, %cst_94 {dimension_numbers = #tpu.dot_dimension_numbers<[1], [0], [0], [1], [0, 0, 1, 1], [], []>} : vector<80x256xbf16>, vector<256x128xbf16>, vector<80x128xf32> -> vector<80x128xf32>
    %105 = arith.addf %100, %104 : vector<80x128xf32>
    %c21 = arith.constant 21 : index
    %c0_95 = arith.constant 0 : index
    %106 = vector.load %arg12[%c21, %c0_95] : memref<120x256xbf16, #tpu.memory_space<vmem>>, vector<80x256xbf16>
    %c1_96 = arith.constant 1 : index
    %c3_97 = arith.constant 3 : index
    %c0_98 = arith.constant 0 : index
    %c0_99 = arith.constant 0 : index
    %107 = vector.load %arg7[%c1_96, %c3_97, %c0_98, %c0_99] : memref<4x4x256x128xbf16, #tpu.memory_space<vmem>>, vector<1x1x256x128xbf16>
    %108 = vector.shape_cast %107 : vector<1x1x256x128xbf16> to vector<256x128xbf16>
    %cst_100 = arith.constant dense<0.000000e+00> : vector<80x128xf32>
    %109 = tpu.matmul %106, %108, %cst_100 {dimension_numbers = #tpu.dot_dimension_numbers<[1], [0], [0], [1], [0, 0, 1, 1], [], []>} : vector<80x256xbf16>, vector<256x128xbf16>, vector<80x128xf32> -> vector<80x128xf32>
    %110 = arith.addf %105, %109 : vector<80x128xf32>
    %111 = vector.broadcast %62 : vector<1x128xf32> to vector<80x128xf32>
    %112 = arith.addf %110, %111 : vector<80x128xf32>
    %cst_101 = arith.constant 0.000000e+00 : f32
    %113 = vector.broadcast %cst_101 : f32 to vector<80x128xf32>
    %114 = arith.maximumf %112, %113 : vector<80x128xf32>
    %115 = arith.truncf %114 : vector<80x128xf32> to vector<80x128xbf16>
    %c0_102 = arith.constant 0 : index
    %c128 = arith.constant 128 : index
    %116 = vector.load %arg13[%c0_102, %c128] : memref<90x512xbf16, #tpu.memory_space<vmem>>, vector<80x128xbf16>
    tpu.vector_store %arg13[%c0_102, %c128], %115 {strides = array<i32>} : memref<90x512xbf16, #tpu.memory_space<vmem>>, vector<80x128xbf16>,
    %cst_103 = arith.constant 0.000000e+00 : f32
    %117 = vector.broadcast %cst_103 : f32 to vector<80x128xf32>
    %c19_104 = arith.constant 19 : index
    %c0_105 = arith.constant 0 : index
    %118 = vector.load %arg12[%c19_104, %c0_105] : memref<120x256xbf16, #tpu.memory_space<vmem>>, vector<80x256xbf16>
    %c2_106 = arith.constant 2 : index
    %c0_107 = arith.constant 0 : index
    %c0_108 = arith.constant 0 : index
    %c0_109 = arith.constant 0 : index
    %119 = vector.load %arg7[%c2_106, %c0_107, %c0_108, %c0_109] : memref<4x4x256x128xbf16, #tpu.memory_space<vmem>>, vector<1x1x256x128xbf16>
    %120 = vector.shape_cast %119 : vector<1x1x256x128xbf16> to vector<256x128xbf16>
    %cst_110 = arith.constant dense<0.000000e+00> : vector<80x128xf32>
    %121 = tpu.matmul %118, %120, %cst_110 {dimension_numbers = #tpu.dot_dimension_numbers<[1], [0], [0], [1], [0, 0, 1, 1], [], []>} : vector<80x256xbf16>, vector<256x128xbf16>, vector<80x128xf32> -> vector<80x128xf32>
    %122 = arith.addf %117, %121 : vector<80x128xf32>
    %c20_111 = arith.constant 20 : index
    %c0_112 = arith.constant 0 : index
    %123 = vector.load %arg12[%c20_111, %c0_112] : memref<120x256xbf16, #tpu.memory_space<vmem>>, vector<80x256xbf16>
    %c2_113 = arith.constant 2 : index
    %c1_114 = arith.constant 1 : index
    %c0_115 = arith.constant 0 : index
    %c0_116 = arith.constant 0 : index
    %124 = vector.load %arg7[%c2_113, %c1_114, %c0_115, %c0_116] : memref<4x4x256x128xbf16, #tpu.memory_space<vmem>>, vector<1x1x256x128xbf16>
    %125 = vector.shape_cast %124 : vector<1x1x256x128xbf16> to vector<256x128xbf16>
    %cst_117 = arith.constant dense<0.000000e+00> : vector<80x128xf32>
    %126 = tpu.matmul %123, %125, %cst_117 {dimension_numbers = #tpu.dot_dimension_numbers<[1], [0], [0], [1], [0, 0, 1, 1], [], []>} : vector<80x256xbf16>, vector<256x128xbf16>, vector<80x128xf32> -> vector<80x128xf32>
    %127 = arith.addf %122, %126 : vector<80x128xf32>
    %c29 = arith.constant 29 : index
    %c0_118 = arith.constant 0 : index
    %128 = vector.load %arg12[%c29, %c0_118] : memref<120x256xbf16, #tpu.memory_space<vmem>>, vector<80x256xbf16>
    %c2_119 = arith.constant 2 : index
    %c2_120 = arith.constant 2 : index
    %c0_121 = arith.constant 0 : index
    %c0_122 = arith.constant 0 : index
    %129 = vector.load %arg7[%c2_119, %c2_120, %c0_121, %c0_122] : memref<4x4x256x128xbf16, #tpu.memory_space<vmem>>, vector<1x1x256x128xbf16>
    %130 = vector.shape_cast %129 : vector<1x1x256x128xbf16> to vector<256x128xbf16>
    %cst_123 = arith.constant dense<0.000000e+00> : vector<80x128xf32>
    %131 = tpu.matmul %128, %130, %cst_123 {dimension_numbers = #tpu.dot_dimension_numbers<[1], [0], [0], [1], [0, 0, 1, 1], [], []>} : vector<80x256xbf16>, vector<256x128xbf16>, vector<80x128xf32> -> vector<80x128xf32>
    %132 = arith.addf %127, %131 : vector<80x128xf32>
    %c30 = arith.constant 30 : index
    %c0_124 = arith.constant 0 : index
    %133 = vector.load %arg12[%c30, %c0_124] : memref<120x256xbf16, #tpu.memory_space<vmem>>, vector<80x256xbf16>
    %c2_125 = arith.constant 2 : index
    %c3_126 = arith.constant 3 : index
    %c0_127 = arith.constant 0 : index
    %c0_128 = arith.constant 0 : index
    %134 = vector.load %arg7[%c2_125, %c3_126, %c0_127, %c0_128] : memref<4x4x256x128xbf16, #tpu.memory_space<vmem>>, vector<1x1x256x128xbf16>
    %135 = vector.shape_cast %134 : vector<1x1x256x128xbf16> to vector<256x128xbf16>
    %cst_129 = arith.constant dense<0.000000e+00> : vector<80x128xf32>
    %136 = tpu.matmul %133, %135, %cst_129 {dimension_numbers = #tpu.dot_dimension_numbers<[1], [0], [0], [1], [0, 0, 1, 1], [], []>} : vector<80x256xbf16>, vector<256x128xbf16>, vector<80x128xf32> -> vector<80x128xf32>
    %137 = arith.addf %132, %136 : vector<80x128xf32>
    %138 = vector.broadcast %62 : vector<1x128xf32> to vector<80x128xf32>
    %139 = arith.addf %137, %138 : vector<80x128xf32>
    %cst_130 = arith.constant 0.000000e+00 : f32
    %140 = vector.broadcast %cst_130 : f32 to vector<80x128xf32>
    %141 = arith.maximumf %139, %140 : vector<80x128xf32>
    %142 = arith.truncf %141 : vector<80x128xf32> to vector<80x128xbf16>
    %c0_131 = arith.constant 0 : index
    %c256 = arith.constant 256 : index
    %143 = vector.load %arg13[%c0_131, %c256] : memref<90x512xbf16, #tpu.memory_space<vmem>>, vector<80x128xbf16>
    tpu.vector_store %arg13[%c0_131, %c256], %142 {strides = array<i32>} : memref<90x512xbf16, #tpu.memory_space<vmem>>, vector<80x128xbf16>,
    %cst_132 = arith.constant 0.000000e+00 : f32
    %144 = vector.broadcast %cst_132 : f32 to vector<80x128xf32>
    %c20_133 = arith.constant 20 : index
    %c0_134 = arith.constant 0 : index
    %145 = vector.load %arg12[%c20_133, %c0_134] : memref<120x256xbf16, #tpu.memory_space<vmem>>, vector<80x256xbf16>
    %c3_135 = arith.constant 3 : index
    %c0_136 = arith.constant 0 : index
    %c0_137 = arith.constant 0 : index
    %c0_138 = arith.constant 0 : index
    %146 = vector.load %arg7[%c3_135, %c0_136, %c0_137, %c0_138] : memref<4x4x256x128xbf16, #tpu.memory_space<vmem>>, vector<1x1x256x128xbf16>
    %147 = vector.shape_cast %146 : vector<1x1x256x128xbf16> to vector<256x128xbf16>
    %cst_139 = arith.constant dense<0.000000e+00> : vector<80x128xf32>
    %148 = tpu.matmul %145, %147, %cst_139 {dimension_numbers = #tpu.dot_dimension_numbers<[1], [0], [0], [1], [0, 0, 1, 1], [], []>} : vector<80x256xbf16>, vector<256x128xbf16>, vector<80x128xf32> -> vector<80x128xf32>
    %149 = arith.addf %144, %148 : vector<80x128xf32>
    %c21_140 = arith.constant 21 : index
    %c0_141 = arith.constant 0 : index
    %150 = vector.load %arg12[%c21_140, %c0_141] : memref<120x256xbf16, #tpu.memory_space<vmem>>, vector<80x256xbf16>
    %c3_142 = arith.constant 3 : index
    %c1_143 = arith.constant 1 : index
    %c0_144 = arith.constant 0 : index
    %c0_145 = arith.constant 0 : index
    %151 = vector.load %arg7[%c3_142, %c1_143, %c0_144, %c0_145] : memref<4x4x256x128xbf16, #tpu.memory_space<vmem>>, vector<1x1x256x128xbf16>
    %152 = vector.shape_cast %151 : vector<1x1x256x128xbf16> to vector<256x128xbf16>
    %cst_146 = arith.constant dense<0.000000e+00> : vector<80x128xf32>
    %153 = tpu.matmul %150, %152, %cst_146 {dimension_numbers = #tpu.dot_dimension_numbers<[1], [0], [0], [1], [0, 0, 1, 1], [], []>} : vector<80x256xbf16>, vector<256x128xbf16>, vector<80x128xf32> -> vector<80x128xf32>
    %154 = arith.addf %149, %153 : vector<80x128xf32>
    %c30_147 = arith.constant 30 : index
    %c0_148 = arith.constant 0 : index
    %155 = vector.load %arg12[%c30_147, %c0_148] : memref<120x256xbf16, #tpu.memory_space<vmem>>, vector<80x256xbf16>
    %c3_149 = arith.constant 3 : index
    %c2_150 = arith.constant 2 : index
    %c0_151 = arith.constant 0 : index
    %c0_152 = arith.constant 0 : index
    %156 = vector.load %arg7[%c3_149, %c2_150, %c0_151, %c0_152] : memref<4x4x256x128xbf16, #tpu.memory_space<vmem>>, vector<1x1x256x128xbf16>
    %157 = vector.shape_cast %156 : vector<1x1x256x128xbf16> to vector<256x128xbf16>
    %cst_153 = arith.constant dense<0.000000e+00> : vector<80x128xf32>
    %158 = tpu.matmul %155, %157, %cst_153 {dimension_numbers = #tpu.dot_dimension_numbers<[1], [0], [0], [1], [0, 0, 1, 1], [], []>} : vector<80x256xbf16>, vector<256x128xbf16>, vector<80x128xf32> -> vector<80x128xf32>
    %159 = arith.addf %154, %158 : vector<80x128xf32>
    %c31 = arith.constant 31 : index
    %c0_154 = arith.constant 0 : index
    %160 = vector.load %arg12[%c31, %c0_154] : memref<120x256xbf16, #tpu.memory_space<vmem>>, vector<80x256xbf16>
    %c3_155 = arith.constant 3 : index
    %c3_156 = arith.constant 3 : index
    %c0_157 = arith.constant 0 : index
    %c0_158 = arith.constant 0 : index
    %161 = vector.load %arg7[%c3_155, %c3_156, %c0_157, %c0_158] : memref<4x4x256x128xbf16, #tpu.memory_space<vmem>>, vector<1x1x256x128xbf16>
    %162 = vector.shape_cast %161 : vector<1x1x256x128xbf16> to vector<256x128xbf16>
    %cst_159 = arith.constant dense<0.000000e+00> : vector<80x128xf32>
    %163 = tpu.matmul %160, %162, %cst_159 {dimension_numbers = #tpu.dot_dimension_numbers<[1], [0], [0], [1], [0, 0, 1, 1], [], []>} : vector<80x256xbf16>, vector<256x128xbf16>, vector<80x128xf32> -> vector<80x128xf32>
    %164 = arith.addf %159, %163 : vector<80x128xf32>
    %165 = vector.broadcast %62 : vector<1x128xf32> to vector<80x128xf32>
    %166 = arith.addf %164, %165 : vector<80x128xf32>
    %cst_160 = arith.constant 0.000000e+00 : f32
    %167 = vector.broadcast %cst_160 : f32 to vector<80x128xf32>
    %168 = arith.maximumf %166, %167 : vector<80x128xf32>
    %169 = arith.truncf %168 : vector<80x128xf32> to vector<80x128xbf16>
    %c0_161 = arith.constant 0 : index
    %c384 = arith.constant 384 : index
    %170 = vector.load %arg13[%c0_161, %c384] : memref<90x512xbf16, #tpu.memory_space<vmem>>, vector<80x128xbf16>
    tpu.vector_store %arg13[%c0_161, %c384], %169 {strides = array<i32>} : memref<90x512xbf16, #tpu.memory_space<vmem>>, vector<80x128xbf16>,
    %cst_162 = arith.constant 0.000000e+00 : f32
    %171 = vector.broadcast %cst_162 : f32 to vector<70x384xf32>
    %c0_163 = arith.constant 0 : index
    %c0_164 = arith.constant 0 : index
    %c0_165 = arith.constant 0 : index
    %c0_166 = arith.constant 0 : index
    %172 = vector.load %arg1[%c0_163, %c0_164, %c0_165, %c0_166] : memref<1x4x90x4xbf16, #tpu.memory_space<vmem>>, vector<1x1x70x4xbf16>
    %173 = vector.shape_cast %172 : vector<1x1x70x4xbf16> to vector<70x4xbf16>
    %c0_167 = arith.constant 0 : index
    %c0_168 = arith.constant 0 : index
    %c0_169 = arith.constant 0 : index
    %c0_170 = arith.constant 0 : index
    %174 = vector.load %arg3[%c0_167, %c0_168, %c0_169, %c0_170] : memref<3x3x4x384xbf16, #tpu.memory_space<vmem>>, vector<1x1x4x384xbf16>
    %175 = vector.shape_cast %174 : vector<1x1x4x384xbf16> to vector<4x384xbf16>
    %cst_171 = arith.constant dense<0.000000e+00> : vector<70x384xf32>
    %176 = tpu.matmul %173, %175, %cst_171 {dimension_numbers = #tpu.dot_dimension_numbers<[1], [0], [0], [1], [0, 0, 1, 1], [], []>} : vector<70x4xbf16>, vector<4x384xbf16>, vector<70x384xf32> -> vector<70x384xf32>
    %177 = arith.addf %171, %176 : vector<70x384xf32>
    %c0_172 = arith.constant 0 : index
    %c1_173 = arith.constant 1 : index
    %c0_174 = arith.constant 0 : index
    %c0_175 = arith.constant 0 : index
    %178 = vector.load %arg1[%c0_172, %c1_173, %c0_174, %c0_175] : memref<1x4x90x4xbf16, #tpu.memory_space<vmem>>, vector<1x1x70x4xbf16>
    %179 = vector.shape_cast %178 : vector<1x1x70x4xbf16> to vector<70x4xbf16>
    %c0_176 = arith.constant 0 : index
    %c1_177 = arith.constant 1 : index
    %c0_178 = arith.constant 0 : index
    %c0_179 = arith.constant 0 : index
    %180 = vector.load %arg3[%c0_176, %c1_177, %c0_178, %c0_179] : memref<3x3x4x384xbf16, #tpu.memory_space<vmem>>, vector<1x1x4x384xbf16>
    %181 = vector.shape_cast %180 : vector<1x1x4x384xbf16> to vector<4x384xbf16>
    %cst_180 = arith.constant dense<0.000000e+00> : vector<70x384xf32>
    %182 = tpu.matmul %179, %181, %cst_180 {dimension_numbers = #tpu.dot_dimension_numbers<[1], [0], [0], [1], [0, 0, 1, 1], [], []>} : vector<70x4xbf16>, vector<4x384xbf16>, vector<70x384xf32> -> vector<70x384xf32>
    %183 = arith.addf %177, %182 : vector<70x384xf32>
    %184 = arith.maximumf %173, %179 : vector<70x4xbf16>
    %c0_181 = arith.constant 0 : index
    %c0_182 = arith.constant 0 : index
    %c1_183 = arith.constant 1 : index
    %c0_184 = arith.constant 0 : index
    %185 = vector.load %arg1[%c0_181, %c0_182, %c1_183, %c0_184] : memref<1x4x90x4xbf16, #tpu.memory_space<vmem>>, vector<1x1x70x4xbf16>
    %186 = vector.shape_cast %185 : vector<1x1x70x4xbf16> to vector<70x4xbf16>
    %c0_185 = arith.constant 0 : index
    %c2_186 = arith.constant 2 : index
    %c0_187 = arith.constant 0 : index
    %c0_188 = arith.constant 0 : index
    %187 = vector.load %arg3[%c0_185, %c2_186, %c0_187, %c0_188] : memref<3x3x4x384xbf16, #tpu.memory_space<vmem>>, vector<1x1x4x384xbf16>
    %188 = vector.shape_cast %187 : vector<1x1x4x384xbf16> to vector<4x384xbf16>
    %cst_189 = arith.constant dense<0.000000e+00> : vector<70x384xf32>
    %189 = tpu.matmul %186, %188, %cst_189 {dimension_numbers = #tpu.dot_dimension_numbers<[1], [0], [0], [1], [0, 0, 1, 1], [], []>} : vector<70x4xbf16>, vector<4x384xbf16>, vector<70x384xf32> -> vector<70x384xf32>
    %190 = arith.addf %183, %189 : vector<70x384xf32>
    %191 = arith.maximumf %184, %186 : vector<70x4xbf16>
    %c0_190 = arith.constant 0 : index
    %c2_191 = arith.constant 2 : index
    %c0_192 = arith.constant 0 : index
    %c0_193 = arith.constant 0 : index
    %192 = vector.load %arg1[%c0_190, %c2_191, %c0_192, %c0_193] : memref<1x4x90x4xbf16, #tpu.memory_space<vmem>>, vector<1x1x70x4xbf16>
    %193 = vector.shape_cast %192 : vector<1x1x70x4xbf16> to vector<70x4xbf16>
    %c1_194 = arith.constant 1 : index
    %c0_195 = arith.constant 0 : index
    %c0_196 = arith.constant 0 : index
    %c0_197 = arith.constant 0 : index
    %194 = vector.load %arg3[%c1_194, %c0_195, %c0_196, %c0_197] : memref<3x3x4x384xbf16, #tpu.memory_space<vmem>>, vector<1x1x4x384xbf16>
    %195 = vector.shape_cast %194 : vector<1x1x4x384xbf16> to vector<4x384xbf16>
    %cst_198 = arith.constant dense<0.000000e+00> : vector<70x384xf32>
    %196 = tpu.matmul %193, %195, %cst_198 {dimension_numbers = #tpu.dot_dimension_numbers<[1], [0], [0], [1], [0, 0, 1, 1], [], []>} : vector<70x4xbf16>, vector<4x384xbf16>, vector<70x384xf32> -> vector<70x384xf32>
    %197 = arith.addf %190, %196 : vector<70x384xf32>
    %198 = arith.maximumf %191, %193 : vector<70x4xbf16>
    %c0_199 = arith.constant 0 : index
    %c3_200 = arith.constant 3 : index
    %c0_201 = arith.constant 0 : index
    %c0_202 = arith.constant 0 : index
    %199 = vector.load %arg1[%c0_199, %c3_200, %c0_201, %c0_202] : memref<1x4x90x4xbf16, #tpu.memory_space<vmem>>, vector<1x1x70x4xbf16>
    %200 = vector.shape_cast %199 : vector<1x1x70x4xbf16> to vector<70x4xbf16>
    %c1_203 = arith.constant 1 : index
    %c1_204 = arith.constant 1 : index
    %c0_205 = arith.constant 0 : index
    %c0_206 = arith.constant 0 : index
    %201 = vector.load %arg3[%c1_203, %c1_204, %c0_205, %c0_206] : memref<3x3x4x384xbf16, #tpu.memory_space<vmem>>, vector<1x1x4x384xbf16>
    %202 = vector.shape_cast %201 : vector<1x1x4x384xbf16> to vector<4x384xbf16>
    %cst_207 = arith.constant dense<0.000000e+00> : vector<70x384xf32>
    %203 = tpu.matmul %200, %202, %cst_207 {dimension_numbers = #tpu.dot_dimension_numbers<[1], [0], [0], [1], [0, 0, 1, 1], [], []>} : vector<70x4xbf16>, vector<4x384xbf16>, vector<70x384xf32> -> vector<70x384xf32>
    %204 = arith.addf %197, %203 : vector<70x384xf32>
    %205 = arith.maximumf %198, %200 : vector<70x4xbf16>
    %c0_208 = arith.constant 0 : index
    %c2_209 = arith.constant 2 : index
    %c1_210 = arith.constant 1 : index
    %c0_211 = arith.constant 0 : index
    %206 = vector.load %arg1[%c0_208, %c2_209, %c1_210, %c0_211] : memref<1x4x90x4xbf16, #tpu.memory_space<vmem>>, vector<1x1x70x4xbf16>
    %207 = vector.shape_cast %206 : vector<1x1x70x4xbf16> to vector<70x4xbf16>
    %c1_212 = arith.constant 1 : index
    %c2_213 = arith.constant 2 : index
    %c0_214 = arith.constant 0 : index
    %c0_215 = arith.constant 0 : index
    %208 = vector.load %arg3[%c1_212, %c2_213, %c0_214, %c0_215] : memref<3x3x4x384xbf16, #tpu.memory_space<vmem>>, vector<1x1x4x384xbf16>
    %209 = vector.shape_cast %208 : vector<1x1x4x384xbf16> to vector<4x384xbf16>
    %cst_216 = arith.constant dense<0.000000e+00> : vector<70x384xf32>
    %210 = tpu.matmul %207, %209, %cst_216 {dimension_numbers = #tpu.dot_dimension_numbers<[1], [0], [0], [1], [0, 0, 1, 1], [], []>} : vector<70x4xbf16>, vector<4x384xbf16>, vector<70x384xf32> -> vector<70x384xf32>
    %211 = arith.addf %204, %210 : vector<70x384xf32>
    %212 = arith.maximumf %205, %207 : vector<70x4xbf16>
    %c0_217 = arith.constant 0 : index
    %c0_218 = arith.constant 0 : index
    %c10_219 = arith.constant 10 : index
    %c0_220 = arith.constant 0 : index
    %213 = vector.load %arg1[%c0_217, %c0_218, %c10_219, %c0_220] : memref<1x4x90x4xbf16, #tpu.memory_space<vmem>>, vector<1x1x70x4xbf16>
    %214 = vector.shape_cast %213 : vector<1x1x70x4xbf16> to vector<70x4xbf16>
    %c2_221 = arith.constant 2 : index
    %c0_222 = arith.constant 0 : index
    %c0_223 = arith.constant 0 : index
    %c0_224 = arith.constant 0 : index
    %215 = vector.load %arg3[%c2_221, %c0_222, %c0_223, %c0_224] : memref<3x3x4x384xbf16, #tpu.memory_space<vmem>>, vector<1x1x4x384xbf16>
    %216 = vector.shape_cast %215 : vector<1x1x4x384xbf16> to vector<4x384xbf16>
    %cst_225 = arith.constant dense<0.000000e+00> : vector<70x384xf32>
    %217 = tpu.matmul %214, %216, %cst_225 {dimension_numbers = #tpu.dot_dimension_numbers<[1], [0], [0], [1], [0, 0, 1, 1], [], []>} : vector<70x4xbf16>, vector<4x384xbf16>, vector<70x384xf32> -> vector<70x384xf32>
    %218 = arith.addf %211, %217 : vector<70x384xf32>
    %219 = arith.maximumf %212, %214 : vector<70x4xbf16>
    %c0_226 = arith.constant 0 : index
    %c1_227 = arith.constant 1 : index
    %c10_228 = arith.constant 10 : index
    %c0_229 = arith.constant 0 : index
    %220 = vector.load %arg1[%c0_226, %c1_227, %c10_228, %c0_229] : memref<1x4x90x4xbf16, #tpu.memory_space<vmem>>, vector<1x1x70x4xbf16>
    %221 = vector.shape_cast %220 : vector<1x1x70x4xbf16> to vector<70x4xbf16>
    %c2_230 = arith.constant 2 : index
    %c1_231 = arith.constant 1 : index
    %c0_232 = arith.constant 0 : index
    %c0_233 = arith.constant 0 : index
    %222 = vector.load %arg3[%c2_230, %c1_231, %c0_232, %c0_233] : memref<3x3x4x384xbf16, #tpu.memory_space<vmem>>, vector<1x1x4x384xbf16>
    %223 = vector.shape_cast %222 : vector<1x1x4x384xbf16> to vector<4x384xbf16>
    %cst_234 = arith.constant dense<0.000000e+00> : vector<70x384xf32>
    %224 = tpu.matmul %221, %223, %cst_234 {dimension_numbers = #tpu.dot_dimension_numbers<[1], [0], [0], [1], [0, 0, 1, 1], [], []>} : vector<70x4xbf16>, vector<4x384xbf16>, vector<70x384xf32> -> vector<70x384xf32>
    %225 = arith.addf %218, %224 : vector<70x384xf32>
    %226 = arith.maximumf %219, %221 : vector<70x4xbf16>
    %c0_235 = arith.constant 0 : index
    %c0_236 = arith.constant 0 : index
    %c11_237 = arith.constant 11 : index
    %c0_238 = arith.constant 0 : index
    %227 = vector.load %arg1[%c0_235, %c0_236, %c11_237, %c0_238] : memref<1x4x90x4xbf16, #tpu.memory_space<vmem>>, vector<1x1x70x4xbf16>
    %228 = vector.shape_cast %227 : vector<1x1x70x4xbf16> to vector<70x4xbf16>
    %c2_239 = arith.constant 2 : index
    %c2_240 = arith.constant 2 : index
    %c0_241 = arith.constant 0 : index
    %c0_242 = arith.constant 0 : index
    %229 = vector.load %arg3[%c2_239, %c2_240, %c0_241, %c0_242] : memref<3x3x4x384xbf16, #tpu.memory_space<vmem>>, vector<1x1x4x384xbf16>
    %230 = vector.shape_cast %229 : vector<1x1x4x384xbf16> to vector<4x384xbf16>
    %cst_243 = arith.constant dense<0.000000e+00> : vector<70x384xf32>
    %231 = tpu.matmul %228, %230, %cst_243 {dimension_numbers = #tpu.dot_dimension_numbers<[1], [0], [0], [1], [0, 0, 1, 1], [], []>} : vector<70x4xbf16>, vector<4x384xbf16>, vector<70x384xf32> -> vector<70x384xf32>
    %232 = arith.addf %225, %231 : vector<70x384xf32>
    %233 = arith.maximumf %226, %228 : vector<70x4xbf16>
    %cst_244 = arith.constant 0.000000e+00 : f32
    %234 = vector.broadcast %cst_244 : f32 to vector<70x128xf32>
    %c0_245 = arith.constant 0 : index
    %c0_246 = arith.constant 0 : index
    %235 = vector.load %arg13[%c0_245, %c0_246] : memref<90x512xbf16, #tpu.memory_space<vmem>>, vector<70x512xbf16>
    %c0_247 = arith.constant 0 : index
    %c0_248 = arith.constant 0 : index
    %c0_249 = arith.constant 0 : index
    %236 = vector.load %arg9[%c0_247, %c0_248, %c0_249] : memref<4x512x128xbf16, #tpu.memory_space<vmem>>, vector<1x512x128xbf16>
    %237 = vector.shape_cast %236 : vector<1x512x128xbf16> to vector<512x128xbf16>
    %cst_250 = arith.constant dense<0.000000e+00> : vector<70x128xf32>
    %238 = tpu.matmul %235, %237, %cst_250 {dimension_numbers = #tpu.dot_dimension_numbers<[1], [0], [0], [1], [0, 0, 1, 1], [], []>} : vector<70x512xbf16>, vector<512x128xbf16>, vector<70x128xf32> -> vector<70x128xf32>
    %239 = arith.addf %234, %238 : vector<70x128xf32>
    %c1_251 = arith.constant 1 : index
    %c0_252 = arith.constant 0 : index
    %240 = vector.load %arg13[%c1_251, %c0_252] : memref<90x512xbf16, #tpu.memory_space<vmem>>, vector<70x512xbf16>
    %c1_253 = arith.constant 1 : index
    %c0_254 = arith.constant 0 : index
    %c0_255 = arith.constant 0 : index
    %241 = vector.load %arg9[%c1_253, %c0_254, %c0_255] : memref<4x512x128xbf16, #tpu.memory_space<vmem>>, vector<1x512x128xbf16>
    %242 = vector.shape_cast %241 : vector<1x512x128xbf16> to vector<512x128xbf16>
    %cst_256 = arith.constant dense<0.000000e+00> : vector<70x128xf32>
    %243 = tpu.matmul %240, %242, %cst_256 {dimension_numbers = #tpu.dot_dimension_numbers<[1], [0], [0], [1], [0, 0, 1, 1], [], []>} : vector<70x512xbf16>, vector<512x128xbf16>, vector<70x128xf32> -> vector<70x128xf32>
    %244 = arith.addf %239, %243 : vector<70x128xf32>
    %c10_257 = arith.constant 10 : index
    %c0_258 = arith.constant 0 : index
    %245 = vector.load %arg13[%c10_257, %c0_258] : memref<90x512xbf16, #tpu.memory_space<vmem>>, vector<70x512xbf16>
    %c2_259 = arith.constant 2 : index
    %c0_260 = arith.constant 0 : index
    %c0_261 = arith.constant 0 : index
    %246 = vector.load %arg9[%c2_259, %c0_260, %c0_261] : memref<4x512x128xbf16, #tpu.memory_space<vmem>>, vector<1x512x128xbf16>
    %247 = vector.shape_cast %246 : vector<1x512x128xbf16> to vector<512x128xbf16>
    %cst_262 = arith.constant dense<0.000000e+00> : vector<70x128xf32>
    %248 = tpu.matmul %245, %247, %cst_262 {dimension_numbers = #tpu.dot_dimension_numbers<[1], [0], [0], [1], [0, 0, 1, 1], [], []>} : vector<70x512xbf16>, vector<512x128xbf16>, vector<70x128xf32> -> vector<70x128xf32>
    %249 = arith.addf %244, %248 : vector<70x128xf32>
    %c11_263 = arith.constant 11 : index
    %c0_264 = arith.constant 0 : index
    %250 = vector.load %arg13[%c11_263, %c0_264] : memref<90x512xbf16, #tpu.memory_space<vmem>>, vector<70x512xbf16>
    %c3_265 = arith.constant 3 : index
    %c0_266 = arith.constant 0 : index
    %c0_267 = arith.constant 0 : index
    %251 = vector.load %arg9[%c3_265, %c0_266, %c0_267] : memref<4x512x128xbf16, #tpu.memory_space<vmem>>, vector<1x512x128xbf16>
    %252 = vector.shape_cast %251 : vector<1x512x128xbf16> to vector<512x128xbf16>
    %cst_268 = arith.constant dense<0.000000e+00> : vector<70x128xf32>
    %253 = tpu.matmul %250, %252, %cst_268 {dimension_numbers = #tpu.dot_dimension_numbers<[1], [0], [0], [1], [0, 0, 1, 1], [], []>} : vector<70x512xbf16>, vector<512x128xbf16>, vector<70x128xf32> -> vector<70x128xf32>
    %254 = arith.addf %249, %253 : vector<70x128xf32>
    %c0_269 = arith.constant 0 : index
    %c0_270 = arith.constant 0 : index
    %255 = vector.load %arg4[%c0_269, %c0_270] : memref<1x384xf32, #tpu.memory_space<vmem>>, vector<1x384xf32>
    %256 = vector.broadcast %255 : vector<1x384xf32> to vector<70x384xf32>
    %257 = arith.addf %232, %256 : vector<70x384xf32>
    %cst_271 = arith.constant 0.000000e+00 : f32
    %258 = vector.broadcast %cst_271 : f32 to vector<70x384xf32>
    %259 = arith.maximumf %257, %258 : vector<70x384xf32>
    %c0_272 = arith.constant 0 : index
    %c0_273 = arith.constant 0 : index
    %260 = vector.load %arg10[%c0_272, %c0_273] : memref<1x128xf32, #tpu.memory_space<vmem>>, vector<1x128xf32>
    %261 = vector.broadcast %260 : vector<1x128xf32> to vector<70x128xf32>
    %262 = arith.addf %254, %261 : vector<70x128xf32>
    %cst_274 = arith.constant 0.000000e+00 : f32
    %263 = vector.broadcast %cst_274 : f32 to vector<70x128xf32>
    %264 = arith.maximumf %262, %263 : vector<70x128xf32>
    %265 = arith.truncf %259 : vector<70x384xf32> to vector<70x384xbf16>
    %c0_275 = arith.constant 0 : index
    %c0_276 = arith.constant 0 : index
    %c0_277 = arith.constant 0 : index
    %266 = vector.load %arg11[%c0_275, %c0_276, %c0_277] : memref<1x70x516xbf16, #tpu.memory_space<vmem>>, vector<1x70x384xbf16>
    %267 = vector.shape_cast %266 : vector<1x70x384xbf16> to vector<70x384xbf16>
    %268 = vector.shape_cast %265 : vector<70x384xbf16> to vector<1x70x384xbf16>
    tpu.vector_store %arg11[%c0_275, %c0_276, %c0_277], %268 {strides = array<i32>} : memref<1x70x516xbf16, #tpu.memory_space<vmem>>, vector<1x70x384xbf16>,
    %269 = arith.truncf %264 : vector<70x128xf32> to vector<70x128xbf16>
    %c0_278 = arith.constant 0 : index
    %c0_279 = arith.constant 0 : index
    %c384_280 = arith.constant 384 : index
    %270 = vector.load %arg11[%c0_278, %c0_279, %c384_280] : memref<1x70x516xbf16, #tpu.memory_space<vmem>>, vector<1x70x128xbf16>
    %271 = vector.shape_cast %270 : vector<1x70x128xbf16> to vector<70x128xbf16>
    %272 = vector.shape_cast %269 : vector<70x128xbf16> to vector<1x70x128xbf16>
    tpu.vector_store %arg11[%c0_278, %c0_279, %c384_280], %272 {strides = array<i32>} : memref<1x70x516xbf16, #tpu.memory_space<vmem>>, vector<1x70x128xbf16>,
    %c0_281 = arith.constant 0 : index
    %c0_282 = arith.constant 0 : index
    %c512 = arith.constant 512 : index
    %273 = vector.load %arg11[%c0_281, %c0_282, %c512] : memref<1x70x516xbf16, #tpu.memory_space<vmem>>, vector<1x70x4xbf16>
    %274 = vector.shape_cast %273 : vector<1x70x4xbf16> to vector<70x4xbf16>
    %275 = vector.shape_cast %233 : vector<70x4xbf16> to vector<1x70x4xbf16>
    tpu.vector_store %arg11[%c0_281, %c0_282, %c512], %275 {strides = array<i32>} : memref<1x70x516xbf16, #tpu.memory_space<vmem>>, vector<1x70x4xbf16>,
    return
  }
  func.func @transform_0(%arg0: i32) -> (i32, i32, i32, i32) {
    %c0_i32 = arith.constant 0 : i32
    %c0_i32_0 = arith.constant 0 : i32
    %c0_i32_1 = arith.constant 0 : i32
    %c0_i32_2 = arith.constant 0 : i32
    return %arg0, %c0_i32, %c0_i32_0, %c0_i32_1 : i32, i32, i32, i32
  }
  func.func @transform_1(%arg0: i32) -> (i32, i32, i32) {
    %c0_i32 = arith.constant 0 : i32
    %c0_i32_0 = arith.constant 0 : i32
    %c0_i32_1 = arith.constant 0 : i32
    %c0_i32_2 = arith.constant 0 : i32
    return %c0_i32, %c0_i32_0, %c0_i32_1 : i32, i32, i32
  }
  func.func @transform_2(%arg0: i32) -> (i32, i32, i32, i32) {
    %c0_i32 = arith.constant 0 : i32
    %c0_i32_0 = arith.constant 0 : i32
    %c0_i32_1 = arith.constant 0 : i32
    %c0_i32_2 = arith.constant 0 : i32
    %c0_i32_3 = arith.constant 0 : i32
    return %c0_i32, %c0_i32_0, %c0_i32_1, %c0_i32_2 : i32, i32, i32, i32
  }
  func.func @transform_3(%arg0: i32) -> (i32, i32) {
    %c0_i32 = arith.constant 0 : i32
    %c0_i32_0 = arith.constant 0 : i32
    %c0_i32_1 = arith.constant 0 : i32
    return %c0_i32, %c0_i32_0 : i32, i32
  }
  func.func @transform_4(%arg0: i32) -> (i32, i32) {
    %c0_i32 = arith.constant 0 : i32
    %c0_i32_0 = arith.constant 0 : i32
    %c0_i32_1 = arith.constant 0 : i32
    return %c0_i32, %c0_i32_0 : i32, i32
  }
  func.func @transform_5(%arg0: i32) -> (i32, i32) {
    %c0_i32 = arith.constant 0 : i32
    %c0_i32_0 = arith.constant 0 : i32
    %c0_i32_1 = arith.constant 0 : i32
    return %c0_i32, %c0_i32_0 : i32, i32
  }
  func.func @transform_6(%arg0: i32) -> (i32, i32, i32, i32) {
    %c0_i32 = arith.constant 0 : i32
    %c0_i32_0 = arith.constant 0 : i32
    %c0_i32_1 = arith.constant 0 : i32
    %c0_i32_2 = arith.constant 0 : i32
    %c0_i32_3 = arith.constant 0 : i32
    return %c0_i32, %c0_i32_0, %c0_i32_1, %c0_i32_2 : i32, i32, i32, i32
  }
  func.func @transform_7(%arg0: i32) -> (i32, i32) {
    %c0_i32 = arith.constant 0 : i32
    %c0_i32_0 = arith.constant 0 : i32
    %c0_i32_1 = arith.constant 0 : i32
    return %c0_i32, %c0_i32_0 : i32, i32
  }
  func.func @transform_8(%arg0: i32) -> (i32, i32, i32) {
    %c0_i32 = arith.constant 0 : i32
    %c0_i32_0 = arith.constant 0 : i32
    %c0_i32_1 = arith.constant 0 : i32
    %c0_i32_2 = arith.constant 0 : i32
    return %c0_i32, %c0_i32_0, %c0_i32_1 : i32, i32, i32
  }
  func.func @transform_9(%arg0: i32) -> (i32, i32) {
    %c0_i32 = arith.constant 0 : i32
    %c0_i32_0 = arith.constant 0 : i32
    %c0_i32_1 = arith.constant 0 : i32
    return %c0_i32, %c0_i32_0 : i32, i32
  }
  func.func @transform_10(%arg0: i32) -> (i32, i32, i32) {
    %c0_i32 = arith.constant 0 : i32
    %c0_i32_0 = arith.constant 0 : i32
    %c0_i32_1 = arith.constant 0 : i32
    return %arg0, %c0_i32, %c0_i32_0 : i32, i32, i32
  }
}

</mosaic_0001>

<llo_original>
// kernel: tpu_custom_call.1
$region0: #{tpu_custom_call.1}
  #allocation0 [shape = 'u32[]', space=smem, size = 0x4, offset = 0x4, fixed_abs, tag = 'smem constant byte address 0x4 - core index']
  #allocation1 [shape = 'u32[144,128]{1,0:T(1,128)}', space=vmem, size = 0x12000, scoped, tag = 'internal scratch']
  #allocation2 [shape = 'bf16[120,256]{1,0:T(8,128)(2,1)}', space=vmem, size = 0xf000, scoped, tag = 'scratch operand']
  #allocation3 [shape = 'bf16[90,512]{1,0:T(8,128)(2,1)}', space=vmem, size = 0x18000, scoped, tag = 'scratch operand']
  %s0 = inlined_call_operand.vmem [shape: bf16[2,4,90,4], index: 0, kind: input, shape index: {}]
  %s1 = inlined_call_operand.vmem [shape: bf16[4,80,1], index: 1, kind: input, shape index: {}]
  %s2 = inlined_call_operand.vmem [shape: bf16[3,3,4,384], index: 2, kind: input, shape index: {}]
  %s3 = inlined_call_operand.vmem [shape: f32[1,384], index: 3, kind: input, shape index: {}]
  %s4 = inlined_call_operand.vmem [shape: bf16[4,64], index: 4, kind: input, shape index: {}]
  %s5 = inlined_call_operand.vmem [shape: f32[1,64], index: 5, kind: input, shape index: {}]
  %s6 = inlined_call_operand.hbm [shape: bf16[4,4,256,128], index: 6, kind: input, shape index: {}]
  %s7 = inlined_call_operand.vmem [shape: f32[1,128], index: 7, kind: input, shape index: {}]
  %s8 = inlined_call_operand.hbm [shape: bf16[4,512,128], index: 8, kind: input, shape index: {}]
  %s9 = inlined_call_operand.vmem [shape: f32[1,128], index: 9, kind: input, shape index: {}]
  %s10 = inlined_call_operand.vmem [shape: bf16[2,70,516], index: 10, kind: output, shape index: {}]
  %s11 = sld [smem:[#allocation0]]
  $region81: #{tpu_custom_call.1} parent=0
    _
  %s13 = ssub.s32 1, %s11
  %s14 = scalar_select 0, %s13, %s11
  $region1: #{tpu_custom_call.1} parent=0
    #allocation4 [shape = 'u8[1048576]{0}', space=vmem, size = 0x100000, scoped, tag = 'input window, operand 6, single buffered']
    #allocation5 [shape = 's32[2]{0}', space=sflag, size = 0x8, scoped, tag = 'scoped memory for tpu_custom_call.1']
    #allocation6 [shape = 'u8[524288]{0}', space=vmem, size = 0x80000, scoped, tag = 'input window, operand 8, single buffered']
    #allocation7 [shape = 's32[1]{0}', space=sflag, size = 0x4, scoped, tag = 'scoped memory for tpu_custom_call.1']
    %15 = vsyncpa [#allocation5], 0
    %16 = vsyncpa [#allocation7], 0
    loop: start=0, step=1, limit=4
    $region2: #{tpu_custom_call.1} parent=1 // loop_pre_header
      _
    $region3: #{tpu_custom_call.1} parent=1 // loop_header
      %s18 = sphi 0, %s22
      %p19 = scmp.ge.s32.totalorder %s18, 4
      %s28 = sphi 0, %s30
      %s31 = sphi 0, %s28
      %s32 = sphi 0, %s31
      %s48 = sphi 0, %s32
      %s52 = sphi 0, %s52
      %s54 = sphi 0, %s52
      %s55 = sphi 0, %s54
      %s69 = sphi 0, %s55
      %s73 = sphi 0, %s73
      %s75 = sphi 0, %s73
      %s76 = sphi 0, %s75
      %s90 = sphi 0, %s76
      %s94 = sphi 0, %s94
      %s96 = sphi 0, %s94
      %s97 = sphi 0, %s96
      %s111 = sphi 0, %s97
      %s115 = sphi 0, %s115
      %s117 = sphi 0, %s115
      %s118 = sphi 0, %s117
      %s132 = sphi 0, %s118
      %s136 = sphi 0, %s136
      %s138 = sphi 0, %s136
      %s139 = sphi 0, %s138
      %s153 = sphi 0, %s139
      %s157 = sphi 0, %s157
      %s159 = sphi 0, %s157
      %s160 = sphi 0, %s159
      %s174 = sphi 0, %s160
      %s178 = sphi 0, %s178
      %s180 = sphi 0, %s178
      %s181 = sphi 0, %s180
      %s195 = sphi 0, %s181
      %s199 = sphi 0, %s199
      %s201 = sphi 0, %s199
      %s202 = sphi 0, %s201
      %s216 = sphi 0, %s202
      %s220 = sphi 0, %s220
      %s222 = sphi 0, %s220
      %s223 = sphi 0, %s222
      %s237 = sphi 0, %s223
      %s243 = sphi 0, %s245
      %s246 = sphi 0, %s243
      %s247 = sphi 0, %s246
      %s263 = sphi 0, %s247
    $region4: #{tpu_custom_call.1} parent=1 // loop_header_branch
      %21 = sbr.rel (%p19) target = $region8
    $region5: #{tpu_custom_call.1} parent=1 // loop_body
      %s23 = ssub.s32 %s18, 1
      %s24 = ssub.s32 %s18, 2
      %s25 = sadd.s32 %s18, 1
      %s26 = ssub.s32 %s18, %s25
      %p27 = scmp.eq.s32.totalorder %s26, 0
      %s29 = sadd.s32 %s28, 1
      %s30 = scalar_select %p27, %s28, %s29
      %p33 = pneg %p27
      %p34 = scmp.eq.s32.totalorder %s18, 1
      %p35 = por %p33, %p34
      %p36 = scmp.ne.s32.totalorder %s28, %s31
      %p37 = scmp.eq.s32.totalorder %s18, 0
      %p38 = por %p36, %p37
      %p39 = scmp.ne.s32.totalorder %s28, %s31
      %p40 = scmp.eq.s32.totalorder %s23, 1
      %p41 = por %p39, %p40
      %p42 = scmp.ne.s32.totalorder %s31, %s32
      %p43 = scmp.eq.s32.totalorder %s23, 0
      %p44 = por %p42, %p43
      %p45 = scmp.ne.s32.totalorder %s31, %s32
      %p46 = scmp.eq.s32.totalorder %s24, 1
      %p47 = por %p45, %p46
      %p49 = scmp.ne.s32.totalorder %s32, %s48
      %p50 = scmp.eq.s32.totalorder %s24, 0
      %p51 = por %p49, %p50
      %s53 = sadd.s32 %s52, 1
      %p56 = scmp.eq.s32.totalorder %s18, 1
      %p57 = scmp.ne.s32.totalorder %s52, %s54
      %p58 = scmp.eq.s32.totalorder %s18, 0
      %p59 = por %p57, %p58
      %p60 = scmp.ne.s32.totalorder %s52, %s54
      %p61 = scmp.eq.s32.totalorder %s23, 1
      %p62 = por %p60, %p61
      %p63 = scmp.ne.s32.totalorder %s54, %s55
      %p64 = scmp.eq.s32.totalorder %s23, 0
      %p65 = por %p63, %p64
      %p66 = scmp.ne.s32.totalorder %s54, %s55
      %p67 = scmp.eq.s32.totalorder %s24, 1
      %p68 = por %p66, %p67
      %p70 = scmp.ne.s32.totalorder %s55, %s69
      %p71 = scmp.eq.s32.totalorder %s24, 0
      %p72 = por %p70, %p71
      %s74 = sadd.s32 %s73, 1
      %p77 = scmp.eq.s32.totalorder %s18, 1
      %p78 = scmp.ne.s32.totalorder %s73, %s75
      %p79 = scmp.eq.s32.totalorder %s18, 0
      %p80 = por %p78, %p79
      %p81 = scmp.ne.s32.totalorder %s73, %s75
      %p82 = scmp.eq.s32.totalorder %s23, 1
      %p83 = por %p81, %p82
      %p84 = scmp.ne.s32.totalorder %s75, %s76
      %p85 = scmp.eq.s32.totalorder %s23, 0
      %p86 = por %p84, %p85
      %p87 = scmp.ne.s32.totalorder %s75, %s76
      %p88 = scmp.eq.s32.totalorder %s24, 1
      %p89 = por %p87, %p88
      %p91 = scmp.ne.s32.totalorder %s76, %s90
      %p92 = scmp.eq.s32.totalorder %s24, 0
      %p93 = por %p91, %p92
      %s95 = sadd.s32 %s94, 1
      %p98 = scmp.eq.s32.totalorder %s18, 1
      %p99 = scmp.ne.s32.totalorder %s94, %s96
      %p100 = scmp.eq.s32.totalorder %s18, 0
      %p101 = por %p99, %p100
      %p102 = scmp.ne.s32.totalorder %s94, %s96
      %p103 = scmp.eq.s32.totalorder %s23, 1
      %p104 = por %p102, %p103
      %p105 = scmp.ne.s32.totalorder %s96, %s97
      %p106 = scmp.eq.s32.totalorder %s23, 0
      %p107 = por %p105, %p106
      %p108 = scmp.ne.s32.totalorder %s96, %s97
      %p109 = scmp.eq.s32.totalorder %s24, 1
      %p110 = por %p108, %p109
      %p112 = scmp.ne.s32.totalorder %s97, %s111
      %p113 = scmp.eq.s32.totalorder %s24, 0
      %p114 = por %p112, %p113
      %s116 = sadd.s32 %s115, 1
      %p119 = scmp.eq.s32.totalorder %s18, 1
      %p120 = scmp.ne.s32.totalorder %s115, %s117
      %p121 = scmp.eq.s32.totalorder %s18, 0
      %p122 = por %p120, %p121
      %p123 = scmp.ne.s32.totalorder %s115, %s117
      %p124 = scmp.eq.s32.totalorder %s23, 1
      %p125 = por %p123, %p124
      %p126 = scmp.ne.s32.totalorder %s117, %s118
      %p127 = scmp.eq.s32.totalorder %s23, 0
      %p128 = por %p126, %p127
      %p129 = scmp.ne.s32.totalorder %s117, %s118
      %p130 = scmp.eq.s32.totalorder %s24, 1
      %p131 = por %p129, %p130
      %p133 = scmp.ne.s32.totalorder %s118, %s132
      %p134 = scmp.eq.s32.totalorder %s24, 0
      %p135 = por %p133, %p134
      %s137 = sadd.s32 %s136, 1
      %p140 = scmp.eq.s32.totalorder %s18, 1
      %p141 = scmp.ne.s32.totalorder %s136, %s138
      %p142 = scmp.eq.s32.totalorder %s18, 0
      %p143 = por %p141, %p142
      %p144 = scmp.ne.s32.totalorder %s136, %s138
      %p145 = scmp.eq.s32.totalorder %s23, 1
      %p146 = por %p144, %p145
      %p147 = scmp.ne.s32.totalorder %s138, %s139
      %p148 = scmp.eq.s32.totalorder %s23, 0
      %p149 = por %p147, %p148
      %p150 = scmp.ne.s32.totalorder %s138, %s139
      %p151 = scmp.eq.s32.totalorder %s24, 1
      %p152 = por %p150, %p151
      %p154 = scmp.ne.s32.totalorder %s139, %s153
      %p155 = scmp.eq.s32.totalorder %s24, 0
      %p156 = por %p154, %p155
      %s158 = sadd.s32 %s157, 1
      %p161 = scmp.eq.s32.totalorder %s18, 1
      %p162 = scmp.ne.s32.totalorder %s157, %s159
      %p163 = scmp.eq.s32.totalorder %s18, 0
      %p164 = por %p162, %p163
      %p165 = scmp.ne.s32.totalorder %s157, %s159
      %p166 = scmp.eq.s32.totalorder %s23, 1
      %p167 = por %p165, %p166
      %p168 = scmp.ne.s32.totalorder %s159, %s160
      %p169 = scmp.eq.s32.totalorder %s23, 0
      %p170 = por %p168, %p169
      %p171 = scmp.ne.s32.totalorder %s159, %s160
      %p172 = scmp.eq.s32.totalorder %s24, 1
      %p173 = por %p171, %p172
      %p175 = scmp.ne.s32.totalorder %s160, %s174
      %p176 = scmp.eq.s32.totalorder %s24, 0
      %p177 = por %p175, %p176
      %s179 = sadd.s32 %s178, 1
      %p182 = scmp.eq.s32.totalorder %s18, 1
      %p183 = scmp.ne.s32.totalorder %s178, %s180
      %p184 = scmp.eq.s32.totalorder %s18, 0
      %p185 = por %p183, %p184
      %p186 = scmp.ne.s32.totalorder %s178, %s180
      %p187 = scmp.eq.s32.totalorder %s23, 1
      %p188 = por %p186, %p187
      %p189 = scmp.ne.s32.totalorder %s180, %s181
      %p190 = scmp.eq.s32.totalorder %s23, 0
      %p191 = por %p189, %p190
      %p192 = scmp.ne.s32.totalorder %s180, %s181
      %p193 = scmp.eq.s32.totalorder %s24, 1
      %p194 = por %p192, %p193
      %p196 = scmp.ne.s32.totalorder %s181, %s195
      %p197 = scmp.eq.s32.totalorder %s24, 0
      %p198 = por %p196, %p197
      %s200 = sadd.s32 %s199, 1
      %p203 = scmp.eq.s32.totalorder %s18, 1
      %p204 = scmp.ne.s32.totalorder %s199, %s201
      %p205 = scmp.eq.s32.totalorder %s18, 0
      %p206 = por %p204, %p205
      %p207 = scmp.ne.s32.totalorder %s199, %s201
      %p208 = scmp.eq.s32.totalorder %s23, 1
      %p209 = por %p207, %p208
      %p210 = scmp.ne.s32.totalorder %s201, %s202
      %p211 = scmp.eq.s32.totalorder %s23, 0
      %p212 = por %p210, %p211
      %p213 = scmp.ne.s32.totalorder %s201, %s202
      %p214 = scmp.eq.s32.totalorder %s24, 1
      %p215 = por %p213, %p214
      %p217 = scmp.ne.s32.totalorder %s202, %s216
      %p218 = scmp.eq.s32.totalorder %s24, 0
      %p219 = por %p217, %p218
      %s221 = sadd.s32 %s220, 1
      %p224 = scmp.eq.s32.totalorder %s18, 1
      %p225 = scmp.ne.s32.totalorder %s220, %s222
      %p226 = scmp.eq.s32.totalorder %s18, 0
      %p227 = por %p225, %p226
      %p228 = scmp.ne.s32.totalorder %s220, %s222
      %p229 = scmp.eq.s32.totalorder %s23, 1
      %p230 = por %p228, %p229
      %p231 = scmp.ne.s32.totalorder %s222, %s223
      %p232 = scmp.eq.s32.totalorder %s23, 0
      %p233 = por %p231, %p232
      %p234 = scmp.ne.s32.totalorder %s222, %s223
      %p235 = scmp.eq.s32.totalorder %s24, 1
      %p236 = por %p234, %p235
      %p238 = scmp.ne.s32.totalorder %s223, %s237
      %p239 = scmp.eq.s32.totalorder %s24, 0
      %p240 = por %p238, %p239
      %s241 = ssub.s32 %s18, %s25
      %p242 = scmp.eq.s32.totalorder %s241, 0
      %s244 = sadd.s32 %s243, 1
      %s245 = scalar_select %p242, %s243, %s244
      %p248 = pneg %p242
      %p249 = scmp.eq.s32.totalorder %s18, 1
      %p250 = por %p248, %p249
      %p251 = scmp.ne.s32.totalorder %s243, %s246
      %p252 = scmp.eq.s32.totalorder %s18, 0
      %p253 = por %p251, %p252
      %p254 = scmp.ne.s32.totalorder %s243, %s246
      %p255 = scmp.eq.s32.totalorder %s23, 1
      %p256 = por %p254, %p255
      %p257 = scmp.ne.s32.totalorder %s246, %s247
      %p258 = scmp.eq.s32.totalorder %s23, 0
      %p259 = por %p257, %p258
      %p260 = scmp.ne.s32.totalorder %s246, %s247
      %p261 = scmp.eq.s32.totalorder %s24, 1
      %p262 = por %p260, %p261
      %p264 = scmp.ne.s32.totalorder %s247, %s263
      %p265 = scmp.eq.s32.totalorder %s24, 0
      %p266 = por %p264, %p265
      %p267 = scmp.le.s32.totalorder 1, %s18
      %p268 = scmp.lt.s32.totalorder %s18, 3
      %p269 = pnand %p267, %p268
      %p270 = pneg %p269
      // Predicated region
      $region9: #{tpu_custom_call.1} parent=5 // pred_check
        _
      $region10: #{tpu_custom_call.1} parent=5 // pred_check_branch
        %272 = sbr.rel (%p269) target = $region12
      $region11: #{tpu_custom_call.1} parent=5 // pred_region
        %s273 = ssub.s32 %s18, 1
        // Predicated region
        $region13: #{tpu_custom_call.1} parent=11 // pred_check
          %p274 = pneg %p65
        $region14: #{tpu_custom_call.1} parent=11 // pred_check_branch
          %276 = sbr.rel (%p274) target = $region16
        $region15: #{tpu_custom_call.1} parent=11 // pred_region
          _
        $region16: #{tpu_custom_call.1} parent=11 // pred_fallthru
          _
        // Predicated region
        $region17: #{tpu_custom_call.1} parent=11 // pred_check
          %p277 = pneg %p86
        $region18: #{tpu_custom_call.1} parent=11 // pred_check_branch
          %279 = sbr.rel (%p277) target = $region20
        $region19: #{tpu_custom_call.1} parent=11 // pred_region
          _
        $region20: #{tpu_custom_call.1} parent=11 // pred_fallthru
          _
        // Predicated region
        $region21: #{tpu_custom_call.1} parent=11 // pred_check
          %p280 = pneg %p107
        $region22: #{tpu_custom_call.1} parent=11 // pred_check_branch
          %282 = sbr.rel (%p280) target = $region24
        $region23: #{tpu_custom_call.1} parent=11 // pred_region
          _
        $region24: #{tpu_custom_call.1} parent=11 // pred_fallthru
          _
        // Predicated region
        $region25: #{tpu_custom_call.1} parent=11 // pred_check
          %p283 = pneg %p128
        $region26: #{tpu_custom_call.1} parent=11 // pred_check_branch
          %285 = sbr.rel (%p283) target = $region28
        $region27: #{tpu_custom_call.1} parent=11 // pred_region
          _
        $region28: #{tpu_custom_call.1} parent=11 // pred_fallthru
          _
        // Predicated region
        $region29: #{tpu_custom_call.1} parent=11 // pred_check
          %p286 = pneg %p149
        $region30: #{tpu_custom_call.1} parent=11 // pred_check_branch
          %288 = sbr.rel (%p286) target = $region32
        $region31: #{tpu_custom_call.1} parent=11 // pred_region
          _
        $region32: #{tpu_custom_call.1} parent=11 // pred_fallthru
          _
        // Predicated region
        $region33: #{tpu_custom_call.1} parent=11 // pred_check
          %p289 = pneg %p170
        $region34: #{tpu_custom_call.1} parent=11 // pred_check_branch
          %291 = sbr.rel (%p289) target = $region36
        $region35: #{tpu_custom_call.1} parent=11 // pred_region
          %s293 = ssub.s32 32768, 32768
          %294 = vsyncadd [#allocation5], %s293
          %s295 = sshll.u32 [#allocation4], 4
          %s296 = int_to_ptr.vmem [resolvable:$true] %s295
          %301 = dma.hbm_to_vmem [thread:$0]  %s6, 32768, %s296, [#allocation5], 64, 64, 4
        $region36: #{tpu_custom_call.1} parent=11 // pred_fallthru
          _
        // Predicated region
        $region37: #{tpu_custom_call.1} parent=11 // pred_check
          %p302 = pneg %p191
        $region38: #{tpu_custom_call.1} parent=11 // pred_check_branch
          %304 = sbr.rel (%p302) target = $region40
        $region39: #{tpu_custom_call.1} parent=11 // pred_region
          _
        $region40: #{tpu_custom_call.1} parent=11 // pred_fallthru
          _
        // Predicated region
        $region41: #{tpu_custom_call.1} parent=11 // pred_check
          %p305 = pneg %p212
        $region42: #{tpu_custom_call.1} parent=11 // pred_check_branch
          %307 = sbr.rel (%p305) target = $region44
        $region43: #{tpu_custom_call.1} parent=11 // pred_region
          %s309 = ssub.s32 16384, 16384
          %310 = vsyncadd [#allocation7], %s309
          %s311 = sshll.u32 [#allocation6], 4
          %s312 = int_to_ptr.vmem [resolvable:$true] %s311
          %317 = dma.hbm_to_vmem [thread:$0]  %s8, 16384, %s312, [#allocation7], 64, 64, 4
        $region44: #{tpu_custom_call.1} parent=11 // pred_fallthru
          _
        // Predicated region
        $region45: #{tpu_custom_call.1} parent=11 // pred_check
          %p318 = pneg %p233
        $region46: #{tpu_custom_call.1} parent=11 // pred_check_branch
          %320 = sbr.rel (%p318) target = $region48
        $region47: #{tpu_custom_call.1} parent=11 // pred_region
          _
        $region48: #{tpu_custom_call.1} parent=11 // pred_fallthru
          _
      $region12: #{tpu_custom_call.1} parent=5 // pred_fallthru
        _
      %p321 = scmp.lt.s32.totalorder %s18, 2
      // Predicated region
      $region49: #{tpu_custom_call.1} parent=5 // pred_check
        %p322 = pneg %p321
      $region50: #{tpu_custom_call.1} parent=5 // pred_check_branch
        %324 = sbr.rel (%p322) target = $region52
      $region51: #{tpu_custom_call.1} parent=5 // pred_region
        // Predicated region
        $region53: #{tpu_custom_call.1} parent=51 // pred_check
          %p325 = pneg %p38
        $region54: #{tpu_custom_call.1} parent=51 // pred_check_branch
          %327 = sbr.rel (%p325) target = $region56
        $region55: #{tpu_custom_call.1} parent=51 // pred_region
          %p328 = scmp.lt.s32.totalorder %s18, 1
          %s329 = scalar_select %p328, %s18, 1
          %s330 = smul.addr %s329, 48
          %s331 = smul.addr %s330, 4
          %s332 = scalar_lea.vmem %s0, %s331
        $region56: #{tpu_custom_call.1} parent=51 // pred_fallthru
          _
      $region52: #{tpu_custom_call.1} parent=5 // pred_fallthru
        _
      %p333 = scmp.le.s32.totalorder 1, %s18
      %p334 = scmp.lt.s32.totalorder %s18, 3
      %p335 = pnand %p333, %p334
      %p336 = pneg %p335
      // Predicated region
      $region57: #{tpu_custom_call.1} parent=5 // pred_check
        _
      $region58: #{tpu_custom_call.1} parent=5 // pred_check_branch
        %338 = sbr.rel (%p335) target = $region60
      $region59: #{tpu_custom_call.1} parent=5 // pred_region
        %s339 = ssub.s32 %s18, 1
        // Predicated region
        $region61: #{tpu_custom_call.1} parent=59 // pred_check
          %p340 = pneg %p170
        $region62: #{tpu_custom_call.1} parent=59 // pred_check_branch
          %342 = sbr.rel (%p340) target = $region64
        $region63: #{tpu_custom_call.1} parent=59 // pred_region
          %343 = dma.done [#allocation5], 32768
        $region64: #{tpu_custom_call.1} parent=59 // pred_fallthru
          _
        // Predicated region
        $region65: #{tpu_custom_call.1} parent=59 // pred_check
          %p344 = pneg %p212
        $region66: #{tpu_custom_call.1} parent=59 // pred_check_branch
          %346 = sbr.rel (%p344) target = $region68
        $region67: #{tpu_custom_call.1} parent=59 // pred_region
          %347 = dma.done [#allocation7], 16384
        $region68: #{tpu_custom_call.1} parent=59 // pred_fallthru
          _
        %p348 = scmp.lt.s32.totalorder %s23, 1
        %s349 = scalar_select %p348, %s23, 1
        %s350 = smul.addr %s349, 48
        %s351 = smul.addr %s350, 4
        %s352 = scalar_lea.vmem %s0, %s351
        %p353 = pneg %p44
        %p354 = pneg %p41
        %p355 = pneg %p65
        %p356 = pneg %p62
        %p357 = pneg %p86
        %p358 = pneg %p83
        %p359 = pneg %p107
        %p360 = pneg %p104
        %p361 = pneg %p128
        %p362 = pneg %p125
        %p363 = pneg %p149
        %p364 = pneg %p146
        %p365 = pneg %p170
        %p366 = pneg %p167
        %p367 = pneg %p191
        %p368 = pneg %p188
        %p369 = pneg %p212
        %p370 = pneg %p209
        %p371 = pneg %p233
        %p372 = pneg %p230
        %p373 = pneg %p259
        %p374 = pneg %p256
        %p375 = scmp.lt.s32.totalorder %s23, 1
        %s376 = scalar_select %p375, %s23, 1
        %s377 = smul.addr %s376, 45
        %s378 = smul.addr %s377, 4
        %s379 = scalar_lea.vmem %s10, %s378
        %p380 = scmp.lt.s32.totalorder %s23, 1
        %s381 = scalar_select %p380, %s23, 1
        %s382 = smul.addr %s381, 48
        %s383 = smul.addr %s382, 4
        %s384 = scalar_lea.vmem %s0, %s383
        %p385 = scmp.lt.s32.totalorder %s23, 1
        %s386 = scalar_select %p385, %s23, 1
        %s387 = smul.addr %s386, 45
        %s388 = smul.addr %s387, 4
        %s389 = scalar_lea.vmem %s10, %s388
        %391 = vst [vmem:[#allocation2] sm:$0xff] 0
        %392 = vst [vmem:[#allocation2 + $0x8] sm:$0xff] 0
        %393 = vst [vmem:[#allocation2 + $0x10] sm:$0x33] 0
        %394 = vst [vmem:[#allocation2 + $0x60] sm:$0xcc] 0
        %395 = vst [vmem:[#allocation2 + $0x68] sm:$0xff] 0
        %396 = vst [vmem:[#allocation2 + $0x70] sm:$0xff] 0
        %397 = vst [vmem:[#allocation3 + $0xa0] sm:$0xff] 0
        %398 = vst [vmem:[#allocation3 + $0xa8] sm:$0xff] 0
        %399 = vst [vmem:[#allocation3 + $0xb0] sm:$0x11] 0
        %400 = vst [vmem:[#allocation3 + $0xb8] sm:$0x11] 0
        %v401 = vld [vmem:[%s4] sm:$0x3]
        %v402 = vld [vmem:[%s5] sm:$0x1]
        %v403 = vld [vmem:[%s384] sm:$0xf]
        %v404 = vld [vmem:[%s384 + $0x4] sm:$0xf]
        %v405 = vld [vmem:[%s384 + $0x8] sm:$0xf]
        %v406 = vld [vmem:[%s384 + $0xc] sm:$0xf]
        %v407 = vld [vmem:[%s384 + $0x10] sm:$0xf]
        %v408 = vld [vmem:[%s384 + $0x14] sm:$0xf]
        %v409 = vld [vmem:[%s384 + $0x18] sm:$0xf]
        %v410 = vld [vmem:[%s384 + $0x1c] sm:$0xf]
        %v411 = vld [vmem:[%s384 + $0x20] sm:$0xf]
        %v412 = vld [vmem:[%s384 + $0x24] sm:$0xf]
        %v414 = vlaneseq
        %v415 = vshrl.u32 %v414, 7
        %v416 = vsub.s32 0, %v415
        %v417 = vrot.slane %v402, %v416
        %v429 = vunpack.c.l.b16 %v403
        %v430 = vunpack.c.l.b16 %v404
        %v431 = vunpack.c.l.b16 %v405
        %v432 = vunpack.c.l.b16 %v406
        %v433 = vunpack.c.l.b16 %v407
        %v434 = vunpack.c.l.b16 %v408
        %v435 = vunpack.c.l.b16 %v409
        %v436 = vunpack.c.l.b16 %v410
        %v437 = vunpack.c.l.b16 %v411
        %v438 = vunpack.c.l.b16 %v412
        %v439 = vpack.c.b16 %v430, %v429
        %v440 = vpack.c.b16 %v432, %v431
        %v441 = vpack.c.b16 %v434, %v433
        %v442 = vpack.c.b16 %v436, %v435
        %v443 = vpack.c.b16 %v438, %v437
        %vm444 = vcmask 31744
        %v446 = vsel %vm444, %v439, 0
        %v449 = vsel %vm444, %v440, 0
        %v452 = vsel %vm444, %v441, 0
        %v455 = vsel %vm444, %v442, 0
        %v458 = vsel %vm444, %v443, 0
        %vm460 = vcmask 1041408
        %v462 = vsel %vm460, %v401, 0
        %464 = vmatprep.subr.bf16.mxu0 0
        %465 = vmatpush1.bf16.msra.mxu0 %v462
        %466 = vmatprep.subr.bf16.mxu0 0
        %467 = vmatpush1.bf16.msra.mxu0 0
        %468 = vmatprep.subr.bf16.mxu0 0
        %469 = vmatpush1.bf16.msra.mxu0 0
        %470 = vmatprep.subr.bf16.mxu0 0
        %471 = vmatpush1.bf16.msra.mxu0 0
        %472 = vmatprep.subr.bf16.mxu0 0
        %473 = vmatpush1.bf16.msra.mxu0 0
        %474 = vmatprep.subr.bf16.mxu0 0
        %475 = vmatpush1.bf16.msra.mxu0 0
        %476 = vmatprep.subr.bf16.mxu0 0
        %477 = vmatpush1.bf16.msra.mxu0 0
        %478 = vmatprep.subr.bf16.mxu0 0
        %479 = vmatpush1.bf16.msra.mxu0 0
        %480 = vmatprep.subr.bf16.mxu0 0
        %481 = vmatpush1.bf16.msra.mxu0 0
        %482 = vmatprep.subr.bf16.mxu0 0
        %483 = vmatpush1.bf16.msra.mxu0 0
        %484 = vmatprep.subr.bf16.mxu0 0
        %485 = vmatpush1.bf16.msra.mxu0 0
        %486 = vmatprep.subr.bf16.mxu0 0
        %487 = vmatpush1.bf16.msra.mxu0 0
        %488 = vmatprep.subr.bf16.mxu0 0
        %489 = vmatpush1.bf16.msra.mxu0 0
        %490 = vmatprep.subr.bf16.mxu0 0
        %491 = vmatpush1.bf16.msra.mxu0 0
        %492 = vmatprep.subr.bf16.mxu0 0
        %493 = vmatpush1.bf16.msra.mxu0 0
        %494 = vmatprep.subr.bf16.mxu0 0
        %495 = vmatpush1.bf16.msra.mxu0 0
        %496 = vmatprep.mubr.bf16.mxu0 0
        %497 = vmatmul.mubr.bf16.gmra.mrb[0].mxu0 %v446
        %v498 = vpop.f32.mrb[0].mxu0
        %v499 = vadd.f32 %v417, %v498
        %v500 = vpop.f32.mrb[0].mxu0
        %v501 = vpop.f32.mrb[0].mxu0
        %v502 = vadd.f32 %v417, %v501
        %v503 = vpop.f32.mrb[0].mxu0
        %504 = vmatprep.mubr.bf16.mxu0 0
        %505 = vmatmul.mubr.bf16.gmra.mrb[0].mxu0 %v449
        %v506 = vpop.f32.mrb[0].mxu0
        %v507 = vadd.f32 %v417, %v506
        %v508 = vpop.f32.mrb[0].mxu0
        %v509 = vpop.f32.mrb[0].mxu0
        %v510 = vadd.f32 %v417, %v509
        %v511 = vpop.f32.mrb[0].mxu0
        %512 = vmatprep.mubr.bf16.mxu0 0
        %513 = vmatmul.mubr.bf16.gmra.mrb[0].mxu0 %v452
        %v514 = vpop.f32.mrb[0].mxu0
        %v515 = vadd.f32 %v417, %v514
        %v516 = vpop.f32.mrb[0].mxu0
        %v517 = vpop.f32.mrb[0].mxu0
        %v518 = vadd.f32 %v417, %v517
        %v519 = vpop.f32.mrb[0].mxu0
        %520 = vmatprep.mubr.bf16.mxu0 0
        %521 = vmatmul.mubr.bf16.gmra.mrb[0].mxu0 %v455
        %v522 = vpop.f32.mrb[0].mxu0
        %v523 = vadd.f32 %v417, %v522
        %v524 = vpop.f32.mrb[0].mxu0
        %v525 = vpop.f32.mrb[0].mxu0
        %v526 = vadd.f32 %v417, %v525
        %v527 = vpop.f32.mrb[0].mxu0
        %528 = vmatprep.mubr.bf16.mxu0 0
        %529 = vmatmul.mubr.bf16.gmra.mrb[0].mxu0 %v458
        %v530 = vpop.f32.mrb[0].mxu0
        %v531 = vadd.f32 %v417, %v530
        %v532 = vpop.f32.mrb[0].mxu0
        %v533 = vpop.f32.mrb[0].mxu0
        %v534 = vadd.f32 %v417, %v533
        %v535 = vpop.f32.mrb[0].mxu0
        %536 = vdwg.mxu0
        %v537 = vmax.f32 %v499, 0.0
        %v538 = vmax.f32 %v502, 0.0
        %v539 = vmax.f32 %v507, 0.0
        %v540 = vmax.f32 %v510, 0.0
        %v541 = vmax.f32 %v515, 0.0
        %v542 = vmax.f32 %v518, 0.0
        %v543 = vmax.f32 %v523, 0.0
        %v544 = vmax.f32 %v526, 0.0
        %v545 = vmax.f32 %v531, 0.0
        %v546 = vmax.f32 %v534, 0.0
        %v547 = vld [vmem:[%s1] sm:$0xf]
        %v548 = vld [vmem:[%s1 + $0x4] sm:$0xf]
        %v549 = vld [vmem:[%s1 + $0x8] sm:$0xf]
        %v550 = vld [vmem:[%s1 + $0xc] sm:$0xf]
        %v551 = vld [vmem:[%s1 + $0x10] sm:$0xf]
        %v552 = vld [vmem:[%s1 + $0x14] sm:$0xf]
        %v553 = vld [vmem:[%s1 + $0x18] sm:$0xf]
        %v554 = vld [vmem:[%s1 + $0x1c] sm:$0xf]
        %v555 = vld [vmem:[%s1 + $0x20] sm:$0xf]
        %v556 = vld [vmem:[%s1 + $0x24] sm:$0xf]
        %v557 = vunpack.c.l.bf16 %v547
        %v558 = vunpack.c.l.bf16 %v548
        %v559 = vunpack.c.l.bf16 %v549
        %v560 = vunpack.c.l.bf16 %v550
        %v561 = vunpack.c.l.bf16 %v551
        %v562 = vunpack.c.l.bf16 %v552
        %v563 = vunpack.c.l.bf16 %v553
        %v564 = vunpack.c.l.bf16 %v554
        %v565 = vunpack.c.l.bf16 %v555
        %v566 = vunpack.c.l.bf16 %v556
        %568 = vset.pattern.permute.xlu0 0
        %569 = vperm.xlu0 %568, %v557
        %v570 = vpop.permute.xlu0 %569
        %573 = vset.pattern.permute.xlu0 0
        %574 = vperm.xlu0 %573, %v558
        %v575 = vpop.permute.xlu0 %574
        %578 = vset.pattern.permute.xlu0 0
        %579 = vperm.xlu0 %578, %v559
        %v580 = vpop.permute.xlu0 %579
        %583 = vset.pattern.permute.xlu0 0
        %584 = vperm.xlu0 %583, %v560
        %v585 = vpop.permute.xlu0 %584
        %588 = vset.pattern.permute.xlu0 0
        %589 = vperm.xlu0 %588, %v561
        %v590 = vpop.permute.xlu0 %589
        %593 = vset.pattern.permute.xlu0 0
        %594 = vperm.xlu0 %593, %v562
        %v595 = vpop.permute.xlu0 %594
        %598 = vset.pattern.permute.xlu0 0
        %599 = vperm.xlu0 %598, %v563
        %v600 = vpop.permute.xlu0 %599
        %603 = vset.pattern.permute.xlu0 0
        %604 = vperm.xlu0 %603, %v564
        %v605 = vpop.permute.xlu0 %604
        %608 = vset.pattern.permute.xlu0 0
        %609 = vperm.xlu0 %608, %v565
        %v610 = vpop.permute.xlu0 %609
        %613 = vset.pattern.permute.xlu0 0
        %614 = vperm.xlu0 %613, %v566
        %v615 = vpop.permute.xlu0 %614
        %v617 = vmul.f32 %v537, %v570
        %v618 = vmul.f32 %v538, %v575
        %v619 = vmul.f32 %v539, %v580
        %v620 = vmul.f32 %v540, %v585
        %v621 = vmul.f32 %v541, %v590
        %v622 = vmul.f32 %v542, %v595
        %v623 = vmul.f32 %v543, %v600
        %v624 = vmul.f32 %v544, %v605
        %v625 = vmul.f32 %v545, %v610
        %v626 = vmul.f32 %v546, %v615
        %v627 = vpack.c.bf16 %v618, %v617
        %v628 = vpack.c.bf16 %v620, %v619
        %v629 = vpack.c.bf16 %v622, %v621
        %v630 = vpack.c.bf16 %v624, %v623
        %v631 = vpack.c.bf16 %v626, %v625
        %s632 = scalar_lea.vmem %s384, 48
        %v633 = vld [vmem:[%s632] sm:$0xf]
        %v634 = vld [vmem:[%s632 + $0x4] sm:$0xf]
        %v635 = vld [vmem:[%s632 + $0x8] sm:$0xf]
        %v636 = vld [vmem:[%s632 + $0xc] sm:$0xf]
        %v637 = vld [vmem:[%s632 + $0x10] sm:$0xf]
        %v638 = vld [vmem:[%s632 + $0x14] sm:$0xf]
        %v639 = vld [vmem:[%s632 + $0x18] sm:$0xf]
        %v640 = vld [vmem:[%s632 + $0x1c] sm:$0xf]
        %v641 = vld [vmem:[%s632 + $0x20] sm:$0xf]
        %v642 = vld [vmem:[%s632 + $0x24] sm:$0xf]
        %v653 = vunpack.c.l.b16 %v633
        %v654 = vunpack.c.l.b16 %v634
        %v655 = vunpack.c.l.b16 %v635
        %v656 = vunpack.c.l.b16 %v636
        %v657 = vunpack.c.l.b16 %v637
        %v658 = vunpack.c.l.b16 %v638
        %v659 = vunpack.c.l.b16 %v639
        %v660 = vunpack.c.l.b16 %v640
        %v661 = vunpack.c.l.b16 %v641
        %v662 = vunpack.c.l.b16 %v642
        %v663 = vpack.c.b16 %v654, %v653
        %v664 = vpack.c.b16 %v656, %v655
        %v665 = vpack.c.b16 %v658, %v657
        %v666 = vpack.c.b16 %v660, %v659
        %v667 = vpack.c.b16 %v662, %v661
        %v669 = vsel %vm444, %v663, 0
        %v672 = vsel %vm444, %v664, 0
        %v675 = vsel %vm444, %v665, 0
        %v678 = vsel %vm444, %v666, 0
        %v681 = vsel %vm444, %v667, 0
        %683 = vmatprep.subr.bf16.mxu0 0
        %684 = vmatpush1.bf16.msra.mxu0 %v462
        %685 = vmatprep.subr.bf16.mxu0 0
        %686 = vmatpush1.bf16.msra.mxu0 0
        %687 = vmatprep.subr.bf16.mxu0 0
        %688 = vmatpush1.bf16.msra.mxu0 0
        %689 = vmatprep.subr.bf16.mxu0 0
        %690 = vmatpush1.bf16.msra.mxu0 0
        %691 = vmatprep.subr.bf16.mxu0 0
        %692 = vmatpush1.bf16.msra.mxu0 0
        %693 = vmatprep.subr.bf16.mxu0 0
        %694 = vmatpush1.bf16.msra.mxu0 0
        %695 = vmatprep.subr.bf16.mxu0 0
        %696 = vmatpush1.bf16.msra.mxu0 0
        %697 = vmatprep.subr.bf16.mxu0 0
        %698 = vmatpush1.bf16.msra.mxu0 0
        %699 = vmatprep.subr.bf16.mxu0 0
        %700 = vmatpush1.bf16.msra.mxu0 0
        %701 = vmatprep.subr.bf16.mxu0 0
        %702 = vmatpush1.bf16.msra.mxu0 0
        %703 = vmatprep.subr.bf16.mxu0 0
        %704 = vmatpush1.bf16.msra.mxu0 0
        %705 = vmatprep.subr.bf16.mxu0 0
        %706 = vmatpush1.bf16.msra.mxu0 0
        %707 = vmatprep.subr.bf16.mxu0 0
        %708 = vmatpush1.bf16.msra.mxu0 0
        %709 = vmatprep.subr.bf16.mxu0 0
        %710 = vmatpush1.bf16.msra.mxu0 0
        %711 = vmatprep.subr.bf16.mxu0 0
        %712 = vmatpush1.bf16.msra.mxu0 0
        %713 = vmatprep.subr.bf16.mxu0 0
        %714 = vmatpush1.bf16.msra.mxu0 0
        %715 = vmatprep.mubr.bf16.mxu0 0
        %716 = vmatmul.mubr.bf16.gmra.mrb[0].mxu0 %v669
        %v717 = vpop.f32.mrb[0].mxu0
        %v718 = vadd.f32 %v417, %v717
        %v719 = vpop.f32.mrb[0].mxu0
        %v720 = vpop.f32.mrb[0].mxu0
        %v721 = vadd.f32 %v417, %v720
        %v722 = vpop.f32.mrb[0].mxu0
        %723 = vmatprep.mubr.bf16.mxu0 0
        %724 = vmatmul.mubr.bf16.gmra.mrb[0].mxu0 %v672
        %v725 = vpop.f32.mrb[0].mxu0
        %v726 = vadd.f32 %v417, %v725
        %v727 = vpop.f32.mrb[0].mxu0
        %v728 = vpop.f32.mrb[0].mxu0
        %v729 = vadd.f32 %v417, %v728
        %v730 = vpop.f32.mrb[0].mxu0
        %731 = vmatprep.mubr.bf16.mxu0 0
        %732 = vmatmul.mubr.bf16.gmra.mrb[0].mxu0 %v675
        %v733 = vpop.f32.mrb[0].mxu0
        %v734 = vadd.f32 %v417, %v733
        %v735 = vpop.f32.mrb[0].mxu0
        %v736 = vpop.f32.mrb[0].mxu0
        %v737 = vadd.f32 %v417, %v736
        %v738 = vpop.f32.mrb[0].mxu0
        %739 = vmatprep.mubr.bf16.mxu0 0
        %740 = vmatmul.mubr.bf16.gmra.mrb[0].mxu0 %v678
        %v741 = vpop.f32.mrb[0].mxu0
        %v742 = vadd.f32 %v417, %v741
        %v743 = vpop.f32.mrb[0].mxu0
        %v744 = vpop.f32.mrb[0].mxu0
        %v745 = vadd.f32 %v417, %v744
        %v746 = vpop.f32.mrb[0].mxu0
        %747 = vmatprep.mubr.bf16.mxu0 0
        %748 = vmatmul.mubr.bf16.gmra.mrb[0].mxu0 %v681
        %v749 = vpop.f32.mrb[0].mxu0
        %v750 = vadd.f32 %v417, %v749
        %v751 = vpop.f32.mrb[0].mxu0
        %v752 = vpop.f32.mrb[0].mxu0
        %v753 = vadd.f32 %v417, %v752
        %v754 = vpop.f32.mrb[0].mxu0
        %755 = vdwg.mxu0
        %v756 = vmax.f32 %v718, 0.0
        %v757 = vmax.f32 %v721, 0.0
        %v758 = vmax.f32 %v726, 0.0
        %v759 = vmax.f32 %v729, 0.0
        %v760 = vmax.f32 %v734, 0.0
        %v761 = vmax.f32 %v737, 0.0
        %v762 = vmax.f32 %v742, 0.0
        %v763 = vmax.f32 %v745, 0.0
        %v764 = vmax.f32 %v750, 0.0
        %v765 = vmax.f32 %v753, 0.0
        %s766 = scalar_lea.vmem %s1, 40
        %v767 = vld [vmem:[%s766] sm:$0xf]
        %v768 = vld [vmem:[%s766 + $0x4] sm:$0xf]
        %v769 = vld [vmem:[%s766 + $0x8] sm:$0xf]
        %v770 = vld [vmem:[%s766 + $0xc] sm:$0xf]
        %v771 = vld [vmem:[%s766 + $0x10] sm:$0xf]
        %v772 = vld [vmem:[%s766 + $0x14] sm:$0xf]
        %v773 = vld [vmem:[%s766 + $0x18] sm:$0xf]
        %v774 = vld [vmem:[%s766 + $0x1c] sm:$0xf]
        %v775 = vld [vmem:[%s766 + $0x20] sm:$0xf]
        %v776 = vld [vmem:[%s766 + $0x24] sm:$0xf]
        %v777 = vunpack.c.l.bf16 %v767
        %v778 = vunpack.c.l.bf16 %v768
        %v779 = vunpack.c.l.bf16 %v769
        %v780 = vunpack.c.l.bf16 %v770
        %v781 = vunpack.c.l.bf16 %v771
        %v782 = vunpack.c.l.bf16 %v772
        %v783 = vunpack.c.l.bf16 %v773
        %v784 = vunpack.c.l.bf16 %v774
        %v785 = vunpack.c.l.bf16 %v775
        %v786 = vunpack.c.l.bf16 %v776
        %788 = vset.pattern.permute.xlu0 0
        %789 = vperm.xlu0 %788, %v777
        %v790 = vpop.permute.xlu0 %789
        %793 = vset.pattern.permute.xlu0 0
        %794 = vperm.xlu0 %793, %v778
        %v795 = vpop.permute.xlu0 %794
        %798 = vset.pattern.permute.xlu0 0
        %799 = vperm.xlu0 %798, %v779
        %v800 = vpop.permute.xlu0 %799
        %803 = vset.pattern.permute.xlu0 0
        %804 = vperm.xlu0 %803, %v780
        %v805 = vpop.permute.xlu0 %804
        %808 = vset.pattern.permute.xlu0 0
        %809 = vperm.xlu0 %808, %v781
        %v810 = vpop.permute.xlu0 %809
        %813 = vset.pattern.permute.xlu0 0
        %814 = vperm.xlu0 %813, %v782
        %v815 = vpop.permute.xlu0 %814
        %818 = vset.pattern.permute.xlu0 0
        %819 = vperm.xlu0 %818, %v783
        %v820 = vpop.permute.xlu0 %819
        %823 = vset.pattern.permute.xlu0 0
        %824 = vperm.xlu0 %823, %v784
        %v825 = vpop.permute.xlu0 %824
        %828 = vset.pattern.permute.xlu0 0
        %829 = vperm.xlu0 %828, %v785
        %v830 = vpop.permute.xlu0 %829
        %833 = vset.pattern.permute.xlu0 0
        %834 = vperm.xlu0 %833, %v786
        %v835 = vpop.permute.xlu0 %834
        %v837 = vmul.f32 %v756, %v790
        %v838 = vmul.f32 %v757, %v795
        %v839 = vmul.f32 %v758, %v800
        %v840 = vmul.f32 %v759, %v805
        %v841 = vmul.f32 %v760, %v810
        %v842 = vmul.f32 %v761, %v815
        %v843 = vmul.f32 %v762, %v820
        %v844 = vmul.f32 %v763, %v825
        %v845 = vmul.f32 %v764, %v830
        %v846 = vmul.f32 %v765, %v835
        %v847 = vpack.c.bf16 %v838, %v837
        %v848 = vpack.c.bf16 %v840, %v839
        %v849 = vpack.c.bf16 %v842, %v841
        %v850 = vpack.c.bf16 %v844, %v843
        %v851 = vpack.c.bf16 %v846, %v845
        %s852 = scalar_lea.vmem %s384, 96
        %v853 = vld [vmem:[%s852] sm:$0xf]
        %v854 = vld [vmem:[%s852 + $0x4] sm:$0xf]
        %v855 = vld [vmem:[%s852 + $0x8] sm:$0xf]
        %v856 = vld [vmem:[%s852 + $0xc] sm:$0xf]
        %v857 = vld [vmem:[%s852 + $0x10] sm:$0xf]
        %v858 = vld [vmem:[%s852 + $0x14] sm:$0xf]
        %v859 = vld [vmem:[%s852 + $0x18] sm:$0xf]
        %v860 = vld [vmem:[%s852 + $0x1c] sm:$0xf]
        %v861 = vld [vmem:[%s852 + $0x20] sm:$0xf]
        %v862 = vld [vmem:[%s852 + $0x24] sm:$0xf]
        %v873 = vunpack.c.l.b16 %v853
        %v874 = vunpack.c.l.b16 %v854
        %v875 = vunpack.c.l.b16 %v855
        %v876 = vunpack.c.l.b16 %v856
        %v877 = vunpack.c.l.b16 %v857
        %v878 = vunpack.c.l.b16 %v858
        %v879 = vunpack.c.l.b16 %v859
        %v880 = vunpack.c.l.b16 %v860
        %v881 = vunpack.c.l.b16 %v861
        %v882 = vunpack.c.l.b16 %v862
        %v883 = vpack.c.b16 %v874, %v873
        %v884 = vpack.c.b16 %v876, %v875
        %v885 = vpack.c.b16 %v878, %v877
        %v886 = vpack.c.b16 %v880, %v879
        %v887 = vpack.c.b16 %v882, %v881
        %v889 = vsel %vm444, %v883, 0
        %v892 = vsel %vm444, %v884, 0
        %v895 = vsel %vm444, %v885, 0
        %v898 = vsel %vm444, %v886, 0
        %v901 = vsel %vm444, %v887, 0
        %903 = vmatprep.subr.bf16.mxu0 0
        %904 = vmatpush1.bf16.msra.mxu0 %v462
        %905 = vmatprep.subr.bf16.mxu0 0
        %906 = vmatpush1.bf16.msra.mxu0 0
        %907 = vmatprep.subr.bf16.mxu0 0
        %908 = vmatpush1.bf16.msra.mxu0 0
        %909 = vmatprep.subr.bf16.mxu0 0
        %910 = vmatpush1.bf16.msra.mxu0 0
        %911 = vmatprep.subr.bf16.mxu0 0
        %912 = vmatpush1.bf16.msra.mxu0 0
        %913 = vmatprep.subr.bf16.mxu0 0
        %914 = vmatpush1.bf16.msra.mxu0 0
        %915 = vmatprep.subr.bf16.mxu0 0
        %916 = vmatpush1.bf16.msra.mxu0 0
        %917 = vmatprep.subr.bf16.mxu0 0
        %918 = vmatpush1.bf16.msra.mxu0 0
        %919 = vmatprep.subr.bf16.mxu0 0
        %920 = vmatpush1.bf16.msra.mxu0 0
        %921 = vmatprep.subr.bf16.mxu0 0
        %922 = vmatpush1.bf16.msra.mxu0 0
        %923 = vmatprep.subr.bf16.mxu0 0
        %924 = vmatpush1.bf16.msra.mxu0 0
        %925 = vmatprep.subr.bf16.mxu0 0
        %926 = vmatpush1.bf16.msra.mxu0 0
        %927 = vmatprep.subr.bf16.mxu0 0
        %928 = vmatpush1.bf16.msra.mxu0 0
        %929 = vmatprep.subr.bf16.mxu0 0
        %930 = vmatpush1.bf16.msra.mxu0 0
        %931 = vmatprep.subr.bf16.mxu0 0
        %932 = vmatpush1.bf16.msra.mxu0 0
        %933 = vmatprep.subr.bf16.mxu0 0
        %934 = vmatpush1.bf16.msra.mxu0 0
        %935 = vmatprep.mubr.bf16.mxu0 0
        %936 = vmatmul.mubr.bf16.gmra.mrb[0].mxu0 %v889
        %v937 = vpop.f32.mrb[0].mxu0
        %v938 = vadd.f32 %v417, %v937
        %v939 = vpop.f32.mrb[0].mxu0
        %v940 = vpop.f32.mrb[0].mxu0
        %v941 = vadd.f32 %v417, %v940
        %v942 = vpop.f32.mrb[0].mxu0
        %943 = vmatprep.mubr.bf16.mxu0 0
        %944 = vmatmul.mubr.bf16.gmra.mrb[0].mxu0 %v892
        %v945 = vpop.f32.mrb[0].mxu0
        %v946 = vadd.f32 %v417, %v945
        %v947 = vpop.f32.mrb[0].mxu0
        %v948 = vpop.f32.mrb[0].mxu0
        %v949 = vadd.f32 %v417, %v948
        %v950 = vpop.f32.mrb[0].mxu0
        %951 = vmatprep.mubr.bf16.mxu0 0
        %952 = vmatmul.mubr.bf16.gmra.mrb[0].mxu0 %v895
        %v953 = vpop.f32.mrb[0].mxu0
        %v954 = vadd.f32 %v417, %v953
        %v955 = vpop.f32.mrb[0].mxu0
        %v956 = vpop.f32.mrb[0].mxu0
        %v957 = vadd.f32 %v417, %v956
        %v958 = vpop.f32.mrb[0].mxu0
        %959 = vmatprep.mubr.bf16.mxu0 0
        %960 = vmatmul.mubr.bf16.gmra.mrb[0].mxu0 %v898
        %v961 = vpop.f32.mrb[0].mxu0
        %v962 = vadd.f32 %v417, %v961
        %v963 = vpop.f32.mrb[0].mxu0
        %v964 = vpop.f32.mrb[0].mxu0
        %v965 = vadd.f32 %v417, %v964
        %v966 = vpop.f32.mrb[0].mxu0
        %967 = vmatprep.mubr.bf16.mxu0 0
        %968 = vmatmul.mubr.bf16.gmra.mrb[0].mxu0 %v901
        %v969 = vpop.f32.mrb[0].mxu0
        %v970 = vadd.f32 %v417, %v969
        %v971 = vpop.f32.mrb[0].mxu0
        %v972 = vpop.f32.mrb[0].mxu0
        %v973 = vadd.f32 %v417, %v972
        %v974 = vpop.f32.mrb[0].mxu0
        %975 = vdwg.mxu0
        %v976 = vmax.f32 %v938, 0.0
        %v977 = vmax.f32 %v941, 0.0
        %v978 = vmax.f32 %v946, 0.0
        %v979 = vmax.f32 %v949, 0.0
        %v980 = vmax.f32 %v954, 0.0
        %v981 = vmax.f32 %v957, 0.0
        %v982 = vmax.f32 %v962, 0.0
        %v983 = vmax.f32 %v965, 0.0
        %v984 = vmax.f32 %v970, 0.0
        %v985 = vmax.f32 %v973, 0.0
        %s986 = scalar_lea.vmem %s1, 80
        %v987 = vld [vmem:[%s986] sm:$0xf]
        %v988 = vld [vmem:[%s986 + $0x4] sm:$0xf]
        %v989 = vld [vmem:[%s986 + $0x8] sm:$0xf]
        %v990 = vld [vmem:[%s986 + $0xc] sm:$0xf]
        %v991 = vld [vmem:[%s986 + $0x10] sm:$0xf]
        %v992 = vld [vmem:[%s986 + $0x14] sm:$0xf]
        %v993 = vld [vmem:[%s986 + $0x18] sm:$0xf]
        %v994 = vld [vmem:[%s986 + $0x1c] sm:$0xf]
        %v995 = vld [vmem:[%s986 + $0x20] sm:$0xf]
        %v996 = vld [vmem:[%s986 + $0x24] sm:$0xf]
        %v997 = vunpack.c.l.bf16 %v987
        %v998 = vunpack.c.l.bf16 %v988
        %v999 = vunpack.c.l.bf16 %v989
        %v1000 = vunpack.c.l.bf16 %v990
        %v1001 = vunpack.c.l.bf16 %v991
        %v1002 = vunpack.c.l.bf16 %v992
        %v1003 = vunpack.c.l.bf16 %v993
        %v1004 = vunpack.c.l.bf16 %v994
        %v1005 = vunpack.c.l.bf16 %v995
        %v1006 = vunpack.c.l.bf16 %v996
        %1008 = vset.pattern.permute.xlu0 0
        %1009 = vperm.xlu0 %1008, %v997
        %v1010 = vpop.permute.xlu0 %1009
        %1013 = vset.pattern.permute.xlu0 0
        %1014 = vperm.xlu0 %1013, %v998
        %v1015 = vpop.permute.xlu0 %1014
        %1018 = vset.pattern.permute.xlu0 0
        %1019 = vperm.xlu0 %1018, %v999
        %v1020 = vpop.permute.xlu0 %1019
        %1023 = vset.pattern.permute.xlu0 0
        %1024 = vperm.xlu0 %1023, %v1000
        %v1025 = vpop.permute.xlu0 %1024
        %1028 = vset.pattern.permute.xlu0 0
        %1029 = vperm.xlu0 %1028, %v1001
        %v1030 = vpop.permute.xlu0 %1029
        %1033 = vset.pattern.permute.xlu0 0
        %1034 = vperm.xlu0 %1033, %v1002
        %v1035 = vpop.permute.xlu0 %1034
        %1038 = vset.pattern.permute.xlu0 0
        %1039 = vperm.xlu0 %1038, %v1003
        %v1040 = vpop.permute.xlu0 %1039
        %1043 = vset.pattern.permute.xlu0 0
        %1044 = vperm.xlu0 %1043, %v1004
        %v1045 = vpop.permute.xlu0 %1044
        %1048 = vset.pattern.permute.xlu0 0
        %1049 = vperm.xlu0 %1048, %v1005
        %v1050 = vpop.permute.xlu0 %1049
        %1053 = vset.pattern.permute.xlu0 0
        %1054 = vperm.xlu0 %1053, %v1006
        %v1055 = vpop.permute.xlu0 %1054
        %v1057 = vmul.f32 %v976, %v1010
        %v1058 = vmul.f32 %v977, %v1015
        %v1059 = vmul.f32 %v978, %v1020
        %v1060 = vmul.f32 %v979, %v1025
        %v1061 = vmul.f32 %v980, %v1030
        %v1062 = vmul.f32 %v981, %v1035
        %v1063 = vmul.f32 %v982, %v1040
        %v1064 = vmul.f32 %v983, %v1045
        %v1065 = vmul.f32 %v984, %v1050
        %v1066 = vmul.f32 %v985, %v1055
        %v1067 = vpack.c.bf16 %v1058, %v1057
        %v1068 = vpack.c.bf16 %v1060, %v1059
        %v1069 = vpack.c.bf16 %v1062, %v1061
        %v1070 = vpack.c.bf16 %v1064, %v1063
        %v1071 = vpack.c.bf16 %v1066, %v1065
        %s1072 = scalar_lea.vmem %s384, 144
        %v1073 = vld [vmem:[%s1072] sm:$0xf]
        %v1074 = vld [vmem:[%s1072 + $0x4] sm:$0xf]
        %v1075 = vld [vmem:[%s1072 + $0x8] sm:$0xf]
        %v1076 = vld [vmem:[%s1072 + $0xc] sm:$0xf]
        %v1077 = vld [vmem:[%s1072 + $0x10] sm:$0xf]
        %v1078 = vld [vmem:[%s1072 + $0x14] sm:$0xf]
        %v1079 = vld [vmem:[%s1072 + $0x18] sm:$0xf]
        %v1080 = vld [vmem:[%s1072 + $0x1c] sm:$0xf]
        %v1081 = vld [vmem:[%s1072 + $0x20] sm:$0xf]
        %v1082 = vld [vmem:[%s1072 + $0x24] sm:$0xf]
        %v1093 = vunpack.c.l.b16 %v1073
        %v1094 = vunpack.c.l.b16 %v1074
        %v1095 = vunpack.c.l.b16 %v1075
        %v1096 = vunpack.c.l.b16 %v1076
        %v1097 = vunpack.c.l.b16 %v1077
        %v1098 = vunpack.c.l.b16 %v1078
        %v1099 = vunpack.c.l.b16 %v1079
        %v1100 = vunpack.c.l.b16 %v1080
        %v1101 = vunpack.c.l.b16 %v1081
        %v1102 = vunpack.c.l.b16 %v1082
        %v1103 = vpack.c.b16 %v1094, %v1093
        %v1104 = vpack.c.b16 %v1096, %v1095
        %v1105 = vpack.c.b16 %v1098, %v1097
        %v1106 = vpack.c.b16 %v1100, %v1099
        %v1107 = vpack.c.b16 %v1102, %v1101
        %v1109 = vsel %vm444, %v1103, 0
        %v1112 = vsel %vm444, %v1104, 0
        %v1115 = vsel %vm444, %v1105, 0
        %v1118 = vsel %vm444, %v1106, 0
        %v1121 = vsel %vm444, %v1107, 0
        %1123 = vmatprep.subr.bf16.mxu0 0
        %1124 = vmatpush1.bf16.msra.mxu0 %v462
        %1125 = vmatprep.subr.bf16.mxu0 0
        %1126 = vmatpush1.bf16.msra.mxu0 0
        %1127 = vmatprep.subr.bf16.mxu0 0
        %1128 = vmatpush1.bf16.msra.mxu0 0
        %1129 = vmatprep.subr.bf16.mxu0 0
        %1130 = vmatpush1.bf16.msra.mxu0 0
        %1131 = vmatprep.subr.bf16.mxu0 0
        %1132 = vmatpush1.bf16.msra.mxu0 0
        %1133 = vmatprep.subr.bf16.mxu0 0
        %1134 = vmatpush1.bf16.msra.mxu0 0
        %1135 = vmatprep.subr.bf16.mxu0 0
        %1136 = vmatpush1.bf16.msra.mxu0 0
        %1137 = vmatprep.subr.bf16.mxu0 0
        %1138 = vmatpush1.bf16.msra.mxu0 0
        %1139 = vmatprep.subr.bf16.mxu0 0
        %1140 = vmatpush1.bf16.msra.mxu0 0
        %1141 = vmatprep.subr.bf16.mxu0 0
        %1142 = vmatpush1.bf16.msra.mxu0 0
        %1143 = vmatprep.subr.bf16.mxu0 0
        %1144 = vmatpush1.bf16.msra.mxu0 0
        %1145 = vmatprep.subr.bf16.mxu0 0
        %1146 = vmatpush1.bf16.msra.mxu0 0
        %1147 = vmatprep.subr.bf16.mxu0 0
        %1148 = vmatpush1.bf16.msra.mxu0 0
        %1149 = vmatprep.subr.bf16.mxu0 0
        %1150 = vmatpush1.bf16.msra.mxu0 0
        %1151 = vmatprep.subr.bf16.mxu0 0
        %1152 = vmatpush1.bf16.msra.mxu0 0
        %1153 = vmatprep.subr.bf16.mxu0 0
        %1154 = vmatpush1.bf16.msra.mxu0 0
        %1155 = vmatprep.mubr.bf16.mxu0 0
        %1156 = vmatmul.mubr.bf16.gmra.mrb[0].mxu0 %v1109
        %v1157 = vpop.f32.mrb[0].mxu0
        %v1158 = vadd.f32 %v417, %v1157
        %v1159 = vpop.f32.mrb[0].mxu0
        %v1160 = vpop.f32.mrb[0].mxu0
        %v1161 = vadd.f32 %v417, %v1160
        %v1162 = vpop.f32.mrb[0].mxu0
        %1163 = vmatprep.mubr.bf16.mxu0 0
        %1164 = vmatmul.mubr.bf16.gmra.mrb[0].mxu0 %v1112
        %v1165 = vpop.f32.mrb[0].mxu0
        %v1166 = vadd.f32 %v417, %v1165
        %v1167 = vpop.f32.mrb[0].mxu0
        %v1168 = vpop.f32.mrb[0].mxu0
        %v1169 = vadd.f32 %v417, %v1168
        %v1170 = vpop.f32.mrb[0].mxu0
        %1171 = vmatprep.mubr.bf16.mxu0 0
        %1172 = vmatmul.mubr.bf16.gmra.mrb[0].mxu0 %v1115
        %v1173 = vpop.f32.mrb[0].mxu0
        %v1174 = vadd.f32 %v417, %v1173
        %v1175 = vpop.f32.mrb[0].mxu0
        %v1176 = vpop.f32.mrb[0].mxu0
        %v1177 = vadd.f32 %v417, %v1176
        %v1178 = vpop.f32.mrb[0].mxu0
        %1179 = vmatprep.mubr.bf16.mxu0 0
        %1180 = vmatmul.mubr.bf16.gmra.mrb[0].mxu0 %v1118
        %v1181 = vpop.f32.mrb[0].mxu0
        %v1182 = vadd.f32 %v417, %v1181
        %v1183 = vpop.f32.mrb[0].mxu0
        %v1184 = vpop.f32.mrb[0].mxu0
        %v1185 = vadd.f32 %v417, %v1184
        %v1186 = vpop.f32.mrb[0].mxu0
        %1187 = vmatprep.mubr.bf16.mxu0 0
        %1188 = vmatmul.mubr.bf16.gmra.mrb[0].mxu0 %v1121
        %v1189 = vpop.f32.mrb[0].mxu0
        %v1190 = vadd.f32 %v417, %v1189
        %v1191 = vpop.f32.mrb[0].mxu0
        %v1192 = vpop.f32.mrb[0].mxu0
        %v1193 = vadd.f32 %v417, %v1192
        %v1194 = vpop.f32.mrb[0].mxu0
        %1195 = vdwg.mxu0
        %v1196 = vmax.f32 %v1158, 0.0
        %v1197 = vmax.f32 %v1161, 0.0
        %v1198 = vmax.f32 %v1166, 0.0
        %v1199 = vmax.f32 %v1169, 0.0
        %v1200 = vmax.f32 %v1174, 0.0
        %v1201 = vmax.f32 %v1177, 0.0
        %v1202 = vmax.f32 %v1182, 0.0
        %v1203 = vmax.f32 %v1185, 0.0
        %v1204 = vmax.f32 %v1190, 0.0
        %v1205 = vmax.f32 %v1193, 0.0
        %s1206 = scalar_lea.vmem %s1, 120
        %v1207 = vld [vmem:[%s1206] sm:$0xf]
        %v1208 = vld [vmem:[%s1206 + $0x4] sm:$0xf]
        %v1209 = vld [vmem:[%s1206 + $0x8] sm:$0xf]
        %v1210 = vld [vmem:[%s1206 + $0xc] sm:$0xf]
        %v1211 = vld [vmem:[%s1206 + $0x10] sm:$0xf]
        %v1212 = vld [vmem:[%s1206 + $0x14] sm:$0xf]
        %v1213 = vld [vmem:[%s1206 + $0x18] sm:$0xf]
        %v1214 = vld [vmem:[%s1206 + $0x1c] sm:$0xf]
        %v1215 = vld [vmem:[%s1206 + $0x20] sm:$0xf]
        %v1216 = vld [vmem:[%s1206 + $0x24] sm:$0xf]
        %v1217 = vunpack.c.l.bf16 %v1207
        %v1218 = vunpack.c.l.bf16 %v1208
        %v1219 = vunpack.c.l.bf16 %v1209
        %v1220 = vunpack.c.l.bf16 %v1210
        %v1221 = vunpack.c.l.bf16 %v1211
        %v1222 = vunpack.c.l.bf16 %v1212
        %v1223 = vunpack.c.l.bf16 %v1213
        %v1224 = vunpack.c.l.bf16 %v1214
        %v1225 = vunpack.c.l.bf16 %v1215
        %v1226 = vunpack.c.l.bf16 %v1216
        %1228 = vset.pattern.permute.xlu0 0
        %1229 = vperm.xlu0 %1228, %v1217
        %v1230 = vpop.permute.xlu0 %1229
        %1233 = vset.pattern.permute.xlu0 0
        %1234 = vperm.xlu0 %1233, %v1218
        %v1235 = vpop.permute.xlu0 %1234
        %1238 = vset.pattern.permute.xlu0 0
        %1239 = vperm.xlu0 %1238, %v1219
        %v1240 = vpop.permute.xlu0 %1239
        %1243 = vset.pattern.permute.xlu0 0
        %1244 = vperm.xlu0 %1243, %v1220
        %v1245 = vpop.permute.xlu0 %1244
        %1248 = vset.pattern.permute.xlu0 0
        %1249 = vperm.xlu0 %1248, %v1221
        %v1250 = vpop.permute.xlu0 %1249
        %1253 = vset.pattern.permute.xlu0 0
        %1254 = vperm.xlu0 %1253, %v1222
        %v1255 = vpop.permute.xlu0 %1254
        %1258 = vset.pattern.permute.xlu0 0
        %1259 = vperm.xlu0 %1258, %v1223
        %v1260 = vpop.permute.xlu0 %1259
        %1263 = vset.pattern.permute.xlu0 0
        %1264 = vperm.xlu0 %1263, %v1224
        %v1265 = vpop.permute.xlu0 %1264
        %1268 = vset.pattern.permute.xlu0 0
        %1269 = vperm.xlu0 %1268, %v1225
        %v1270 = vpop.permute.xlu0 %1269
        %1273 = vset.pattern.permute.xlu0 0
        %1274 = vperm.xlu0 %1273, %v1226
        %v1275 = vpop.permute.xlu0 %1274
        %v1277 = vmul.f32 %v1196, %v1230
        %v1278 = vmul.f32 %v1197, %v1235
        %v1279 = vmul.f32 %v1198, %v1240
        %v1280 = vmul.f32 %v1199, %v1245
        %v1281 = vmul.f32 %v1200, %v1250
        %v1282 = vmul.f32 %v1201, %v1255
        %v1283 = vmul.f32 %v1202, %v1260
        %v1284 = vmul.f32 %v1203, %v1265
        %v1285 = vmul.f32 %v1204, %v1270
        %v1286 = vmul.f32 %v1205, %v1275
        %v1287 = vpack.c.bf16 %v1278, %v1277
        %v1288 = vpack.c.bf16 %v1280, %v1279
        %v1289 = vpack.c.bf16 %v1282, %v1281
        %v1290 = vpack.c.bf16 %v1284, %v1283
        %v1291 = vpack.c.bf16 %v1286, %v1285
        %1297 = vrot.lane.b32.xlu0 %v847, 64
        %v1298 = vpop.permute.xlu0 %1297
        %1299 = vrot.lane.b32.xlu0 %v848, 64
        %v1300 = vpop.permute.xlu0 %1299
        %1301 = vrot.lane.b32.xlu0 %v849, 64
        %v1302 = vpop.permute.xlu0 %1301
        %1303 = vrot.lane.b32.xlu0 %v850, 64
        %v1304 = vpop.permute.xlu0 %1303
        %1305 = vrot.lane.b32.xlu0 %v851, 64
        %v1306 = vpop.permute.xlu0 %1305
        %1312 = vrot.lane.b32.xlu0 %v1287, 64
        %v1313 = vpop.permute.xlu0 %1312
        %1314 = vrot.lane.b32.xlu0 %v1288, 64
        %v1315 = vpop.permute.xlu0 %1314
        %1316 = vrot.lane.b32.xlu0 %v1289, 64
        %v1317 = vpop.permute.xlu0 %1316
        %1318 = vrot.lane.b32.xlu0 %v1290, 64
        %v1319 = vpop.permute.xlu0 %1318
        %1320 = vrot.lane.b32.xlu0 %v1291, 64
        %v1321 = vpop.permute.xlu0 %1320
        %vm1322 = vcmask 523264
        %v1325 = vsel %vm1322, %v627, %v1298
        %v1328 = vsel %vm1322, %v628, %v1300
        %v1331 = vsel %vm1322, %v629, %v1302
        %v1334 = vsel %vm1322, %v630, %v1304
        %v1337 = vsel %vm1322, %v631, %v1306
        %v1340 = vsel %vm1322, %v1067, %v1313
        %v1343 = vsel %vm1322, %v1068, %v1315
        %v1346 = vsel %vm1322, %v1069, %v1317
        %v1349 = vsel %vm1322, %v1070, %v1319
        %v1352 = vsel %vm1322, %v1071, %v1321
        %v1363 = vunpack.c.l.b16 %v1325
        %v1364 = vunpack.c.l.b16 %v1340
        %v1365 = vunpack.c.h.b16 %v1325
        %v1366 = vunpack.c.h.b16 %v1340
        %v1367 = vunpack.c.l.b16 %v1328
        %v1368 = vunpack.c.l.b16 %v1343
        %v1369 = vunpack.c.h.b16 %v1328
        %v1370 = vunpack.c.h.b16 %v1343
        %v1371 = vunpack.c.l.b16 %v1331
        %v1372 = vunpack.c.l.b16 %v1346
        %v1373 = vunpack.c.h.b16 %v1331
        %v1374 = vunpack.c.h.b16 %v1346
        %v1375 = vunpack.c.l.b16 %v1334
        %v1376 = vunpack.c.l.b16 %v1349
        %v1377 = vunpack.c.h.b16 %v1334
        %v1378 = vunpack.c.h.b16 %v1349
        %v1379 = vunpack.c.l.b16 %v1337
        %v1380 = vunpack.c.l.b16 %v1352
        %v1381 = vunpack.c.h.b16 %v1337
        %v1382 = vunpack.c.h.b16 %v1352
        %v1383 = vpack.c.b16 %v1364, %v1363
        %v1384 = vpack.c.b16 %v1366, %v1365
        %v1385 = vpack.c.b16 %v1368, %v1367
        %v1386 = vpack.c.b16 %v1370, %v1369
        %v1387 = vpack.c.b16 %v1372, %v1371
        %v1388 = vpack.c.b16 %v1374, %v1373
        %v1389 = vpack.c.b16 %v1376, %v1375
        %v1390 = vpack.c.b16 %v1378, %v1377
        %v1391 = vpack.c.b16 %v1380, %v1379
        %v1392 = vpack.c.b16 %v1382, %v1381
        %vm1393 = vcmask 1041408
        %vm1394 = vcmask 1045508
        %vm1395 = vmor %vm1393, %vm1394
        %v1396 = vrot.slane %v1383, 6
        %v1397 = vrot.slane %v1396, 4
        %v1398 = vrot.slane %v1384, 6
        %v1399 = vsel %vm1395, %v1397, %v1398
        %v1400 = vrot.slane %v1398, 4
        %v1401 = vrot.slane %v1385, 6
        %v1402 = vsel %vm1395, %v1400, %v1401
        %v1403 = vrot.slane %v1401, 4
        %v1404 = vrot.slane %v1386, 6
        %v1405 = vsel %vm1395, %v1403, %v1404
        %v1406 = vrot.slane %v1404, 4
        %v1407 = vrot.slane %v1387, 6
        %v1408 = vsel %vm1395, %v1406, %v1407
        %v1409 = vrot.slane %v1407, 4
        %v1410 = vrot.slane %v1388, 6
        %v1411 = vsel %vm1395, %v1409, %v1410
        %v1412 = vrot.slane %v1410, 4
        %v1413 = vrot.slane %v1389, 6
        %v1414 = vsel %vm1395, %v1412, %v1413
        %v1415 = vrot.slane %v1413, 4
        %v1416 = vrot.slane %v1390, 6
        %v1417 = vsel %vm1395, %v1415, %v1416
        %v1418 = vrot.slane %v1416, 4
        %v1419 = vrot.slane %v1391, 6
        %v1420 = vsel %vm1395, %v1418, %v1419
        %v1421 = vrot.slane %v1419, 4
        %v1422 = vrot.slane %v1392, 6
        %v1423 = vsel %vm1395, %v1421, %v1422
        %v1424 = vrot.slane %v1422, 4
        %1436 = vst [vmem:[#allocation2 + $0x10] sm:$0xcc] %v1396
        %1437 = vst [vmem:[#allocation2 + $0x18] sm:$0xff] %v1399
        %1438 = vst [vmem:[#allocation2 + $0x20] sm:$0xff] %v1402
        %1439 = vst [vmem:[#allocation2 + $0x28] sm:$0xff] %v1405
        %1440 = vst [vmem:[#allocation2 + $0x30] sm:$0xff] %v1408
        %1441 = vst [vmem:[#allocation2 + $0x38] sm:$0xff] %v1411
        %1442 = vst [vmem:[#allocation2 + $0x40] sm:$0xff] %v1414
        %1443 = vst [vmem:[#allocation2 + $0x48] sm:$0xff] %v1417
        %1444 = vst [vmem:[#allocation2 + $0x50] sm:$0xff] %v1420
        %1445 = vst [vmem:[#allocation2 + $0x58] sm:$0xff] %v1423
        %1446 = vst [vmem:[#allocation2 + $0x60] sm:$0x33] %v1424
        %v1447 = vld [vmem:[%s7] sm:$0x1]
        %v1448 = vld [vmem:[#allocation2 + $0x8] sm:$0xff]
        %v1449 = vld [vmem:[#allocation2 + $0x10] sm:$0xff]
        %v1450 = vld [vmem:[#allocation2 + $0x18] sm:$0xff]
        %v1451 = vld [vmem:[#allocation2 + $0x20] sm:$0xff]
        %v1452 = vld [vmem:[#allocation2 + $0x28] sm:$0xff]
        %v1453 = vld [vmem:[#allocation2 + $0x30] sm:$0xff]
        %v1454 = vld [vmem:[#allocation2 + $0x38] sm:$0xff]
        %v1455 = vld [vmem:[#allocation2 + $0x40] sm:$0xff]
        %v1456 = vld [vmem:[#allocation2 + $0x48] sm:$0xff]
        %v1457 = vld [vmem:[#allocation2 + $0x50] sm:$0xff]
        %v1458 = vld [vmem:[#allocation2 + $0x58] sm:$0x11]
        %v1459 = vld [vmem:[#allocation4] sm:$0xf]
        %v1460 = vld [vmem:[#allocation4 + $0x4] sm:$0xf]
        %v1461 = vld [vmem:[#allocation4 + $0x8] sm:$0xf]
        %v1462 = vld [vmem:[#allocation4 + $0xc] sm:$0xf]
        %v1463 = vld [vmem:[#allocation4 + $0x10] sm:$0xf]
        %v1464 = vld [vmem:[#allocation4 + $0x14] sm:$0xf]
        %v1465 = vld [vmem:[#allocation4 + $0x18] sm:$0xf]
        %v1466 = vld [vmem:[#allocation4 + $0x1c] sm:$0xf]
        %v1467 = vld [vmem:[#allocation4 + $0x20] sm:$0xf]
        %v1468 = vld [vmem:[#allocation4 + $0x24] sm:$0xf]
        %v1469 = vld [vmem:[#allocation4 + $0x28] sm:$0xf]
        %v1470 = vld [vmem:[#allocation4 + $0x2c] sm:$0xf]
        %v1471 = vld [vmem:[#allocation4 + $0x30] sm:$0xf]
        %v1472 = vld [vmem:[#allocation4 + $0x34] sm:$0xf]
        %v1473 = vld [vmem:[#allocation4 + $0x38] sm:$0xf]
        %v1474 = vld [vmem:[#allocation4 + $0x3c] sm:$0xf]
        %v1475 = vld [vmem:[#allocation4 + $0x40] sm:$0xf]
        %v1476 = vld [vmem:[#allocation4 + $0x44] sm:$0xf]
        %v1477 = vld [vmem:[#allocation4 + $0x48] sm:$0xf]
        %v1478 = vld [vmem:[#allocation4 + $0x4c] sm:$0xf]
        %v1479 = vld [vmem:[#allocation4 + $0x50] sm:$0xf]
        %v1480 = vld [vmem:[#allocation4 + $0x54] sm:$0xf]
        %v1481 = vld [vmem:[#allocation4 + $0x58] sm:$0xf]
        %v1482 = vld [vmem:[#allocation4 + $0x5c] sm:$0xf]
        %v1483 = vld [vmem:[#allocation4 + $0x60] sm:$0xf]
        %v1484 = vld [vmem:[#allocation4 + $0x64] sm:$0xf]
        %v1485 = vld [vmem:[#allocation4 + $0x68] sm:$0xf]
        %v1486 = vld [vmem:[#allocation4 + $0x6c] sm:$0xf]
        %v1487 = vld [vmem:[#allocation4 + $0x70] sm:$0xf]
        %v1488 = vld [vmem:[#allocation4 + $0x74] sm:$0xf]
        %v1489 = vld [vmem:[#allocation4 + $0x78] sm:$0xf]
        %v1490 = vld [vmem:[#allocation4 + $0x7c] sm:$0xf]
        %v1491 = vld [vmem:[#allocation2 + $0x8] sm:$0xee]
        %s1492 = scalar_lea.vmem [#allocation4], 128
        %v1493 = vld [vmem:[%s1492] sm:$0xf]
        %v1494 = vld [vmem:[%s1492 + $0x4] sm:$0xf]
        %v1495 = vld [vmem:[%s1492 + $0x8] sm:$0xf]
        %v1496 = vld [vmem:[%s1492 + $0xc] sm:$0xf]
        %v1497 = vld [vmem:[%s1492 + $0x10] sm:$0xf]
        %v1498 = vld [vmem:[%s1492 + $0x14] sm:$0xf]
        %v1499 = vld [vmem:[%s1492 + $0x18] sm:$0xf]
        %v1500 = vld [vmem:[%s1492 + $0x1c] sm:$0xf]
        %v1501 = vld [vmem:[%s1492 + $0x20] sm:$0xf]
        %v1502 = vld [vmem:[%s1492 + $0x24] sm:$0xf]
        %v1503 = vld [vmem:[%s1492 + $0x28] sm:$0xf]
        %v1504 = vld [vmem:[%s1492 + $0x2c] sm:$0xf]
        %v1505 = vld [vmem:[%s1492 + $0x30] sm:$0xf]
        %v1506 = vld [vmem:[%s1492 + $0x34] sm:$0xf]
        %v1507 = vld [vmem:[%s1492 + $0x38] sm:$0xf]
        %v1508 = vld [vmem:[%s1492 + $0x3c] sm:$0xf]
        %v1509 = vld [vmem:[%s1492 + $0x40] sm:$0xf]
        %v1510 = vld [vmem:[%s1492 + $0x44] sm:$0xf]
        %v1511 = vld [vmem:[%s1492 + $0x48] sm:$0xf]
        %v1512 = vld [vmem:[%s1492 + $0x4c] sm:$0xf]
        %v1513 = vld [vmem:[%s1492 + $0x50] sm:$0xf]
        %v1514 = vld [vmem:[%s1492 + $0x54] sm:$0xf]
        %v1515 = vld [vmem:[%s1492 + $0x58] sm:$0xf]
        %v1516 = vld [vmem:[%s1492 + $0x5c] sm:$0xf]
        %v1517 = vld [vmem:[%s1492 + $0x60] sm:$0xf]
        %v1518 = vld [vmem:[%s1492 + $0x64] sm:$0xf]
        %v1519 = vld [vmem:[%s1492 + $0x68] sm:$0xf]
        %v1520 = vld [vmem:[%s1492 + $0x6c] sm:$0xf]
        %v1521 = vld [vmem:[%s1492 + $0x70] sm:$0xf]
        %v1522 = vld [vmem:[%s1492 + $0x74] sm:$0xf]
        %v1523 = vld [vmem:[%s1492 + $0x78] sm:$0xf]
        %v1524 = vld [vmem:[%s1492 + $0x7c] sm:$0xf]
        %v1536 = vunpack.c.l.b16 %v1491
        %v1537 = vunpack.c.h.b16 %v1491
        %v1538 = vunpack.c.l.b16 %v1449
        %v1539 = vunpack.c.h.b16 %v1449
        %v1540 = vunpack.c.l.b16 %v1450
        %v1541 = vunpack.c.h.b16 %v1450
        %v1542 = vunpack.c.l.b16 %v1451
        %v1543 = vunpack.c.h.b16 %v1451
        %v1544 = vunpack.c.l.b16 %v1452
        %v1545 = vunpack.c.h.b16 %v1452
        %v1546 = vunpack.c.l.b16 %v1453
        %v1547 = vunpack.c.h.b16 %v1453
        %v1548 = vunpack.c.l.b16 %v1454
        %v1549 = vunpack.c.h.b16 %v1454
        %v1550 = vunpack.c.l.b16 %v1455
        %v1551 = vunpack.c.h.b16 %v1455
        %v1552 = vunpack.c.l.b16 %v1456
        %v1553 = vunpack.c.h.b16 %v1456
        %v1554 = vunpack.c.l.b16 %v1457
        %v1555 = vunpack.c.h.b16 %v1457
        %v1556 = vunpack.c.l.b16 %v1458
        %v1557 = vunpack.c.h.b16 %v1458
        %v1558 = vpack.c.b16 %v1538, %v1536
        %v1559 = vpack.c.b16 %v1539, %v1537
        %v1560 = vpack.c.b16 %v1542, %v1540
        %v1561 = vpack.c.b16 %v1543, %v1541
        %v1562 = vpack.c.b16 %v1546, %v1544
        %v1563 = vpack.c.b16 %v1547, %v1545
        %v1564 = vpack.c.b16 %v1550, %v1548
        %v1565 = vpack.c.b16 %v1551, %v1549
        %v1566 = vpack.c.b16 %v1554, %v1552
        %v1567 = vpack.c.b16 %v1555, %v1553
        %v1568 = vpack.c.b16 %v1556, %v1556
        %v1569 = vpack.c.b16 %v1557, %v1557
        %vm1570 = vcmask 1046528
        %v1571 = vrot.slane %v1558, 1
        %v1572 = vrot.slane %v1560, 1
        %v1573 = vsel %vm1570, %v1571, %v1572
        %v1574 = vrot.slane %v1559, 1
        %v1575 = vrot.slane %v1561, 1
        %v1576 = vsel %vm1570, %v1574, %v1575
        %v1577 = vrot.slane %v1562, 1
        %v1578 = vsel %vm1570, %v1572, %v1577
        %v1579 = vrot.slane %v1563, 1
        %v1580 = vsel %vm1570, %v1575, %v1579
        %v1581 = vrot.slane %v1564, 1
        %v1582 = vsel %vm1570, %v1577, %v1581
        %v1583 = vrot.slane %v1565, 1
        %v1584 = vsel %vm1570, %v1579, %v1583
        %v1585 = vrot.slane %v1566, 1
        %v1586 = vsel %vm1570, %v1581, %v1585
        %v1587 = vrot.slane %v1567, 1
        %v1588 = vsel %vm1570, %v1583, %v1587
        %v1589 = vrot.slane %v1568, 1
        %v1590 = vsel %vm1570, %v1585, %v1589
        %v1591 = vrot.slane %v1569, 1
        %v1592 = vsel %vm1570, %v1587, %v1591
        %v1635 = vunpack.c.l.b16 %v1493
        %v1636 = vunpack.c.l.b16 %v1494
        %v1637 = vunpack.c.l.b16 %v1495
        %v1638 = vunpack.c.l.b16 %v1496
        %v1639 = vunpack.c.l.b16 %v1497
        %v1640 = vunpack.c.l.b16 %v1498
        %v1641 = vunpack.c.l.b16 %v1499
        %v1642 = vunpack.c.l.b16 %v1500
        %v1643 = vunpack.c.l.b16 %v1501
        %v1644 = vunpack.c.l.b16 %v1502
        %v1645 = vunpack.c.l.b16 %v1503
        %v1646 = vunpack.c.l.b16 %v1504
        %v1647 = vunpack.c.l.b16 %v1505
        %v1648 = vunpack.c.l.b16 %v1506
        %v1649 = vunpack.c.l.b16 %v1507
        %v1650 = vunpack.c.l.b16 %v1508
        %v1651 = vunpack.c.l.b16 %v1509
        %v1652 = vunpack.c.l.b16 %v1510
        %v1653 = vunpack.c.l.b16 %v1511
        %v1654 = vunpack.c.l.b16 %v1512
        %v1655 = vunpack.c.l.b16 %v1513
        %v1656 = vunpack.c.l.b16 %v1514
        %v1657 = vunpack.c.l.b16 %v1515
        %v1658 = vunpack.c.l.b16 %v1516
        %v1659 = vunpack.c.l.b16 %v1517
        %v1660 = vunpack.c.l.b16 %v1518
        %v1661 = vunpack.c.l.b16 %v1519
        %v1662 = vunpack.c.l.b16 %v1520
        %v1663 = vunpack.c.l.b16 %v1521
        %v1664 = vunpack.c.l.b16 %v1522
        %v1665 = vunpack.c.l.b16 %v1523
        %v1666 = vunpack.c.l.b16 %v1524
        %v1667 = vpack.c.b16 %v1636, %v1635
        %v1668 = vpack.c.b16 %v1638, %v1637
        %v1669 = vpack.c.b16 %v1640, %v1639
        %v1670 = vpack.c.b16 %v1642, %v1641
        %v1671 = vpack.c.b16 %v1644, %v1643
        %v1672 = vpack.c.b16 %v1646, %v1645
        %v1673 = vpack.c.b16 %v1648, %v1647
        %v1674 = vpack.c.b16 %v1650, %v1649
        %v1675 = vpack.c.b16 %v1652, %v1651
        %v1676 = vpack.c.b16 %v1654, %v1653
        %v1677 = vpack.c.b16 %v1656, %v1655
        %v1678 = vpack.c.b16 %v1658, %v1657
        %v1679 = vpack.c.b16 %v1660, %v1659
        %v1680 = vpack.c.b16 %v1662, %v1661
        %v1681 = vpack.c.b16 %v1664, %v1663
        %v1682 = vpack.c.b16 %v1666, %v1665
        %1699 = vmatprep.subr.bf16.mxu0 0
        %1700 = vmatpush1.bf16.msra.mxu0 %v1667
        %1701 = vmatprep.subr.bf16.mxu0 0
        %1702 = vmatpush1.bf16.msra.mxu0 %v1668
        %1703 = vmatprep.subr.bf16.mxu0 0
        %1704 = vmatpush1.bf16.msra.mxu0 %v1669
        %1705 = vmatprep.subr.bf16.mxu0 0
        %1706 = vmatpush1.bf16.msra.mxu0 %v1670
        %1707 = vmatprep.subr.bf16.mxu0 0
        %1708 = vmatpush1.bf16.msra.mxu0 %v1671
        %1709 = vmatprep.subr.bf16.mxu0 0
        %1710 = vmatpush1.bf16.msra.mxu0 %v1672
        %1711 = vmatprep.subr.bf16.mxu0 0
        %1712 = vmatpush1.bf16.msra.mxu0 %v1673
        %1713 = vmatprep.subr.bf16.mxu0 0
        %1714 = vmatpush1.bf16.msra.mxu0 %v1674
        %1715 = vmatprep.subr.bf16.mxu0 0
        %1716 = vmatpush1.bf16.msra.mxu0 %v1675
        %1717 = vmatprep.subr.bf16.mxu0 0
        %1718 = vmatpush1.bf16.msra.mxu0 %v1676
        %1719 = vmatprep.subr.bf16.mxu0 0
        %1720 = vmatpush1.bf16.msra.mxu0 %v1677
        %1721 = vmatprep.subr.bf16.mxu0 0
        %1722 = vmatpush1.bf16.msra.mxu0 %v1678
        %1723 = vmatprep.subr.bf16.mxu0 0
        %1724 = vmatpush1.bf16.msra.mxu0 %v1679
        %1725 = vmatprep.subr.bf16.mxu0 0
        %1726 = vmatpush1.bf16.msra.mxu0 %v1680
        %1727 = vmatprep.subr.bf16.mxu0 0
        %1728 = vmatpush1.bf16.msra.mxu0 %v1681
        %1729 = vmatprep.subr.bf16.mxu0 0
        %1730 = vmatpush1.bf16.msra.mxu0 %v1682
        %1731 = vmatprep.mubr.bf16.mxu0 %v1576
        %1732 = vmatmul.mubr.bf16.gmra.mrb[0].mxu0 %v1573
        %v1733 = vpop.f32.mrb[0].mxu0
        %v1734 = vadd.f32 0.0, %v1733
        %v1735 = vpop.f32.mrb[0].mxu0
        %v1736 = vpop.f32.mrb[0].mxu0
        %v1737 = vadd.f32 0.0, %v1736
        %v1738 = vpop.f32.mrb[0].mxu0
        %1739 = vmatprep.mubr.bf16.mxu0 %v1580
        %1740 = vmatmul.mubr.bf16.gmra.mrb[0].mxu0 %v1578
        %v1741 = vpop.f32.mrb[0].mxu0
        %v1742 = vadd.f32 0.0, %v1741
        %v1743 = vpop.f32.mrb[0].mxu0
        %v1744 = vpop.f32.mrb[0].mxu0
        %v1745 = vadd.f32 0.0, %v1744
        %v1746 = vpop.f32.mrb[0].mxu0
        %1747 = vmatprep.mubr.bf16.mxu0 %v1584
        %1748 = vmatmul.mubr.bf16.gmra.mrb[0].mxu0 %v1582
        %v1749 = vpop.f32.mrb[0].mxu0
        %v1750 = vadd.f32 0.0, %v1749
        %v1751 = vpop.f32.mrb[0].mxu0
        %v1752 = vpop.f32.mrb[0].mxu0
        %v1753 = vadd.f32 0.0, %v1752
        %v1754 = vpop.f32.mrb[0].mxu0
        %1755 = vmatprep.mubr.bf16.mxu0 %v1588
        %1756 = vmatmul.mubr.bf16.gmra.mrb[0].mxu0 %v1586
        %v1757 = vpop.f32.mrb[0].mxu0
        %v1758 = vadd.f32 0.0, %v1757
        %v1759 = vpop.f32.mrb[0].mxu0
        %v1760 = vpop.f32.mrb[0].mxu0
        %v1761 = vadd.f32 0.0, %v1760
        %v1762 = vpop.f32.mrb[0].mxu0
        %1763 = vmatprep.mubr.bf16.mxu0 %v1592
        %1764 = vmatmul.mubr.bf16.gmra.mrb[0].mxu0 %v1590
        %v1765 = vpop.f32.mrb[0].mxu0
        %v1766 = vadd.f32 0.0, %v1765
        %v1767 = vpop.f32.mrb[0].mxu0
        %v1768 = vpop.f32.mrb[0].mxu0
        %v1769 = vadd.f32 0.0, %v1768
        %v1770 = vpop.f32.mrb[0].mxu0
        %1771 = vdwg.mxu0
        %v1773 = vunpack.c.l.b16 %v1448
        %v1774 = vunpack.c.h.b16 %v1448
        %v1775 = vpack.c.b16 %v1538, %v1773
        %v1776 = vpack.c.b16 %v1539, %v1774
        %vm1777 = vsmask.f32 7424
        %v1779 = vshrl.u32 %v1775, 16
        %v1781 = vshll.u32 %v1775, 16
        %v1783 = vrot.slane %v1781, 1
        %v1784 = vor.u32 %v1779, %v1783
        %v1786 = vshll.u32 %v1560, 16
        %v1788 = vrot.slane %v1786, 1
        %v1789 = vsel %vm1777, %v1784, %v1788
        %v1791 = vshrl.u32 %v1776, 16
        %v1793 = vshll.u32 %v1776, 16
        %v1795 = vrot.slane %v1793, 1
        %v1796 = vor.u32 %v1791, %v1795
        %v1798 = vshll.u32 %v1561, 16
        %v1800 = vrot.slane %v1798, 1
        %v1801 = vsel %vm1777, %v1796, %v1800
        %v1802 = vshrl.u32 %v1560, 16
        %v1804 = vor.u32 %v1802, %v1788
        %v1806 = vshll.u32 %v1562, 16
        %v1808 = vrot.slane %v1806, 1
        %v1809 = vsel %vm1777, %v1804, %v1808
        %v1810 = vshrl.u32 %v1561, 16
        %v1812 = vor.u32 %v1810, %v1800
        %v1814 = vshll.u32 %v1563, 16
        %v1816 = vrot.slane %v1814, 1
        %v1817 = vsel %vm1777, %v1812, %v1816
        %v1818 = vshrl.u32 %v1562, 16
        %v1820 = vor.u32 %v1818, %v1808
        %v1822 = vshll.u32 %v1564, 16
        %v1824 = vrot.slane %v1822, 1
        %v1825 = vsel %vm1777, %v1820, %v1824
        %v1826 = vshrl.u32 %v1563, 16
        %v1828 = vor.u32 %v1826, %v1816
        %v1830 = vshll.u32 %v1565, 16
        %v1832 = vrot.slane %v1830, 1
        %v1833 = vsel %vm1777, %v1828, %v1832
        %v1834 = vshrl.u32 %v1564, 16
        %v1836 = vor.u32 %v1834, %v1824
        %v1838 = vshll.u32 %v1566, 16
        %v1840 = vrot.slane %v1838, 1
        %v1841 = vsel %vm1777, %v1836, %v1840
        %v1842 = vshrl.u32 %v1565, 16
        %v1844 = vor.u32 %v1842, %v1832
        %v1846 = vshll.u32 %v1567, 16
        %v1848 = vrot.slane %v1846, 1
        %v1849 = vsel %vm1777, %v1844, %v1848
        %v1850 = vshrl.u32 %v1566, 16
        %v1852 = vor.u32 %v1850, %v1840
        %v1854 = vshll.u32 %v1568, 16
        %v1856 = vrot.slane %v1854, 1
        %v1857 = vsel %vm1777, %v1852, %v1856
        %v1858 = vshrl.u32 %v1567, 16
        %v1860 = vor.u32 %v1858, %v1848
        %v1862 = vshll.u32 %v1569, 16
        %v1864 = vrot.slane %v1862, 1
        %v1865 = vsel %vm1777, %v1860, %v1864
        %v1908 = vunpack.c.l.b16 %v1459
        %v1909 = vunpack.c.l.b16 %v1460
        %v1910 = vunpack.c.l.b16 %v1461
        %v1911 = vunpack.c.l.b16 %v1462
        %v1912 = vunpack.c.l.b16 %v1463
        %v1913 = vunpack.c.l.b16 %v1464
        %v1914 = vunpack.c.l.b16 %v1465
        %v1915 = vunpack.c.l.b16 %v1466
        %v1916 = vunpack.c.l.b16 %v1467
        %v1917 = vunpack.c.l.b16 %v1468
        %v1918 = vunpack.c.l.b16 %v1469
        %v1919 = vunpack.c.l.b16 %v1470
        %v1920 = vunpack.c.l.b16 %v1471
        %v1921 = vunpack.c.l.b16 %v1472
        %v1922 = vunpack.c.l.b16 %v1473
        %v1923 = vunpack.c.l.b16 %v1474
        %v1924 = vunpack.c.l.b16 %v1475
        %v1925 = vunpack.c.l.b16 %v1476
        %v1926 = vunpack.c.l.b16 %v1477
        %v1927 = vunpack.c.l.b16 %v1478
        %v1928 = vunpack.c.l.b16 %v1479
        %v1929 = vunpack.c.l.b16 %v1480
        %v1930 = vunpack.c.l.b16 %v1481
        %v1931 = vunpack.c.l.b16 %v1482
        %v1932 = vunpack.c.l.b16 %v1483
        %v1933 = vunpack.c.l.b16 %v1484
        %v1934 = vunpack.c.l.b16 %v1485
        %v1935 = vunpack.c.l.b16 %v1486
        %v1936 = vunpack.c.l.b16 %v1487
        %v1937 = vunpack.c.l.b16 %v1488
        %v1938 = vunpack.c.l.b16 %v1489
        %v1939 = vunpack.c.l.b16 %v1490
        %v1940 = vpack.c.b16 %v1909, %v1908
        %v1941 = vpack.c.b16 %v1911, %v1910
        %v1942 = vpack.c.b16 %v1913, %v1912
        %v1943 = vpack.c.b16 %v1915, %v1914
        %v1944 = vpack.c.b16 %v1917, %v1916
        %v1945 = vpack.c.b16 %v1919, %v1918
        %v1946 = vpack.c.b16 %v1921, %v1920
        %v1947 = vpack.c.b16 %v1923, %v1922
        %v1948 = vpack.c.b16 %v1925, %v1924
        %v1949 = vpack.c.b16 %v1927, %v1926
        %v1950 = vpack.c.b16 %v1929, %v1928
        %v1951 = vpack.c.b16 %v1931, %v1930
        %v1952 = vpack.c.b16 %v1933, %v1932
        %v1953 = vpack.c.b16 %v1935, %v1934
        %v1954 = vpack.c.b16 %v1937, %v1936
        %v1955 = vpack.c.b16 %v1939, %v1938
        %1972 = vmatprep.subr.bf16.mxu0 0
        %1973 = vmatpush1.bf16.msra.mxu0 %v1940
        %1974 = vmatprep.subr.bf16.mxu0 0
        %1975 = vmatpush1.bf16.msra.mxu0 %v1941
        %1976 = vmatprep.subr.bf16.mxu0 0
        %1977 = vmatpush1.bf16.msra.mxu0 %v1942
        %1978 = vmatprep.subr.bf16.mxu0 0
        %1979 = vmatpush1.bf16.msra.mxu0 %v1943
        %1980 = vmatprep.subr.bf16.mxu0 0
        %1981 = vmatpush1.bf16.msra.mxu0 %v1944
        %1982 = vmatprep.subr.bf16.mxu0 0
        %1983 = vmatpush1.bf16.msra.mxu0 %v1945
        %1984 = vmatprep.subr.bf16.mxu0 0
        %1985 = vmatpush1.bf16.msra.mxu0 %v1946
        %1986 = vmatprep.subr.bf16.mxu0 0
        %1987 = vmatpush1.bf16.msra.mxu0 %v1947
        %1988 = vmatprep.subr.bf16.mxu0 0
        %1989 = vmatpush1.bf16.msra.mxu0 %v1948
        %1990 = vmatprep.subr.bf16.mxu0 0
        %1991 = vmatpush1.bf16.msra.mxu0 %v1949
        %1992 = vmatprep.subr.bf16.mxu0 0
        %1993 = vmatpush1.bf16.msra.mxu0 %v1950
        %1994 = vmatprep.subr.bf16.mxu0 0
        %1995 = vmatpush1.bf16.msra.mxu0 %v1951
        %1996 = vmatprep.subr.bf16.mxu0 0
        %1997 = vmatpush1.bf16.msra.mxu0 %v1952
        %1998 = vmatprep.subr.bf16.mxu0 0
        %1999 = vmatpush1.bf16.msra.mxu0 %v1953
        %2000 = vmatprep.subr.bf16.mxu0 0
        %2001 = vmatpush1.bf16.msra.mxu0 %v1954
        %2002 = vmatprep.subr.bf16.mxu0 0
        %2003 = vmatpush1.bf16.msra.mxu0 %v1955
        %2004 = vmatprep.mubr.bf16.mxu0 %v1801
        %2005 = vmatmul.mubr.bf16.gmra.mrb[0].mxu0 %v1789
        %v2006 = vpop.f32.mrb[0].mxu0
        %v2007 = vadd.f32 %v1734, %v2006
        %v2008 = vpop.f32.mrb[0].mxu0
        %v2009 = vpop.f32.mrb[0].mxu0
        %v2010 = vadd.f32 %v1737, %v2009
        %v2011 = vpop.f32.mrb[0].mxu0
        %2012 = vmatprep.mubr.bf16.mxu0 %v1817
        %2013 = vmatmul.mubr.bf16.gmra.mrb[0].mxu0 %v1809
        %v2014 = vpop.f32.mrb[0].mxu0
        %v2015 = vadd.f32 %v1742, %v2014
        %v2016 = vpop.f32.mrb[0].mxu0
        %v2017 = vpop.f32.mrb[0].mxu0
        %v2018 = vadd.f32 %v1745, %v2017
        %v2019 = vpop.f32.mrb[0].mxu0
        %2020 = vmatprep.mubr.bf16.mxu0 %v1833
        %2021 = vmatmul.mubr.bf16.gmra.mrb[0].mxu0 %v1825
        %v2022 = vpop.f32.mrb[0].mxu0
        %v2023 = vadd.f32 %v1750, %v2022
        %v2024 = vpop.f32.mrb[0].mxu0
        %v2025 = vpop.f32.mrb[0].mxu0
        %v2026 = vadd.f32 %v1753, %v2025
        %v2027 = vpop.f32.mrb[0].mxu0
        %2028 = vmatprep.mubr.bf16.mxu0 %v1849
        %2029 = vmatmul.mubr.bf16.gmra.mrb[0].mxu0 %v1841
        %v2030 = vpop.f32.mrb[0].mxu0
        %v2031 = vadd.f32 %v1758, %v2030
        %v2032 = vpop.f32.mrb[0].mxu0
        %v2033 = vpop.f32.mrb[0].mxu0
        %v2034 = vadd.f32 %v1761, %v2033
        %v2035 = vpop.f32.mrb[0].mxu0
        %2036 = vmatprep.mubr.bf16.mxu0 %v1865
        %2037 = vmatmul.mubr.bf16.gmra.mrb[0].mxu0 %v1857
        %v2038 = vpop.f32.mrb[0].mxu0
        %v2039 = vadd.f32 %v1766, %v2038
        %v2040 = vpop.f32.mrb[0].mxu0
        %v2041 = vpop.f32.mrb[0].mxu0
        %v2042 = vadd.f32 %v1769, %v2041
        %v2043 = vpop.f32.mrb[0].mxu0
        %2044 = vdwg.mxu0
        %v2045 = vld [vmem:[#allocation2 + $0x10] sm:$0xee]
        %v2046 = vld [vmem:[#allocation2 + $0x18] sm:$0xff]
        %v2047 = vld [vmem:[#allocation2 + $0x20] sm:$0xff]
        %v2048 = vld [vmem:[#allocation2 + $0x28] sm:$0xff]
        %v2049 = vld [vmem:[#allocation2 + $0x30] sm:$0xff]
        %v2050 = vld [vmem:[#allocation2 + $0x38] sm:$0xff]
        %v2051 = vld [vmem:[#allocation2 + $0x40] sm:$0xff]
        %v2052 = vld [vmem:[#allocation2 + $0x48] sm:$0xff]
        %v2053 = vld [vmem:[#allocation2 + $0x50] sm:$0xff]
        %v2054 = vld [vmem:[#allocation2 + $0x58] sm:$0xff]
        %v2055 = vld [vmem:[#allocation2 + $0x60] sm:$0x33]
        %s2056 = scalar_lea.vmem [#allocation4], 256
        %v2057 = vld [vmem:[%s2056] sm:$0xf]
        %v2058 = vld [vmem:[%s2056 + $0x4] sm:$0xf]
        %v2059 = vld [vmem:[%s2056 + $0x8] sm:$0xf]
        %v2060 = vld [vmem:[%s2056 + $0xc] sm:$0xf]
        %v2061 = vld [vmem:[%s2056 + $0x10] sm:$0xf]
        %v2062 = vld [vmem:[%s2056 + $0x14] sm:$0xf]
        %v2063 = vld [vmem:[%s2056 + $0x18] sm:$0xf]
        %v2064 = vld [vmem:[%s2056 + $0x1c] sm:$0xf]
        %v2065 = vld [vmem:[%s2056 + $0x20] sm:$0xf]
        %v2066 = vld [vmem:[%s2056 + $0x24] sm:$0xf]
        %v2067 = vld [vmem:[%s2056 + $0x28] sm:$0xf]
        %v2068 = vld [vmem:[%s2056 + $0x2c] sm:$0xf]
        %v2069 = vld [vmem:[%s2056 + $0x30] sm:$0xf]
        %v2070 = vld [vmem:[%s2056 + $0x34] sm:$0xf]
        %v2071 = vld [vmem:[%s2056 + $0x38] sm:$0xf]
        %v2072 = vld [vmem:[%s2056 + $0x3c] sm:$0xf]
        %v2073 = vld [vmem:[%s2056 + $0x40] sm:$0xf]
        %v2074 = vld [vmem:[%s2056 + $0x44] sm:$0xf]
        %v2075 = vld [vmem:[%s2056 + $0x48] sm:$0xf]
        %v2076 = vld [vmem:[%s2056 + $0x4c] sm:$0xf]
        %v2077 = vld [vmem:[%s2056 + $0x50] sm:$0xf]
        %v2078 = vld [vmem:[%s2056 + $0x54] sm:$0xf]
        %v2079 = vld [vmem:[%s2056 + $0x58] sm:$0xf]
        %v2080 = vld [vmem:[%s2056 + $0x5c] sm:$0xf]
        %v2081 = vld [vmem:[%s2056 + $0x60] sm:$0xf]
        %v2082 = vld [vmem:[%s2056 + $0x64] sm:$0xf]
        %v2083 = vld [vmem:[%s2056 + $0x68] sm:$0xf]
        %v2084 = vld [vmem:[%s2056 + $0x6c] sm:$0xf]
        %v2085 = vld [vmem:[%s2056 + $0x70] sm:$0xf]
        %v2086 = vld [vmem:[%s2056 + $0x74] sm:$0xf]
        %v2087 = vld [vmem:[%s2056 + $0x78] sm:$0xf]
        %v2088 = vld [vmem:[%s2056 + $0x7c] sm:$0xf]
        %v2100 = vunpack.c.l.b16 %v2045
        %v2101 = vunpack.c.h.b16 %v2045
        %v2102 = vunpack.c.l.b16 %v2046
        %v2103 = vunpack.c.h.b16 %v2046
        %v2104 = vunpack.c.l.b16 %v2047
        %v2105 = vunpack.c.h.b16 %v2047
        %v2106 = vunpack.c.l.b16 %v2048
        %v2107 = vunpack.c.h.b16 %v2048
        %v2108 = vunpack.c.l.b16 %v2049
        %v2109 = vunpack.c.h.b16 %v2049
        %v2110 = vunpack.c.l.b16 %v2050
        %v2111 = vunpack.c.h.b16 %v2050
        %v2112 = vunpack.c.l.b16 %v2051
        %v2113 = vunpack.c.h.b16 %v2051
        %v2114 = vunpack.c.l.b16 %v2052
        %v2115 = vunpack.c.h.b16 %v2052
        %v2116 = vunpack.c.l.b16 %v2053
        %v2117 = vunpack.c.h.b16 %v2053
        %v2118 = vunpack.c.l.b16 %v2054
        %v2119 = vunpack.c.h.b16 %v2054
        %v2120 = vunpack.c.l.b16 %v2055
        %v2121 = vunpack.c.h.b16 %v2055
        %v2122 = vpack.c.b16 %v2102, %v2100
        %v2123 = vpack.c.b16 %v2103, %v2101
        %v2124 = vpack.c.b16 %v2106, %v2104
        %v2125 = vpack.c.b16 %v2107, %v2105
        %v2126 = vpack.c.b16 %v2110, %v2108
        %v2127 = vpack.c.b16 %v2111, %v2109
        %v2128 = vpack.c.b16 %v2114, %v2112
        %v2129 = vpack.c.b16 %v2115, %v2113
        %v2130 = vpack.c.b16 %v2118, %v2116
        %v2131 = vpack.c.b16 %v2119, %v2117
        %v2132 = vpack.c.b16 %v2120, %v2120
        %v2133 = vpack.c.b16 %v2121, %v2121
        %vm2134 = vsmask.f32 6400
        %v2136 = vshrl.u32 %v2122, 16
        %v2138 = vrot.slane %v2136, 1
        %v2139 = vshll.u32 %v2122, 16
        %v2141 = vrot.slane %v2139, 2
        %v2142 = vor.u32 %v2138, %v2141
        %v2144 = vshrl.u32 %v2124, 16
        %v2146 = vrot.slane %v2144, 1
        %v2147 = vshll.u32 %v2124, 16
        %v2149 = vrot.slane %v2147, 2
        %v2150 = vor.u32 %v2146, %v2149
        %v2151 = vsel %vm2134, %v2142, %v2150
        %v2153 = vshrl.u32 %v2123, 16
        %v2155 = vrot.slane %v2153, 1
        %v2156 = vshll.u32 %v2123, 16
        %v2158 = vrot.slane %v2156, 2
        %v2159 = vor.u32 %v2155, %v2158
        %v2161 = vshrl.u32 %v2125, 16
        %v2163 = vrot.slane %v2161, 1
        %v2164 = vshll.u32 %v2125, 16
        %v2166 = vrot.slane %v2164, 2
        %v2167 = vor.u32 %v2163, %v2166
        %v2168 = vsel %vm2134, %v2159, %v2167
        %v2170 = vshrl.u32 %v2126, 16
        %v2172 = vrot.slane %v2170, 1
        %v2173 = vshll.u32 %v2126, 16
        %v2175 = vrot.slane %v2173, 2
        %v2176 = vor.u32 %v2172, %v2175
        %v2177 = vsel %vm2134, %v2150, %v2176
        %v2179 = vshrl.u32 %v2127, 16
        %v2181 = vrot.slane %v2179, 1
        %v2182 = vshll.u32 %v2127, 16
        %v2184 = vrot.slane %v2182, 2
        %v2185 = vor.u32 %v2181, %v2184
        %v2186 = vsel %vm2134, %v2167, %v2185
        %v2188 = vshrl.u32 %v2128, 16
        %v2190 = vrot.slane %v2188, 1
        %v2191 = vshll.u32 %v2128, 16
        %v2193 = vrot.slane %v2191, 2
        %v2194 = vor.u32 %v2190, %v2193
        %v2195 = vsel %vm2134, %v2176, %v2194
        %v2197 = vshrl.u32 %v2129, 16
        %v2199 = vrot.slane %v2197, 1
        %v2200 = vshll.u32 %v2129, 16
        %v2202 = vrot.slane %v2200, 2
        %v2203 = vor.u32 %v2199, %v2202
        %v2204 = vsel %vm2134, %v2185, %v2203
        %v2206 = vshrl.u32 %v2130, 16
        %v2208 = vrot.slane %v2206, 1
        %v2209 = vshll.u32 %v2130, 16
        %v2211 = vrot.slane %v2209, 2
        %v2212 = vor.u32 %v2208, %v2211
        %v2213 = vsel %vm2134, %v2194, %v2212
        %v2215 = vshrl.u32 %v2131, 16
        %v2217 = vrot.slane %v2215, 1
        %v2218 = vshll.u32 %v2131, 16
        %v2220 = vrot.slane %v2218, 2
        %v2221 = vor.u32 %v2217, %v2220
        %v2222 = vsel %vm2134, %v2203, %v2221
        %v2224 = vshrl.u32 %v2132, 16
        %v2226 = vrot.slane %v2224, 1
        %v2227 = vshll.u32 %v2132, 16
        %v2229 = vrot.slane %v2227, 2
        %v2230 = vor.u32 %v2226, %v2229
        %v2231 = vsel %vm2134, %v2212, %v2230
        %v2233 = vshrl.u32 %v2133, 16
        %v2235 = vrot.slane %v2233, 1
        %v2236 = vshll.u32 %v2133, 16
        %v2238 = vrot.slane %v2236, 2
        %v2239 = vor.u32 %v2235, %v2238
        %v2240 = vsel %vm2134, %v2221, %v2239
        %v2283 = vunpack.c.l.b16 %v2057
        %v2284 = vunpack.c.l.b16 %v2058
        %v2285 = vunpack.c.l.b16 %v2059
        %v2286 = vunpack.c.l.b16 %v2060
        %v2287 = vunpack.c.l.b16 %v2061
        %v2288 = vunpack.c.l.b16 %v2062
        %v2289 = vunpack.c.l.b16 %v2063
        %v2290 = vunpack.c.l.b16 %v2064
        %v2291 = vunpack.c.l.b16 %v2065
        %v2292 = vunpack.c.l.b16 %v2066
        %v2293 = vunpack.c.l.b16 %v2067
        %v2294 = vunpack.c.l.b16 %v2068
        %v2295 = vunpack.c.l.b16 %v2069
        %v2296 = vunpack.c.l.b16 %v2070
        %v2297 = vunpack.c.l.b16 %v2071
        %v2298 = vunpack.c.l.b16 %v2072
        %v2299 = vunpack.c.l.b16 %v2073
        %v2300 = vunpack.c.l.b16 %v2074
        %v2301 = vunpack.c.l.b16 %v2075
        %v2302 = vunpack.c.l.b16 %v2076
        %v2303 = vunpack.c.l.b16 %v2077
        %v2304 = vunpack.c.l.b16 %v2078
        %v2305 = vunpack.c.l.b16 %v2079
        %v2306 = vunpack.c.l.b16 %v2080
        %v2307 = vunpack.c.l.b16 %v2081
        %v2308 = vunpack.c.l.b16 %v2082
        %v2309 = vunpack.c.l.b16 %v2083
        %v2310 = vunpack.c.l.b16 %v2084
        %v2311 = vunpack.c.l.b16 %v2085
        %v2312 = vunpack.c.l.b16 %v2086
        %v2313 = vunpack.c.l.b16 %v2087
        %v2314 = vunpack.c.l.b16 %v2088
        %v2315 = vpack.c.b16 %v2284, %v2283
        %v2316 = vpack.c.b16 %v2286, %v2285
        %v2317 = vpack.c.b16 %v2288, %v2287
        %v2318 = vpack.c.b16 %v2290, %v2289
        %v2319 = vpack.c.b16 %v2292, %v2291
        %v2320 = vpack.c.b16 %v2294, %v2293
        %v2321 = vpack.c.b16 %v2296, %v2295
        %v2322 = vpack.c.b16 %v2298, %v2297
        %v2323 = vpack.c.b16 %v2300, %v2299
        %v2324 = vpack.c.b16 %v2302, %v2301
        %v2325 = vpack.c.b16 %v2304, %v2303
        %v2326 = vpack.c.b16 %v2306, %v2305
        %v2327 = vpack.c.b16 %v2308, %v2307
        %v2328 = vpack.c.b16 %v2310, %v2309
        %v2329 = vpack.c.b16 %v2312, %v2311
        %v2330 = vpack.c.b16 %v2314, %v2313
        %2347 = vmatprep.subr.bf16.mxu0 0
        %2348 = vmatpush1.bf16.msra.mxu0 %v2315
        %2349 = vmatprep.subr.bf16.mxu0 0
        %2350 = vmatpush1.bf16.msra.mxu0 %v2316
        %2351 = vmatprep.subr.bf16.mxu0 0
        %2352 = vmatpush1.bf16.msra.mxu0 %v2317
        %2353 = vmatprep.subr.bf16.mxu0 0
        %2354 = vmatpush1.bf16.msra.mxu0 %v2318
        %2355 = vmatprep.subr.bf16.mxu0 0
        %2356 = vmatpush1.bf16.msra.mxu0 %v2319
        %2357 = vmatprep.subr.bf16.mxu0 0
        %2358 = vmatpush1.bf16.msra.mxu0 %v2320
        %2359 = vmatprep.subr.bf16.mxu0 0
        %2360 = vmatpush1.bf16.msra.mxu0 %v2321
        %2361 = vmatprep.subr.bf16.mxu0 0
        %2362 = vmatpush1.bf16.msra.mxu0 %v2322
        %2363 = vmatprep.subr.bf16.mxu0 0
        %2364 = vmatpush1.bf16.msra.mxu0 %v2323
        %2365 = vmatprep.subr.bf16.mxu0 0
        %2366 = vmatpush1.bf16.msra.mxu0 %v2324
        %2367 = vmatprep.subr.bf16.mxu0 0
        %2368 = vmatpush1.bf16.msra.mxu0 %v2325
        %2369 = vmatprep.subr.bf16.mxu0 0
        %2370 = vmatpush1.bf16.msra.mxu0 %v2326
        %2371 = vmatprep.subr.bf16.mxu0 0
        %2372 = vmatpush1.bf16.msra.mxu0 %v2327
        %2373 = vmatprep.subr.bf16.mxu0 0
        %2374 = vmatpush1.bf16.msra.mxu0 %v2328
        %2375 = vmatprep.subr.bf16.mxu0 0
        %2376 = vmatpush1.bf16.msra.mxu0 %v2329
        %2377 = vmatprep.subr.bf16.mxu0 0
        %2378 = vmatpush1.bf16.msra.mxu0 %v2330
        %2379 = vmatprep.mubr.bf16.mxu0 %v2168
        %2380 = vmatmul.mubr.bf16.gmra.mrb[0].mxu0 %v2151
        %v2381 = vpop.f32.mrb[0].mxu0
        %v2382 = vadd.f32 0.0, %v2381
        %v2383 = vpop.f32.mrb[0].mxu0
        %v2384 = vpop.f32.mrb[0].mxu0
        %v2385 = vadd.f32 0.0, %v2384
        %v2386 = vpop.f32.mrb[0].mxu0
        %2387 = vmatprep.mubr.bf16.mxu0 %v2186
        %2388 = vmatmul.mubr.bf16.gmra.mrb[0].mxu0 %v2177
        %v2389 = vpop.f32.mrb[0].mxu0
        %v2390 = vadd.f32 0.0, %v2389
        %v2391 = vpop.f32.mrb[0].mxu0
        %v2392 = vpop.f32.mrb[0].mxu0
        %v2393 = vadd.f32 0.0, %v2392
        %v2394 = vpop.f32.mrb[0].mxu0
        %2395 = vmatprep.mubr.bf16.mxu0 %v2204
        %2396 = vmatmul.mubr.bf16.gmra.mrb[0].mxu0 %v2195
        %v2397 = vpop.f32.mrb[0].mxu0
        %v2398 = vadd.f32 0.0, %v2397
        %v2399 = vpop.f32.mrb[0].mxu0
        %v2400 = vpop.f32.mrb[0].mxu0
        %v2401 = vadd.f32 0.0, %v2400
        %v2402 = vpop.f32.mrb[0].mxu0
        %2403 = vmatprep.mubr.bf16.mxu0 %v2222
        %2404 = vmatmul.mubr.bf16.gmra.mrb[0].mxu0 %v2213
        %v2405 = vpop.f32.mrb[0].mxu0
        %v2406 = vadd.f32 0.0, %v2405
        %v2407 = vpop.f32.mrb[0].mxu0
        %v2408 = vpop.f32.mrb[0].mxu0
        %v2409 = vadd.f32 0.0, %v2408
        %v2410 = vpop.f32.mrb[0].mxu0
        %2411 = vmatprep.mubr.bf16.mxu0 %v2240
        %2412 = vmatmul.mubr.bf16.gmra.mrb[0].mxu0 %v2231
        %v2413 = vpop.f32.mrb[0].mxu0
        %v2414 = vadd.f32 0.0, %v2413
        %v2415 = vpop.f32.mrb[0].mxu0
        %v2416 = vpop.f32.mrb[0].mxu0
        %v2417 = vadd.f32 0.0, %v2416
        %v2418 = vpop.f32.mrb[0].mxu0
        %2419 = vdwg.mxu0
        %v2420 = vadd.f32 %v2007, %v2382
        %v2421 = vadd.f32 %v2010, %v2385
        %v2422 = vadd.f32 %v2015, %v2390
        %v2423 = vadd.f32 %v2018, %v2393
        %v2424 = vadd.f32 %v2023, %v2398
        %v2425 = vadd.f32 %v2026, %v2401
        %v2426 = vadd.f32 %v2031, %v2406
        %v2427 = vadd.f32 %v2034, %v2409
        %v2428 = vadd.f32 %v2039, %v2414
        %v2429 = vadd.f32 %v2042, %v2417
        %v2430 = vld [vmem:[#allocation2 + $0x10] sm:$0xcc]
        %s2431 = scalar_lea.vmem [#allocation4], 384
        %v2432 = vld [vmem:[%s2431] sm:$0xf]
        %v2433 = vld [vmem:[%s2431 + $0x4] sm:$0xf]
        %v2434 = vld [vmem:[%s2431 + $0x8] sm:$0xf]
        %v2435 = vld [vmem:[%s2431 + $0xc] sm:$0xf]
        %v2436 = vld [vmem:[%s2431 + $0x10] sm:$0xf]
        %v2437 = vld [vmem:[%s2431 + $0x14] sm:$0xf]
        %v2438 = vld [vmem:[%s2431 + $0x18] sm:$0xf]
        %v2439 = vld [vmem:[%s2431 + $0x1c] sm:$0xf]
        %v2440 = vld [vmem:[%s2431 + $0x20] sm:$0xf]
        %v2441 = vld [vmem:[%s2431 + $0x24] sm:$0xf]
        %v2442 = vld [vmem:[%s2431 + $0x28] sm:$0xf]
        %v2443 = vld [vmem:[%s2431 + $0x2c] sm:$0xf]
        %v2444 = vld [vmem:[%s2431 + $0x30] sm:$0xf]
        %v2445 = vld [vmem:[%s2431 + $0x34] sm:$0xf]
        %v2446 = vld [vmem:[%s2431 + $0x38] sm:$0xf]
        %v2447 = vld [vmem:[%s2431 + $0x3c] sm:$0xf]
        %v2448 = vld [vmem:[%s2431 + $0x40] sm:$0xf]
        %v2449 = vld [vmem:[%s2431 + $0x44] sm:$0xf]
        %v2450 = vld [vmem:[%s2431 + $0x48] sm:$0xf]
        %v2451 = vld [vmem:[%s2431 + $0x4c] sm:$0xf]
        %v2452 = vld [vmem:[%s2431 + $0x50] sm:$0xf]
        %v2453 = vld [vmem:[%s2431 + $0x54] sm:$0xf]
        %v2454 = vld [vmem:[%s2431 + $0x58] sm:$0xf]
        %v2455 = vld [vmem:[%s2431 + $0x5c] sm:$0xf]
        %v2456 = vld [vmem:[%s2431 + $0x60] sm:$0xf]
        %v2457 = vld [vmem:[%s2431 + $0x64] sm:$0xf]
        %v2458 = vld [vmem:[%s2431 + $0x68] sm:$0xf]
        %v2459 = vld [vmem:[%s2431 + $0x6c] sm:$0xf]
        %v2460 = vld [vmem:[%s2431 + $0x70] sm:$0xf]
        %v2461 = vld [vmem:[%s2431 + $0x74] sm:$0xf]
        %v2462 = vld [vmem:[%s2431 + $0x78] sm:$0xf]
        %v2463 = vld [vmem:[%s2431 + $0x7c] sm:$0xf]
        %v2465 = vunpack.c.l.b16 %v2430
        %v2466 = vunpack.c.h.b16 %v2430
        %v2467 = vpack.c.b16 %v2102, %v2465
        %v2468 = vpack.c.b16 %v2103, %v2466
        %vm2469 = vcmask 1045504
        %v2470 = vrot.slane %v2467, 2
        %v2471 = vrot.slane %v2124, 2
        %v2472 = vsel %vm2469, %v2470, %v2471
        %v2473 = vrot.slane %v2468, 2
        %v2474 = vrot.slane %v2125, 2
        %v2475 = vsel %vm2469, %v2473, %v2474
        %v2476 = vrot.slane %v2126, 2
        %v2477 = vsel %vm2469, %v2471, %v2476
        %v2478 = vrot.slane %v2127, 2
        %v2479 = vsel %vm2469, %v2474, %v2478
        %v2480 = vrot.slane %v2128, 2
        %v2481 = vsel %vm2469, %v2476, %v2480
        %v2482 = vrot.slane %v2129, 2
        %v2483 = vsel %vm2469, %v2478, %v2482
        %v2484 = vrot.slane %v2130, 2
        %v2485 = vsel %vm2469, %v2480, %v2484
        %v2486 = vrot.slane %v2131, 2
        %v2487 = vsel %vm2469, %v2482, %v2486
        %v2488 = vrot.slane %v2132, 2
        %v2489 = vsel %vm2469, %v2484, %v2488
        %v2490 = vrot.slane %v2133, 2
        %v2491 = vsel %vm2469, %v2486, %v2490
        %v2534 = vunpack.c.l.b16 %v2432
        %v2535 = vunpack.c.l.b16 %v2433
        %v2536 = vunpack.c.l.b16 %v2434
        %v2537 = vunpack.c.l.b16 %v2435
        %v2538 = vunpack.c.l.b16 %v2436
        %v2539 = vunpack.c.l.b16 %v2437
        %v2540 = vunpack.c.l.b16 %v2438
        %v2541 = vunpack.c.l.b16 %v2439
        %v2542 = vunpack.c.l.b16 %v2440
        %v2543 = vunpack.c.l.b16 %v2441
        %v2544 = vunpack.c.l.b16 %v2442
        %v2545 = vunpack.c.l.b16 %v2443
        %v2546 = vunpack.c.l.b16 %v2444
        %v2547 = vunpack.c.l.b16 %v2445
        %v2548 = vunpack.c.l.b16 %v2446
        %v2549 = vunpack.c.l.b16 %v2447
        %v2550 = vunpack.c.l.b16 %v2448
        %v2551 = vunpack.c.l.b16 %v2449
        %v2552 = vunpack.c.l.b16 %v2450
        %v2553 = vunpack.c.l.b16 %v2451
        %v2554 = vunpack.c.l.b16 %v2452
        %v2555 = vunpack.c.l.b16 %v2453
        %v2556 = vunpack.c.l.b16 %v2454
        %v2557 = vunpack.c.l.b16 %v2455
        %v2558 = vunpack.c.l.b16 %v2456
        %v2559 = vunpack.c.l.b16 %v2457
        %v2560 = vunpack.c.l.b16 %v2458
        %v2561 = vunpack.c.l.b16 %v2459
        %v2562 = vunpack.c.l.b16 %v2460
        %v2563 = vunpack.c.l.b16 %v2461
        %v2564 = vunpack.c.l.b16 %v2462
        %v2565 = vunpack.c.l.b16 %v2463
        %v2566 = vpack.c.b16 %v2535, %v2534
        %v2567 = vpack.c.b16 %v2537, %v2536
        %v2568 = vpack.c.b16 %v2539, %v2538
        %v2569 = vpack.c.b16 %v2541, %v2540
        %v2570 = vpack.c.b16 %v2543, %v2542
        %v2571 = vpack.c.b16 %v2545, %v2544
        %v2572 = vpack.c.b16 %v2547, %v2546
        %v2573 = vpack.c.b16 %v2549, %v2548
        %v2574 = vpack.c.b16 %v2551, %v2550
        %v2575 = vpack.c.b16 %v2553, %v2552
        %v2576 = vpack.c.b16 %v2555, %v2554
        %v2577 = vpack.c.b16 %v2557, %v2556
        %v2578 = vpack.c.b16 %v2559, %v2558
        %v2579 = vpack.c.b16 %v2561, %v2560
        %v2580 = vpack.c.b16 %v2563, %v2562
        %v2581 = vpack.c.b16 %v2565, %v2564
        %2598 = vmatprep.subr.bf16.mxu0 0
        %2599 = vmatpush1.bf16.msra.mxu0 %v2566
        %2600 = vmatprep.subr.bf16.mxu0 0
        %2601 = vmatpush1.bf16.msra.mxu0 %v2567
        %2602 = vmatprep.subr.bf16.mxu0 0
        %2603 = vmatpush1.bf16.msra.mxu0 %v2568
        %2604 = vmatprep.subr.bf16.mxu0 0
        %2605 = vmatpush1.bf16.msra.mxu0 %v2569
        %2606 = vmatprep.subr.bf16.mxu0 0
        %2607 = vmatpush1.bf16.msra.mxu0 %v2570
        %2608 = vmatprep.subr.bf16.mxu0 0
        %2609 = vmatpush1.bf16.msra.mxu0 %v2571
        %2610 = vmatprep.subr.bf16.mxu0 0
        %2611 = vmatpush1.bf16.msra.mxu0 %v2572
        %2612 = vmatprep.subr.bf16.mxu0 0
        %2613 = vmatpush1.bf16.msra.mxu0 %v2573
        %2614 = vmatprep.subr.bf16.mxu0 0
        %2615 = vmatpush1.bf16.msra.mxu0 %v2574
        %2616 = vmatprep.subr.bf16.mxu0 0
        %2617 = vmatpush1.bf16.msra.mxu0 %v2575
        %2618 = vmatprep.subr.bf16.mxu0 0
        %2619 = vmatpush1.bf16.msra.mxu0 %v2576
        %2620 = vmatprep.subr.bf16.mxu0 0
        %2621 = vmatpush1.bf16.msra.mxu0 %v2577
        %2622 = vmatprep.subr.bf16.mxu0 0
        %2623 = vmatpush1.bf16.msra.mxu0 %v2578
        %2624 = vmatprep.subr.bf16.mxu0 0
        %2625 = vmatpush1.bf16.msra.mxu0 %v2579
        %2626 = vmatprep.subr.bf16.mxu0 0
        %2627 = vmatpush1.bf16.msra.mxu0 %v2580
        %2628 = vmatprep.subr.bf16.mxu0 0
        %2629 = vmatpush1.bf16.msra.mxu0 %v2581
        %2630 = vmatprep.mubr.bf16.mxu0 %v2475
        %2631 = vmatmul.mubr.bf16.gmra.mrb[0].mxu0 %v2472
        %v2632 = vpop.f32.mrb[0].mxu0
        %v2633 = vadd.f32 0.0, %v2632
        %v2634 = vpop.f32.mrb[0].mxu0
        %v2635 = vpop.f32.mrb[0].mxu0
        %v2636 = vadd.f32 0.0, %v2635
        %v2637 = vpop.f32.mrb[0].mxu0
        %2638 = vmatprep.mubr.bf16.mxu0 %v2479
        %2639 = vmatmul.mubr.bf16.gmra.mrb[0].mxu0 %v2477
        %v2640 = vpop.f32.mrb[0].mxu0
        %v2641 = vadd.f32 0.0, %v2640
        %v2642 = vpop.f32.mrb[0].mxu0
        %v2643 = vpop.f32.mrb[0].mxu0
        %v2644 = vadd.f32 0.0, %v2643
        %v2645 = vpop.f32.mrb[0].mxu0
        %2646 = vmatprep.mubr.bf16.mxu0 %v2483
        %2647 = vmatmul.mubr.bf16.gmra.mrb[0].mxu0 %v2481
        %v2648 = vpop.f32.mrb[0].mxu0
        %v2649 = vadd.f32 0.0, %v2648
        %v2650 = vpop.f32.mrb[0].mxu0
        %v2651 = vpop.f32.mrb[0].mxu0
        %v2652 = vadd.f32 0.0, %v2651
        %v2653 = vpop.f32.mrb[0].mxu0
        %2654 = vmatprep.mubr.bf16.mxu0 %v2487
        %2655 = vmatmul.mubr.bf16.gmra.mrb[0].mxu0 %v2485
        %v2656 = vpop.f32.mrb[0].mxu0
        %v2657 = vadd.f32 0.0, %v2656
        %v2658 = vpop.f32.mrb[0].mxu0
        %v2659 = vpop.f32.mrb[0].mxu0
        %v2660 = vadd.f32 0.0, %v2659
        %v2661 = vpop.f32.mrb[0].mxu0
        %2662 = vmatprep.mubr.bf16.mxu0 %v2491
        %2663 = vmatmul.mubr.bf16.gmra.mrb[0].mxu0 %v2489
        %v2664 = vpop.f32.mrb[0].mxu0
        %v2665 = vadd.f32 0.0, %v2664
        %v2666 = vpop.f32.mrb[0].mxu0
        %v2667 = vpop.f32.mrb[0].mxu0
        %v2668 = vadd.f32 0.0, %v2667
        %v2669 = vpop.f32.mrb[0].mxu0
        %2670 = vdwg.mxu0
        %v2671 = vadd.f32 %v2420, %v2633
        %v2672 = vadd.f32 %v2421, %v2636
        %v2673 = vadd.f32 %v2422, %v2641
        %v2674 = vadd.f32 %v2423, %v2644
        %v2675 = vadd.f32 %v2424, %v2649
        %v2676 = vadd.f32 %v2425, %v2652
        %v2677 = vadd.f32 %v2426, %v2657
        %v2678 = vadd.f32 %v2427, %v2660
        %v2679 = vadd.f32 %v2428, %v2665
        %v2680 = vadd.f32 %v2429, %v2668
        %v2682 = vlaneseq
        %v2683 = vshrl.u32 %v2682, 7
        %v2684 = vsub.s32 0, %v2683
        %v2685 = vrot.slane %v1447, %v2684
        %v2687 = vadd.f32 %v2671, %v2685
        %v2688 = vadd.f32 %v2672, %v2685
        %v2689 = vadd.f32 %v2673, %v2685
        %v2690 = vadd.f32 %v2674, %v2685
        %v2691 = vadd.f32 %v2675, %v2685
        %v2692 = vadd.f32 %v2676, %v2685
        %v2693 = vadd.f32 %v2677, %v2685
        %v2694 = vadd.f32 %v2678, %v2685
        %v2695 = vadd.f32 %v2679, %v2685
        %v2696 = vadd.f32 %v2680, %v2685
        %v2697 = vmax.f32 %v2687, 0.0
        %v2698 = vmax.f32 %v2688, 0.0
        %v2699 = vmax.f32 %v2689, 0.0
        %v2700 = vmax.f32 %v2690, 0.0
        %v2701 = vmax.f32 %v2691, 0.0
        %v2702 = vmax.f32 %v2692, 0.0
        %v2703 = vmax.f32 %v2693, 0.0
        %v2704 = vmax.f32 %v2694, 0.0
        %v2705 = vmax.f32 %v2695, 0.0
        %v2706 = vmax.f32 %v2696, 0.0
        %v2707 = vpack.c.bf16 %v2698, %v2697
        %v2708 = vpack.c.bf16 %v2700, %v2699
        %v2709 = vpack.c.bf16 %v2702, %v2701
        %v2710 = vpack.c.bf16 %v2704, %v2703
        %v2711 = vpack.c.bf16 %v2706, %v2705
        %v2717 = vunpack.c.l.b16 %v2707
        %v2718 = vunpack.c.h.b16 %v2707
        %v2719 = vunpack.c.l.b16 %v2708
        %v2720 = vunpack.c.h.b16 %v2708
        %v2721 = vunpack.c.l.b16 %v2709
        %v2722 = vunpack.c.h.b16 %v2709
        %v2723 = vunpack.c.l.b16 %v2710
        %v2724 = vunpack.c.h.b16 %v2710
        %v2725 = vunpack.c.l.b16 %v2711
        %v2726 = vunpack.c.h.b16 %v2711
        %v2727 = vpack.c.b16 %v2717, %v2717
        %v2728 = vpack.c.b16 %v2718, %v2718
        %v2729 = vpack.c.b16 %v2719, %v2719
        %v2730 = vpack.c.b16 %v2720, %v2720
        %v2731 = vpack.c.b16 %v2721, %v2721
        %v2732 = vpack.c.b16 %v2722, %v2722
        %v2733 = vpack.c.b16 %v2723, %v2723
        %v2734 = vpack.c.b16 %v2724, %v2724
        %v2735 = vpack.c.b16 %v2725, %v2725
        %v2736 = vpack.c.b16 %v2726, %v2726
        %2747 = vst [vmem:[#allocation3] sm:$0xf] %v2727
        %2748 = vst [vmem:[#allocation3 + $0x10] sm:$0xf] %v2728
        %2749 = vst [vmem:[#allocation3 + $0x20] sm:$0xf] %v2729
        %2750 = vst [vmem:[#allocation3 + $0x30] sm:$0xf] %v2730
        %2751 = vst [vmem:[#allocation3 + $0x40] sm:$0xf] %v2731
        %2752 = vst [vmem:[#allocation3 + $0x50] sm:$0xf] %v2732
        %2753 = vst [vmem:[#allocation3 + $0x60] sm:$0xf] %v2733
        %2754 = vst [vmem:[#allocation3 + $0x70] sm:$0xf] %v2734
        %2755 = vst [vmem:[#allocation3 + $0x80] sm:$0xf] %v2735
        %2756 = vst [vmem:[#allocation3 + $0x90] sm:$0xf] %v2736
        %v2757 = vld [vmem:[#allocation2 + $0x8] sm:$0xee]
        %v2758 = vld [vmem:[#allocation2 + $0x10] sm:$0xff]
        %v2759 = vld [vmem:[#allocation2 + $0x18] sm:$0xff]
        %v2760 = vld [vmem:[#allocation2 + $0x20] sm:$0xff]
        %v2761 = vld [vmem:[#allocation2 + $0x28] sm:$0xff]
        %v2762 = vld [vmem:[#allocation2 + $0x30] sm:$0xff]
        %v2763 = vld [vmem:[#allocation2 + $0x38] sm:$0xff]
        %v2764 = vld [vmem:[#allocation2 + $0x40] sm:$0xff]
        %v2765 = vld [vmem:[#allocation2 + $0x48] sm:$0xff]
        %v2766 = vld [vmem:[#allocation2 + $0x50] sm:$0xff]
        %v2767 = vld [vmem:[#allocation2 + $0x58] sm:$0x11]
        %s2768 = scalar_lea.vmem [#allocation4], 512
        %v2769 = vld [vmem:[%s2768] sm:$0xf]
        %v2770 = vld [vmem:[%s2768 + $0x4] sm:$0xf]
        %v2771 = vld [vmem:[%s2768 + $0x8] sm:$0xf]
        %v2772 = vld [vmem:[%s2768 + $0xc] sm:$0xf]
        %v2773 = vld [vmem:[%s2768 + $0x10] sm:$0xf]
        %v2774 = vld [vmem:[%s2768 + $0x14] sm:$0xf]
        %v2775 = vld [vmem:[%s2768 + $0x18] sm:$0xf]
        %v2776 = vld [vmem:[%s2768 + $0x1c] sm:$0xf]
        %v2777 = vld [vmem:[%s2768 + $0x20] sm:$0xf]
        %v2778 = vld [vmem:[%s2768 + $0x24] sm:$0xf]
        %v2779 = vld [vmem:[%s2768 + $0x28] sm:$0xf]
        %v2780 = vld [vmem:[%s2768 + $0x2c] sm:$0xf]
        %v2781 = vld [vmem:[%s2768 + $0x30] sm:$0xf]
        %v2782 = vld [vmem:[%s2768 + $0x34] sm:$0xf]
        %v2783 = vld [vmem:[%s2768 + $0x38] sm:$0xf]
        %v2784 = vld [vmem:[%s2768 + $0x3c] sm:$0xf]
        %v2785 = vld [vmem:[%s2768 + $0x40] sm:$0xf]
        %v2786 = vld [vmem:[%s2768 + $0x44] sm:$0xf]
        %v2787 = vld [vmem:[%s2768 + $0x48] sm:$0xf]
        %v2788 = vld [vmem:[%s2768 + $0x4c] sm:$0xf]
        %v2789 = vld [vmem:[%s2768 + $0x50] sm:$0xf]
        %v2790 = vld [vmem:[%s2768 + $0x54] sm:$0xf]
        %v2791 = vld [vmem:[%s2768 + $0x58] sm:$0xf]
        %v2792 = vld [vmem:[%s2768 + $0x5c] sm:$0xf]
        %v2793 = vld [vmem:[%s2768 + $0x60] sm:$0xf]
        %v2794 = vld [vmem:[%s2768 + $0x64] sm:$0xf]
        %v2795 = vld [vmem:[%s2768 + $0x68] sm:$0xf]
        %v2796 = vld [vmem:[%s2768 + $0x6c] sm:$0xf]
        %v2797 = vld [vmem:[%s2768 + $0x70] sm:$0xf]
        %v2798 = vld [vmem:[%s2768 + $0x74] sm:$0xf]
        %v2799 = vld [vmem:[%s2768 + $0x78] sm:$0xf]
        %v2800 = vld [vmem:[%s2768 + $0x7c] sm:$0xf]
        %v2801 = vld [vmem:[#allocation2 + $0x58] sm:$0x33]
        %s2802 = scalar_lea.vmem [#allocation4], 640
        %v2803 = vld [vmem:[%s2802] sm:$0xf]
        %v2804 = vld [vmem:[%s2802 + $0x4] sm:$0xf]
        %v2805 = vld [vmem:[%s2802 + $0x8] sm:$0xf]
        %v2806 = vld [vmem:[%s2802 + $0xc] sm:$0xf]
        %v2807 = vld [vmem:[%s2802 + $0x10] sm:$0xf]
        %v2808 = vld [vmem:[%s2802 + $0x14] sm:$0xf]
        %v2809 = vld [vmem:[%s2802 + $0x18] sm:$0xf]
        %v2810 = vld [vmem:[%s2802 + $0x1c] sm:$0xf]
        %v2811 = vld [vmem:[%s2802 + $0x20] sm:$0xf]
        %v2812 = vld [vmem:[%s2802 + $0x24] sm:$0xf]
        %v2813 = vld [vmem:[%s2802 + $0x28] sm:$0xf]
        %v2814 = vld [vmem:[%s2802 + $0x2c] sm:$0xf]
        %v2815 = vld [vmem:[%s2802 + $0x30] sm:$0xf]
        %v2816 = vld [vmem:[%s2802 + $0x34] sm:$0xf]
        %v2817 = vld [vmem:[%s2802 + $0x38] sm:$0xf]
        %v2818 = vld [vmem:[%s2802 + $0x3c] sm:$0xf]
        %v2819 = vld [vmem:[%s2802 + $0x40] sm:$0xf]
        %v2820 = vld [vmem:[%s2802 + $0x44] sm:$0xf]
        %v2821 = vld [vmem:[%s2802 + $0x48] sm:$0xf]
        %v2822 = vld [vmem:[%s2802 + $0x4c] sm:$0xf]
        %v2823 = vld [vmem:[%s2802 + $0x50] sm:$0xf]
        %v2824 = vld [vmem:[%s2802 + $0x54] sm:$0xf]
        %v2825 = vld [vmem:[%s2802 + $0x58] sm:$0xf]
        %v2826 = vld [vmem:[%s2802 + $0x5c] sm:$0xf]
        %v2827 = vld [vmem:[%s2802 + $0x60] sm:$0xf]
        %v2828 = vld [vmem:[%s2802 + $0x64] sm:$0xf]
        %v2829 = vld [vmem:[%s2802 + $0x68] sm:$0xf]
        %v2830 = vld [vmem:[%s2802 + $0x6c] sm:$0xf]
        %v2831 = vld [vmem:[%s2802 + $0x70] sm:$0xf]
        %v2832 = vld [vmem:[%s2802 + $0x74] sm:$0xf]
        %v2833 = vld [vmem:[%s2802 + $0x78] sm:$0xf]
        %v2834 = vld [vmem:[%s2802 + $0x7c] sm:$0xf]
        %v2846 = vunpack.c.l.b16 %v2757
        %v2847 = vunpack.c.h.b16 %v2757
        %v2848 = vunpack.c.l.b16 %v2758
        %v2849 = vunpack.c.h.b16 %v2758
        %v2850 = vunpack.c.l.b16 %v2759
        %v2851 = vunpack.c.h.b16 %v2759
        %v2852 = vunpack.c.l.b16 %v2760
        %v2853 = vunpack.c.h.b16 %v2760
        %v2854 = vunpack.c.l.b16 %v2761
        %v2855 = vunpack.c.h.b16 %v2761
        %v2856 = vunpack.c.l.b16 %v2762
        %v2857 = vunpack.c.h.b16 %v2762
        %v2858 = vunpack.c.l.b16 %v2763
        %v2859 = vunpack.c.h.b16 %v2763
        %v2860 = vunpack.c.l.b16 %v2764
        %v2861 = vunpack.c.h.b16 %v2764
        %v2862 = vunpack.c.l.b16 %v2765
        %v2863 = vunpack.c.h.b16 %v2765
        %v2864 = vunpack.c.l.b16 %v2766
        %v2865 = vunpack.c.h.b16 %v2766
        %v2866 = vunpack.c.l.b16 %v2801
        %v2867 = vunpack.c.h.b16 %v2801
        %v2868 = vpack.c.b16 %v2848, %v2846
        %v2869 = vpack.c.b16 %v2849, %v2847
        %v2870 = vpack.c.b16 %v2852, %v2850
        %v2871 = vpack.c.b16 %v2853, %v2851
        %v2872 = vpack.c.b16 %v2856, %v2854
        %v2873 = vpack.c.b16 %v2857, %v2855
        %v2874 = vpack.c.b16 %v2860, %v2858
        %v2875 = vpack.c.b16 %v2861, %v2859
        %v2876 = vpack.c.b16 %v2864, %v2862
        %v2877 = vpack.c.b16 %v2865, %v2863
        %v2878 = vpack.c.b16 %v2866, %v2866
        %v2879 = vpack.c.b16 %v2867, %v2867
        %v2881 = vshrl.u32 %v2868, 16
        %v2883 = vrot.slane %v2881, 1
        %v2884 = vshll.u32 %v2868, 16
        %v2886 = vrot.slane %v2884, 2
        %v2887 = vor.u32 %v2883, %v2886
        %v2889 = vshrl.u32 %v2870, 16
        %v2891 = vrot.slane %v2889, 1
        %v2892 = vshll.u32 %v2870, 16
        %v2894 = vrot.slane %v2892, 2
        %v2895 = vor.u32 %v2891, %v2894
        %v2896 = vsel %vm2134, %v2887, %v2895
        %v2898 = vshrl.u32 %v2869, 16
        %v2900 = vrot.slane %v2898, 1
        %v2901 = vshll.u32 %v2869, 16
        %v2903 = vrot.slane %v2901, 2
        %v2904 = vor.u32 %v2900, %v2903
        %v2906 = vshrl.u32 %v2871, 16
        %v2908 = vrot.slane %v2906, 1
        %v2909 = vshll.u32 %v2871, 16
        %v2911 = vrot.slane %v2909, 2
        %v2912 = vor.u32 %v2908, %v2911
        %v2913 = vsel %vm2134, %v2904, %v2912
        %v2915 = vshrl.u32 %v2872, 16
        %v2917 = vrot.slane %v2915, 1
        %v2918 = vshll.u32 %v2872, 16
        %v2920 = vrot.slane %v2918, 2
        %v2921 = vor.u32 %v2917, %v2920
        %v2922 = vsel %vm2134, %v2895, %v2921
        %v2924 = vshrl.u32 %v2873, 16
        %v2926 = vrot.slane %v2924, 1
        %v2927 = vshll.u32 %v2873, 16
        %v2929 = vrot.slane %v2927, 2
        %v2930 = vor.u32 %v2926, %v2929
        %v2931 = vsel %vm2134, %v2912, %v2930
        %v2933 = vshrl.u32 %v2874, 16
        %v2935 = vrot.slane %v2933, 1
        %v2936 = vshll.u32 %v2874, 16
        %v2938 = vrot.slane %v2936, 2
        %v2939 = vor.u32 %v2935, %v2938
        %v2940 = vsel %vm2134, %v2921, %v2939
        %v2942 = vshrl.u32 %v2875, 16
        %v2944 = vrot.slane %v2942, 1
        %v2945 = vshll.u32 %v2875, 16
        %v2947 = vrot.slane %v2945, 2
        %v2948 = vor.u32 %v2944, %v2947
        %v2949 = vsel %vm2134, %v2930, %v2948
        %v2951 = vshrl.u32 %v2876, 16
        %v2953 = vrot.slane %v2951, 1
        %v2954 = vshll.u32 %v2876, 16
        %v2956 = vrot.slane %v2954, 2
        %v2957 = vor.u32 %v2953, %v2956
        %v2958 = vsel %vm2134, %v2939, %v2957
        %v2960 = vshrl.u32 %v2877, 16
        %v2962 = vrot.slane %v2960, 1
        %v2963 = vshll.u32 %v2877, 16
        %v2965 = vrot.slane %v2963, 2
        %v2966 = vor.u32 %v2962, %v2965
        %v2967 = vsel %vm2134, %v2948, %v2966
        %v2969 = vshrl.u32 %v2878, 16
        %v2971 = vrot.slane %v2969, 1
        %v2972 = vshll.u32 %v2878, 16
        %v2974 = vrot.slane %v2972, 2
        %v2975 = vor.u32 %v2971, %v2974
        %v2976 = vsel %vm2134, %v2957, %v2975
        %v2978 = vshrl.u32 %v2879, 16
        %v2980 = vrot.slane %v2978, 1
        %v2981 = vshll.u32 %v2879, 16
        %v2983 = vrot.slane %v2981, 2
        %v2984 = vor.u32 %v2980, %v2983
        %v2985 = vsel %vm2134, %v2966, %v2984
        %v3028 = vunpack.c.l.b16 %v2803
        %v3029 = vunpack.c.l.b16 %v2804
        %v3030 = vunpack.c.l.b16 %v2805
        %v3031 = vunpack.c.l.b16 %v2806
        %v3032 = vunpack.c.l.b16 %v2807
        %v3033 = vunpack.c.l.b16 %v2808
        %v3034 = vunpack.c.l.b16 %v2809
        %v3035 = vunpack.c.l.b16 %v2810
        %v3036 = vunpack.c.l.b16 %v2811
        %v3037 = vunpack.c.l.b16 %v2812
        %v3038 = vunpack.c.l.b16 %v2813
        %v3039 = vunpack.c.l.b16 %v2814
        %v3040 = vunpack.c.l.b16 %v2815
        %v3041 = vunpack.c.l.b16 %v2816
        %v3042 = vunpack.c.l.b16 %v2817
        %v3043 = vunpack.c.l.b16 %v2818
        %v3044 = vunpack.c.l.b16 %v2819
        %v3045 = vunpack.c.l.b16 %v2820
        %v3046 = vunpack.c.l.b16 %v2821
        %v3047 = vunpack.c.l.b16 %v2822
        %v3048 = vunpack.c.l.b16 %v2823
        %v3049 = vunpack.c.l.b16 %v2824
        %v3050 = vunpack.c.l.b16 %v2825
        %v3051 = vunpack.c.l.b16 %v2826
        %v3052 = vunpack.c.l.b16 %v2827
        %v3053 = vunpack.c.l.b16 %v2828
        %v3054 = vunpack.c.l.b16 %v2829
        %v3055 = vunpack.c.l.b16 %v2830
        %v3056 = vunpack.c.l.b16 %v2831
        %v3057 = vunpack.c.l.b16 %v2832
        %v3058 = vunpack.c.l.b16 %v2833
        %v3059 = vunpack.c.l.b16 %v2834
        %v3060 = vpack.c.b16 %v3029, %v3028
        %v3061 = vpack.c.b16 %v3031, %v3030
        %v3062 = vpack.c.b16 %v3033, %v3032
        %v3063 = vpack.c.b16 %v3035, %v3034
        %v3064 = vpack.c.b16 %v3037, %v3036
        %v3065 = vpack.c.b16 %v3039, %v3038
        %v3066 = vpack.c.b16 %v3041, %v3040
        %v3067 = vpack.c.b16 %v3043, %v3042
        %v3068 = vpack.c.b16 %v3045, %v3044
        %v3069 = vpack.c.b16 %v3047, %v3046
        %v3070 = vpack.c.b16 %v3049, %v3048
        %v3071 = vpack.c.b16 %v3051, %v3050
        %v3072 = vpack.c.b16 %v3053, %v3052
        %v3073 = vpack.c.b16 %v3055, %v3054
        %v3074 = vpack.c.b16 %v3057, %v3056
        %v3075 = vpack.c.b16 %v3059, %v3058
        %3092 = vmatprep.subr.bf16.mxu0 0
        %3093 = vmatpush1.bf16.msra.mxu0 %v3060
        %3094 = vmatprep.subr.bf16.mxu0 0
        %3095 = vmatpush1.bf16.msra.mxu0 %v3061
        %3096 = vmatprep.subr.bf16.mxu0 0
        %3097 = vmatpush1.bf16.msra.mxu0 %v3062
        %3098 = vmatprep.subr.bf16.mxu0 0
        %3099 = vmatpush1.bf16.msra.mxu0 %v3063
        %3100 = vmatprep.subr.bf16.mxu0 0
        %3101 = vmatpush1.bf16.msra.mxu0 %v3064
        %3102 = vmatprep.subr.bf16.mxu0 0
        %3103 = vmatpush1.bf16.msra.mxu0 %v3065
        %3104 = vmatprep.subr.bf16.mxu0 0
        %3105 = vmatpush1.bf16.msra.mxu0 %v3066
        %3106 = vmatprep.subr.bf16.mxu0 0
        %3107 = vmatpush1.bf16.msra.mxu0 %v3067
        %3108 = vmatprep.subr.bf16.mxu0 0
        %3109 = vmatpush1.bf16.msra.mxu0 %v3068
        %3110 = vmatprep.subr.bf16.mxu0 0
        %3111 = vmatpush1.bf16.msra.mxu0 %v3069
        %3112 = vmatprep.subr.bf16.mxu0 0
        %3113 = vmatpush1.bf16.msra.mxu0 %v3070
        %3114 = vmatprep.subr.bf16.mxu0 0
        %3115 = vmatpush1.bf16.msra.mxu0 %v3071
        %3116 = vmatprep.subr.bf16.mxu0 0
        %3117 = vmatpush1.bf16.msra.mxu0 %v3072
        %3118 = vmatprep.subr.bf16.mxu0 0
        %3119 = vmatpush1.bf16.msra.mxu0 %v3073
        %3120 = vmatprep.subr.bf16.mxu0 0
        %3121 = vmatpush1.bf16.msra.mxu0 %v3074
        %3122 = vmatprep.subr.bf16.mxu0 0
        %3123 = vmatpush1.bf16.msra.mxu0 %v3075
        %3124 = vmatprep.mubr.bf16.mxu0 %v2913
        %3125 = vmatmul.mubr.bf16.gmra.mrb[0].mxu0 %v2896
        %v3126 = vpop.f32.mrb[0].mxu0
        %v3127 = vadd.f32 0.0, %v3126
        %v3128 = vpop.f32.mrb[0].mxu0
        %v3129 = vpop.f32.mrb[0].mxu0
        %v3130 = vadd.f32 0.0, %v3129
        %v3131 = vpop.f32.mrb[0].mxu0
        %3132 = vmatprep.mubr.bf16.mxu0 %v2931
        %3133 = vmatmul.mubr.bf16.gmra.mrb[0].mxu0 %v2922
        %v3134 = vpop.f32.mrb[0].mxu0
        %v3135 = vadd.f32 0.0, %v3134
        %v3136 = vpop.f32.mrb[0].mxu0
        %v3137 = vpop.f32.mrb[0].mxu0
        %v3138 = vadd.f32 0.0, %v3137
        %v3139 = vpop.f32.mrb[0].mxu0
        %3140 = vmatprep.mubr.bf16.mxu0 %v2949
        %3141 = vmatmul.mubr.bf16.gmra.mrb[0].mxu0 %v2940
        %v3142 = vpop.f32.mrb[0].mxu0
        %v3143 = vadd.f32 0.0, %v3142
        %v3144 = vpop.f32.mrb[0].mxu0
        %v3145 = vpop.f32.mrb[0].mxu0
        %v3146 = vadd.f32 0.0, %v3145
        %v3147 = vpop.f32.mrb[0].mxu0
        %3148 = vmatprep.mubr.bf16.mxu0 %v2967
        %3149 = vmatmul.mubr.bf16.gmra.mrb[0].mxu0 %v2958
        %v3150 = vpop.f32.mrb[0].mxu0
        %v3151 = vadd.f32 0.0, %v3150
        %v3152 = vpop.f32.mrb[0].mxu0
        %v3153 = vpop.f32.mrb[0].mxu0
        %v3154 = vadd.f32 0.0, %v3153
        %v3155 = vpop.f32.mrb[0].mxu0
        %3156 = vmatprep.mubr.bf16.mxu0 %v2985
        %3157 = vmatmul.mubr.bf16.gmra.mrb[0].mxu0 %v2976
        %v3158 = vpop.f32.mrb[0].mxu0
        %v3159 = vadd.f32 0.0, %v3158
        %v3160 = vpop.f32.mrb[0].mxu0
        %v3161 = vpop.f32.mrb[0].mxu0
        %v3162 = vadd.f32 0.0, %v3161
        %v3163 = vpop.f32.mrb[0].mxu0
        %3164 = vdwg.mxu0
        %v3166 = vunpack.c.l.b16 %v2767
        %v3167 = vunpack.c.h.b16 %v2767
        %v3168 = vpack.c.b16 %v3166, %v3166
        %v3169 = vpack.c.b16 %v3167, %v3167
        %v3170 = vrot.slane %v2868, 1
        %v3171 = vrot.slane %v2870, 1
        %v3172 = vsel %vm1570, %v3170, %v3171
        %v3173 = vrot.slane %v2869, 1
        %v3174 = vrot.slane %v2871, 1
        %v3175 = vsel %vm1570, %v3173, %v3174
        %v3176 = vrot.slane %v2872, 1
        %v3177 = vsel %vm1570, %v3171, %v3176
        %v3178 = vrot.slane %v2873, 1
        %v3179 = vsel %vm1570, %v3174, %v3178
        %v3180 = vrot.slane %v2874, 1
        %v3181 = vsel %vm1570, %v3176, %v3180
        %v3182 = vrot.slane %v2875, 1
        %v3183 = vsel %vm1570, %v3178, %v3182
        %v3184 = vrot.slane %v2876, 1
        %v3185 = vsel %vm1570, %v3180, %v3184
        %v3186 = vrot.slane %v2877, 1
        %v3187 = vsel %vm1570, %v3182, %v3186
        %v3188 = vrot.slane %v3168, 1
        %v3189 = vsel %vm1570, %v3184, %v3188
        %v3190 = vrot.slane %v3169, 1
        %v3191 = vsel %vm1570, %v3186, %v3190
        %v3234 = vunpack.c.l.b16 %v2769
        %v3235 = vunpack.c.l.b16 %v2770
        %v3236 = vunpack.c.l.b16 %v2771
        %v3237 = vunpack.c.l.b16 %v2772
        %v3238 = vunpack.c.l.b16 %v2773
        %v3239 = vunpack.c.l.b16 %v2774
        %v3240 = vunpack.c.l.b16 %v2775
        %v3241 = vunpack.c.l.b16 %v2776
        %v3242 = vunpack.c.l.b16 %v2777
        %v3243 = vunpack.c.l.b16 %v2778
        %v3244 = vunpack.c.l.b16 %v2779
        %v3245 = vunpack.c.l.b16 %v2780
        %v3246 = vunpack.c.l.b16 %v2781
        %v3247 = vunpack.c.l.b16 %v2782
        %v3248 = vunpack.c.l.b16 %v2783
        %v3249 = vunpack.c.l.b16 %v2784
        %v3250 = vunpack.c.l.b16 %v2785
        %v3251 = vunpack.c.l.b16 %v2786
        %v3252 = vunpack.c.l.b16 %v2787
        %v3253 = vunpack.c.l.b16 %v2788
        %v3254 = vunpack.c.l.b16 %v2789
        %v3255 = vunpack.c.l.b16 %v2790
        %v3256 = vunpack.c.l.b16 %v2791
        %v3257 = vunpack.c.l.b16 %v2792
        %v3258 = vunpack.c.l.b16 %v2793
        %v3259 = vunpack.c.l.b16 %v2794
        %v3260 = vunpack.c.l.b16 %v2795
        %v3261 = vunpack.c.l.b16 %v2796
        %v3262 = vunpack.c.l.b16 %v2797
        %v3263 = vunpack.c.l.b16 %v2798
        %v3264 = vunpack.c.l.b16 %v2799
        %v3265 = vunpack.c.l.b16 %v2800
        %v3266 = vpack.c.b16 %v3235, %v3234
        %v3267 = vpack.c.b16 %v3237, %v3236
        %v3268 = vpack.c.b16 %v3239, %v3238
        %v3269 = vpack.c.b16 %v3241, %v3240
        %v3270 = vpack.c.b16 %v3243, %v3242
        %v3271 = vpack.c.b16 %v3245, %v3244
        %v3272 = vpack.c.b16 %v3247, %v3246
        %v3273 = vpack.c.b16 %v3249, %v3248
        %v3274 = vpack.c.b16 %v3251, %v3250
        %v3275 = vpack.c.b16 %v3253, %v3252
        %v3276 = vpack.c.b16 %v3255, %v3254
        %v3277 = vpack.c.b16 %v3257, %v3256
        %v3278 = vpack.c.b16 %v3259, %v3258
        %v3279 = vpack.c.b16 %v3261, %v3260
        %v3280 = vpack.c.b16 %v3263, %v3262
        %v3281 = vpack.c.b16 %v3265, %v3264
        %3298 = vmatprep.subr.bf16.mxu0 0
        %3299 = vmatpush1.bf16.msra.mxu0 %v3266
        %3300 = vmatprep.subr.bf16.mxu0 0
        %3301 = vmatpush1.bf16.msra.mxu0 %v3267
        %3302 = vmatprep.subr.bf16.mxu0 0
        %3303 = vmatpush1.bf16.msra.mxu0 %v3268
        %3304 = vmatprep.subr.bf16.mxu0 0
        %3305 = vmatpush1.bf16.msra.mxu0 %v3269
        %3306 = vmatprep.subr.bf16.mxu0 0
        %3307 = vmatpush1.bf16.msra.mxu0 %v3270
        %3308 = vmatprep.subr.bf16.mxu0 0
        %3309 = vmatpush1.bf16.msra.mxu0 %v3271
        %3310 = vmatprep.subr.bf16.mxu0 0
        %3311 = vmatpush1.bf16.msra.mxu0 %v3272
        %3312 = vmatprep.subr.bf16.mxu0 0
        %3313 = vmatpush1.bf16.msra.mxu0 %v3273
        %3314 = vmatprep.subr.bf16.mxu0 0
        %3315 = vmatpush1.bf16.msra.mxu0 %v3274
        %3316 = vmatprep.subr.bf16.mxu0 0
        %3317 = vmatpush1.bf16.msra.mxu0 %v3275
        %3318 = vmatprep.subr.bf16.mxu0 0
        %3319 = vmatpush1.bf16.msra.mxu0 %v3276
        %3320 = vmatprep.subr.bf16.mxu0 0
        %3321 = vmatpush1.bf16.msra.mxu0 %v3277
        %3322 = vmatprep.subr.bf16.mxu0 0
        %3323 = vmatpush1.bf16.msra.mxu0 %v3278
        %3324 = vmatprep.subr.bf16.mxu0 0
        %3325 = vmatpush1.bf16.msra.mxu0 %v3279
        %3326 = vmatprep.subr.bf16.mxu0 0
        %3327 = vmatpush1.bf16.msra.mxu0 %v3280
        %3328 = vmatprep.subr.bf16.mxu0 0
        %3329 = vmatpush1.bf16.msra.mxu0 %v3281
        %3330 = vmatprep.mubr.bf16.mxu0 %v3175
        %3331 = vmatmul.mubr.bf16.gmra.mrb[0].mxu0 %v3172
        %v3332 = vpop.f32.mrb[0].mxu0
        %v3333 = vadd.f32 %v3127, %v3332
        %v3334 = vpop.f32.mrb[0].mxu0
        %v3335 = vpop.f32.mrb[0].mxu0
        %v3336 = vadd.f32 %v3130, %v3335
        %v3337 = vpop.f32.mrb[0].mxu0
        %3338 = vmatprep.mubr.bf16.mxu0 %v3179
        %3339 = vmatmul.mubr.bf16.gmra.mrb[0].mxu0 %v3177
        %v3340 = vpop.f32.mrb[0].mxu0
        %v3341 = vadd.f32 %v3135, %v3340
        %v3342 = vpop.f32.mrb[0].mxu0
        %v3343 = vpop.f32.mrb[0].mxu0
        %v3344 = vadd.f32 %v3138, %v3343
        %v3345 = vpop.f32.mrb[0].mxu0
        %3346 = vmatprep.mubr.bf16.mxu0 %v3183
        %3347 = vmatmul.mubr.bf16.gmra.mrb[0].mxu0 %v3181
        %v3348 = vpop.f32.mrb[0].mxu0
        %v3349 = vadd.f32 %v3143, %v3348
        %v3350 = vpop.f32.mrb[0].mxu0
        %v3351 = vpop.f32.mrb[0].mxu0
        %v3352 = vadd.f32 %v3146, %v3351
        %v3353 = vpop.f32.mrb[0].mxu0
        %3354 = vmatprep.mubr.bf16.mxu0 %v3187
        %3355 = vmatmul.mubr.bf16.gmra.mrb[0].mxu0 %v3185
        %v3356 = vpop.f32.mrb[0].mxu0
        %v3357 = vadd.f32 %v3151, %v3356
        %v3358 = vpop.f32.mrb[0].mxu0
        %v3359 = vpop.f32.mrb[0].mxu0
        %v3360 = vadd.f32 %v3154, %v3359
        %v3361 = vpop.f32.mrb[0].mxu0
        %3362 = vmatprep.mubr.bf16.mxu0 %v3191
        %3363 = vmatmul.mubr.bf16.gmra.mrb[0].mxu0 %v3189
        %v3364 = vpop.f32.mrb[0].mxu0
        %v3365 = vadd.f32 %v3159, %v3364
        %v3366 = vpop.f32.mrb[0].mxu0
        %v3367 = vpop.f32.mrb[0].mxu0
        %v3368 = vadd.f32 %v3162, %v3367
        %v3369 = vpop.f32.mrb[0].mxu0
        %3370 = vdwg.mxu0
        %v3371 = vld [vmem:[#allocation2 + $0x10] sm:$0xcc]
        %v3372 = vld [vmem:[#allocation2 + $0x18] sm:$0xff]
        %v3373 = vld [vmem:[#allocation2 + $0x20] sm:$0xff]
        %v3374 = vld [vmem:[#allocation2 + $0x28] sm:$0xff]
        %v3375 = vld [vmem:[#allocation2 + $0x30] sm:$0xff]
        %v3376 = vld [vmem:[#allocation2 + $0x38] sm:$0xff]
        %v3377 = vld [vmem:[#allocation2 + $0x40] sm:$0xff]
        %v3378 = vld [vmem:[#allocation2 + $0x48] sm:$0xff]
        %v3379 = vld [vmem:[#allocation2 + $0x50] sm:$0xff]
        %v3380 = vld [vmem:[#allocation2 + $0x58] sm:$0xff]
        %v3381 = vld [vmem:[#allocation2 + $0x60] sm:$0x33]
        %s3382 = scalar_lea.vmem [#allocation4], 768
        %v3383 = vld [vmem:[%s3382] sm:$0xf]
        %v3384 = vld [vmem:[%s3382 + $0x4] sm:$0xf]
        %v3385 = vld [vmem:[%s3382 + $0x8] sm:$0xf]
        %v3386 = vld [vmem:[%s3382 + $0xc] sm:$0xf]
        %v3387 = vld [vmem:[%s3382 + $0x10] sm:$0xf]
        %v3388 = vld [vmem:[%s3382 + $0x14] sm:$0xf]
        %v3389 = vld [vmem:[%s3382 + $0x18] sm:$0xf]
        %v3390 = vld [vmem:[%s3382 + $0x1c] sm:$0xf]
        %v3391 = vld [vmem:[%s3382 + $0x20] sm:$0xf]
        %v3392 = vld [vmem:[%s3382 + $0x24] sm:$0xf]
        %v3393 = vld [vmem:[%s3382 + $0x28] sm:$0xf]
        %v3394 = vld [vmem:[%s3382 + $0x2c] sm:$0xf]
        %v3395 = vld [vmem:[%s3382 + $0x30] sm:$0xf]
        %v3396 = vld [vmem:[%s3382 + $0x34] sm:$0xf]
        %v3397 = vld [vmem:[%s3382 + $0x38] sm:$0xf]
        %v3398 = vld [vmem:[%s3382 + $0x3c] sm:$0xf]
        %v3399 = vld [vmem:[%s3382 + $0x40] sm:$0xf]
        %v3400 = vld [vmem:[%s3382 + $0x44] sm:$0xf]
        %v3401 = vld [vmem:[%s3382 + $0x48] sm:$0xf]
        %v3402 = vld [vmem:[%s3382 + $0x4c] sm:$0xf]
        %v3403 = vld [vmem:[%s3382 + $0x50] sm:$0xf]
        %v3404 = vld [vmem:[%s3382 + $0x54] sm:$0xf]
        %v3405 = vld [vmem:[%s3382 + $0x58] sm:$0xf]
        %v3406 = vld [vmem:[%s3382 + $0x5c] sm:$0xf]
        %v3407 = vld [vmem:[%s3382 + $0x60] sm:$0xf]
        %v3408 = vld [vmem:[%s3382 + $0x64] sm:$0xf]
        %v3409 = vld [vmem:[%s3382 + $0x68] sm:$0xf]
        %v3410 = vld [vmem:[%s3382 + $0x6c] sm:$0xf]
        %v3411 = vld [vmem:[%s3382 + $0x70] sm:$0xf]
        %v3412 = vld [vmem:[%s3382 + $0x74] sm:$0xf]
        %v3413 = vld [vmem:[%s3382 + $0x78] sm:$0xf]
        %v3414 = vld [vmem:[%s3382 + $0x7c] sm:$0xf]
        %v3426 = vunpack.c.l.b16 %v3371
        %v3427 = vunpack.c.h.b16 %v3371
        %v3428 = vunpack.c.l.b16 %v3372
        %v3429 = vunpack.c.h.b16 %v3372
        %v3430 = vunpack.c.l.b16 %v3373
        %v3431 = vunpack.c.h.b16 %v3373
        %v3432 = vunpack.c.l.b16 %v3374
        %v3433 = vunpack.c.h.b16 %v3374
        %v3434 = vunpack.c.l.b16 %v3375
        %v3435 = vunpack.c.h.b16 %v3375
        %v3436 = vunpack.c.l.b16 %v3376
        %v3437 = vunpack.c.h.b16 %v3376
        %v3438 = vunpack.c.l.b16 %v3377
        %v3439 = vunpack.c.h.b16 %v3377
        %v3440 = vunpack.c.l.b16 %v3378
        %v3441 = vunpack.c.h.b16 %v3378
        %v3442 = vunpack.c.l.b16 %v3379
        %v3443 = vunpack.c.h.b16 %v3379
        %v3444 = vunpack.c.l.b16 %v3380
        %v3445 = vunpack.c.h.b16 %v3380
        %v3446 = vunpack.c.l.b16 %v3381
        %v3447 = vunpack.c.h.b16 %v3381
        %v3448 = vpack.c.b16 %v3428, %v3426
        %v3449 = vpack.c.b16 %v3429, %v3427
        %v3450 = vpack.c.b16 %v3432, %v3430
        %v3451 = vpack.c.b16 %v3433, %v3431
        %v3452 = vpack.c.b16 %v3436, %v3434
        %v3453 = vpack.c.b16 %v3437, %v3435
        %v3454 = vpack.c.b16 %v3440, %v3438
        %v3455 = vpack.c.b16 %v3441, %v3439
        %v3456 = vpack.c.b16 %v3444, %v3442
        %v3457 = vpack.c.b16 %v3445, %v3443
        %v3458 = vpack.c.b16 %v3446, %v3446
        %v3459 = vpack.c.b16 %v3447, %v3447
        %v3460 = vrot.slane %v3448, 2
        %v3461 = vrot.slane %v3450, 2
        %v3462 = vsel %vm2469, %v3460, %v3461
        %v3463 = vrot.slane %v3449, 2
        %v3464 = vrot.slane %v3451, 2
        %v3465 = vsel %vm2469, %v3463, %v3464
        %v3466 = vrot.slane %v3452, 2
        %v3467 = vsel %vm2469, %v3461, %v3466
        %v3468 = vrot.slane %v3453, 2
        %v3469 = vsel %vm2469, %v3464, %v3468
        %v3470 = vrot.slane %v3454, 2
        %v3471 = vsel %vm2469, %v3466, %v3470
        %v3472 = vrot.slane %v3455, 2
        %v3473 = vsel %vm2469, %v3468, %v3472
        %v3474 = vrot.slane %v3456, 2
        %v3475 = vsel %vm2469, %v3470, %v3474
        %v3476 = vrot.slane %v3457, 2
        %v3477 = vsel %vm2469, %v3472, %v3476
        %v3478 = vrot.slane %v3458, 2
        %v3479 = vsel %vm2469, %v3474, %v3478
        %v3480 = vrot.slane %v3459, 2
        %v3481 = vsel %vm2469, %v3476, %v3480
        %v3524 = vunpack.c.l.b16 %v3383
        %v3525 = vunpack.c.l.b16 %v3384
        %v3526 = vunpack.c.l.b16 %v3385
        %v3527 = vunpack.c.l.b16 %v3386
        %v3528 = vunpack.c.l.b16 %v3387
        %v3529 = vunpack.c.l.b16 %v3388
        %v3530 = vunpack.c.l.b16 %v3389
        %v3531 = vunpack.c.l.b16 %v3390
        %v3532 = vunpack.c.l.b16 %v3391
        %v3533 = vunpack.c.l.b16 %v3392
        %v3534 = vunpack.c.l.b16 %v3393
        %v3535 = vunpack.c.l.b16 %v3394
        %v3536 = vunpack.c.l.b16 %v3395
        %v3537 = vunpack.c.l.b16 %v3396
        %v3538 = vunpack.c.l.b16 %v3397
        %v3539 = vunpack.c.l.b16 %v3398
        %v3540 = vunpack.c.l.b16 %v3399
        %v3541 = vunpack.c.l.b16 %v3400
        %v3542 = vunpack.c.l.b16 %v3401
        %v3543 = vunpack.c.l.b16 %v3402
        %v3544 = vunpack.c.l.b16 %v3403
        %v3545 = vunpack.c.l.b16 %v3404
        %v3546 = vunpack.c.l.b16 %v3405
        %v3547 = vunpack.c.l.b16 %v3406
        %v3548 = vunpack.c.l.b16 %v3407
        %v3549 = vunpack.c.l.b16 %v3408
        %v3550 = vunpack.c.l.b16 %v3409
        %v3551 = vunpack.c.l.b16 %v3410
        %v3552 = vunpack.c.l.b16 %v3411
        %v3553 = vunpack.c.l.b16 %v3412
        %v3554 = vunpack.c.l.b16 %v3413
        %v3555 = vunpack.c.l.b16 %v3414
        %v3556 = vpack.c.b16 %v3525, %v3524
        %v3557 = vpack.c.b16 %v3527, %v3526
        %v3558 = vpack.c.b16 %v3529, %v3528
        %v3559 = vpack.c.b16 %v3531, %v3530
        %v3560 = vpack.c.b16 %v3533, %v3532
        %v3561 = vpack.c.b16 %v3535, %v3534
        %v3562 = vpack.c.b16 %v3537, %v3536
        %v3563 = vpack.c.b16 %v3539, %v3538
        %v3564 = vpack.c.b16 %v3541, %v3540
        %v3565 = vpack.c.b16 %v3543, %v3542
        %v3566 = vpack.c.b16 %v3545, %v3544
        %v3567 = vpack.c.b16 %v3547, %v3546
        %v3568 = vpack.c.b16 %v3549, %v3548
        %v3569 = vpack.c.b16 %v3551, %v3550
        %v3570 = vpack.c.b16 %v3553, %v3552
        %v3571 = vpack.c.b16 %v3555, %v3554
        %3588 = vmatprep.subr.bf16.mxu0 0
        %3589 = vmatpush1.bf16.msra.mxu0 %v3556
        %3590 = vmatprep.subr.bf16.mxu0 0
        %3591 = vmatpush1.bf16.msra.mxu0 %v3557
        %3592 = vmatprep.subr.bf16.mxu0 0
        %3593 = vmatpush1.bf16.msra.mxu0 %v3558
        %3594 = vmatprep.subr.bf16.mxu0 0
        %3595 = vmatpush1.bf16.msra.mxu0 %v3559
        %3596 = vmatprep.subr.bf16.mxu0 0
        %3597 = vmatpush1.bf16.msra.mxu0 %v3560
        %3598 = vmatprep.subr.bf16.mxu0 0
        %3599 = vmatpush1.bf16.msra.mxu0 %v3561
        %3600 = vmatprep.subr.bf16.mxu0 0
        %3601 = vmatpush1.bf16.msra.mxu0 %v3562
        %3602 = vmatprep.subr.bf16.mxu0 0
        %3603 = vmatpush1.bf16.msra.mxu0 %v3563
        %3604 = vmatprep.subr.bf16.mxu0 0
        %3605 = vmatpush1.bf16.msra.mxu0 %v3564
        %3606 = vmatprep.subr.bf16.mxu0 0
        %3607 = vmatpush1.bf16.msra.mxu0 %v3565
        %3608 = vmatprep.subr.bf16.mxu0 0
        %3609 = vmatpush1.bf16.msra.mxu0 %v3566
        %3610 = vmatprep.subr.bf16.mxu0 0
        %3611 = vmatpush1.bf16.msra.mxu0 %v3567
        %3612 = vmatprep.subr.bf16.mxu0 0
        %3613 = vmatpush1.bf16.msra.mxu0 %v3568
        %3614 = vmatprep.subr.bf16.mxu0 0
        %3615 = vmatpush1.bf16.msra.mxu0 %v3569
        %3616 = vmatprep.subr.bf16.mxu0 0
        %3617 = vmatpush1.bf16.msra.mxu0 %v3570
        %3618 = vmatprep.subr.bf16.mxu0 0
        %3619 = vmatpush1.bf16.msra.mxu0 %v3571
        %3620 = vmatprep.mubr.bf16.mxu0 %v3465
        %3621 = vmatmul.mubr.bf16.gmra.mrb[0].mxu0 %v3462
        %v3622 = vpop.f32.mrb[0].mxu0
        %v3623 = vadd.f32 0.0, %v3622
        %v3624 = vpop.f32.mrb[0].mxu0
        %v3625 = vpop.f32.mrb[0].mxu0
        %v3626 = vadd.f32 0.0, %v3625
        %v3627 = vpop.f32.mrb[0].mxu0
        %3628 = vmatprep.mubr.bf16.mxu0 %v3469
        %3629 = vmatmul.mubr.bf16.gmra.mrb[0].mxu0 %v3467
        %v3630 = vpop.f32.mrb[0].mxu0
        %v3631 = vadd.f32 0.0, %v3630
        %v3632 = vpop.f32.mrb[0].mxu0
        %v3633 = vpop.f32.mrb[0].mxu0
        %v3634 = vadd.f32 0.0, %v3633
        %v3635 = vpop.f32.mrb[0].mxu0
        %3636 = vmatprep.mubr.bf16.mxu0 %v3473
        %3637 = vmatmul.mubr.bf16.gmra.mrb[0].mxu0 %v3471
        %v3638 = vpop.f32.mrb[0].mxu0
        %v3639 = vadd.f32 0.0, %v3638
        %v3640 = vpop.f32.mrb[0].mxu0
        %v3641 = vpop.f32.mrb[0].mxu0
        %v3642 = vadd.f32 0.0, %v3641
        %v3643 = vpop.f32.mrb[0].mxu0
        %3644 = vmatprep.mubr.bf16.mxu0 %v3477
        %3645 = vmatmul.mubr.bf16.gmra.mrb[0].mxu0 %v3475
        %v3646 = vpop.f32.mrb[0].mxu0
        %v3647 = vadd.f32 0.0, %v3646
        %v3648 = vpop.f32.mrb[0].mxu0
        %v3649 = vpop.f32.mrb[0].mxu0
        %v3650 = vadd.f32 0.0, %v3649
        %v3651 = vpop.f32.mrb[0].mxu0
        %3652 = vmatprep.mubr.bf16.mxu0 %v3481
        %3653 = vmatmul.mubr.bf16.gmra.mrb[0].mxu0 %v3479
        %v3654 = vpop.f32.mrb[0].mxu0
        %v3655 = vadd.f32 0.0, %v3654
        %v3656 = vpop.f32.mrb[0].mxu0
        %v3657 = vpop.f32.mrb[0].mxu0
        %v3658 = vadd.f32 0.0, %v3657
        %v3659 = vpop.f32.mrb[0].mxu0
        %3660 = vdwg.mxu0
        %v3661 = vadd.f32 %v3333, %v3623
        %v3662 = vadd.f32 %v3336, %v3626
        %v3663 = vadd.f32 %v3341, %v3631
        %v3664 = vadd.f32 %v3344, %v3634
        %v3665 = vadd.f32 %v3349, %v3639
        %v3666 = vadd.f32 %v3352, %v3642
        %v3667 = vadd.f32 %v3357, %v3647
        %v3668 = vadd.f32 %v3360, %v3650
        %v3669 = vadd.f32 %v3365, %v3655
        %v3670 = vadd.f32 %v3368, %v3658
        %v3671 = vld [vmem:[#allocation2 + $0x60] sm:$0x77]
        %s3672 = scalar_lea.vmem [#allocation4], 896
        %v3673 = vld [vmem:[%s3672] sm:$0xf]
        %v3674 = vld [vmem:[%s3672 + $0x4] sm:$0xf]
        %v3675 = vld [vmem:[%s3672 + $0x8] sm:$0xf]
        %v3676 = vld [vmem:[%s3672 + $0xc] sm:$0xf]
        %v3677 = vld [vmem:[%s3672 + $0x10] sm:$0xf]
        %v3678 = vld [vmem:[%s3672 + $0x14] sm:$0xf]
        %v3679 = vld [vmem:[%s3672 + $0x18] sm:$0xf]
        %v3680 = vld [vmem:[%s3672 + $0x1c] sm:$0xf]
        %v3681 = vld [vmem:[%s3672 + $0x20] sm:$0xf]
        %v3682 = vld [vmem:[%s3672 + $0x24] sm:$0xf]
        %v3683 = vld [vmem:[%s3672 + $0x28] sm:$0xf]
        %v3684 = vld [vmem:[%s3672 + $0x2c] sm:$0xf]
        %v3685 = vld [vmem:[%s3672 + $0x30] sm:$0xf]
        %v3686 = vld [vmem:[%s3672 + $0x34] sm:$0xf]
        %v3687 = vld [vmem:[%s3672 + $0x38] sm:$0xf]
        %v3688 = vld [vmem:[%s3672 + $0x3c] sm:$0xf]
        %v3689 = vld [vmem:[%s3672 + $0x40] sm:$0xf]
        %v3690 = vld [vmem:[%s3672 + $0x44] sm:$0xf]
        %v3691 = vld [vmem:[%s3672 + $0x48] sm:$0xf]
        %v3692 = vld [vmem:[%s3672 + $0x4c] sm:$0xf]
        %v3693 = vld [vmem:[%s3672 + $0x50] sm:$0xf]
        %v3694 = vld [vmem:[%s3672 + $0x54] sm:$0xf]
        %v3695 = vld [vmem:[%s3672 + $0x58] sm:$0xf]
        %v3696 = vld [vmem:[%s3672 + $0x5c] sm:$0xf]
        %v3697 = vld [vmem:[%s3672 + $0x60] sm:$0xf]
        %v3698 = vld [vmem:[%s3672 + $0x64] sm:$0xf]
        %v3699 = vld [vmem:[%s3672 + $0x68] sm:$0xf]
        %v3700 = vld [vmem:[%s3672 + $0x6c] sm:$0xf]
        %v3701 = vld [vmem:[%s3672 + $0x70] sm:$0xf]
        %v3702 = vld [vmem:[%s3672 + $0x74] sm:$0xf]
        %v3703 = vld [vmem:[%s3672 + $0x78] sm:$0xf]
        %v3704 = vld [vmem:[%s3672 + $0x7c] sm:$0xf]
        %v3706 = vunpack.c.l.b16 %v3671
        %v3707 = vunpack.c.h.b16 %v3671
        %v3708 = vpack.c.b16 %v3706, %v3706
        %v3709 = vpack.c.b16 %v3707, %v3707
        %vm3710 = vsmask.f32 5376
        %v3712 = vshrl.u32 %v3448, 16
        %v3714 = vrot.slane %v3712, 2
        %v3715 = vshll.u32 %v3448, 16
        %v3717 = vrot.slane %v3715, 3
        %v3718 = vor.u32 %v3714, %v3717
        %v3720 = vshrl.u32 %v3450, 16
        %v3722 = vrot.slane %v3720, 2
        %v3723 = vshll.u32 %v3450, 16
        %v3725 = vrot.slane %v3723, 3
        %v3726 = vor.u32 %v3722, %v3725
        %v3727 = vsel %vm3710, %v3718, %v3726
        %v3729 = vshrl.u32 %v3449, 16
        %v3731 = vrot.slane %v3729, 2
        %v3732 = vshll.u32 %v3449, 16
        %v3734 = vrot.slane %v3732, 3
        %v3735 = vor.u32 %v3731, %v3734
        %v3737 = vshrl.u32 %v3451, 16
        %v3739 = vrot.slane %v3737, 2
        %v3740 = vshll.u32 %v3451, 16
        %v3742 = vrot.slane %v3740, 3
        %v3743 = vor.u32 %v3739, %v3742
        %v3744 = vsel %vm3710, %v3735, %v3743
        %v3746 = vshrl.u32 %v3452, 16
        %v3748 = vrot.slane %v3746, 2
        %v3749 = vshll.u32 %v3452, 16
        %v3751 = vrot.slane %v3749, 3
        %v3752 = vor.u32 %v3748, %v3751
        %v3753 = vsel %vm3710, %v3726, %v3752
        %v3755 = vshrl.u32 %v3453, 16
        %v3757 = vrot.slane %v3755, 2
        %v3758 = vshll.u32 %v3453, 16
        %v3760 = vrot.slane %v3758, 3
        %v3761 = vor.u32 %v3757, %v3760
        %v3762 = vsel %vm3710, %v3743, %v3761
        %v3764 = vshrl.u32 %v3454, 16
        %v3766 = vrot.slane %v3764, 2
        %v3767 = vshll.u32 %v3454, 16
        %v3769 = vrot.slane %v3767, 3
        %v3770 = vor.u32 %v3766, %v3769
        %v3771 = vsel %vm3710, %v3752, %v3770
        %v3773 = vshrl.u32 %v3455, 16
        %v3775 = vrot.slane %v3773, 2
        %v3776 = vshll.u32 %v3455, 16
        %v3778 = vrot.slane %v3776, 3
        %v3779 = vor.u32 %v3775, %v3778
        %v3780 = vsel %vm3710, %v3761, %v3779
        %v3782 = vshrl.u32 %v3456, 16
        %v3784 = vrot.slane %v3782, 2
        %v3785 = vshll.u32 %v3456, 16
        %v3787 = vrot.slane %v3785, 3
        %v3788 = vor.u32 %v3784, %v3787
        %v3789 = vsel %vm3710, %v3770, %v3788
        %v3791 = vshrl.u32 %v3457, 16
        %v3793 = vrot.slane %v3791, 2
        %v3794 = vshll.u32 %v3457, 16
        %v3796 = vrot.slane %v3794, 3
        %v3797 = vor.u32 %v3793, %v3796
        %v3798 = vsel %vm3710, %v3779, %v3797
        %v3800 = vshrl.u32 %v3708, 16
        %v3802 = vrot.slane %v3800, 2
        %v3803 = vshll.u32 %v3708, 16
        %v3805 = vrot.slane %v3803, 3
        %v3806 = vor.u32 %v3802, %v3805
        %v3807 = vsel %vm3710, %v3788, %v3806
        %v3809 = vshrl.u32 %v3709, 16
        %v3811 = vrot.slane %v3809, 2
        %v3812 = vshll.u32 %v3709, 16
        %v3814 = vrot.slane %v3812, 3
        %v3815 = vor.u32 %v3811, %v3814
        %v3816 = vsel %vm3710, %v3797, %v3815
        %v3859 = vunpack.c.l.b16 %v3673
        %v3860 = vunpack.c.l.b16 %v3674
        %v3861 = vunpack.c.l.b16 %v3675
        %v3862 = vunpack.c.l.b16 %v3676
        %v3863 = vunpack.c.l.b16 %v3677
        %v3864 = vunpack.c.l.b16 %v3678
        %v3865 = vunpack.c.l.b16 %v3679
        %v3866 = vunpack.c.l.b16 %v3680
        %v3867 = vunpack.c.l.b16 %v3681
        %v3868 = vunpack.c.l.b16 %v3682
        %v3869 = vunpack.c.l.b16 %v3683
        %v3870 = vunpack.c.l.b16 %v3684
        %v3871 = vunpack.c.l.b16 %v3685
        %v3872 = vunpack.c.l.b16 %v3686
        %v3873 = vunpack.c.l.b16 %v3687
        %v3874 = vunpack.c.l.b16 %v3688
        %v3875 = vunpack.c.l.b16 %v3689
        %v3876 = vunpack.c.l.b16 %v3690
        %v3877 = vunpack.c.l.b16 %v3691
        %v3878 = vunpack.c.l.b16 %v3692
        %v3879 = vunpack.c.l.b16 %v3693
        %v3880 = vunpack.c.l.b16 %v3694
        %v3881 = vunpack.c.l.b16 %v3695
        %v3882 = vunpack.c.l.b16 %v3696
        %v3883 = vunpack.c.l.b16 %v3697
        %v3884 = vunpack.c.l.b16 %v3698
        %v3885 = vunpack.c.l.b16 %v3699
        %v3886 = vunpack.c.l.b16 %v3700
        %v3887 = vunpack.c.l.b16 %v3701
        %v3888 = vunpack.c.l.b16 %v3702
        %v3889 = vunpack.c.l.b16 %v3703
        %v3890 = vunpack.c.l.b16 %v3704
        %v3891 = vpack.c.b16 %v3860, %v3859
        %v3892 = vpack.c.b16 %v3862, %v3861
        %v3893 = vpack.c.b16 %v3864, %v3863
        %v3894 = vpack.c.b16 %v3866, %v3865
        %v3895 = vpack.c.b16 %v3868, %v3867
        %v3896 = vpack.c.b16 %v3870, %v3869
        %v3897 = vpack.c.b16 %v3872, %v3871
        %v3898 = vpack.c.b16 %v3874, %v3873
        %v3899 = vpack.c.b16 %v3876, %v3875
        %v3900 = vpack.c.b16 %v3878, %v3877
        %v3901 = vpack.c.b16 %v3880, %v3879
        %v3902 = vpack.c.b16 %v3882, %v3881
        %v3903 = vpack.c.b16 %v3884, %v3883
        %v3904 = vpack.c.b16 %v3886, %v3885
        %v3905 = vpack.c.b16 %v3888, %v3887
        %v3906 = vpack.c.b16 %v3890, %v3889
        %3923 = vmatprep.subr.bf16.mxu0 0
        %3924 = vmatpush1.bf16.msra.mxu0 %v3891
        %3925 = vmatprep.subr.bf16.mxu0 0
        %3926 = vmatpush1.bf16.msra.mxu0 %v3892
        %3927 = vmatprep.subr.bf16.mxu0 0
        %3928 = vmatpush1.bf16.msra.mxu0 %v3893
        %3929 = vmatprep.subr.bf16.mxu0 0
        %3930 = vmatpush1.bf16.msra.mxu0 %v3894
        %3931 = vmatprep.subr.bf16.mxu0 0
        %3932 = vmatpush1.bf16.msra.mxu0 %v3895
        %3933 = vmatprep.subr.bf16.mxu0 0
        %3934 = vmatpush1.bf16.msra.mxu0 %v3896
        %3935 = vmatprep.subr.bf16.mxu0 0
        %3936 = vmatpush1.bf16.msra.mxu0 %v3897
        %3937 = vmatprep.subr.bf16.mxu0 0
        %3938 = vmatpush1.bf16.msra.mxu0 %v3898
        %3939 = vmatprep.subr.bf16.mxu0 0
        %3940 = vmatpush1.bf16.msra.mxu0 %v3899
        %3941 = vmatprep.subr.bf16.mxu0 0
        %3942 = vmatpush1.bf16.msra.mxu0 %v3900
        %3943 = vmatprep.subr.bf16.mxu0 0
        %3944 = vmatpush1.bf16.msra.mxu0 %v3901
        %3945 = vmatprep.subr.bf16.mxu0 0
        %3946 = vmatpush1.bf16.msra.mxu0 %v3902
        %3947 = vmatprep.subr.bf16.mxu0 0
        %3948 = vmatpush1.bf16.msra.mxu0 %v3903
        %3949 = vmatprep.subr.bf16.mxu0 0
        %3950 = vmatpush1.bf16.msra.mxu0 %v3904
        %3951 = vmatprep.subr.bf16.mxu0 0
        %3952 = vmatpush1.bf16.msra.mxu0 %v3905
        %3953 = vmatprep.subr.bf16.mxu0 0
        %3954 = vmatpush1.bf16.msra.mxu0 %v3906
        %3955 = vmatprep.mubr.bf16.mxu0 %v3744
        %3956 = vmatmul.mubr.bf16.gmra.mrb[0].mxu0 %v3727
        %v3957 = vpop.f32.mrb[0].mxu0
        %v3958 = vadd.f32 0.0, %v3957
        %v3959 = vpop.f32.mrb[0].mxu0
        %v3960 = vpop.f32.mrb[0].mxu0
        %v3961 = vadd.f32 0.0, %v3960
        %v3962 = vpop.f32.mrb[0].mxu0
        %3963 = vmatprep.mubr.bf16.mxu0 %v3762
        %3964 = vmatmul.mubr.bf16.gmra.mrb[0].mxu0 %v3753
        %v3965 = vpop.f32.mrb[0].mxu0
        %v3966 = vadd.f32 0.0, %v3965
        %v3967 = vpop.f32.mrb[0].mxu0
        %v3968 = vpop.f32.mrb[0].mxu0
        %v3969 = vadd.f32 0.0, %v3968
        %v3970 = vpop.f32.mrb[0].mxu0
        %3971 = vmatprep.mubr.bf16.mxu0 %v3780
        %3972 = vmatmul.mubr.bf16.gmra.mrb[0].mxu0 %v3771
        %v3973 = vpop.f32.mrb[0].mxu0
        %v3974 = vadd.f32 0.0, %v3973
        %v3975 = vpop.f32.mrb[0].mxu0
        %v3976 = vpop.f32.mrb[0].mxu0
        %v3977 = vadd.f32 0.0, %v3976
        %v3978 = vpop.f32.mrb[0].mxu0
        %3979 = vmatprep.mubr.bf16.mxu0 %v3798
        %3980 = vmatmul.mubr.bf16.gmra.mrb[0].mxu0 %v3789
        %v3981 = vpop.f32.mrb[0].mxu0
        %v3982 = vadd.f32 0.0, %v3981
        %v3983 = vpop.f32.mrb[0].mxu0
        %v3984 = vpop.f32.mrb[0].mxu0
        %v3985 = vadd.f32 0.0, %v3984
        %v3986 = vpop.f32.mrb[0].mxu0
        %3987 = vmatprep.mubr.bf16.mxu0 %v3816
        %3988 = vmatmul.mubr.bf16.gmra.mrb[0].mxu0 %v3807
        %v3989 = vpop.f32.mrb[0].mxu0
        %v3990 = vadd.f32 0.0, %v3989
        %v3991 = vpop.f32.mrb[0].mxu0
        %v3992 = vpop.f32.mrb[0].mxu0
        %v3993 = vadd.f32 0.0, %v3992
        %v3994 = vpop.f32.mrb[0].mxu0
        %3995 = vdwg.mxu0
        %v3996 = vadd.f32 %v3661, %v3958
        %v3997 = vadd.f32 %v3662, %v3961
        %v3998 = vadd.f32 %v3663, %v3966
        %v3999 = vadd.f32 %v3664, %v3969
        %v4000 = vadd.f32 %v3665, %v3974
        %v4001 = vadd.f32 %v3666, %v3977
        %v4002 = vadd.f32 %v3667, %v3982
        %v4003 = vadd.f32 %v3668, %v3985
        %v4004 = vadd.f32 %v3669, %v3990
        %v4005 = vadd.f32 %v3670, %v3993
        %v4006 = vadd.f32 %v3996, %v2685
        %v4007 = vadd.f32 %v3997, %v2685
        %v4008 = vadd.f32 %v3998, %v2685
        %v4009 = vadd.f32 %v3999, %v2685
        %v4010 = vadd.f32 %v4000, %v2685
        %v4011 = vadd.f32 %v4001, %v2685
        %v4012 = vadd.f32 %v4002, %v2685
        %v4013 = vadd.f32 %v4003, %v2685
        %v4014 = vadd.f32 %v4004, %v2685
        %v4015 = vadd.f32 %v4005, %v2685
        %v4016 = vmax.f32 %v4006, 0.0
        %v4017 = vmax.f32 %v4007, 0.0
        %v4018 = vmax.f32 %v4008, 0.0
        %v4019 = vmax.f32 %v4009, 0.0
        %v4020 = vmax.f32 %v4010, 0.0
        %v4021 = vmax.f32 %v4011, 0.0
        %v4022 = vmax.f32 %v4012, 0.0
        %v4023 = vmax.f32 %v4013, 0.0
        %v4024 = vmax.f32 %v4014, 0.0
        %v4025 = vmax.f32 %v4015, 0.0
        %v4026 = vpack.c.bf16 %v4017, %v4016
        %v4027 = vpack.c.bf16 %v4019, %v4018
        %v4028 = vpack.c.bf16 %v4021, %v4020
        %v4029 = vpack.c.bf16 %v4023, %v4022
        %v4030 = vpack.c.bf16 %v4025, %v4024
        %v4036 = vunpack.c.l.b16 %v4026
        %v4037 = vunpack.c.h.b16 %v4026
        %v4038 = vunpack.c.l.b16 %v4027
        %v4039 = vunpack.c.h.b16 %v4027
        %v4040 = vunpack.c.l.b16 %v4028
        %v4041 = vunpack.c.h.b16 %v4028
        %v4042 = vunpack.c.l.b16 %v4029
        %v4043 = vunpack.c.h.b16 %v4029
        %v4044 = vunpack.c.l.b16 %v4030
        %v4045 = vunpack.c.h.b16 %v4030
        %v4046 = vpack.c.b16 %v4036, %v4036
        %v4047 = vpack.c.b16 %v4037, %v4037
        %v4048 = vpack.c.b16 %v4038, %v4038
        %v4049 = vpack.c.b16 %v4039, %v4039
        %v4050 = vpack.c.b16 %v4040, %v4040
        %v4051 = vpack.c.b16 %v4041, %v4041
        %v4052 = vpack.c.b16 %v4042, %v4042
        %v4053 = vpack.c.b16 %v4043, %v4043
        %v4054 = vpack.c.b16 %v4044, %v4044
        %v4055 = vpack.c.b16 %v4045, %v4045
        %4066 = vst [vmem:[#allocation3 + $0x4] sm:$0xf] %v4046
        %4067 = vst [vmem:[#allocation3 + $0x14] sm:$0xf] %v4047
        %4068 = vst [vmem:[#allocation3 + $0x24] sm:$0xf] %v4048
        %4069 = vst [vmem:[#allocation3 + $0x34] sm:$0xf] %v4049
        %4070 = vst [vmem:[#allocation3 + $0x44] sm:$0xf] %v4050
        %4071 = vst [vmem:[#allocation3 + $0x54] sm:$0xf] %v4051
        %4072 = vst [vmem:[#allocation3 + $0x64] sm:$0xf] %v4052
        %4073 = vst [vmem:[#allocation3 + $0x74] sm:$0xf] %v4053
        %4074 = vst [vmem:[#allocation3 + $0x84] sm:$0xf] %v4054
        %4075 = vst [vmem:[#allocation3 + $0x94] sm:$0xf] %v4055
        %v4076 = vld [vmem:[#allocation2 + $0x10] sm:$0xee]
        %v4077 = vld [vmem:[#allocation2 + $0x18] sm:$0xff]
        %v4078 = vld [vmem:[#allocation2 + $0x20] sm:$0xff]
        %v4079 = vld [vmem:[#allocation2 + $0x28] sm:$0xff]
        %v4080 = vld [vmem:[#allocation2 + $0x30] sm:$0xff]
        %v4081 = vld [vmem:[#allocation2 + $0x38] sm:$0xff]
        %v4082 = vld [vmem:[#allocation2 + $0x40] sm:$0xff]
        %v4083 = vld [vmem:[#allocation2 + $0x48] sm:$0xff]
        %v4084 = vld [vmem:[#allocation2 + $0x50] sm:$0xff]
        %v4085 = vld [vmem:[#allocation2 + $0x58] sm:$0xff]
        %v4086 = vld [vmem:[#allocation2 + $0x60] sm:$0x33]
        %s4087 = scalar_lea.vmem [#allocation4], 1024
        %v4088 = vld [vmem:[%s4087] sm:$0xf]
        %v4089 = vld [vmem:[%s4087 + $0x4] sm:$0xf]
        %v4090 = vld [vmem:[%s4087 + $0x8] sm:$0xf]
        %v4091 = vld [vmem:[%s4087 + $0xc] sm:$0xf]
        %v4092 = vld [vmem:[%s4087 + $0x10] sm:$0xf]
        %v4093 = vld [vmem:[%s4087 + $0x14] sm:$0xf]
        %v4094 = vld [vmem:[%s4087 + $0x18] sm:$0xf]
        %v4095 = vld [vmem:[%s4087 + $0x1c] sm:$0xf]
        %v4096 = vld [vmem:[%s4087 + $0x20] sm:$0xf]
        %v4097 = vld [vmem:[%s4087 + $0x24] sm:$0xf]
        %v4098 = vld [vmem:[%s4087 + $0x28] sm:$0xf]
        %v4099 = vld [vmem:[%s4087 + $0x2c] sm:$0xf]
        %v4100 = vld [vmem:[%s4087 + $0x30] sm:$0xf]
        %v4101 = vld [vmem:[%s4087 + $0x34] sm:$0xf]
        %v4102 = vld [vmem:[%s4087 + $0x38] sm:$0xf]
        %v4103 = vld [vmem:[%s4087 + $0x3c] sm:$0xf]
        %v4104 = vld [vmem:[%s4087 + $0x40] sm:$0xf]
        %v4105 = vld [vmem:[%s4087 + $0x44] sm:$0xf]
        %v4106 = vld [vmem:[%s4087 + $0x48] sm:$0xf]
        %v4107 = vld [vmem:[%s4087 + $0x4c] sm:$0xf]
        %v4108 = vld [vmem:[%s4087 + $0x50] sm:$0xf]
        %v4109 = vld [vmem:[%s4087 + $0x54] sm:$0xf]
        %v4110 = vld [vmem:[%s4087 + $0x58] sm:$0xf]
        %v4111 = vld [vmem:[%s4087 + $0x5c] sm:$0xf]
        %v4112 = vld [vmem:[%s4087 + $0x60] sm:$0xf]
        %v4113 = vld [vmem:[%s4087 + $0x64] sm:$0xf]
        %v4114 = vld [vmem:[%s4087 + $0x68] sm:$0xf]
        %v4115 = vld [vmem:[%s4087 + $0x6c] sm:$0xf]
        %v4116 = vld [vmem:[%s4087 + $0x70] sm:$0xf]
        %v4117 = vld [vmem:[%s4087 + $0x74] sm:$0xf]
        %v4118 = vld [vmem:[%s4087 + $0x78] sm:$0xf]
        %v4119 = vld [vmem:[%s4087 + $0x7c] sm:$0xf]
        %v4120 = vld [vmem:[#allocation2 + $0x10] sm:$0xcc]
        %s4121 = scalar_lea.vmem [#allocation4], 1152
        %v4122 = vld [vmem:[%s4121] sm:$0xf]
        %v4123 = vld [vmem:[%s4121 + $0x4] sm:$0xf]
        %v4124 = vld [vmem:[%s4121 + $0x8] sm:$0xf]
        %v4125 = vld [vmem:[%s4121 + $0xc] sm:$0xf]
        %v4126 = vld [vmem:[%s4121 + $0x10] sm:$0xf]
        %v4127 = vld [vmem:[%s4121 + $0x14] sm:$0xf]
        %v4128 = vld [vmem:[%s4121 + $0x18] sm:$0xf]
        %v4129 = vld [vmem:[%s4121 + $0x1c] sm:$0xf]
        %v4130 = vld [vmem:[%s4121 + $0x20] sm:$0xf]
        %v4131 = vld [vmem:[%s4121 + $0x24] sm:$0xf]
        %v4132 = vld [vmem:[%s4121 + $0x28] sm:$0xf]
        %v4133 = vld [vmem:[%s4121 + $0x2c] sm:$0xf]
        %v4134 = vld [vmem:[%s4121 + $0x30] sm:$0xf]
        %v4135 = vld [vmem:[%s4121 + $0x34] sm:$0xf]
        %v4136 = vld [vmem:[%s4121 + $0x38] sm:$0xf]
        %v4137 = vld [vmem:[%s4121 + $0x3c] sm:$0xf]
        %v4138 = vld [vmem:[%s4121 + $0x40] sm:$0xf]
        %v4139 = vld [vmem:[%s4121 + $0x44] sm:$0xf]
        %v4140 = vld [vmem:[%s4121 + $0x48] sm:$0xf]
        %v4141 = vld [vmem:[%s4121 + $0x4c] sm:$0xf]
        %v4142 = vld [vmem:[%s4121 + $0x50] sm:$0xf]
        %v4143 = vld [vmem:[%s4121 + $0x54] sm:$0xf]
        %v4144 = vld [vmem:[%s4121 + $0x58] sm:$0xf]
        %v4145 = vld [vmem:[%s4121 + $0x5c] sm:$0xf]
        %v4146 = vld [vmem:[%s4121 + $0x60] sm:$0xf]
        %v4147 = vld [vmem:[%s4121 + $0x64] sm:$0xf]
        %v4148 = vld [vmem:[%s4121 + $0x68] sm:$0xf]
        %v4149 = vld [vmem:[%s4121 + $0x6c] sm:$0xf]
        %v4150 = vld [vmem:[%s4121 + $0x70] sm:$0xf]
        %v4151 = vld [vmem:[%s4121 + $0x74] sm:$0xf]
        %v4152 = vld [vmem:[%s4121 + $0x78] sm:$0xf]
        %v4153 = vld [vmem:[%s4121 + $0x7c] sm:$0xf]
        %v4165 = vunpack.c.l.b16 %v4120
        %v4166 = vunpack.c.h.b16 %v4120
        %v4167 = vunpack.c.l.b16 %v4077
        %v4168 = vunpack.c.h.b16 %v4077
        %v4169 = vunpack.c.l.b16 %v4078
        %v4170 = vunpack.c.h.b16 %v4078
        %v4171 = vunpack.c.l.b16 %v4079
        %v4172 = vunpack.c.h.b16 %v4079
        %v4173 = vunpack.c.l.b16 %v4080
        %v4174 = vunpack.c.h.b16 %v4080
        %v4175 = vunpack.c.l.b16 %v4081
        %v4176 = vunpack.c.h.b16 %v4081
        %v4177 = vunpack.c.l.b16 %v4082
        %v4178 = vunpack.c.h.b16 %v4082
        %v4179 = vunpack.c.l.b16 %v4083
        %v4180 = vunpack.c.h.b16 %v4083
        %v4181 = vunpack.c.l.b16 %v4084
        %v4182 = vunpack.c.h.b16 %v4084
        %v4183 = vunpack.c.l.b16 %v4085
        %v4184 = vunpack.c.h.b16 %v4085
        %v4185 = vunpack.c.l.b16 %v4086
        %v4186 = vunpack.c.h.b16 %v4086
        %v4187 = vpack.c.b16 %v4167, %v4165
        %v4188 = vpack.c.b16 %v4168, %v4166
        %v4189 = vpack.c.b16 %v4171, %v4169
        %v4190 = vpack.c.b16 %v4172, %v4170
        %v4191 = vpack.c.b16 %v4175, %v4173
        %v4192 = vpack.c.b16 %v4176, %v4174
        %v4193 = vpack.c.b16 %v4179, %v4177
        %v4194 = vpack.c.b16 %v4180, %v4178
        %v4195 = vpack.c.b16 %v4183, %v4181
        %v4196 = vpack.c.b16 %v4184, %v4182
        %v4197 = vpack.c.b16 %v4185, %v4185
        %v4198 = vpack.c.b16 %v4186, %v4186
        %v4199 = vrot.slane %v4187, 2
        %v4200 = vrot.slane %v4189, 2
        %v4201 = vsel %vm2469, %v4199, %v4200
        %v4202 = vrot.slane %v4188, 2
        %v4203 = vrot.slane %v4190, 2
        %v4204 = vsel %vm2469, %v4202, %v4203
        %v4205 = vrot.slane %v4191, 2
        %v4206 = vsel %vm2469, %v4200, %v4205
        %v4207 = vrot.slane %v4192, 2
        %v4208 = vsel %vm2469, %v4203, %v4207
        %v4209 = vrot.slane %v4193, 2
        %v4210 = vsel %vm2469, %v4205, %v4209
        %v4211 = vrot.slane %v4194, 2
        %v4212 = vsel %vm2469, %v4207, %v4211
        %v4213 = vrot.slane %v4195, 2
        %v4214 = vsel %vm2469, %v4209, %v4213
        %v4215 = vrot.slane %v4196, 2
        %v4216 = vsel %vm2469, %v4211, %v4215
        %v4217 = vrot.slane %v4197, 2
        %v4218 = vsel %vm2469, %v4213, %v4217
        %v4219 = vrot.slane %v4198, 2
        %v4220 = vsel %vm2469, %v4215, %v4219
        %v4263 = vunpack.c.l.b16 %v4122
        %v4264 = vunpack.c.l.b16 %v4123
        %v4265 = vunpack.c.l.b16 %v4124
        %v4266 = vunpack.c.l.b16 %v4125
        %v4267 = vunpack.c.l.b16 %v4126
        %v4268 = vunpack.c.l.b16 %v4127
        %v4269 = vunpack.c.l.b16 %v4128
        %v4270 = vunpack.c.l.b16 %v4129
        %v4271 = vunpack.c.l.b16 %v4130
        %v4272 = vunpack.c.l.b16 %v4131
        %v4273 = vunpack.c.l.b16 %v4132
        %v4274 = vunpack.c.l.b16 %v4133
        %v4275 = vunpack.c.l.b16 %v4134
        %v4276 = vunpack.c.l.b16 %v4135
        %v4277 = vunpack.c.l.b16 %v4136
        %v4278 = vunpack.c.l.b16 %v4137
        %v4279 = vunpack.c.l.b16 %v4138
        %v4280 = vunpack.c.l.b16 %v4139
        %v4281 = vunpack.c.l.b16 %v4140
        %v4282 = vunpack.c.l.b16 %v4141
        %v4283 = vunpack.c.l.b16 %v4142
        %v4284 = vunpack.c.l.b16 %v4143
        %v4285 = vunpack.c.l.b16 %v4144
        %v4286 = vunpack.c.l.b16 %v4145
        %v4287 = vunpack.c.l.b16 %v4146
        %v4288 = vunpack.c.l.b16 %v4147
        %v4289 = vunpack.c.l.b16 %v4148
        %v4290 = vunpack.c.l.b16 %v4149
        %v4291 = vunpack.c.l.b16 %v4150
        %v4292 = vunpack.c.l.b16 %v4151
        %v4293 = vunpack.c.l.b16 %v4152
        %v4294 = vunpack.c.l.b16 %v4153
        %v4295 = vpack.c.b16 %v4264, %v4263
        %v4296 = vpack.c.b16 %v4266, %v4265
        %v4297 = vpack.c.b16 %v4268, %v4267
        %v4298 = vpack.c.b16 %v4270, %v4269
        %v4299 = vpack.c.b16 %v4272, %v4271
        %v4300 = vpack.c.b16 %v4274, %v4273
        %v4301 = vpack.c.b16 %v4276, %v4275
        %v4302 = vpack.c.b16 %v4278, %v4277
        %v4303 = vpack.c.b16 %v4280, %v4279
        %v4304 = vpack.c.b16 %v4282, %v4281
        %v4305 = vpack.c.b16 %v4284, %v4283
        %v4306 = vpack.c.b16 %v4286, %v4285
        %v4307 = vpack.c.b16 %v4288, %v4287
        %v4308 = vpack.c.b16 %v4290, %v4289
        %v4309 = vpack.c.b16 %v4292, %v4291
        %v4310 = vpack.c.b16 %v4294, %v4293
        %4327 = vmatprep.subr.bf16.mxu0 0
        %4328 = vmatpush1.bf16.msra.mxu0 %v4295
        %4329 = vmatprep.subr.bf16.mxu0 0
        %4330 = vmatpush1.bf16.msra.mxu0 %v4296
        %4331 = vmatprep.subr.bf16.mxu0 0
        %4332 = vmatpush1.bf16.msra.mxu0 %v4297
        %4333 = vmatprep.subr.bf16.mxu0 0
        %4334 = vmatpush1.bf16.msra.mxu0 %v4298
        %4335 = vmatprep.subr.bf16.mxu0 0
        %4336 = vmatpush1.bf16.msra.mxu0 %v4299
        %4337 = vmatprep.subr.bf16.mxu0 0
        %4338 = vmatpush1.bf16.msra.mxu0 %v4300
        %4339 = vmatprep.subr.bf16.mxu0 0
        %4340 = vmatpush1.bf16.msra.mxu0 %v4301
        %4341 = vmatprep.subr.bf16.mxu0 0
        %4342 = vmatpush1.bf16.msra.mxu0 %v4302
        %4343 = vmatprep.subr.bf16.mxu0 0
        %4344 = vmatpush1.bf16.msra.mxu0 %v4303
        %4345 = vmatprep.subr.bf16.mxu0 0
        %4346 = vmatpush1.bf16.msra.mxu0 %v4304
        %4347 = vmatprep.subr.bf16.mxu0 0
        %4348 = vmatpush1.bf16.msra.mxu0 %v4305
        %4349 = vmatprep.subr.bf16.mxu0 0
        %4350 = vmatpush1.bf16.msra.mxu0 %v4306
        %4351 = vmatprep.subr.bf16.mxu0 0
        %4352 = vmatpush1.bf16.msra.mxu0 %v4307
        %4353 = vmatprep.subr.bf16.mxu0 0
        %4354 = vmatpush1.bf16.msra.mxu0 %v4308
        %4355 = vmatprep.subr.bf16.mxu0 0
        %4356 = vmatpush1.bf16.msra.mxu0 %v4309
        %4357 = vmatprep.subr.bf16.mxu0 0
        %4358 = vmatpush1.bf16.msra.mxu0 %v4310
        %4359 = vmatprep.mubr.bf16.mxu0 %v4204
        %4360 = vmatmul.mubr.bf16.gmra.mrb[0].mxu0 %v4201
        %v4361 = vpop.f32.mrb[0].mxu0
        %v4362 = vadd.f32 0.0, %v4361
        %v4363 = vpop.f32.mrb[0].mxu0
        %v4364 = vpop.f32.mrb[0].mxu0
        %v4365 = vadd.f32 0.0, %v4364
        %v4366 = vpop.f32.mrb[0].mxu0
        %4367 = vmatprep.mubr.bf16.mxu0 %v4208
        %4368 = vmatmul.mubr.bf16.gmra.mrb[0].mxu0 %v4206
        %v4369 = vpop.f32.mrb[0].mxu0
        %v4370 = vadd.f32 0.0, %v4369
        %v4371 = vpop.f32.mrb[0].mxu0
        %v4372 = vpop.f32.mrb[0].mxu0
        %v4373 = vadd.f32 0.0, %v4372
        %v4374 = vpop.f32.mrb[0].mxu0
        %4375 = vmatprep.mubr.bf16.mxu0 %v4212
        %4376 = vmatmul.mubr.bf16.gmra.mrb[0].mxu0 %v4210
        %v4377 = vpop.f32.mrb[0].mxu0
        %v4378 = vadd.f32 0.0, %v4377
        %v4379 = vpop.f32.mrb[0].mxu0
        %v4380 = vpop.f32.mrb[0].mxu0
        %v4381 = vadd.f32 0.0, %v4380
        %v4382 = vpop.f32.mrb[0].mxu0
        %4383 = vmatprep.mubr.bf16.mxu0 %v4216
        %4384 = vmatmul.mubr.bf16.gmra.mrb[0].mxu0 %v4214
        %v4385 = vpop.f32.mrb[0].mxu0
        %v4386 = vadd.f32 0.0, %v4385
        %v4387 = vpop.f32.mrb[0].mxu0
        %v4388 = vpop.f32.mrb[0].mxu0
        %v4389 = vadd.f32 0.0, %v4388
        %v4390 = vpop.f32.mrb[0].mxu0
        %4391 = vmatprep.mubr.bf16.mxu0 %v4220
        %4392 = vmatmul.mubr.bf16.gmra.mrb[0].mxu0 %v4218
        %v4393 = vpop.f32.mrb[0].mxu0
        %v4394 = vadd.f32 0.0, %v4393
        %v4395 = vpop.f32.mrb[0].mxu0
        %v4396 = vpop.f32.mrb[0].mxu0
        %v4397 = vadd.f32 0.0, %v4396
        %v4398 = vpop.f32.mrb[0].mxu0
        %4399 = vdwg.mxu0
        %v4401 = vunpack.c.l.b16 %v4076
        %v4402 = vunpack.c.h.b16 %v4076
        %v4403 = vpack.c.b16 %v4167, %v4401
        %v4404 = vpack.c.b16 %v4168, %v4402
        %v4406 = vshrl.u32 %v4403, 16
        %v4408 = vrot.slane %v4406, 1
        %v4409 = vshll.u32 %v4403, 16
        %v4411 = vrot.slane %v4409, 2
        %v4412 = vor.u32 %v4408, %v4411
        %v4414 = vshrl.u32 %v4189, 16
        %v4416 = vrot.slane %v4414, 1
        %v4417 = vshll.u32 %v4189, 16
        %v4419 = vrot.slane %v4417, 2
        %v4420 = vor.u32 %v4416, %v4419
        %v4421 = vsel %vm2134, %v4412, %v4420
        %v4423 = vshrl.u32 %v4404, 16
        %v4425 = vrot.slane %v4423, 1
        %v4426 = vshll.u32 %v4404, 16
        %v4428 = vrot.slane %v4426, 2
        %v4429 = vor.u32 %v4425, %v4428
        %v4431 = vshrl.u32 %v4190, 16
        %v4433 = vrot.slane %v4431, 1
        %v4434 = vshll.u32 %v4190, 16
        %v4436 = vrot.slane %v4434, 2
        %v4437 = vor.u32 %v4433, %v4436
        %v4438 = vsel %vm2134, %v4429, %v4437
        %v4440 = vshrl.u32 %v4191, 16
        %v4442 = vrot.slane %v4440, 1
        %v4443 = vshll.u32 %v4191, 16
        %v4445 = vrot.slane %v4443, 2
        %v4446 = vor.u32 %v4442, %v4445
        %v4447 = vsel %vm2134, %v4420, %v4446
        %v4449 = vshrl.u32 %v4192, 16
        %v4451 = vrot.slane %v4449, 1
        %v4452 = vshll.u32 %v4192, 16
        %v4454 = vrot.slane %v4452, 2
        %v4455 = vor.u32 %v4451, %v4454
        %v4456 = vsel %vm2134, %v4437, %v4455
        %v4458 = vshrl.u32 %v4193, 16
        %v4460 = vrot.slane %v4458, 1
        %v4461 = vshll.u32 %v4193, 16
        %v4463 = vrot.slane %v4461, 2
        %v4464 = vor.u32 %v4460, %v4463
        %v4465 = vsel %vm2134, %v4446, %v4464
        %v4467 = vshrl.u32 %v4194, 16
        %v4469 = vrot.slane %v4467, 1
        %v4470 = vshll.u32 %v4194, 16
        %v4472 = vrot.slane %v4470, 2
        %v4473 = vor.u32 %v4469, %v4472
        %v4474 = vsel %vm2134, %v4455, %v4473
        %v4476 = vshrl.u32 %v4195, 16
        %v4478 = vrot.slane %v4476, 1
        %v4479 = vshll.u32 %v4195, 16
        %v4481 = vrot.slane %v4479, 2
        %v4482 = vor.u32 %v4478, %v4481
        %v4483 = vsel %vm2134, %v4464, %v4482
        %v4485 = vshrl.u32 %v4196, 16
        %v4487 = vrot.slane %v4485, 1
        %v4488 = vshll.u32 %v4196, 16
        %v4490 = vrot.slane %v4488, 2
        %v4491 = vor.u32 %v4487, %v4490
        %v4492 = vsel %vm2134, %v4473, %v4491
        %v4494 = vshrl.u32 %v4197, 16
        %v4496 = vrot.slane %v4494, 1
        %v4497 = vshll.u32 %v4197, 16
        %v4499 = vrot.slane %v4497, 2
        %v4500 = vor.u32 %v4496, %v4499
        %v4501 = vsel %vm2134, %v4482, %v4500
        %v4503 = vshrl.u32 %v4198, 16
        %v4505 = vrot.slane %v4503, 1
        %v4506 = vshll.u32 %v4198, 16
        %v4508 = vrot.slane %v4506, 2
        %v4509 = vor.u32 %v4505, %v4508
        %v4510 = vsel %vm2134, %v4491, %v4509
        %v4553 = vunpack.c.l.b16 %v4088
        %v4554 = vunpack.c.l.b16 %v4089
        %v4555 = vunpack.c.l.b16 %v4090
        %v4556 = vunpack.c.l.b16 %v4091
        %v4557 = vunpack.c.l.b16 %v4092
        %v4558 = vunpack.c.l.b16 %v4093
        %v4559 = vunpack.c.l.b16 %v4094
        %v4560 = vunpack.c.l.b16 %v4095
        %v4561 = vunpack.c.l.b16 %v4096
        %v4562 = vunpack.c.l.b16 %v4097
        %v4563 = vunpack.c.l.b16 %v4098
        %v4564 = vunpack.c.l.b16 %v4099
        %v4565 = vunpack.c.l.b16 %v4100
        %v4566 = vunpack.c.l.b16 %v4101
        %v4567 = vunpack.c.l.b16 %v4102
        %v4568 = vunpack.c.l.b16 %v4103
        %v4569 = vunpack.c.l.b16 %v4104
        %v4570 = vunpack.c.l.b16 %v4105
        %v4571 = vunpack.c.l.b16 %v4106
        %v4572 = vunpack.c.l.b16 %v4107
        %v4573 = vunpack.c.l.b16 %v4108
        %v4574 = vunpack.c.l.b16 %v4109
        %v4575 = vunpack.c.l.b16 %v4110
        %v4576 = vunpack.c.l.b16 %v4111
        %v4577 = vunpack.c.l.b16 %v4112
        %v4578 = vunpack.c.l.b16 %v4113
        %v4579 = vunpack.c.l.b16 %v4114
        %v4580 = vunpack.c.l.b16 %v4115
        %v4581 = vunpack.c.l.b16 %v4116
        %v4582 = vunpack.c.l.b16 %v4117
        %v4583 = vunpack.c.l.b16 %v4118
        %v4584 = vunpack.c.l.b16 %v4119
        %v4585 = vpack.c.b16 %v4554, %v4553
        %v4586 = vpack.c.b16 %v4556, %v4555
        %v4587 = vpack.c.b16 %v4558, %v4557
        %v4588 = vpack.c.b16 %v4560, %v4559
        %v4589 = vpack.c.b16 %v4562, %v4561
        %v4590 = vpack.c.b16 %v4564, %v4563
        %v4591 = vpack.c.b16 %v4566, %v4565
        %v4592 = vpack.c.b16 %v4568, %v4567
        %v4593 = vpack.c.b16 %v4570, %v4569
        %v4594 = vpack.c.b16 %v4572, %v4571
        %v4595 = vpack.c.b16 %v4574, %v4573
        %v4596 = vpack.c.b16 %v4576, %v4575
        %v4597 = vpack.c.b16 %v4578, %v4577
        %v4598 = vpack.c.b16 %v4580, %v4579
        %v4599 = vpack.c.b16 %v4582, %v4581
        %v4600 = vpack.c.b16 %v4584, %v4583
        %4617 = vmatprep.subr.bf16.mxu0 0
        %4618 = vmatpush1.bf16.msra.mxu0 %v4585
        %4619 = vmatprep.subr.bf16.mxu0 0
        %4620 = vmatpush1.bf16.msra.mxu0 %v4586
        %4621 = vmatprep.subr.bf16.mxu0 0
        %4622 = vmatpush1.bf16.msra.mxu0 %v4587
        %4623 = vmatprep.subr.bf16.mxu0 0
        %4624 = vmatpush1.bf16.msra.mxu0 %v4588
        %4625 = vmatprep.subr.bf16.mxu0 0
        %4626 = vmatpush1.bf16.msra.mxu0 %v4589
        %4627 = vmatprep.subr.bf16.mxu0 0
        %4628 = vmatpush1.bf16.msra.mxu0 %v4590
        %4629 = vmatprep.subr.bf16.mxu0 0
        %4630 = vmatpush1.bf16.msra.mxu0 %v4591
        %4631 = vmatprep.subr.bf16.mxu0 0
        %4632 = vmatpush1.bf16.msra.mxu0 %v4592
        %4633 = vmatprep.subr.bf16.mxu0 0
        %4634 = vmatpush1.bf16.msra.mxu0 %v4593
        %4635 = vmatprep.subr.bf16.mxu0 0
        %4636 = vmatpush1.bf16.msra.mxu0 %v4594
        %4637 = vmatprep.subr.bf16.mxu0 0
        %4638 = vmatpush1.bf16.msra.mxu0 %v4595
        %4639 = vmatprep.subr.bf16.mxu0 0
        %4640 = vmatpush1.bf16.msra.mxu0 %v4596
        %4641 = vmatprep.subr.bf16.mxu0 0
        %4642 = vmatpush1.bf16.msra.mxu0 %v4597
        %4643 = vmatprep.subr.bf16.mxu0 0
        %4644 = vmatpush1.bf16.msra.mxu0 %v4598
        %4645 = vmatprep.subr.bf16.mxu0 0
        %4646 = vmatpush1.bf16.msra.mxu0 %v4599
        %4647 = vmatprep.subr.bf16.mxu0 0
        %4648 = vmatpush1.bf16.msra.mxu0 %v4600
        %4649 = vmatprep.mubr.bf16.mxu0 %v4438
        %4650 = vmatmul.mubr.bf16.gmra.mrb[0].mxu0 %v4421
        %v4651 = vpop.f32.mrb[0].mxu0
        %v4652 = vadd.f32 %v4362, %v4651
        %v4653 = vpop.f32.mrb[0].mxu0
        %v4654 = vpop.f32.mrb[0].mxu0
        %v4655 = vadd.f32 %v4365, %v4654
        %v4656 = vpop.f32.mrb[0].mxu0
        %4657 = vmatprep.mubr.bf16.mxu0 %v4456
        %4658 = vmatmul.mubr.bf16.gmra.mrb[0].mxu0 %v4447
        %v4659 = vpop.f32.mrb[0].mxu0
        %v4660 = vadd.f32 %v4370, %v4659
        %v4661 = vpop.f32.mrb[0].mxu0
        %v4662 = vpop.f32.mrb[0].mxu0
        %v4663 = vadd.f32 %v4373, %v4662
        %v4664 = vpop.f32.mrb[0].mxu0
        %4665 = vmatprep.mubr.bf16.mxu0 %v4474
        %4666 = vmatmul.mubr.bf16.gmra.mrb[0].mxu0 %v4465
        %v4667 = vpop.f32.mrb[0].mxu0
        %v4668 = vadd.f32 %v4378, %v4667
        %v4669 = vpop.f32.mrb[0].mxu0
        %v4670 = vpop.f32.mrb[0].mxu0
        %v4671 = vadd.f32 %v4381, %v4670
        %v4672 = vpop.f32.mrb[0].mxu0
        %4673 = vmatprep.mubr.bf16.mxu0 %v4492
        %4674 = vmatmul.mubr.bf16.gmra.mrb[0].mxu0 %v4483
        %v4675 = vpop.f32.mrb[0].mxu0
        %v4676 = vadd.f32 %v4386, %v4675
        %v4677 = vpop.f32.mrb[0].mxu0
        %v4678 = vpop.f32.mrb[0].mxu0
        %v4679 = vadd.f32 %v4389, %v4678
        %v4680 = vpop.f32.mrb[0].mxu0
        %4681 = vmatprep.mubr.bf16.mxu0 %v4510
        %4682 = vmatmul.mubr.bf16.gmra.mrb[0].mxu0 %v4501
        %v4683 = vpop.f32.mrb[0].mxu0
        %v4684 = vadd.f32 %v4394, %v4683
        %v4685 = vpop.f32.mrb[0].mxu0
        %v4686 = vpop.f32.mrb[0].mxu0
        %v4687 = vadd.f32 %v4397, %v4686
        %v4688 = vpop.f32.mrb[0].mxu0
        %4689 = vdwg.mxu0
        %v4690 = vld [vmem:[#allocation2 + $0x18] sm:$0xcc]
        %v4691 = vld [vmem:[#allocation2 + $0x20] sm:$0xff]
        %v4692 = vld [vmem:[#allocation2 + $0x28] sm:$0xff]
        %v4693 = vld [vmem:[#allocation2 + $0x30] sm:$0xff]
        %v4694 = vld [vmem:[#allocation2 + $0x38] sm:$0xff]
        %v4695 = vld [vmem:[#allocation2 + $0x40] sm:$0xff]
        %v4696 = vld [vmem:[#allocation2 + $0x48] sm:$0xff]
        %v4697 = vld [vmem:[#allocation2 + $0x50] sm:$0xff]
        %v4698 = vld [vmem:[#allocation2 + $0x58] sm:$0xff]
        %v4699 = vld [vmem:[#allocation2 + $0x60] sm:$0xff]
        %v4700 = vld [vmem:[#allocation2 + $0x68] sm:$0x77]
        %s4701 = scalar_lea.vmem [#allocation4], 1280
        %v4702 = vld [vmem:[%s4701] sm:$0xf]
        %v4703 = vld [vmem:[%s4701 + $0x4] sm:$0xf]
        %v4704 = vld [vmem:[%s4701 + $0x8] sm:$0xf]
        %v4705 = vld [vmem:[%s4701 + $0xc] sm:$0xf]
        %v4706 = vld [vmem:[%s4701 + $0x10] sm:$0xf]
        %v4707 = vld [vmem:[%s4701 + $0x14] sm:$0xf]
        %v4708 = vld [vmem:[%s4701 + $0x18] sm:$0xf]
        %v4709 = vld [vmem:[%s4701 + $0x1c] sm:$0xf]
        %v4710 = vld [vmem:[%s4701 + $0x20] sm:$0xf]
        %v4711 = vld [vmem:[%s4701 + $0x24] sm:$0xf]
        %v4712 = vld [vmem:[%s4701 + $0x28] sm:$0xf]
        %v4713 = vld [vmem:[%s4701 + $0x2c] sm:$0xf]
        %v4714 = vld [vmem:[%s4701 + $0x30] sm:$0xf]
        %v4715 = vld [vmem:[%s4701 + $0x34] sm:$0xf]
        %v4716 = vld [vmem:[%s4701 + $0x38] sm:$0xf]
        %v4717 = vld [vmem:[%s4701 + $0x3c] sm:$0xf]
        %v4718 = vld [vmem:[%s4701 + $0x40] sm:$0xf]
        %v4719 = vld [vmem:[%s4701 + $0x44] sm:$0xf]
        %v4720 = vld [vmem:[%s4701 + $0x48] sm:$0xf]
        %v4721 = vld [vmem:[%s4701 + $0x4c] sm:$0xf]
        %v4722 = vld [vmem:[%s4701 + $0x50] sm:$0xf]
        %v4723 = vld [vmem:[%s4701 + $0x54] sm:$0xf]
        %v4724 = vld [vmem:[%s4701 + $0x58] sm:$0xf]
        %v4725 = vld [vmem:[%s4701 + $0x5c] sm:$0xf]
        %v4726 = vld [vmem:[%s4701 + $0x60] sm:$0xf]
        %v4727 = vld [vmem:[%s4701 + $0x64] sm:$0xf]
        %v4728 = vld [vmem:[%s4701 + $0x68] sm:$0xf]
        %v4729 = vld [vmem:[%s4701 + $0x6c] sm:$0xf]
        %v4730 = vld [vmem:[%s4701 + $0x70] sm:$0xf]
        %v4731 = vld [vmem:[%s4701 + $0x74] sm:$0xf]
        %v4732 = vld [vmem:[%s4701 + $0x78] sm:$0xf]
        %v4733 = vld [vmem:[%s4701 + $0x7c] sm:$0xf]
        %v4745 = vunpack.c.l.b16 %v4690
        %v4746 = vunpack.c.h.b16 %v4690
        %v4747 = vunpack.c.l.b16 %v4691
        %v4748 = vunpack.c.h.b16 %v4691
        %v4749 = vunpack.c.l.b16 %v4692
        %v4750 = vunpack.c.h.b16 %v4692
        %v4751 = vunpack.c.l.b16 %v4693
        %v4752 = vunpack.c.h.b16 %v4693
        %v4753 = vunpack.c.l.b16 %v4694
        %v4754 = vunpack.c.h.b16 %v4694
        %v4755 = vunpack.c.l.b16 %v4695
        %v4756 = vunpack.c.h.b16 %v4695
        %v4757 = vunpack.c.l.b16 %v4696
        %v4758 = vunpack.c.h.b16 %v4696
        %v4759 = vunpack.c.l.b16 %v4697
        %v4760 = vunpack.c.h.b16 %v4697
        %v4761 = vunpack.c.l.b16 %v4698
        %v4762 = vunpack.c.h.b16 %v4698
        %v4763 = vunpack.c.l.b16 %v4699
        %v4764 = vunpack.c.h.b16 %v4699
        %v4765 = vunpack.c.l.b16 %v4700
        %v4766 = vunpack.c.h.b16 %v4700
        %v4767 = vpack.c.b16 %v4747, %v4745
        %v4768 = vpack.c.b16 %v4748, %v4746
        %v4769 = vpack.c.b16 %v4751, %v4749
        %v4770 = vpack.c.b16 %v4752, %v4750
        %v4771 = vpack.c.b16 %v4755, %v4753
        %v4772 = vpack.c.b16 %v4756, %v4754
        %v4773 = vpack.c.b16 %v4759, %v4757
        %v4774 = vpack.c.b16 %v4760, %v4758
        %v4775 = vpack.c.b16 %v4763, %v4761
        %v4776 = vpack.c.b16 %v4764, %v4762
        %v4777 = vpack.c.b16 %v4765, %v4765
        %v4778 = vpack.c.b16 %v4766, %v4766
        %v4780 = vshrl.u32 %v4767, 16
        %v4782 = vrot.slane %v4780, 2
        %v4783 = vshll.u32 %v4767, 16
        %v4785 = vrot.slane %v4783, 3
        %v4786 = vor.u32 %v4782, %v4785
        %v4788 = vshrl.u32 %v4769, 16
        %v4790 = vrot.slane %v4788, 2
        %v4791 = vshll.u32 %v4769, 16
        %v4793 = vrot.slane %v4791, 3
        %v4794 = vor.u32 %v4790, %v4793
        %v4795 = vsel %vm3710, %v4786, %v4794
        %v4797 = vshrl.u32 %v4768, 16
        %v4799 = vrot.slane %v4797, 2
        %v4800 = vshll.u32 %v4768, 16
        %v4802 = vrot.slane %v4800, 3
        %v4803 = vor.u32 %v4799, %v4802
        %v4805 = vshrl.u32 %v4770, 16
        %v4807 = vrot.slane %v4805, 2
        %v4808 = vshll.u32 %v4770, 16
        %v4810 = vrot.slane %v4808, 3
        %v4811 = vor.u32 %v4807, %v4810
        %v4812 = vsel %vm3710, %v4803, %v4811
        %v4814 = vshrl.u32 %v4771, 16
        %v4816 = vrot.slane %v4814, 2
        %v4817 = vshll.u32 %v4771, 16
        %v4819 = vrot.slane %v4817, 3
        %v4820 = vor.u32 %v4816, %v4819
        %v4821 = vsel %vm3710, %v4794, %v4820
        %v4823 = vshrl.u32 %v4772, 16
        %v4825 = vrot.slane %v4823, 2
        %v4826 = vshll.u32 %v4772, 16
        %v4828 = vrot.slane %v4826, 3
        %v4829 = vor.u32 %v4825, %v4828
        %v4830 = vsel %vm3710, %v4811, %v4829
        %v4832 = vshrl.u32 %v4773, 16
        %v4834 = vrot.slane %v4832, 2
        %v4835 = vshll.u32 %v4773, 16
        %v4837 = vrot.slane %v4835, 3
        %v4838 = vor.u32 %v4834, %v4837
        %v4839 = vsel %vm3710, %v4820, %v4838
        %v4841 = vshrl.u32 %v4774, 16
        %v4843 = vrot.slane %v4841, 2
        %v4844 = vshll.u32 %v4774, 16
        %v4846 = vrot.slane %v4844, 3
        %v4847 = vor.u32 %v4843, %v4846
        %v4848 = vsel %vm3710, %v4829, %v4847
        %v4850 = vshrl.u32 %v4775, 16
        %v4852 = vrot.slane %v4850, 2
        %v4853 = vshll.u32 %v4775, 16
        %v4855 = vrot.slane %v4853, 3
        %v4856 = vor.u32 %v4852, %v4855
        %v4857 = vsel %vm3710, %v4838, %v4856
        %v4859 = vshrl.u32 %v4776, 16
        %v4861 = vrot.slane %v4859, 2
        %v4862 = vshll.u32 %v4776, 16
        %v4864 = vrot.slane %v4862, 3
        %v4865 = vor.u32 %v4861, %v4864
        %v4866 = vsel %vm3710, %v4847, %v4865
        %v4868 = vshrl.u32 %v4777, 16
        %v4870 = vrot.slane %v4868, 2
        %v4871 = vshll.u32 %v4777, 16
        %v4873 = vrot.slane %v4871, 3
        %v4874 = vor.u32 %v4870, %v4873
        %v4875 = vsel %vm3710, %v4856, %v4874
        %v4877 = vshrl.u32 %v4778, 16
        %v4879 = vrot.slane %v4877, 2
        %v4880 = vshll.u32 %v4778, 16
        %v4882 = vrot.slane %v4880, 3
        %v4883 = vor.u32 %v4879, %v4882
        %v4884 = vsel %vm3710, %v4865, %v4883
        %v4927 = vunpack.c.l.b16 %v4702
        %v4928 = vunpack.c.l.b16 %v4703
        %v4929 = vunpack.c.l.b16 %v4704
        %v4930 = vunpack.c.l.b16 %v4705
        %v4931 = vunpack.c.l.b16 %v4706
        %v4932 = vunpack.c.l.b16 %v4707
        %v4933 = vunpack.c.l.b16 %v4708
        %v4934 = vunpack.c.l.b16 %v4709
        %v4935 = vunpack.c.l.b16 %v4710
        %v4936 = vunpack.c.l.b16 %v4711
        %v4937 = vunpack.c.l.b16 %v4712
        %v4938 = vunpack.c.l.b16 %v4713
        %v4939 = vunpack.c.l.b16 %v4714
        %v4940 = vunpack.c.l.b16 %v4715
        %v4941 = vunpack.c.l.b16 %v4716
        %v4942 = vunpack.c.l.b16 %v4717
        %v4943 = vunpack.c.l.b16 %v4718
        %v4944 = vunpack.c.l.b16 %v4719
        %v4945 = vunpack.c.l.b16 %v4720
        %v4946 = vunpack.c.l.b16 %v4721
        %v4947 = vunpack.c.l.b16 %v4722
        %v4948 = vunpack.c.l.b16 %v4723
        %v4949 = vunpack.c.l.b16 %v4724
        %v4950 = vunpack.c.l.b16 %v4725
        %v4951 = vunpack.c.l.b16 %v4726
        %v4952 = vunpack.c.l.b16 %v4727
        %v4953 = vunpack.c.l.b16 %v4728
        %v4954 = vunpack.c.l.b16 %v4729
        %v4955 = vunpack.c.l.b16 %v4730
        %v4956 = vunpack.c.l.b16 %v4731
        %v4957 = vunpack.c.l.b16 %v4732
        %v4958 = vunpack.c.l.b16 %v4733
        %v4959 = vpack.c.b16 %v4928, %v4927
        %v4960 = vpack.c.b16 %v4930, %v4929
        %v4961 = vpack.c.b16 %v4932, %v4931
        %v4962 = vpack.c.b16 %v4934, %v4933
        %v4963 = vpack.c.b16 %v4936, %v4935
        %v4964 = vpack.c.b16 %v4938, %v4937
        %v4965 = vpack.c.b16 %v4940, %v4939
        %v4966 = vpack.c.b16 %v4942, %v4941
        %v4967 = vpack.c.b16 %v4944, %v4943
        %v4968 = vpack.c.b16 %v4946, %v4945
        %v4969 = vpack.c.b16 %v4948, %v4947
        %v4970 = vpack.c.b16 %v4950, %v4949
        %v4971 = vpack.c.b16 %v4952, %v4951
        %v4972 = vpack.c.b16 %v4954, %v4953
        %v4973 = vpack.c.b16 %v4956, %v4955
        %v4974 = vpack.c.b16 %v4958, %v4957
        %4991 = vmatprep.subr.bf16.mxu0 0
        %4992 = vmatpush1.bf16.msra.mxu0 %v4959
        %4993 = vmatprep.subr.bf16.mxu0 0
        %4994 = vmatpush1.bf16.msra.mxu0 %v4960
        %4995 = vmatprep.subr.bf16.mxu0 0
        %4996 = vmatpush1.bf16.msra.mxu0 %v4961
        %4997 = vmatprep.subr.bf16.mxu0 0
        %4998 = vmatpush1.bf16.msra.mxu0 %v4962
        %4999 = vmatprep.subr.bf16.mxu0 0
        %5000 = vmatpush1.bf16.msra.mxu0 %v4963
        %5001 = vmatprep.subr.bf16.mxu0 0
        %5002 = vmatpush1.bf16.msra.mxu0 %v4964
        %5003 = vmatprep.subr.bf16.mxu0 0
        %5004 = vmatpush1.bf16.msra.mxu0 %v4965
        %5005 = vmatprep.subr.bf16.mxu0 0
        %5006 = vmatpush1.bf16.msra.mxu0 %v4966
        %5007 = vmatprep.subr.bf16.mxu0 0
        %5008 = vmatpush1.bf16.msra.mxu0 %v4967
        %5009 = vmatprep.subr.bf16.mxu0 0
        %5010 = vmatpush1.bf16.msra.mxu0 %v4968
        %5011 = vmatprep.subr.bf16.mxu0 0
        %5012 = vmatpush1.bf16.msra.mxu0 %v4969
        %5013 = vmatprep.subr.bf16.mxu0 0
        %5014 = vmatpush1.bf16.msra.mxu0 %v4970
        %5015 = vmatprep.subr.bf16.mxu0 0
        %5016 = vmatpush1.bf16.msra.mxu0 %v4971
        %5017 = vmatprep.subr.bf16.mxu0 0
        %5018 = vmatpush1.bf16.msra.mxu0 %v4972
        %5019 = vmatprep.subr.bf16.mxu0 0
        %5020 = vmatpush1.bf16.msra.mxu0 %v4973
        %5021 = vmatprep.subr.bf16.mxu0 0
        %5022 = vmatpush1.bf16.msra.mxu0 %v4974
        %5023 = vmatprep.mubr.bf16.mxu0 %v4812
        %5024 = vmatmul.mubr.bf16.gmra.mrb[0].mxu0 %v4795
        %v5025 = vpop.f32.mrb[0].mxu0
        %v5026 = vadd.f32 0.0, %v5025
        %v5027 = vpop.f32.mrb[0].mxu0
        %v5028 = vpop.f32.mrb[0].mxu0
        %v5029 = vadd.f32 0.0, %v5028
        %v5030 = vpop.f32.mrb[0].mxu0
        %5031 = vmatprep.mubr.bf16.mxu0 %v4830
        %5032 = vmatmul.mubr.bf16.gmra.mrb[0].mxu0 %v4821
        %v5033 = vpop.f32.mrb[0].mxu0
        %v5034 = vadd.f32 0.0, %v5033
        %v5035 = vpop.f32.mrb[0].mxu0
        %v5036 = vpop.f32.mrb[0].mxu0
        %v5037 = vadd.f32 0.0, %v5036
        %v5038 = vpop.f32.mrb[0].mxu0
        %5039 = vmatprep.mubr.bf16.mxu0 %v4848
        %5040 = vmatmul.mubr.bf16.gmra.mrb[0].mxu0 %v4839
        %v5041 = vpop.f32.mrb[0].mxu0
        %v5042 = vadd.f32 0.0, %v5041
        %v5043 = vpop.f32.mrb[0].mxu0
        %v5044 = vpop.f32.mrb[0].mxu0
        %v5045 = vadd.f32 0.0, %v5044
        %v5046 = vpop.f32.mrb[0].mxu0
        %5047 = vmatprep.mubr.bf16.mxu0 %v4866
        %5048 = vmatmul.mubr.bf16.gmra.mrb[0].mxu0 %v4857
        %v5049 = vpop.f32.mrb[0].mxu0
        %v5050 = vadd.f32 0.0, %v5049
        %v5051 = vpop.f32.mrb[0].mxu0
        %v5052 = vpop.f32.mrb[0].mxu0
        %v5053 = vadd.f32 0.0, %v5052
        %v5054 = vpop.f32.mrb[0].mxu0
        %5055 = vmatprep.mubr.bf16.mxu0 %v4884
        %5056 = vmatmul.mubr.bf16.gmra.mrb[0].mxu0 %v4875
        %v5057 = vpop.f32.mrb[0].mxu0
        %v5058 = vadd.f32 0.0, %v5057
        %v5059 = vpop.f32.mrb[0].mxu0
        %v5060 = vpop.f32.mrb[0].mxu0
        %v5061 = vadd.f32 0.0, %v5060
        %v5062 = vpop.f32.mrb[0].mxu0
        %5063 = vdwg.mxu0
        %v5064 = vadd.f32 %v4652, %v5026
        %v5065 = vadd.f32 %v4655, %v5029
        %v5066 = vadd.f32 %v4660, %v5034
        %v5067 = vadd.f32 %v4663, %v5037
        %v5068 = vadd.f32 %v4668, %v5042
        %v5069 = vadd.f32 %v4671, %v5045
        %v5070 = vadd.f32 %v4676, %v5050
        %v5071 = vadd.f32 %v4679, %v5053
        %v5072 = vadd.f32 %v4684, %v5058
        %v5073 = vadd.f32 %v4687, %v5061
        %v5074 = vld [vmem:[#allocation2 + $0x18] sm:$0x88]
        %s5075 = scalar_lea.vmem [#allocation4], 1408
        %v5076 = vld [vmem:[%s5075] sm:$0xf]
        %v5077 = vld [vmem:[%s5075 + $0x4] sm:$0xf]
        %v5078 = vld [vmem:[%s5075 + $0x8] sm:$0xf]
        %v5079 = vld [vmem:[%s5075 + $0xc] sm:$0xf]
        %v5080 = vld [vmem:[%s5075 + $0x10] sm:$0xf]
        %v5081 = vld [vmem:[%s5075 + $0x14] sm:$0xf]
        %v5082 = vld [vmem:[%s5075 + $0x18] sm:$0xf]
        %v5083 = vld [vmem:[%s5075 + $0x1c] sm:$0xf]
        %v5084 = vld [vmem:[%s5075 + $0x20] sm:$0xf]
        %v5085 = vld [vmem:[%s5075 + $0x24] sm:$0xf]
        %v5086 = vld [vmem:[%s5075 + $0x28] sm:$0xf]
        %v5087 = vld [vmem:[%s5075 + $0x2c] sm:$0xf]
        %v5088 = vld [vmem:[%s5075 + $0x30] sm:$0xf]
        %v5089 = vld [vmem:[%s5075 + $0x34] sm:$0xf]
        %v5090 = vld [vmem:[%s5075 + $0x38] sm:$0xf]
        %v5091 = vld [vmem:[%s5075 + $0x3c] sm:$0xf]
        %v5092 = vld [vmem:[%s5075 + $0x40] sm:$0xf]
        %v5093 = vld [vmem:[%s5075 + $0x44] sm:$0xf]
        %v5094 = vld [vmem:[%s5075 + $0x48] sm:$0xf]
        %v5095 = vld [vmem:[%s5075 + $0x4c] sm:$0xf]
        %v5096 = vld [vmem:[%s5075 + $0x50] sm:$0xf]
        %v5097 = vld [vmem:[%s5075 + $0x54] sm:$0xf]
        %v5098 = vld [vmem:[%s5075 + $0x58] sm:$0xf]
        %v5099 = vld [vmem:[%s5075 + $0x5c] sm:$0xf]
        %v5100 = vld [vmem:[%s5075 + $0x60] sm:$0xf]
        %v5101 = vld [vmem:[%s5075 + $0x64] sm:$0xf]
        %v5102 = vld [vmem:[%s5075 + $0x68] sm:$0xf]
        %v5103 = vld [vmem:[%s5075 + $0x6c] sm:$0xf]
        %v5104 = vld [vmem:[%s5075 + $0x70] sm:$0xf]
        %v5105 = vld [vmem:[%s5075 + $0x74] sm:$0xf]
        %v5106 = vld [vmem:[%s5075 + $0x78] sm:$0xf]
        %v5107 = vld [vmem:[%s5075 + $0x7c] sm:$0xf]
        %v5109 = vunpack.c.l.b16 %v5074
        %v5110 = vunpack.c.h.b16 %v5074
        %v5111 = vpack.c.b16 %v4747, %v5109
        %v5112 = vpack.c.b16 %v4748, %v5110
        %vm5113 = vcmask 1044480
        %v5114 = vrot.slane %v5111, 3
        %v5115 = vrot.slane %v4769, 3
        %v5116 = vsel %vm5113, %v5114, %v5115
        %v5117 = vrot.slane %v5112, 3
        %v5118 = vrot.slane %v4770, 3
        %v5119 = vsel %vm5113, %v5117, %v5118
        %v5120 = vrot.slane %v4771, 3
        %v5121 = vsel %vm5113, %v5115, %v5120
        %v5122 = vrot.slane %v4772, 3
        %v5123 = vsel %vm5113, %v5118, %v5122
        %v5124 = vrot.slane %v4773, 3
        %v5125 = vsel %vm5113, %v5120, %v5124
        %v5126 = vrot.slane %v4774, 3
        %v5127 = vsel %vm5113, %v5122, %v5126
        %v5128 = vrot.slane %v4775, 3
        %v5129 = vsel %vm5113, %v5124, %v5128
        %v5130 = vrot.slane %v4776, 3
        %v5131 = vsel %vm5113, %v5126, %v5130
        %v5132 = vrot.slane %v4777, 3
        %v5133 = vsel %vm5113, %v5128, %v5132
        %v5134 = vrot.slane %v4778, 3
        %v5135 = vsel %vm5113, %v5130, %v5134
        %v5178 = vunpack.c.l.b16 %v5076
        %v5179 = vunpack.c.l.b16 %v5077
        %v5180 = vunpack.c.l.b16 %v5078
        %v5181 = vunpack.c.l.b16 %v5079
        %v5182 = vunpack.c.l.b16 %v5080
        %v5183 = vunpack.c.l.b16 %v5081
        %v5184 = vunpack.c.l.b16 %v5082
        %v5185 = vunpack.c.l.b16 %v5083
        %v5186 = vunpack.c.l.b16 %v5084
        %v5187 = vunpack.c.l.b16 %v5085
        %v5188 = vunpack.c.l.b16 %v5086
        %v5189 = vunpack.c.l.b16 %v5087
        %v5190 = vunpack.c.l.b16 %v5088
        %v5191 = vunpack.c.l.b16 %v5089
        %v5192 = vunpack.c.l.b16 %v5090
        %v5193 = vunpack.c.l.b16 %v5091
        %v5194 = vunpack.c.l.b16 %v5092
        %v5195 = vunpack.c.l.b16 %v5093
        %v5196 = vunpack.c.l.b16 %v5094
        %v5197 = vunpack.c.l.b16 %v5095
        %v5198 = vunpack.c.l.b16 %v5096
        %v5199 = vunpack.c.l.b16 %v5097
        %v5200 = vunpack.c.l.b16 %v5098
        %v5201 = vunpack.c.l.b16 %v5099
        %v5202 = vunpack.c.l.b16 %v5100
        %v5203 = vunpack.c.l.b16 %v5101
        %v5204 = vunpack.c.l.b16 %v5102
        %v5205 = vunpack.c.l.b16 %v5103
        %v5206 = vunpack.c.l.b16 %v5104
        %v5207 = vunpack.c.l.b16 %v5105
        %v5208 = vunpack.c.l.b16 %v5106
        %v5209 = vunpack.c.l.b16 %v5107
        %v5210 = vpack.c.b16 %v5179, %v5178
        %v5211 = vpack.c.b16 %v5181, %v5180
        %v5212 = vpack.c.b16 %v5183, %v5182
        %v5213 = vpack.c.b16 %v5185, %v5184
        %v5214 = vpack.c.b16 %v5187, %v5186
        %v5215 = vpack.c.b16 %v5189, %v5188
        %v5216 = vpack.c.b16 %v5191, %v5190
        %v5217 = vpack.c.b16 %v5193, %v5192
        %v5218 = vpack.c.b16 %v5195, %v5194
        %v5219 = vpack.c.b16 %v5197, %v5196
        %v5220 = vpack.c.b16 %v5199, %v5198
        %v5221 = vpack.c.b16 %v5201, %v5200
        %v5222 = vpack.c.b16 %v5203, %v5202
        %v5223 = vpack.c.b16 %v5205, %v5204
        %v5224 = vpack.c.b16 %v5207, %v5206
        %v5225 = vpack.c.b16 %v5209, %v5208
        %5242 = vmatprep.subr.bf16.mxu0 0
        %5243 = vmatpush1.bf16.msra.mxu0 %v5210
        %5244 = vmatprep.subr.bf16.mxu0 0
        %5245 = vmatpush1.bf16.msra.mxu0 %v5211
        %5246 = vmatprep.subr.bf16.mxu0 0
        %5247 = vmatpush1.bf16.msra.mxu0 %v5212
        %5248 = vmatprep.subr.bf16.mxu0 0
        %5249 = vmatpush1.bf16.msra.mxu0 %v5213
        %5250 = vmatprep.subr.bf16.mxu0 0
        %5251 = vmatpush1.bf16.msra.mxu0 %v5214
        %5252 = vmatprep.subr.bf16.mxu0 0
        %5253 = vmatpush1.bf16.msra.mxu0 %v5215
        %5254 = vmatprep.subr.bf16.mxu0 0
        %5255 = vmatpush1.bf16.msra.mxu0 %v5216
        %5256 = vmatprep.subr.bf16.mxu0 0
        %5257 = vmatpush1.bf16.msra.mxu0 %v5217
        %5258 = vmatprep.subr.bf16.mxu0 0
        %5259 = vmatpush1.bf16.msra.mxu0 %v5218
        %5260 = vmatprep.subr.bf16.mxu0 0
        %5261 = vmatpush1.bf16.msra.mxu0 %v5219
        %5262 = vmatprep.subr.bf16.mxu0 0
        %5263 = vmatpush1.bf16.msra.mxu0 %v5220
        %5264 = vmatprep.subr.bf16.mxu0 0
        %5265 = vmatpush1.bf16.msra.mxu0 %v5221
        %5266 = vmatprep.subr.bf16.mxu0 0
        %5267 = vmatpush1.bf16.msra.mxu0 %v5222
        %5268 = vmatprep.subr.bf16.mxu0 0
        %5269 = vmatpush1.bf16.msra.mxu0 %v5223
        %5270 = vmatprep.subr.bf16.mxu0 0
        %5271 = vmatpush1.bf16.msra.mxu0 %v5224
        %5272 = vmatprep.subr.bf16.mxu0 0
        %5273 = vmatpush1.bf16.msra.mxu0 %v5225
        %5274 = vmatprep.mubr.bf16.mxu0 %v5119
        %5275 = vmatmul.mubr.bf16.gmra.mrb[0].mxu0 %v5116
        %v5276 = vpop.f32.mrb[0].mxu0
        %v5277 = vadd.f32 0.0, %v5276
        %v5278 = vpop.f32.mrb[0].mxu0
        %v5279 = vpop.f32.mrb[0].mxu0
        %v5280 = vadd.f32 0.0, %v5279
        %v5281 = vpop.f32.mrb[0].mxu0
        %5282 = vmatprep.mubr.bf16.mxu0 %v5123
        %5283 = vmatmul.mubr.bf16.gmra.mrb[0].mxu0 %v5121
        %v5284 = vpop.f32.mrb[0].mxu0
        %v5285 = vadd.f32 0.0, %v5284
        %v5286 = vpop.f32.mrb[0].mxu0
        %v5287 = vpop.f32.mrb[0].mxu0
        %v5288 = vadd.f32 0.0, %v5287
        %v5289 = vpop.f32.mrb[0].mxu0
        %5290 = vmatprep.mubr.bf16.mxu0 %v5127
        %5291 = vmatmul.mubr.bf16.gmra.mrb[0].mxu0 %v5125
        %v5292 = vpop.f32.mrb[0].mxu0
        %v5293 = vadd.f32 0.0, %v5292
        %v5294 = vpop.f32.mrb[0].mxu0
        %v5295 = vpop.f32.mrb[0].mxu0
        %v5296 = vadd.f32 0.0, %v5295
        %v5297 = vpop.f32.mrb[0].mxu0
        %5298 = vmatprep.mubr.bf16.mxu0 %v5131
        %5299 = vmatmul.mubr.bf16.gmra.mrb[0].mxu0 %v5129
        %v5300 = vpop.f32.mrb[0].mxu0
        %v5301 = vadd.f32 0.0, %v5300
        %v5302 = vpop.f32.mrb[0].mxu0
        %v5303 = vpop.f32.mrb[0].mxu0
        %v5304 = vadd.f32 0.0, %v5303
        %v5305 = vpop.f32.mrb[0].mxu0
        %5306 = vmatprep.mubr.bf16.mxu0 %v5135
        %5307 = vmatmul.mubr.bf16.gmra.mrb[0].mxu0 %v5133
        %v5308 = vpop.f32.mrb[0].mxu0
        %v5309 = vadd.f32 0.0, %v5308
        %v5310 = vpop.f32.mrb[0].mxu0
        %v5311 = vpop.f32.mrb[0].mxu0
        %v5312 = vadd.f32 0.0, %v5311
        %v5313 = vpop.f32.mrb[0].mxu0
        %5314 = vdwg.mxu0
        %v5315 = vadd.f32 %v5064, %v5277
        %v5316 = vadd.f32 %v5065, %v5280
        %v5317 = vadd.f32 %v5066, %v5285
        %v5318 = vadd.f32 %v5067, %v5288
        %v5319 = vadd.f32 %v5068, %v5293
        %v5320 = vadd.f32 %v5069, %v5296
        %v5321 = vadd.f32 %v5070, %v5301
        %v5322 = vadd.f32 %v5071, %v5304
        %v5323 = vadd.f32 %v5072, %v5309
        %v5324 = vadd.f32 %v5073, %v5312
        %v5325 = vadd.f32 %v5315, %v2685
        %v5326 = vadd.f32 %v5316, %v2685
        %v5327 = vadd.f32 %v5317, %v2685
        %v5328 = vadd.f32 %v5318, %v2685
        %v5329 = vadd.f32 %v5319, %v2685
        %v5330 = vadd.f32 %v5320, %v2685
        %v5331 = vadd.f32 %v5321, %v2685
        %v5332 = vadd.f32 %v5322, %v2685
        %v5333 = vadd.f32 %v5323, %v2685
        %v5334 = vadd.f32 %v5324, %v2685
        %v5335 = vmax.f32 %v5325, 0.0
        %v5336 = vmax.f32 %v5326, 0.0
        %v5337 = vmax.f32 %v5327, 0.0
        %v5338 = vmax.f32 %v5328, 0.0
        %v5339 = vmax.f32 %v5329, 0.0
        %v5340 = vmax.f32 %v5330, 0.0
        %v5341 = vmax.f32 %v5331, 0.0
        %v5342 = vmax.f32 %v5332, 0.0
        %v5343 = vmax.f32 %v5333, 0.0
        %v5344 = vmax.f32 %v5334, 0.0
        %v5345 = vpack.c.bf16 %v5336, %v5335
        %v5346 = vpack.c.bf16 %v5338, %v5337
        %v5347 = vpack.c.bf16 %v5340, %v5339
        %v5348 = vpack.c.bf16 %v5342, %v5341
        %v5349 = vpack.c.bf16 %v5344, %v5343
        %v5355 = vunpack.c.l.b16 %v5345
        %v5356 = vunpack.c.h.b16 %v5345
        %v5357 = vunpack.c.l.b16 %v5346
        %v5358 = vunpack.c.h.b16 %v5346
        %v5359 = vunpack.c.l.b16 %v5347
        %v5360 = vunpack.c.h.b16 %v5347
        %v5361 = vunpack.c.l.b16 %v5348
        %v5362 = vunpack.c.h.b16 %v5348
        %v5363 = vunpack.c.l.b16 %v5349
        %v5364 = vunpack.c.h.b16 %v5349
        %v5365 = vpack.c.b16 %v5355, %v5355
        %v5366 = vpack.c.b16 %v5356, %v5356
        %v5367 = vpack.c.b16 %v5357, %v5357
        %v5368 = vpack.c.b16 %v5358, %v5358
        %v5369 = vpack.c.b16 %v5359, %v5359
        %v5370 = vpack.c.b16 %v5360, %v5360
        %v5371 = vpack.c.b16 %v5361, %v5361
        %v5372 = vpack.c.b16 %v5362, %v5362
        %v5373 = vpack.c.b16 %v5363, %v5363
        %v5374 = vpack.c.b16 %v5364, %v5364
        %5385 = vst [vmem:[#allocation3 + $0x8] sm:$0xf] %v5365
        %5386 = vst [vmem:[#allocation3 + $0x18] sm:$0xf] %v5366
        %5387 = vst [vmem:[#allocation3 + $0x28] sm:$0xf] %v5367
        %5388 = vst [vmem:[#allocation3 + $0x38] sm:$0xf] %v5368
        %5389 = vst [vmem:[#allocation3 + $0x48] sm:$0xf] %v5369
        %5390 = vst [vmem:[#allocation3 + $0x58] sm:$0xf] %v5370
        %5391 = vst [vmem:[#allocation3 + $0x68] sm:$0xf] %v5371
        %5392 = vst [vmem:[#allocation3 + $0x78] sm:$0xf] %v5372
        %5393 = vst [vmem:[#allocation3 + $0x88] sm:$0xf] %v5373
        %5394 = vst [vmem:[#allocation3 + $0x98] sm:$0xf] %v5374
        %v5395 = vld [vmem:[#allocation2 + $0x10] sm:$0xcc]
        %v5396 = vld [vmem:[#allocation2 + $0x18] sm:$0xff]
        %v5397 = vld [vmem:[#allocation2 + $0x20] sm:$0xff]
        %v5398 = vld [vmem:[#allocation2 + $0x28] sm:$0xff]
        %v5399 = vld [vmem:[#allocation2 + $0x30] sm:$0xff]
        %v5400 = vld [vmem:[#allocation2 + $0x38] sm:$0xff]
        %v5401 = vld [vmem:[#allocation2 + $0x40] sm:$0xff]
        %v5402 = vld [vmem:[#allocation2 + $0x48] sm:$0xff]
        %v5403 = vld [vmem:[#allocation2 + $0x50] sm:$0xff]
        %v5404 = vld [vmem:[#allocation2 + $0x58] sm:$0xff]
        %v5405 = vld [vmem:[#allocation2 + $0x60] sm:$0x33]
        %s5406 = scalar_lea.vmem [#allocation4], 1536
        %v5407 = vld [vmem:[%s5406] sm:$0xf]
        %v5408 = vld [vmem:[%s5406 + $0x4] sm:$0xf]
        %v5409 = vld [vmem:[%s5406 + $0x8] sm:$0xf]
        %v5410 = vld [vmem:[%s5406 + $0xc] sm:$0xf]
        %v5411 = vld [vmem:[%s5406 + $0x10] sm:$0xf]
        %v5412 = vld [vmem:[%s5406 + $0x14] sm:$0xf]
        %v5413 = vld [vmem:[%s5406 + $0x18] sm:$0xf]
        %v5414 = vld [vmem:[%s5406 + $0x1c] sm:$0xf]
        %v5415 = vld [vmem:[%s5406 + $0x20] sm:$0xf]
        %v5416 = vld [vmem:[%s5406 + $0x24] sm:$0xf]
        %v5417 = vld [vmem:[%s5406 + $0x28] sm:$0xf]
        %v5418 = vld [vmem:[%s5406 + $0x2c] sm:$0xf]
        %v5419 = vld [vmem:[%s5406 + $0x30] sm:$0xf]
        %v5420 = vld [vmem:[%s5406 + $0x34] sm:$0xf]
        %v5421 = vld [vmem:[%s5406 + $0x38] sm:$0xf]
        %v5422 = vld [vmem:[%s5406 + $0x3c] sm:$0xf]
        %v5423 = vld [vmem:[%s5406 + $0x40] sm:$0xf]
        %v5424 = vld [vmem:[%s5406 + $0x44] sm:$0xf]
        %v5425 = vld [vmem:[%s5406 + $0x48] sm:$0xf]
        %v5426 = vld [vmem:[%s5406 + $0x4c] sm:$0xf]
        %v5427 = vld [vmem:[%s5406 + $0x50] sm:$0xf]
        %v5428 = vld [vmem:[%s5406 + $0x54] sm:$0xf]
        %v5429 = vld [vmem:[%s5406 + $0x58] sm:$0xf]
        %v5430 = vld [vmem:[%s5406 + $0x5c] sm:$0xf]
        %v5431 = vld [vmem:[%s5406 + $0x60] sm:$0xf]
        %v5432 = vld [vmem:[%s5406 + $0x64] sm:$0xf]
        %v5433 = vld [vmem:[%s5406 + $0x68] sm:$0xf]
        %v5434 = vld [vmem:[%s5406 + $0x6c] sm:$0xf]
        %v5435 = vld [vmem:[%s5406 + $0x70] sm:$0xf]
        %v5436 = vld [vmem:[%s5406 + $0x74] sm:$0xf]
        %v5437 = vld [vmem:[%s5406 + $0x78] sm:$0xf]
        %v5438 = vld [vmem:[%s5406 + $0x7c] sm:$0xf]
        %v5439 = vld [vmem:[#allocation2 + $0x60] sm:$0x77]
        %s5440 = scalar_lea.vmem [#allocation4], 1664
        %v5441 = vld [vmem:[%s5440] sm:$0xf]
        %v5442 = vld [vmem:[%s5440 + $0x4] sm:$0xf]
        %v5443 = vld [vmem:[%s5440 + $0x8] sm:$0xf]
        %v5444 = vld [vmem:[%s5440 + $0xc] sm:$0xf]
        %v5445 = vld [vmem:[%s5440 + $0x10] sm:$0xf]
        %v5446 = vld [vmem:[%s5440 + $0x14] sm:$0xf]
        %v5447 = vld [vmem:[%s5440 + $0x18] sm:$0xf]
        %v5448 = vld [vmem:[%s5440 + $0x1c] sm:$0xf]
        %v5449 = vld [vmem:[%s5440 + $0x20] sm:$0xf]
        %v5450 = vld [vmem:[%s5440 + $0x24] sm:$0xf]
        %v5451 = vld [vmem:[%s5440 + $0x28] sm:$0xf]
        %v5452 = vld [vmem:[%s5440 + $0x2c] sm:$0xf]
        %v5453 = vld [vmem:[%s5440 + $0x30] sm:$0xf]
        %v5454 = vld [vmem:[%s5440 + $0x34] sm:$0xf]
        %v5455 = vld [vmem:[%s5440 + $0x38] sm:$0xf]
        %v5456 = vld [vmem:[%s5440 + $0x3c] sm:$0xf]
        %v5457 = vld [vmem:[%s5440 + $0x40] sm:$0xf]
        %v5458 = vld [vmem:[%s5440 + $0x44] sm:$0xf]
        %v5459 = vld [vmem:[%s5440 + $0x48] sm:$0xf]
        %v5460 = vld [vmem:[%s5440 + $0x4c] sm:$0xf]
        %v5461 = vld [vmem:[%s5440 + $0x50] sm:$0xf]
        %v5462 = vld [vmem:[%s5440 + $0x54] sm:$0xf]
        %v5463 = vld [vmem:[%s5440 + $0x58] sm:$0xf]
        %v5464 = vld [vmem:[%s5440 + $0x5c] sm:$0xf]
        %v5465 = vld [vmem:[%s5440 + $0x60] sm:$0xf]
        %v5466 = vld [vmem:[%s5440 + $0x64] sm:$0xf]
        %v5467 = vld [vmem:[%s5440 + $0x68] sm:$0xf]
        %v5468 = vld [vmem:[%s5440 + $0x6c] sm:$0xf]
        %v5469 = vld [vmem:[%s5440 + $0x70] sm:$0xf]
        %v5470 = vld [vmem:[%s5440 + $0x74] sm:$0xf]
        %v5471 = vld [vmem:[%s5440 + $0x78] sm:$0xf]
        %v5472 = vld [vmem:[%s5440 + $0x7c] sm:$0xf]
        %v5484 = vunpack.c.l.b16 %v5395
        %v5485 = vunpack.c.h.b16 %v5395
        %v5486 = vunpack.c.l.b16 %v5396
        %v5487 = vunpack.c.h.b16 %v5396
        %v5488 = vunpack.c.l.b16 %v5397
        %v5489 = vunpack.c.h.b16 %v5397
        %v5490 = vunpack.c.l.b16 %v5398
        %v5491 = vunpack.c.h.b16 %v5398
        %v5492 = vunpack.c.l.b16 %v5399
        %v5493 = vunpack.c.h.b16 %v5399
        %v5494 = vunpack.c.l.b16 %v5400
        %v5495 = vunpack.c.h.b16 %v5400
        %v5496 = vunpack.c.l.b16 %v5401
        %v5497 = vunpack.c.h.b16 %v5401
        %v5498 = vunpack.c.l.b16 %v5402
        %v5499 = vunpack.c.h.b16 %v5402
        %v5500 = vunpack.c.l.b16 %v5403
        %v5501 = vunpack.c.h.b16 %v5403
        %v5502 = vunpack.c.l.b16 %v5404
        %v5503 = vunpack.c.h.b16 %v5404
        %v5504 = vunpack.c.l.b16 %v5439
        %v5505 = vunpack.c.h.b16 %v5439
        %v5506 = vpack.c.b16 %v5486, %v5484
        %v5507 = vpack.c.b16 %v5487, %v5485
        %v5508 = vpack.c.b16 %v5490, %v5488
        %v5509 = vpack.c.b16 %v5491, %v5489
        %v5510 = vpack.c.b16 %v5494, %v5492
        %v5511 = vpack.c.b16 %v5495, %v5493
        %v5512 = vpack.c.b16 %v5498, %v5496
        %v5513 = vpack.c.b16 %v5499, %v5497
        %v5514 = vpack.c.b16 %v5502, %v5500
        %v5515 = vpack.c.b16 %v5503, %v5501
        %v5516 = vpack.c.b16 %v5504, %v5504
        %v5517 = vpack.c.b16 %v5505, %v5505
        %v5519 = vshrl.u32 %v5506, 16
        %v5521 = vrot.slane %v5519, 2
        %v5522 = vshll.u32 %v5506, 16
        %v5524 = vrot.slane %v5522, 3
        %v5525 = vor.u32 %v5521, %v5524
        %v5527 = vshrl.u32 %v5508, 16
        %v5529 = vrot.slane %v5527, 2
        %v5530 = vshll.u32 %v5508, 16
        %v5532 = vrot.slane %v5530, 3
        %v5533 = vor.u32 %v5529, %v5532
        %v5534 = vsel %vm3710, %v5525, %v5533
        %v5536 = vshrl.u32 %v5507, 16
        %v5538 = vrot.slane %v5536, 2
        %v5539 = vshll.u32 %v5507, 16
        %v5541 = vrot.slane %v5539, 3
        %v5542 = vor.u32 %v5538, %v5541
        %v5544 = vshrl.u32 %v5509, 16
        %v5546 = vrot.slane %v5544, 2
        %v5547 = vshll.u32 %v5509, 16
        %v5549 = vrot.slane %v5547, 3
        %v5550 = vor.u32 %v5546, %v5549
        %v5551 = vsel %vm3710, %v5542, %v5550
        %v5553 = vshrl.u32 %v5510, 16
        %v5555 = vrot.slane %v5553, 2
        %v5556 = vshll.u32 %v5510, 16
        %v5558 = vrot.slane %v5556, 3
        %v5559 = vor.u32 %v5555, %v5558
        %v5560 = vsel %vm3710, %v5533, %v5559
        %v5562 = vshrl.u32 %v5511, 16
        %v5564 = vrot.slane %v5562, 2
        %v5565 = vshll.u32 %v5511, 16
        %v5567 = vrot.slane %v5565, 3
        %v5568 = vor.u32 %v5564, %v5567
        %v5569 = vsel %vm3710, %v5550, %v5568
        %v5571 = vshrl.u32 %v5512, 16
        %v5573 = vrot.slane %v5571, 2
        %v5574 = vshll.u32 %v5512, 16
        %v5576 = vrot.slane %v5574, 3
        %v5577 = vor.u32 %v5573, %v5576
        %v5578 = vsel %vm3710, %v5559, %v5577
        %v5580 = vshrl.u32 %v5513, 16
        %v5582 = vrot.slane %v5580, 2
        %v5583 = vshll.u32 %v5513, 16
        %v5585 = vrot.slane %v5583, 3
        %v5586 = vor.u32 %v5582, %v5585
        %v5587 = vsel %vm3710, %v5568, %v5586
        %v5589 = vshrl.u32 %v5514, 16
        %v5591 = vrot.slane %v5589, 2
        %v5592 = vshll.u32 %v5514, 16
        %v5594 = vrot.slane %v5592, 3
        %v5595 = vor.u32 %v5591, %v5594
        %v5596 = vsel %vm3710, %v5577, %v5595
        %v5598 = vshrl.u32 %v5515, 16
        %v5600 = vrot.slane %v5598, 2
        %v5601 = vshll.u32 %v5515, 16
        %v5603 = vrot.slane %v5601, 3
        %v5604 = vor.u32 %v5600, %v5603
        %v5605 = vsel %vm3710, %v5586, %v5604
        %v5607 = vshrl.u32 %v5516, 16
        %v5609 = vrot.slane %v5607, 2
        %v5610 = vshll.u32 %v5516, 16
        %v5612 = vrot.slane %v5610, 3
        %v5613 = vor.u32 %v5609, %v5612
        %v5614 = vsel %vm3710, %v5595, %v5613
        %v5616 = vshrl.u32 %v5517, 16
        %v5618 = vrot.slane %v5616, 2
        %v5619 = vshll.u32 %v5517, 16
        %v5621 = vrot.slane %v5619, 3
        %v5622 = vor.u32 %v5618, %v5621
        %v5623 = vsel %vm3710, %v5604, %v5622
        %v5666 = vunpack.c.l.b16 %v5441
        %v5667 = vunpack.c.l.b16 %v5442
        %v5668 = vunpack.c.l.b16 %v5443
        %v5669 = vunpack.c.l.b16 %v5444
        %v5670 = vunpack.c.l.b16 %v5445
        %v5671 = vunpack.c.l.b16 %v5446
        %v5672 = vunpack.c.l.b16 %v5447
        %v5673 = vunpack.c.l.b16 %v5448
        %v5674 = vunpack.c.l.b16 %v5449
        %v5675 = vunpack.c.l.b16 %v5450
        %v5676 = vunpack.c.l.b16 %v5451
        %v5677 = vunpack.c.l.b16 %v5452
        %v5678 = vunpack.c.l.b16 %v5453
        %v5679 = vunpack.c.l.b16 %v5454
        %v5680 = vunpack.c.l.b16 %v5455
        %v5681 = vunpack.c.l.b16 %v5456
        %v5682 = vunpack.c.l.b16 %v5457
        %v5683 = vunpack.c.l.b16 %v5458
        %v5684 = vunpack.c.l.b16 %v5459
        %v5685 = vunpack.c.l.b16 %v5460
        %v5686 = vunpack.c.l.b16 %v5461
        %v5687 = vunpack.c.l.b16 %v5462
        %v5688 = vunpack.c.l.b16 %v5463
        %v5689 = vunpack.c.l.b16 %v5464
        %v5690 = vunpack.c.l.b16 %v5465
        %v5691 = vunpack.c.l.b16 %v5466
        %v5692 = vunpack.c.l.b16 %v5467
        %v5693 = vunpack.c.l.b16 %v5468
        %v5694 = vunpack.c.l.b16 %v5469
        %v5695 = vunpack.c.l.b16 %v5470
        %v5696 = vunpack.c.l.b16 %v5471
        %v5697 = vunpack.c.l.b16 %v5472
        %v5698 = vpack.c.b16 %v5667, %v5666
        %v5699 = vpack.c.b16 %v5669, %v5668
        %v5700 = vpack.c.b16 %v5671, %v5670
        %v5701 = vpack.c.b16 %v5673, %v5672
        %v5702 = vpack.c.b16 %v5675, %v5674
        %v5703 = vpack.c.b16 %v5677, %v5676
        %v5704 = vpack.c.b16 %v5679, %v5678
        %v5705 = vpack.c.b16 %v5681, %v5680
        %v5706 = vpack.c.b16 %v5683, %v5682
        %v5707 = vpack.c.b16 %v5685, %v5684
        %v5708 = vpack.c.b16 %v5687, %v5686
        %v5709 = vpack.c.b16 %v5689, %v5688
        %v5710 = vpack.c.b16 %v5691, %v5690
        %v5711 = vpack.c.b16 %v5693, %v5692
        %v5712 = vpack.c.b16 %v5695, %v5694
        %v5713 = vpack.c.b16 %v5697, %v5696
        %5730 = vmatprep.subr.bf16.mxu0 0
        %5731 = vmatpush1.bf16.msra.mxu0 %v5698
        %5732 = vmatprep.subr.bf16.mxu0 0
        %5733 = vmatpush1.bf16.msra.mxu0 %v5699
        %5734 = vmatprep.subr.bf16.mxu0 0
        %5735 = vmatpush1.bf16.msra.mxu0 %v5700
        %5736 = vmatprep.subr.bf16.mxu0 0
        %5737 = vmatpush1.bf16.msra.mxu0 %v5701
        %5738 = vmatprep.subr.bf16.mxu0 0
        %5739 = vmatpush1.bf16.msra.mxu0 %v5702
        %5740 = vmatprep.subr.bf16.mxu0 0
        %5741 = vmatpush1.bf16.msra.mxu0 %v5703
        %5742 = vmatprep.subr.bf16.mxu0 0
        %5743 = vmatpush1.bf16.msra.mxu0 %v5704
        %5744 = vmatprep.subr.bf16.mxu0 0
        %5745 = vmatpush1.bf16.msra.mxu0 %v5705
        %5746 = vmatprep.subr.bf16.mxu0 0
        %5747 = vmatpush1.bf16.msra.mxu0 %v5706
        %5748 = vmatprep.subr.bf16.mxu0 0
        %5749 = vmatpush1.bf16.msra.mxu0 %v5707
        %5750 = vmatprep.subr.bf16.mxu0 0
        %5751 = vmatpush1.bf16.msra.mxu0 %v5708
        %5752 = vmatprep.subr.bf16.mxu0 0
        %5753 = vmatpush1.bf16.msra.mxu0 %v5709
        %5754 = vmatprep.subr.bf16.mxu0 0
        %5755 = vmatpush1.bf16.msra.mxu0 %v5710
        %5756 = vmatprep.subr.bf16.mxu0 0
        %5757 = vmatpush1.bf16.msra.mxu0 %v5711
        %5758 = vmatprep.subr.bf16.mxu0 0
        %5759 = vmatpush1.bf16.msra.mxu0 %v5712
        %5760 = vmatprep.subr.bf16.mxu0 0
        %5761 = vmatpush1.bf16.msra.mxu0 %v5713
        %5762 = vmatprep.mubr.bf16.mxu0 %v5551
        %5763 = vmatmul.mubr.bf16.gmra.mrb[0].mxu0 %v5534
        %v5764 = vpop.f32.mrb[0].mxu0
        %v5765 = vadd.f32 0.0, %v5764
        %v5766 = vpop.f32.mrb[0].mxu0
        %v5767 = vpop.f32.mrb[0].mxu0
        %v5768 = vadd.f32 0.0, %v5767
        %v5769 = vpop.f32.mrb[0].mxu0
        %5770 = vmatprep.mubr.bf16.mxu0 %v5569
        %5771 = vmatmul.mubr.bf16.gmra.mrb[0].mxu0 %v5560
        %v5772 = vpop.f32.mrb[0].mxu0
        %v5773 = vadd.f32 0.0, %v5772
        %v5774 = vpop.f32.mrb[0].mxu0
        %v5775 = vpop.f32.mrb[0].mxu0
        %v5776 = vadd.f32 0.0, %v5775
        %v5777 = vpop.f32.mrb[0].mxu0
        %5778 = vmatprep.mubr.bf16.mxu0 %v5587
        %5779 = vmatmul.mubr.bf16.gmra.mrb[0].mxu0 %v5578
        %v5780 = vpop.f32.mrb[0].mxu0
        %v5781 = vadd.f32 0.0, %v5780
        %v5782 = vpop.f32.mrb[0].mxu0
        %v5783 = vpop.f32.mrb[0].mxu0
        %v5784 = vadd.f32 0.0, %v5783
        %v5785 = vpop.f32.mrb[0].mxu0
        %5786 = vmatprep.mubr.bf16.mxu0 %v5605
        %5787 = vmatmul.mubr.bf16.gmra.mrb[0].mxu0 %v5596
        %v5788 = vpop.f32.mrb[0].mxu0
        %v5789 = vadd.f32 0.0, %v5788
        %v5790 = vpop.f32.mrb[0].mxu0
        %v5791 = vpop.f32.mrb[0].mxu0
        %v5792 = vadd.f32 0.0, %v5791
        %v5793 = vpop.f32.mrb[0].mxu0
        %5794 = vmatprep.mubr.bf16.mxu0 %v5623
        %5795 = vmatmul.mubr.bf16.gmra.mrb[0].mxu0 %v5614
        %v5796 = vpop.f32.mrb[0].mxu0
        %v5797 = vadd.f32 0.0, %v5796
        %v5798 = vpop.f32.mrb[0].mxu0
        %v5799 = vpop.f32.mrb[0].mxu0
        %v5800 = vadd.f32 0.0, %v5799
        %v5801 = vpop.f32.mrb[0].mxu0
        %5802 = vdwg.mxu0
        %v5804 = vunpack.c.l.b16 %v5405
        %v5805 = vunpack.c.h.b16 %v5405
        %v5806 = vpack.c.b16 %v5804, %v5804
        %v5807 = vpack.c.b16 %v5805, %v5805
        %v5808 = vrot.slane %v5506, 2
        %v5809 = vrot.slane %v5508, 2
        %v5810 = vsel %vm2469, %v5808, %v5809
        %v5811 = vrot.slane %v5507, 2
        %v5812 = vrot.slane %v5509, 2
        %v5813 = vsel %vm2469, %v5811, %v5812
        %v5814 = vrot.slane %v5510, 2
        %v5815 = vsel %vm2469, %v5809, %v5814
        %v5816 = vrot.slane %v5511, 2
        %v5817 = vsel %vm2469, %v5812, %v5816
        %v5818 = vrot.slane %v5512, 2
        %v5819 = vsel %vm2469, %v5814, %v5818
        %v5820 = vrot.slane %v5513, 2
        %v5821 = vsel %vm2469, %v5816, %v5820
        %v5822 = vrot.slane %v5514, 2
        %v5823 = vsel %vm2469, %v5818, %v5822
        %v5824 = vrot.slane %v5515, 2
        %v5825 = vsel %vm2469, %v5820, %v5824
        %v5826 = vrot.slane %v5806, 2
        %v5827 = vsel %vm2469, %v5822, %v5826
        %v5828 = vrot.slane %v5807, 2
        %v5829 = vsel %vm2469, %v5824, %v5828
        %v5872 = vunpack.c.l.b16 %v5407
        %v5873 = vunpack.c.l.b16 %v5408
        %v5874 = vunpack.c.l.b16 %v5409
        %v5875 = vunpack.c.l.b16 %v5410
        %v5876 = vunpack.c.l.b16 %v5411
        %v5877 = vunpack.c.l.b16 %v5412
        %v5878 = vunpack.c.l.b16 %v5413
        %v5879 = vunpack.c.l.b16 %v5414
        %v5880 = vunpack.c.l.b16 %v5415
        %v5881 = vunpack.c.l.b16 %v5416
        %v5882 = vunpack.c.l.b16 %v5417
        %v5883 = vunpack.c.l.b16 %v5418
        %v5884 = vunpack.c.l.b16 %v5419
        %v5885 = vunpack.c.l.b16 %v5420
        %v5886 = vunpack.c.l.b16 %v5421
        %v5887 = vunpack.c.l.b16 %v5422
        %v5888 = vunpack.c.l.b16 %v5423
        %v5889 = vunpack.c.l.b16 %v5424
        %v5890 = vunpack.c.l.b16 %v5425
        %v5891 = vunpack.c.l.b16 %v5426
        %v5892 = vunpack.c.l.b16 %v5427
        %v5893 = vunpack.c.l.b16 %v5428
        %v5894 = vunpack.c.l.b16 %v5429
        %v5895 = vunpack.c.l.b16 %v5430
        %v5896 = vunpack.c.l.b16 %v5431
        %v5897 = vunpack.c.l.b16 %v5432
        %v5898 = vunpack.c.l.b16 %v5433
        %v5899 = vunpack.c.l.b16 %v5434
        %v5900 = vunpack.c.l.b16 %v5435
        %v5901 = vunpack.c.l.b16 %v5436
        %v5902 = vunpack.c.l.b16 %v5437
        %v5903 = vunpack.c.l.b16 %v5438
        %v5904 = vpack.c.b16 %v5873, %v5872
        %v5905 = vpack.c.b16 %v5875, %v5874
        %v5906 = vpack.c.b16 %v5877, %v5876
        %v5907 = vpack.c.b16 %v5879, %v5878
        %v5908 = vpack.c.b16 %v5881, %v5880
        %v5909 = vpack.c.b16 %v5883, %v5882
        %v5910 = vpack.c.b16 %v5885, %v5884
        %v5911 = vpack.c.b16 %v5887, %v5886
        %v5912 = vpack.c.b16 %v5889, %v5888
        %v5913 = vpack.c.b16 %v5891, %v5890
        %v5914 = vpack.c.b16 %v5893, %v5892
        %v5915 = vpack.c.b16 %v5895, %v5894
        %v5916 = vpack.c.b16 %v5897, %v5896
        %v5917 = vpack.c.b16 %v5899, %v5898
        %v5918 = vpack.c.b16 %v5901, %v5900
        %v5919 = vpack.c.b16 %v5903, %v5902
        %5936 = vmatprep.subr.bf16.mxu0 0
        %5937 = vmatpush1.bf16.msra.mxu0 %v5904
        %5938 = vmatprep.subr.bf16.mxu0 0
        %5939 = vmatpush1.bf16.msra.mxu0 %v5905
        %5940 = vmatprep.subr.bf16.mxu0 0
        %5941 = vmatpush1.bf16.msra.mxu0 %v5906
        %5942 = vmatprep.subr.bf16.mxu0 0
        %5943 = vmatpush1.bf16.msra.mxu0 %v5907
        %5944 = vmatprep.subr.bf16.mxu0 0
        %5945 = vmatpush1.bf16.msra.mxu0 %v5908
        %5946 = vmatprep.subr.bf16.mxu0 0
        %5947 = vmatpush1.bf16.msra.mxu0 %v5909
        %5948 = vmatprep.subr.bf16.mxu0 0
        %5949 = vmatpush1.bf16.msra.mxu0 %v5910
        %5950 = vmatprep.subr.bf16.mxu0 0
        %5951 = vmatpush1.bf16.msra.mxu0 %v5911
        %5952 = vmatprep.subr.bf16.mxu0 0
        %5953 = vmatpush1.bf16.msra.mxu0 %v5912
        %5954 = vmatprep.subr.bf16.mxu0 0
        %5955 = vmatpush1.bf16.msra.mxu0 %v5913
        %5956 = vmatprep.subr.bf16.mxu0 0
        %5957 = vmatpush1.bf16.msra.mxu0 %v5914
        %5958 = vmatprep.subr.bf16.mxu0 0
        %5959 = vmatpush1.bf16.msra.mxu0 %v5915
        %5960 = vmatprep.subr.bf16.mxu0 0
        %5961 = vmatpush1.bf16.msra.mxu0 %v5916
        %5962 = vmatprep.subr.bf16.mxu0 0
        %5963 = vmatpush1.bf16.msra.mxu0 %v5917
        %5964 = vmatprep.subr.bf16.mxu0 0
        %5965 = vmatpush1.bf16.msra.mxu0 %v5918
        %5966 = vmatprep.subr.bf16.mxu0 0
        %5967 = vmatpush1.bf16.msra.mxu0 %v5919
        %5968 = vmatprep.mubr.bf16.mxu0 %v5813
        %5969 = vmatmul.mubr.bf16.gmra.mrb[0].mxu0 %v5810
        %v5970 = vpop.f32.mrb[0].mxu0
        %v5971 = vadd.f32 %v5765, %v5970
        %v5972 = vpop.f32.mrb[0].mxu0
        %v5973 = vpop.f32.mrb[0].mxu0
        %v5974 = vadd.f32 %v5768, %v5973
        %v5975 = vpop.f32.mrb[0].mxu0
        %5976 = vmatprep.mubr.bf16.mxu0 %v5817
        %5977 = vmatmul.mubr.bf16.gmra.mrb[0].mxu0 %v5815
        %v5978 = vpop.f32.mrb[0].mxu0
        %v5979 = vadd.f32 %v5773, %v5978
        %v5980 = vpop.f32.mrb[0].mxu0
        %v5981 = vpop.f32.mrb[0].mxu0
        %v5982 = vadd.f32 %v5776, %v5981
        %v5983 = vpop.f32.mrb[0].mxu0
        %5984 = vmatprep.mubr.bf16.mxu0 %v5821
        %5985 = vmatmul.mubr.bf16.gmra.mrb[0].mxu0 %v5819
        %v5986 = vpop.f32.mrb[0].mxu0
        %v5987 = vadd.f32 %v5781, %v5986
        %v5988 = vpop.f32.mrb[0].mxu0
        %v5989 = vpop.f32.mrb[0].mxu0
        %v5990 = vadd.f32 %v5784, %v5989
        %v5991 = vpop.f32.mrb[0].mxu0
        %5992 = vmatprep.mubr.bf16.mxu0 %v5825
        %5993 = vmatmul.mubr.bf16.gmra.mrb[0].mxu0 %v5823
        %v5994 = vpop.f32.mrb[0].mxu0
        %v5995 = vadd.f32 %v5789, %v5994
        %v5996 = vpop.f32.mrb[0].mxu0
        %v5997 = vpop.f32.mrb[0].mxu0
        %v5998 = vadd.f32 %v5792, %v5997
        %v5999 = vpop.f32.mrb[0].mxu0
        %6000 = vmatprep.mubr.bf16.mxu0 %v5829
        %6001 = vmatmul.mubr.bf16.gmra.mrb[0].mxu0 %v5827
        %v6002 = vpop.f32.mrb[0].mxu0
        %v6003 = vadd.f32 %v5797, %v6002
        %v6004 = vpop.f32.mrb[0].mxu0
        %v6005 = vpop.f32.mrb[0].mxu0
        %v6006 = vadd.f32 %v5800, %v6005
        %v6007 = vpop.f32.mrb[0].mxu0
        %6008 = vdwg.mxu0
        %v6009 = vld [vmem:[#allocation2 + $0x18] sm:$0x88]
        %v6010 = vld [vmem:[#allocation2 + $0x20] sm:$0xff]
        %v6011 = vld [vmem:[#allocation2 + $0x28] sm:$0xff]
        %v6012 = vld [vmem:[#allocation2 + $0x30] sm:$0xff]
        %v6013 = vld [vmem:[#allocation2 + $0x38] sm:$0xff]
        %v6014 = vld [vmem:[#allocation2 + $0x40] sm:$0xff]
        %v6015 = vld [vmem:[#allocation2 + $0x48] sm:$0xff]
        %v6016 = vld [vmem:[#allocation2 + $0x50] sm:$0xff]
        %v6017 = vld [vmem:[#allocation2 + $0x58] sm:$0xff]
        %v6018 = vld [vmem:[#allocation2 + $0x60] sm:$0xff]
        %v6019 = vld [vmem:[#allocation2 + $0x68] sm:$0x77]
        %s6020 = scalar_lea.vmem [#allocation4], 1792
        %v6021 = vld [vmem:[%s6020] sm:$0xf]
        %v6022 = vld [vmem:[%s6020 + $0x4] sm:$0xf]
        %v6023 = vld [vmem:[%s6020 + $0x8] sm:$0xf]
        %v6024 = vld [vmem:[%s6020 + $0xc] sm:$0xf]
        %v6025 = vld [vmem:[%s6020 + $0x10] sm:$0xf]
        %v6026 = vld [vmem:[%s6020 + $0x14] sm:$0xf]
        %v6027 = vld [vmem:[%s6020 + $0x18] sm:$0xf]
        %v6028 = vld [vmem:[%s6020 + $0x1c] sm:$0xf]
        %v6029 = vld [vmem:[%s6020 + $0x20] sm:$0xf]
        %v6030 = vld [vmem:[%s6020 + $0x24] sm:$0xf]
        %v6031 = vld [vmem:[%s6020 + $0x28] sm:$0xf]
        %v6032 = vld [vmem:[%s6020 + $0x2c] sm:$0xf]
        %v6033 = vld [vmem:[%s6020 + $0x30] sm:$0xf]
        %v6034 = vld [vmem:[%s6020 + $0x34] sm:$0xf]
        %v6035 = vld [vmem:[%s6020 + $0x38] sm:$0xf]
        %v6036 = vld [vmem:[%s6020 + $0x3c] sm:$0xf]
        %v6037 = vld [vmem:[%s6020 + $0x40] sm:$0xf]
        %v6038 = vld [vmem:[%s6020 + $0x44] sm:$0xf]
        %v6039 = vld [vmem:[%s6020 + $0x48] sm:$0xf]
        %v6040 = vld [vmem:[%s6020 + $0x4c] sm:$0xf]
        %v6041 = vld [vmem:[%s6020 + $0x50] sm:$0xf]
        %v6042 = vld [vmem:[%s6020 + $0x54] sm:$0xf]
        %v6043 = vld [vmem:[%s6020 + $0x58] sm:$0xf]
        %v6044 = vld [vmem:[%s6020 + $0x5c] sm:$0xf]
        %v6045 = vld [vmem:[%s6020 + $0x60] sm:$0xf]
        %v6046 = vld [vmem:[%s6020 + $0x64] sm:$0xf]
        %v6047 = vld [vmem:[%s6020 + $0x68] sm:$0xf]
        %v6048 = vld [vmem:[%s6020 + $0x6c] sm:$0xf]
        %v6049 = vld [vmem:[%s6020 + $0x70] sm:$0xf]
        %v6050 = vld [vmem:[%s6020 + $0x74] sm:$0xf]
        %v6051 = vld [vmem:[%s6020 + $0x78] sm:$0xf]
        %v6052 = vld [vmem:[%s6020 + $0x7c] sm:$0xf]
        %v6064 = vunpack.c.l.b16 %v6009
        %v6065 = vunpack.c.h.b16 %v6009
        %v6066 = vunpack.c.l.b16 %v6010
        %v6067 = vunpack.c.h.b16 %v6010
        %v6068 = vunpack.c.l.b16 %v6011
        %v6069 = vunpack.c.h.b16 %v6011
        %v6070 = vunpack.c.l.b16 %v6012
        %v6071 = vunpack.c.h.b16 %v6012
        %v6072 = vunpack.c.l.b16 %v6013
        %v6073 = vunpack.c.h.b16 %v6013
        %v6074 = vunpack.c.l.b16 %v6014
        %v6075 = vunpack.c.h.b16 %v6014
        %v6076 = vunpack.c.l.b16 %v6015
        %v6077 = vunpack.c.h.b16 %v6015
        %v6078 = vunpack.c.l.b16 %v6016
        %v6079 = vunpack.c.h.b16 %v6016
        %v6080 = vunpack.c.l.b16 %v6017
        %v6081 = vunpack.c.h.b16 %v6017
        %v6082 = vunpack.c.l.b16 %v6018
        %v6083 = vunpack.c.h.b16 %v6018
        %v6084 = vunpack.c.l.b16 %v6019
        %v6085 = vunpack.c.h.b16 %v6019
        %v6086 = vpack.c.b16 %v6066, %v6064
        %v6087 = vpack.c.b16 %v6067, %v6065
        %v6088 = vpack.c.b16 %v6070, %v6068
        %v6089 = vpack.c.b16 %v6071, %v6069
        %v6090 = vpack.c.b16 %v6074, %v6072
        %v6091 = vpack.c.b16 %v6075, %v6073
        %v6092 = vpack.c.b16 %v6078, %v6076
        %v6093 = vpack.c.b16 %v6079, %v6077
        %v6094 = vpack.c.b16 %v6082, %v6080
        %v6095 = vpack.c.b16 %v6083, %v6081
        %v6096 = vpack.c.b16 %v6084, %v6084
        %v6097 = vpack.c.b16 %v6085, %v6085
        %v6098 = vrot.slane %v6086, 3
        %v6099 = vrot.slane %v6088, 3
        %v6100 = vsel %vm5113, %v6098, %v6099
        %v6101 = vrot.slane %v6087, 3
        %v6102 = vrot.slane %v6089, 3
        %v6103 = vsel %vm5113, %v6101, %v6102
        %v6104 = vrot.slane %v6090, 3
        %v6105 = vsel %vm5113, %v6099, %v6104
        %v6106 = vrot.slane %v6091, 3
        %v6107 = vsel %vm5113, %v6102, %v6106
        %v6108 = vrot.slane %v6092, 3
        %v6109 = vsel %vm5113, %v6104, %v6108
        %v6110 = vrot.slane %v6093, 3
        %v6111 = vsel %vm5113, %v6106, %v6110
        %v6112 = vrot.slane %v6094, 3
        %v6113 = vsel %vm5113, %v6108, %v6112
        %v6114 = vrot.slane %v6095, 3
        %v6115 = vsel %vm5113, %v6110, %v6114
        %v6116 = vrot.slane %v6096, 3
        %v6117 = vsel %vm5113, %v6112, %v6116
        %v6118 = vrot.slane %v6097, 3
        %v6119 = vsel %vm5113, %v6114, %v6118
        %v6162 = vunpack.c.l.b16 %v6021
        %v6163 = vunpack.c.l.b16 %v6022
        %v6164 = vunpack.c.l.b16 %v6023
        %v6165 = vunpack.c.l.b16 %v6024
        %v6166 = vunpack.c.l.b16 %v6025
        %v6167 = vunpack.c.l.b16 %v6026
        %v6168 = vunpack.c.l.b16 %v6027
        %v6169 = vunpack.c.l.b16 %v6028
        %v6170 = vunpack.c.l.b16 %v6029
        %v6171 = vunpack.c.l.b16 %v6030
        %v6172 = vunpack.c.l.b16 %v6031
        %v6173 = vunpack.c.l.b16 %v6032
        %v6174 = vunpack.c.l.b16 %v6033
        %v6175 = vunpack.c.l.b16 %v6034
        %v6176 = vunpack.c.l.b16 %v6035
        %v6177 = vunpack.c.l.b16 %v6036
        %v6178 = vunpack.c.l.b16 %v6037
        %v6179 = vunpack.c.l.b16 %v6038
        %v6180 = vunpack.c.l.b16 %v6039
        %v6181 = vunpack.c.l.b16 %v6040
        %v6182 = vunpack.c.l.b16 %v6041
        %v6183 = vunpack.c.l.b16 %v6042
        %v6184 = vunpack.c.l.b16 %v6043
        %v6185 = vunpack.c.l.b16 %v6044
        %v6186 = vunpack.c.l.b16 %v6045
        %v6187 = vunpack.c.l.b16 %v6046
        %v6188 = vunpack.c.l.b16 %v6047
        %v6189 = vunpack.c.l.b16 %v6048
        %v6190 = vunpack.c.l.b16 %v6049
        %v6191 = vunpack.c.l.b16 %v6050
        %v6192 = vunpack.c.l.b16 %v6051
        %v6193 = vunpack.c.l.b16 %v6052
        %v6194 = vpack.c.b16 %v6163, %v6162
        %v6195 = vpack.c.b16 %v6165, %v6164
        %v6196 = vpack.c.b16 %v6167, %v6166
        %v6197 = vpack.c.b16 %v6169, %v6168
        %v6198 = vpack.c.b16 %v6171, %v6170
        %v6199 = vpack.c.b16 %v6173, %v6172
        %v6200 = vpack.c.b16 %v6175, %v6174
        %v6201 = vpack.c.b16 %v6177, %v6176
        %v6202 = vpack.c.b16 %v6179, %v6178
        %v6203 = vpack.c.b16 %v6181, %v6180
        %v6204 = vpack.c.b16 %v6183, %v6182
        %v6205 = vpack.c.b16 %v6185, %v6184
        %v6206 = vpack.c.b16 %v6187, %v6186
        %v6207 = vpack.c.b16 %v6189, %v6188
        %v6208 = vpack.c.b16 %v6191, %v6190
        %v6209 = vpack.c.b16 %v6193, %v6192
        %6226 = vmatprep.subr.bf16.mxu0 0
        %6227 = vmatpush1.bf16.msra.mxu0 %v6194
        %6228 = vmatprep.subr.bf16.mxu0 0
        %6229 = vmatpush1.bf16.msra.mxu0 %v6195
        %6230 = vmatprep.subr.bf16.mxu0 0
        %6231 = vmatpush1.bf16.msra.mxu0 %v6196
        %6232 = vmatprep.subr.bf16.mxu0 0
        %6233 = vmatpush1.bf16.msra.mxu0 %v6197
        %6234 = vmatprep.subr.bf16.mxu0 0
        %6235 = vmatpush1.bf16.msra.mxu0 %v6198
        %6236 = vmatprep.subr.bf16.mxu0 0
        %6237 = vmatpush1.bf16.msra.mxu0 %v6199
        %6238 = vmatprep.subr.bf16.mxu0 0
        %6239 = vmatpush1.bf16.msra.mxu0 %v6200
        %6240 = vmatprep.subr.bf16.mxu0 0
        %6241 = vmatpush1.bf16.msra.mxu0 %v6201
        %6242 = vmatprep.subr.bf16.mxu0 0
        %6243 = vmatpush1.bf16.msra.mxu0 %v6202
        %6244 = vmatprep.subr.bf16.mxu0 0
        %6245 = vmatpush1.bf16.msra.mxu0 %v6203
        %6246 = vmatprep.subr.bf16.mxu0 0
        %6247 = vmatpush1.bf16.msra.mxu0 %v6204
        %6248 = vmatprep.subr.bf16.mxu0 0
        %6249 = vmatpush1.bf16.msra.mxu0 %v6205
        %6250 = vmatprep.subr.bf16.mxu0 0
        %6251 = vmatpush1.bf16.msra.mxu0 %v6206
        %6252 = vmatprep.subr.bf16.mxu0 0
        %6253 = vmatpush1.bf16.msra.mxu0 %v6207
        %6254 = vmatprep.subr.bf16.mxu0 0
        %6255 = vmatpush1.bf16.msra.mxu0 %v6208
        %6256 = vmatprep.subr.bf16.mxu0 0
        %6257 = vmatpush1.bf16.msra.mxu0 %v6209
        %6258 = vmatprep.mubr.bf16.mxu0 %v6103
        %6259 = vmatmul.mubr.bf16.gmra.mrb[0].mxu0 %v6100
        %v6260 = vpop.f32.mrb[0].mxu0
        %v6261 = vadd.f32 0.0, %v6260
        %v6262 = vpop.f32.mrb[0].mxu0
        %v6263 = vpop.f32.mrb[0].mxu0
        %v6264 = vadd.f32 0.0, %v6263
        %v6265 = vpop.f32.mrb[0].mxu0
        %6266 = vmatprep.mubr.bf16.mxu0 %v6107
        %6267 = vmatmul.mubr.bf16.gmra.mrb[0].mxu0 %v6105
        %v6268 = vpop.f32.mrb[0].mxu0
        %v6269 = vadd.f32 0.0, %v6268
        %v6270 = vpop.f32.mrb[0].mxu0
        %v6271 = vpop.f32.mrb[0].mxu0
        %v6272 = vadd.f32 0.0, %v6271
        %v6273 = vpop.f32.mrb[0].mxu0
        %6274 = vmatprep.mubr.bf16.mxu0 %v6111
        %6275 = vmatmul.mubr.bf16.gmra.mrb[0].mxu0 %v6109
        %v6276 = vpop.f32.mrb[0].mxu0
        %v6277 = vadd.f32 0.0, %v6276
        %v6278 = vpop.f32.mrb[0].mxu0
        %v6279 = vpop.f32.mrb[0].mxu0
        %v6280 = vadd.f32 0.0, %v6279
        %v6281 = vpop.f32.mrb[0].mxu0
        %6282 = vmatprep.mubr.bf16.mxu0 %v6115
        %6283 = vmatmul.mubr.bf16.gmra.mrb[0].mxu0 %v6113
        %v6284 = vpop.f32.mrb[0].mxu0
        %v6285 = vadd.f32 0.0, %v6284
        %v6286 = vpop.f32.mrb[0].mxu0
        %v6287 = vpop.f32.mrb[0].mxu0
        %v6288 = vadd.f32 0.0, %v6287
        %v6289 = vpop.f32.mrb[0].mxu0
        %6290 = vmatprep.mubr.bf16.mxu0 %v6119
        %6291 = vmatmul.mubr.bf16.gmra.mrb[0].mxu0 %v6117
        %v6292 = vpop.f32.mrb[0].mxu0
        %v6293 = vadd.f32 0.0, %v6292
        %v6294 = vpop.f32.mrb[0].mxu0
        %v6295 = vpop.f32.mrb[0].mxu0
        %v6296 = vadd.f32 0.0, %v6295
        %v6297 = vpop.f32.mrb[0].mxu0
        %6298 = vdwg.mxu0
        %v6299 = vadd.f32 %v5971, %v6261
        %v6300 = vadd.f32 %v5974, %v6264
        %v6301 = vadd.f32 %v5979, %v6269
        %v6302 = vadd.f32 %v5982, %v6272
        %v6303 = vadd.f32 %v5987, %v6277
        %v6304 = vadd.f32 %v5990, %v6280
        %v6305 = vadd.f32 %v5995, %v6285
        %v6306 = vadd.f32 %v5998, %v6288
        %v6307 = vadd.f32 %v6003, %v6293
        %v6308 = vadd.f32 %v6006, %v6296
        %v6309 = vld [vmem:[#allocation2 + $0x68] sm:$0xff]
        %s6310 = scalar_lea.vmem [#allocation4], 1920
        %v6311 = vld [vmem:[%s6310] sm:$0xf]
        %v6312 = vld [vmem:[%s6310 + $0x4] sm:$0xf]
        %v6313 = vld [vmem:[%s6310 + $0x8] sm:$0xf]
        %v6314 = vld [vmem:[%s6310 + $0xc] sm:$0xf]
        %v6315 = vld [vmem:[%s6310 + $0x10] sm:$0xf]
        %v6316 = vld [vmem:[%s6310 + $0x14] sm:$0xf]
        %v6317 = vld [vmem:[%s6310 + $0x18] sm:$0xf]
        %v6318 = vld [vmem:[%s6310 + $0x1c] sm:$0xf]
        %v6319 = vld [vmem:[%s6310 + $0x20] sm:$0xf]
        %v6320 = vld [vmem:[%s6310 + $0x24] sm:$0xf]
        %v6321 = vld [vmem:[%s6310 + $0x28] sm:$0xf]
        %v6322 = vld [vmem:[%s6310 + $0x2c] sm:$0xf]
        %v6323 = vld [vmem:[%s6310 + $0x30] sm:$0xf]
        %v6324 = vld [vmem:[%s6310 + $0x34] sm:$0xf]
        %v6325 = vld [vmem:[%s6310 + $0x38] sm:$0xf]
        %v6326 = vld [vmem:[%s6310 + $0x3c] sm:$0xf]
        %v6327 = vld [vmem:[%s6310 + $0x40] sm:$0xf]
        %v6328 = vld [vmem:[%s6310 + $0x44] sm:$0xf]
        %v6329 = vld [vmem:[%s6310 + $0x48] sm:$0xf]
        %v6330 = vld [vmem:[%s6310 + $0x4c] sm:$0xf]
        %v6331 = vld [vmem:[%s6310 + $0x50] sm:$0xf]
        %v6332 = vld [vmem:[%s6310 + $0x54] sm:$0xf]
        %v6333 = vld [vmem:[%s6310 + $0x58] sm:$0xf]
        %v6334 = vld [vmem:[%s6310 + $0x5c] sm:$0xf]
        %v6335 = vld [vmem:[%s6310 + $0x60] sm:$0xf]
        %v6336 = vld [vmem:[%s6310 + $0x64] sm:$0xf]
        %v6337 = vld [vmem:[%s6310 + $0x68] sm:$0xf]
        %v6338 = vld [vmem:[%s6310 + $0x6c] sm:$0xf]
        %v6339 = vld [vmem:[%s6310 + $0x70] sm:$0xf]
        %v6340 = vld [vmem:[%s6310 + $0x74] sm:$0xf]
        %v6341 = vld [vmem:[%s6310 + $0x78] sm:$0xf]
        %v6342 = vld [vmem:[%s6310 + $0x7c] sm:$0xf]
        %v6344 = vunpack.c.l.b16 %v6309
        %v6345 = vunpack.c.h.b16 %v6309
        %v6346 = vpack.c.b16 %v6344, %v6344
        %v6347 = vpack.c.b16 %v6345, %v6345
        %vm6348 = vsmask.f32 4352
        %v6350 = vshrl.u32 %v6086, 16
        %v6352 = vrot.slane %v6350, 3
        %v6353 = vshll.u32 %v6086, 16
        %v6355 = vrot.slane %v6353, 4
        %v6356 = vor.u32 %v6352, %v6355
        %v6358 = vshrl.u32 %v6088, 16
        %v6360 = vrot.slane %v6358, 3
        %v6361 = vshll.u32 %v6088, 16
        %v6363 = vrot.slane %v6361, 4
        %v6364 = vor.u32 %v6360, %v6363
        %v6365 = vsel %vm6348, %v6356, %v6364
        %v6367 = vshrl.u32 %v6087, 16
        %v6369 = vrot.slane %v6367, 3
        %v6370 = vshll.u32 %v6087, 16
        %v6372 = vrot.slane %v6370, 4
        %v6373 = vor.u32 %v6369, %v6372
        %v6375 = vshrl.u32 %v6089, 16
        %v6377 = vrot.slane %v6375, 3
        %v6378 = vshll.u32 %v6089, 16
        %v6380 = vrot.slane %v6378, 4
        %v6381 = vor.u32 %v6377, %v6380
        %v6382 = vsel %vm6348, %v6373, %v6381
        %v6384 = vshrl.u32 %v6090, 16
        %v6386 = vrot.slane %v6384, 3
        %v6387 = vshll.u32 %v6090, 16
        %v6389 = vrot.slane %v6387, 4
        %v6390 = vor.u32 %v6386, %v6389
        %v6391 = vsel %vm6348, %v6364, %v6390
        %v6393 = vshrl.u32 %v6091, 16
        %v6395 = vrot.slane %v6393, 3
        %v6396 = vshll.u32 %v6091, 16
        %v6398 = vrot.slane %v6396, 4
        %v6399 = vor.u32 %v6395, %v6398
        %v6400 = vsel %vm6348, %v6381, %v6399
        %v6402 = vshrl.u32 %v6092, 16
        %v6404 = vrot.slane %v6402, 3
        %v6405 = vshll.u32 %v6092, 16
        %v6407 = vrot.slane %v6405, 4
        %v6408 = vor.u32 %v6404, %v6407
        %v6409 = vsel %vm6348, %v6390, %v6408
        %v6411 = vshrl.u32 %v6093, 16
        %v6413 = vrot.slane %v6411, 3
        %v6414 = vshll.u32 %v6093, 16
        %v6416 = vrot.slane %v6414, 4
        %v6417 = vor.u32 %v6413, %v6416
        %v6418 = vsel %vm6348, %v6399, %v6417
        %v6420 = vshrl.u32 %v6094, 16
        %v6422 = vrot.slane %v6420, 3
        %v6423 = vshll.u32 %v6094, 16
        %v6425 = vrot.slane %v6423, 4
        %v6426 = vor.u32 %v6422, %v6425
        %v6427 = vsel %vm6348, %v6408, %v6426
        %v6429 = vshrl.u32 %v6095, 16
        %v6431 = vrot.slane %v6429, 3
        %v6432 = vshll.u32 %v6095, 16
        %v6434 = vrot.slane %v6432, 4
        %v6435 = vor.u32 %v6431, %v6434
        %v6436 = vsel %vm6348, %v6417, %v6435
        %v6438 = vshrl.u32 %v6346, 16
        %v6440 = vrot.slane %v6438, 3
        %v6441 = vshll.u32 %v6346, 16
        %v6443 = vrot.slane %v6441, 4
        %v6444 = vor.u32 %v6440, %v6443
        %v6445 = vsel %vm6348, %v6426, %v6444
        %v6447 = vshrl.u32 %v6347, 16
        %v6449 = vrot.slane %v6447, 3
        %v6450 = vshll.u32 %v6347, 16
        %v6452 = vrot.slane %v6450, 4
        %v6453 = vor.u32 %v6449, %v6452
        %v6454 = vsel %vm6348, %v6435, %v6453
        %v6497 = vunpack.c.l.b16 %v6311
        %v6498 = vunpack.c.l.b16 %v6312
        %v6499 = vunpack.c.l.b16 %v6313
        %v6500 = vunpack.c.l.b16 %v6314
        %v6501 = vunpack.c.l.b16 %v6315
        %v6502 = vunpack.c.l.b16 %v6316
        %v6503 = vunpack.c.l.b16 %v6317
        %v6504 = vunpack.c.l.b16 %v6318
        %v6505 = vunpack.c.l.b16 %v6319
        %v6506 = vunpack.c.l.b16 %v6320
        %v6507 = vunpack.c.l.b16 %v6321
        %v6508 = vunpack.c.l.b16 %v6322
        %v6509 = vunpack.c.l.b16 %v6323
        %v6510 = vunpack.c.l.b16 %v6324
        %v6511 = vunpack.c.l.b16 %v6325
        %v6512 = vunpack.c.l.b16 %v6326
        %v6513 = vunpack.c.l.b16 %v6327
        %v6514 = vunpack.c.l.b16 %v6328
        %v6515 = vunpack.c.l.b16 %v6329
        %v6516 = vunpack.c.l.b16 %v6330
        %v6517 = vunpack.c.l.b16 %v6331
        %v6518 = vunpack.c.l.b16 %v6332
        %v6519 = vunpack.c.l.b16 %v6333
        %v6520 = vunpack.c.l.b16 %v6334
        %v6521 = vunpack.c.l.b16 %v6335
        %v6522 = vunpack.c.l.b16 %v6336
        %v6523 = vunpack.c.l.b16 %v6337
        %v6524 = vunpack.c.l.b16 %v6338
        %v6525 = vunpack.c.l.b16 %v6339
        %v6526 = vunpack.c.l.b16 %v6340
        %v6527 = vunpack.c.l.b16 %v6341
        %v6528 = vunpack.c.l.b16 %v6342
        %v6529 = vpack.c.b16 %v6498, %v6497
        %v6530 = vpack.c.b16 %v6500, %v6499
        %v6531 = vpack.c.b16 %v6502, %v6501
        %v6532 = vpack.c.b16 %v6504, %v6503
        %v6533 = vpack.c.b16 %v6506, %v6505
        %v6534 = vpack.c.b16 %v6508, %v6507
        %v6535 = vpack.c.b16 %v6510, %v6509
        %v6536 = vpack.c.b16 %v6512, %v6511
        %v6537 = vpack.c.b16 %v6514, %v6513
        %v6538 = vpack.c.b16 %v6516, %v6515
        %v6539 = vpack.c.b16 %v6518, %v6517
        %v6540 = vpack.c.b16 %v6520, %v6519
        %v6541 = vpack.c.b16 %v6522, %v6521
        %v6542 = vpack.c.b16 %v6524, %v6523
        %v6543 = vpack.c.b16 %v6526, %v6525
        %v6544 = vpack.c.b16 %v6528, %v6527
        %6561 = vmatprep.subr.bf16.mxu0 0
        %6562 = vmatpush1.bf16.msra.mxu0 %v6529
        %6563 = vmatprep.subr.bf16.mxu0 0
        %6564 = vmatpush1.bf16.msra.mxu0 %v6530
        %6565 = vmatprep.subr.bf16.mxu0 0
        %6566 = vmatpush1.bf16.msra.mxu0 %v6531
        %6567 = vmatprep.subr.bf16.mxu0 0
        %6568 = vmatpush1.bf16.msra.mxu0 %v6532
        %6569 = vmatprep.subr.bf16.mxu0 0
        %6570 = vmatpush1.bf16.msra.mxu0 %v6533
        %6571 = vmatprep.subr.bf16.mxu0 0
        %6572 = vmatpush1.bf16.msra.mxu0 %v6534
        %6573 = vmatprep.subr.bf16.mxu0 0
        %6574 = vmatpush1.bf16.msra.mxu0 %v6535
        %6575 = vmatprep.subr.bf16.mxu0 0
        %6576 = vmatpush1.bf16.msra.mxu0 %v6536
        %6577 = vmatprep.subr.bf16.mxu0 0
        %6578 = vmatpush1.bf16.msra.mxu0 %v6537
        %6579 = vmatprep.subr.bf16.mxu0 0
        %6580 = vmatpush1.bf16.msra.mxu0 %v6538
        %6581 = vmatprep.subr.bf16.mxu0 0
        %6582 = vmatpush1.bf16.msra.mxu0 %v6539
        %6583 = vmatprep.subr.bf16.mxu0 0
        %6584 = vmatpush1.bf16.msra.mxu0 %v6540
        %6585 = vmatprep.subr.bf16.mxu0 0
        %6586 = vmatpush1.bf16.msra.mxu0 %v6541
        %6587 = vmatprep.subr.bf16.mxu0 0
        %6588 = vmatpush1.bf16.msra.mxu0 %v6542
        %6589 = vmatprep.subr.bf16.mxu0 0
        %6590 = vmatpush1.bf16.msra.mxu0 %v6543
        %6591 = vmatprep.subr.bf16.mxu0 0
        %6592 = vmatpush1.bf16.msra.mxu0 %v6544
        %6593 = vmatprep.mubr.bf16.mxu0 %v6382
        %6594 = vmatmul.mubr.bf16.gmra.mrb[0].mxu0 %v6365
        %v6595 = vpop.f32.mrb[0].mxu0
        %v6596 = vadd.f32 0.0, %v6595
        %v6597 = vpop.f32.mrb[0].mxu0
        %v6598 = vpop.f32.mrb[0].mxu0
        %v6599 = vadd.f32 0.0, %v6598
        %v6600 = vpop.f32.mrb[0].mxu0
        %6601 = vmatprep.mubr.bf16.mxu0 %v6400
        %6602 = vmatmul.mubr.bf16.gmra.mrb[0].mxu0 %v6391
        %v6603 = vpop.f32.mrb[0].mxu0
        %v6604 = vadd.f32 0.0, %v6603
        %v6605 = vpop.f32.mrb[0].mxu0
        %v6606 = vpop.f32.mrb[0].mxu0
        %v6607 = vadd.f32 0.0, %v6606
        %v6608 = vpop.f32.mrb[0].mxu0
        %6609 = vmatprep.mubr.bf16.mxu0 %v6418
        %6610 = vmatmul.mubr.bf16.gmra.mrb[0].mxu0 %v6409
        %v6611 = vpop.f32.mrb[0].mxu0
        %v6612 = vadd.f32 0.0, %v6611
        %v6613 = vpop.f32.mrb[0].mxu0
        %v6614 = vpop.f32.mrb[0].mxu0
        %v6615 = vadd.f32 0.0, %v6614
        %v6616 = vpop.f32.mrb[0].mxu0
        %6617 = vmatprep.mubr.bf16.mxu0 %v6436
        %6618 = vmatmul.mubr.bf16.gmra.mrb[0].mxu0 %v6427
        %v6619 = vpop.f32.mrb[0].mxu0
        %v6620 = vadd.f32 0.0, %v6619
        %v6621 = vpop.f32.mrb[0].mxu0
        %v6622 = vpop.f32.mrb[0].mxu0
        %v6623 = vadd.f32 0.0, %v6622
        %v6624 = vpop.f32.mrb[0].mxu0
        %6625 = vmatprep.mubr.bf16.mxu0 %v6454
        %6626 = vmatmul.mubr.bf16.gmra.mrb[0].mxu0 %v6445
        %v6627 = vpop.f32.mrb[0].mxu0
        %v6628 = vadd.f32 0.0, %v6627
        %v6629 = vpop.f32.mrb[0].mxu0
        %v6630 = vpop.f32.mrb[0].mxu0
        %v6631 = vadd.f32 0.0, %v6630
        %v6632 = vpop.f32.mrb[0].mxu0
        %6633 = vdwg.mxu0
        %v6634 = vadd.f32 %v6299, %v6596
        %v6635 = vadd.f32 %v6300, %v6599
        %v6636 = vadd.f32 %v6301, %v6604
        %v6637 = vadd.f32 %v6302, %v6607
        %v6638 = vadd.f32 %v6303, %v6612
        %v6639 = vadd.f32 %v6304, %v6615
        %v6640 = vadd.f32 %v6305, %v6620
        %v6641 = vadd.f32 %v6306, %v6623
        %v6642 = vadd.f32 %v6307, %v6628
        %v6643 = vadd.f32 %v6308, %v6631
        %v6644 = vadd.f32 %v6634, %v2685
        %v6645 = vadd.f32 %v6635, %v2685
        %v6646 = vadd.f32 %v6636, %v2685
        %v6647 = vadd.f32 %v6637, %v2685
        %v6648 = vadd.f32 %v6638, %v2685
        %v6649 = vadd.f32 %v6639, %v2685
        %v6650 = vadd.f32 %v6640, %v2685
        %v6651 = vadd.f32 %v6641, %v2685
        %v6652 = vadd.f32 %v6642, %v2685
        %v6653 = vadd.f32 %v6643, %v2685
        %v6654 = vmax.f32 %v6644, 0.0
        %v6655 = vmax.f32 %v6645, 0.0
        %v6656 = vmax.f32 %v6646, 0.0
        %v6657 = vmax.f32 %v6647, 0.0
        %v6658 = vmax.f32 %v6648, 0.0
        %v6659 = vmax.f32 %v6649, 0.0
        %v6660 = vmax.f32 %v6650, 0.0
        %v6661 = vmax.f32 %v6651, 0.0
        %v6662 = vmax.f32 %v6652, 0.0
        %v6663 = vmax.f32 %v6653, 0.0
        %v6664 = vpack.c.bf16 %v6655, %v6654
        %v6665 = vpack.c.bf16 %v6657, %v6656
        %v6666 = vpack.c.bf16 %v6659, %v6658
        %v6667 = vpack.c.bf16 %v6661, %v6660
        %v6668 = vpack.c.bf16 %v6663, %v6662
        %v6674 = vunpack.c.l.b16 %v6664
        %v6675 = vunpack.c.h.b16 %v6664
        %v6676 = vunpack.c.l.b16 %v6665
        %v6677 = vunpack.c.h.b16 %v6665
        %v6678 = vunpack.c.l.b16 %v6666
        %v6679 = vunpack.c.h.b16 %v6666
        %v6680 = vunpack.c.l.b16 %v6667
        %v6681 = vunpack.c.h.b16 %v6667
        %v6682 = vunpack.c.l.b16 %v6668
        %v6683 = vunpack.c.h.b16 %v6668
        %v6684 = vpack.c.b16 %v6674, %v6674
        %v6685 = vpack.c.b16 %v6675, %v6675
        %v6686 = vpack.c.b16 %v6676, %v6676
        %v6687 = vpack.c.b16 %v6677, %v6677
        %v6688 = vpack.c.b16 %v6678, %v6678
        %v6689 = vpack.c.b16 %v6679, %v6679
        %v6690 = vpack.c.b16 %v6680, %v6680
        %v6691 = vpack.c.b16 %v6681, %v6681
        %v6692 = vpack.c.b16 %v6682, %v6682
        %v6693 = vpack.c.b16 %v6683, %v6683
        %6704 = vst [vmem:[#allocation3 + $0xc] sm:$0xf] %v6684
        %6705 = vst [vmem:[#allocation3 + $0x1c] sm:$0xf] %v6685
        %6706 = vst [vmem:[#allocation3 + $0x2c] sm:$0xf] %v6686
        %6707 = vst [vmem:[#allocation3 + $0x3c] sm:$0xf] %v6687
        %6708 = vst [vmem:[#allocation3 + $0x4c] sm:$0xf] %v6688
        %6709 = vst [vmem:[#allocation3 + $0x5c] sm:$0xf] %v6689
        %6710 = vst [vmem:[#allocation3 + $0x6c] sm:$0xf] %v6690
        %6711 = vst [vmem:[#allocation3 + $0x7c] sm:$0xf] %v6691
        %6712 = vst [vmem:[#allocation3 + $0x8c] sm:$0xf] %v6692
        %6713 = vst [vmem:[#allocation3 + $0x9c] sm:$0xf] %v6693
        %v6714 = vld [vmem:[%s384] sm:$0xf]
        %v6715 = vld [vmem:[%s384 + $0x4] sm:$0xf]
        %v6716 = vld [vmem:[%s384 + $0x8] sm:$0xf]
        %v6717 = vld [vmem:[%s384 + $0xc] sm:$0xf]
        %v6718 = vld [vmem:[%s384 + $0x10] sm:$0xf]
        %v6719 = vld [vmem:[%s384 + $0x14] sm:$0xf]
        %v6720 = vld [vmem:[%s384 + $0x18] sm:$0xf]
        %v6721 = vld [vmem:[%s384 + $0x1c] sm:$0xf]
        %v6722 = vld [vmem:[%s384 + $0x20] sm:$0x7]
        %v6723 = vld [vmem:[%s2] sm:$0x3f]
        %v6724 = vld [vmem:[%s632] sm:$0xf]
        %v6725 = vld [vmem:[%s632 + $0x4] sm:$0xf]
        %v6726 = vld [vmem:[%s632 + $0x8] sm:$0xf]
        %v6727 = vld [vmem:[%s632 + $0xc] sm:$0xf]
        %v6728 = vld [vmem:[%s632 + $0x10] sm:$0xf]
        %v6729 = vld [vmem:[%s632 + $0x14] sm:$0xf]
        %v6730 = vld [vmem:[%s632 + $0x18] sm:$0xf]
        %v6731 = vld [vmem:[%s632 + $0x1c] sm:$0xf]
        %v6732 = vld [vmem:[%s632 + $0x20] sm:$0x7]
        %s6733 = scalar_lea.vmem %s2, 6
        %v6734 = vld [vmem:[%s6733] sm:$0x3f]
        %v6744 = vunpack.c.l.b16 %v6724
        %v6745 = vunpack.c.l.b16 %v6725
        %v6746 = vunpack.c.l.b16 %v6726
        %v6747 = vunpack.c.l.b16 %v6727
        %v6748 = vunpack.c.l.b16 %v6728
        %v6749 = vunpack.c.l.b16 %v6729
        %v6750 = vunpack.c.l.b16 %v6730
        %v6751 = vunpack.c.l.b16 %v6731
        %v6752 = vunpack.c.l.b16 %v6732
        %v6753 = vpack.c.b16 %v6745, %v6744
        %v6754 = vpack.c.b16 %v6747, %v6746
        %v6755 = vpack.c.b16 %v6749, %v6748
        %v6756 = vpack.c.b16 %v6751, %v6750
        %v6757 = vpack.c.b16 %v6752, %v6752
        %v6759 = vcombine.high %v6734, %v6734
        %v6761 = vunpack.c.l.s4 1983009808
        %v6762 = vunpack.c.0.s8 %v6761
        %v6763 = vlaneseq
        %v6764 = vshrl.u32 %v6763, 7
        %v6765 = vsub.s32 %v6762, %v6764
        %v6766 = vrot.slane %v6734, %v6765
        %v6768 = vunpack.c.l.s4 1983009808
        %v6769 = vunpack.c.0.s8 %v6768
        %v6770 = vlaneseq
        %v6771 = vshrl.u32 %v6770, 7
        %v6772 = vsub.s32 %v6769, %v6771
        %v6773 = vrot.slane %v6759, %v6772
        %v6774 = vcombine.high %v6766, %v6766
        %v6776 = vsel %vm444, %v6753, 0
        %v6779 = vsel %vm444, %v6754, 0
        %v6782 = vsel %vm444, %v6755, 0
        %v6785 = vsel %vm444, %v6756, 0
        %v6788 = vsel %vm444, %v6757, 0
        %v6791 = vsel %vm460, %v6766, 0
        %v6794 = vsel %vm460, %v6774, 0
        %v6797 = vsel %vm460, %v6773, 0
        %6799 = vmatprep.subr.bf16.mxu0 %v6794
        %6800 = vmatpush1.bf16.msra.mxu0 %v6791
        %6801 = vmatprep.subr.bf16.mxu0 0
        %6802 = vmatpush1.bf16.msra.mxu0 0
        %6803 = vmatprep.subr.bf16.mxu0 0
        %6804 = vmatpush1.bf16.msra.mxu0 0
        %6805 = vmatprep.subr.bf16.mxu0 0
        %6806 = vmatpush1.bf16.msra.mxu0 0
        %6807 = vmatprep.subr.bf16.mxu0 0
        %6808 = vmatpush1.bf16.msra.mxu0 0
        %6809 = vmatprep.subr.bf16.mxu0 0
        %6810 = vmatpush1.bf16.msra.mxu0 0
        %6811 = vmatprep.subr.bf16.mxu0 0
        %6812 = vmatpush1.bf16.msra.mxu0 0
        %6813 = vmatprep.subr.bf16.mxu0 0
        %6814 = vmatpush1.bf16.msra.mxu0 0
        %6815 = vmatprep.subr.bf16.mxu0 0
        %6816 = vmatpush1.bf16.msra.mxu0 0
        %6817 = vmatprep.subr.bf16.mxu0 0
        %6818 = vmatpush1.bf16.msra.mxu0 0
        %6819 = vmatprep.subr.bf16.mxu0 0
        %6820 = vmatpush1.bf16.msra.mxu0 0
        %6821 = vmatprep.subr.bf16.mxu0 0
        %6822 = vmatpush1.bf16.msra.mxu0 0
        %6823 = vmatprep.subr.bf16.mxu0 0
        %6824 = vmatpush1.bf16.msra.mxu0 0
        %6825 = vmatprep.subr.bf16.mxu0 0
        %6826 = vmatpush1.bf16.msra.mxu0 0
        %6827 = vmatprep.subr.bf16.mxu0 0
        %6828 = vmatpush1.bf16.msra.mxu0 0
        %6829 = vmatprep.subr.bf16.mxu0 0
        %6830 = vmatpush1.bf16.msra.mxu0 0
        %6831 = vmatprep.mubr.bf16.mxu0 0
        %6832 = vmatmul.mubr.bf16.gmra.mrb[0].mxu0 %v6776
        %v6833 = vpop.f32.mrb[0].mxu0
        %v6834 = vadd.f32 0.0, %v6833
        %v6835 = vpop.f32.mrb[0].mxu0
        %v6836 = vadd.f32 0.0, %v6835
        %v6837 = vpop.f32.mrb[0].mxu0
        %v6838 = vadd.f32 0.0, %v6837
        %v6839 = vpop.f32.mrb[0].mxu0
        %v6840 = vadd.f32 0.0, %v6839
        %6841 = vmatprep.mubr.bf16.mxu0 0
        %6842 = vmatmul.mubr.bf16.gmra.mrb[0].mxu0 %v6779
        %v6843 = vpop.f32.mrb[0].mxu0
        %v6844 = vadd.f32 0.0, %v6843
        %v6845 = vpop.f32.mrb[0].mxu0
        %v6846 = vadd.f32 0.0, %v6845
        %v6847 = vpop.f32.mrb[0].mxu0
        %v6848 = vadd.f32 0.0, %v6847
        %v6849 = vpop.f32.mrb[0].mxu0
        %v6850 = vadd.f32 0.0, %v6849
        %6851 = vmatprep.mubr.bf16.mxu0 0
        %6852 = vmatmul.mubr.bf16.gmra.mrb[0].mxu0 %v6782
        %v6853 = vpop.f32.mrb[0].mxu0
        %v6854 = vadd.f32 0.0, %v6853
        %v6855 = vpop.f32.mrb[0].mxu0
        %v6856 = vadd.f32 0.0, %v6855
        %v6857 = vpop.f32.mrb[0].mxu0
        %v6858 = vadd.f32 0.0, %v6857
        %v6859 = vpop.f32.mrb[0].mxu0
        %v6860 = vadd.f32 0.0, %v6859
        %6861 = vmatprep.mubr.bf16.mxu0 0
        %6862 = vmatmul.mubr.bf16.gmra.mrb[0].mxu0 %v6785
        %v6863 = vpop.f32.mrb[0].mxu0
        %v6864 = vadd.f32 0.0, %v6863
        %v6865 = vpop.f32.mrb[0].mxu0
        %v6866 = vadd.f32 0.0, %v6865
        %v6867 = vpop.f32.mrb[0].mxu0
        %v6868 = vadd.f32 0.0, %v6867
        %v6869 = vpop.f32.mrb[0].mxu0
        %v6870 = vadd.f32 0.0, %v6869
        %6871 = vmatprep.mubr.bf16.mxu0 0
        %6872 = vmatmul.mubr.bf16.gmra.mrb[0].mxu0 %v6788
        %v6873 = vpop.f32.mrb[0].mxu0
        %v6874 = vadd.f32 0.0, %v6873
        %v6875 = vpop.f32.mrb[0].mxu0
        %v6876 = vadd.f32 0.0, %v6875
        %v6877 = vpop.f32.mrb[0].mxu0
        %v6878 = vpop.f32.mrb[0].mxu0
        %6879 = vdwg.mxu0
        %6880 = vmatprep.subr.bf16.mxu0 0
        %6881 = vmatpush1.bf16.msra.mxu0 %v6797
        %6882 = vmatprep.subr.bf16.mxu0 0
        %6883 = vmatpush1.bf16.msra.mxu0 0
        %6884 = vmatprep.subr.bf16.mxu0 0
        %6885 = vmatpush1.bf16.msra.mxu0 0
        %6886 = vmatprep.subr.bf16.mxu0 0
        %6887 = vmatpush1.bf16.msra.mxu0 0
        %6888 = vmatprep.subr.bf16.mxu0 0
        %6889 = vmatpush1.bf16.msra.mxu0 0
        %6890 = vmatprep.subr.bf16.mxu0 0
        %6891 = vmatpush1.bf16.msra.mxu0 0
        %6892 = vmatprep.subr.bf16.mxu0 0
        %6893 = vmatpush1.bf16.msra.mxu0 0
        %6894 = vmatprep.subr.bf16.mxu0 0
        %6895 = vmatpush1.bf16.msra.mxu0 0
        %6896 = vmatprep.subr.bf16.mxu0 0
        %6897 = vmatpush1.bf16.msra.mxu0 0
        %6898 = vmatprep.subr.bf16.mxu0 0
        %6899 = vmatpush1.bf16.msra.mxu0 0
        %6900 = vmatprep.subr.bf16.mxu0 0
        %6901 = vmatpush1.bf16.msra.mxu0 0
        %6902 = vmatprep.subr.bf16.mxu0 0
        %6903 = vmatpush1.bf16.msra.mxu0 0
        %6904 = vmatprep.subr.bf16.mxu0 0
        %6905 = vmatpush1.bf16.msra.mxu0 0
        %6906 = vmatprep.subr.bf16.mxu0 0
        %6907 = vmatpush1.bf16.msra.mxu0 0
        %6908 = vmatprep.subr.bf16.mxu0 0
        %6909 = vmatpush1.bf16.msra.mxu0 0
        %6910 = vmatprep.subr.bf16.mxu0 0
        %6911 = vmatpush1.bf16.msra.mxu0 0
        %6912 = vmatprep.mubr.bf16.mxu0 0
        %6913 = vmatmul.mubr.bf16.gmra.mrb[0].mxu0 %v6776
        %v6914 = vpop.f32.mrb[0].mxu0
        %v6915 = vadd.f32 0.0, %v6914
        %v6916 = vpop.f32.mrb[0].mxu0
        %v6917 = vpop.f32.mrb[0].mxu0
        %v6918 = vadd.f32 0.0, %v6917
        %v6919 = vpop.f32.mrb[0].mxu0
        %6920 = vmatprep.mubr.bf16.mxu0 0
        %6921 = vmatmul.mubr.bf16.gmra.mrb[0].mxu0 %v6779
        %v6922 = vpop.f32.mrb[0].mxu0
        %v6923 = vadd.f32 0.0, %v6922
        %v6924 = vpop.f32.mrb[0].mxu0
        %v6925 = vpop.f32.mrb[0].mxu0
        %v6926 = vadd.f32 0.0, %v6925
        %v6927 = vpop.f32.mrb[0].mxu0
        %6928 = vmatprep.mubr.bf16.mxu0 0
        %6929 = vmatmul.mubr.bf16.gmra.mrb[0].mxu0 %v6782
        %v6930 = vpop.f32.mrb[0].mxu0
        %v6931 = vadd.f32 0.0, %v6930
        %v6932 = vpop.f32.mrb[0].mxu0
        %v6933 = vpop.f32.mrb[0].mxu0
        %v6934 = vadd.f32 0.0, %v6933
        %v6935 = vpop.f32.mrb[0].mxu0
        %6936 = vmatprep.mubr.bf16.mxu0 0
        %6937 = vmatmul.mubr.bf16.gmra.mrb[0].mxu0 %v6785
        %v6938 = vpop.f32.mrb[0].mxu0
        %v6939 = vadd.f32 0.0, %v6938
        %v6940 = vpop.f32.mrb[0].mxu0
        %v6941 = vpop.f32.mrb[0].mxu0
        %v6942 = vadd.f32 0.0, %v6941
        %v6943 = vpop.f32.mrb[0].mxu0
        %6944 = vmatprep.mubr.bf16.mxu0 0
        %6945 = vmatmul.mubr.bf16.gmra.mrb[0].mxu0 %v6788
        %v6946 = vpop.f32.mrb[0].mxu0
        %v6947 = vadd.f32 0.0, %v6946
        %v6948 = vpop.f32.mrb[0].mxu0
        %v6949 = vpop.f32.mrb[0].mxu0
        %v6950 = vpop.f32.mrb[0].mxu0
        %6951 = vdwg.mxu0
        %v6961 = vunpack.c.l.b16 %v6714
        %v6962 = vunpack.c.l.b16 %v6715
        %v6963 = vunpack.c.l.b16 %v6716
        %v6964 = vunpack.c.l.b16 %v6717
        %v6965 = vunpack.c.l.b16 %v6718
        %v6966 = vunpack.c.l.b16 %v6719
        %v6967 = vunpack.c.l.b16 %v6720
        %v6968 = vunpack.c.l.b16 %v6721
        %v6969 = vunpack.c.l.b16 %v6722
        %v6970 = vpack.c.b16 %v6962, %v6961
        %v6971 = vpack.c.b16 %v6964, %v6963
        %v6972 = vpack.c.b16 %v6966, %v6965
        %v6973 = vpack.c.b16 %v6968, %v6967
        %v6974 = vpack.c.b16 %v6969, %v6969
        %v6976 = vcombine.high %v6723, %v6723
        %v6978 = vunpack.c.l.s4 1983009808
        %v6979 = vunpack.c.0.s8 %v6978
        %v6980 = vlaneseq
        %v6981 = vshrl.u32 %v6980, 7
        %v6982 = vsub.s32 %v6979, %v6981
        %v6983 = vrot.slane %v6723, %v6982
        %v6985 = vunpack.c.l.s4 1983009808
        %v6986 = vunpack.c.0.s8 %v6985
        %v6987 = vlaneseq
        %v6988 = vshrl.u32 %v6987, 7
        %v6989 = vsub.s32 %v6986, %v6988
        %v6990 = vrot.slane %v6976, %v6989
        %v6991 = vcombine.high %v6983, %v6983
        %v6993 = vsel %vm444, %v6970, 0
        %v6996 = vsel %vm444, %v6971, 0
        %v6999 = vsel %vm444, %v6972, 0
        %v7002 = vsel %vm444, %v6973, 0
        %v7005 = vsel %vm444, %v6974, 0
        %v7008 = vsel %vm460, %v6983, 0
        %v7011 = vsel %vm460, %v6991, 0
        %v7014 = vsel %vm460, %v6990, 0
        %7016 = vmatprep.subr.bf16.mxu0 %v7011
        %7017 = vmatpush1.bf16.msra.mxu0 %v7008
        %7018 = vmatprep.subr.bf16.mxu0 0
        %7019 = vmatpush1.bf16.msra.mxu0 0
        %7020 = vmatprep.subr.bf16.mxu0 0
        %7021 = vmatpush1.bf16.msra.mxu0 0
        %7022 = vmatprep.subr.bf16.mxu0 0
        %7023 = vmatpush1.bf16.msra.mxu0 0
        %7024 = vmatprep.subr.bf16.mxu0 0
        %7025 = vmatpush1.bf16.msra.mxu0 0
        %7026 = vmatprep.subr.bf16.mxu0 0
        %7027 = vmatpush1.bf16.msra.mxu0 0
        %7028 = vmatprep.subr.bf16.mxu0 0
        %7029 = vmatpush1.bf16.msra.mxu0 0
        %7030 = vmatprep.subr.bf16.mxu0 0
        %7031 = vmatpush1.bf16.msra.mxu0 0
        %7032 = vmatprep.subr.bf16.mxu0 0
        %7033 = vmatpush1.bf16.msra.mxu0 0
        %7034 = vmatprep.subr.bf16.mxu0 0
        %7035 = vmatpush1.bf16.msra.mxu0 0
        %7036 = vmatprep.subr.bf16.mxu0 0
        %7037 = vmatpush1.bf16.msra.mxu0 0
        %7038 = vmatprep.subr.bf16.mxu0 0
        %7039 = vmatpush1.bf16.msra.mxu0 0
        %7040 = vmatprep.subr.bf16.mxu0 0
        %7041 = vmatpush1.bf16.msra.mxu0 0
        %7042 = vmatprep.subr.bf16.mxu0 0
        %7043 = vmatpush1.bf16.msra.mxu0 0
        %7044 = vmatprep.subr.bf16.mxu0 0
        %7045 = vmatpush1.bf16.msra.mxu0 0
        %7046 = vmatprep.subr.bf16.mxu0 0
        %7047 = vmatpush1.bf16.msra.mxu0 0
        %7048 = vmatprep.mubr.bf16.mxu0 0
        %7049 = vmatmul.mubr.bf16.gmra.mrb[0].mxu0 %v6993
        %v7050 = vpop.f32.mrb[0].mxu0
        %v7051 = vadd.f32 %v6834, %v7050
        %v7052 = vpop.f32.mrb[0].mxu0
        %v7053 = vadd.f32 %v6836, %v7052
        %v7054 = vpop.f32.mrb[0].mxu0
        %v7055 = vadd.f32 %v6838, %v7054
        %v7056 = vpop.f32.mrb[0].mxu0
        %v7057 = vadd.f32 %v6840, %v7056
        %7058 = vmatprep.mubr.bf16.mxu0 0
        %7059 = vmatmul.mubr.bf16.gmra.mrb[0].mxu0 %v6996
        %v7060 = vpop.f32.mrb[0].mxu0
        %v7061 = vadd.f32 %v6844, %v7060
        %v7062 = vpop.f32.mrb[0].mxu0
        %v7063 = vadd.f32 %v6846, %v7062
        %v7064 = vpop.f32.mrb[0].mxu0
        %v7065 = vadd.f32 %v6848, %v7064
        %v7066 = vpop.f32.mrb[0].mxu0
        %v7067 = vadd.f32 %v6850, %v7066
        %7068 = vmatprep.mubr.bf16.mxu0 0
        %7069 = vmatmul.mubr.bf16.gmra.mrb[0].mxu0 %v6999
        %v7070 = vpop.f32.mrb[0].mxu0
        %v7071 = vadd.f32 %v6854, %v7070
        %v7072 = vpop.f32.mrb[0].mxu0
        %v7073 = vadd.f32 %v6856, %v7072
        %v7074 = vpop.f32.mrb[0].mxu0
        %v7075 = vadd.f32 %v6858, %v7074
        %v7076 = vpop.f32.mrb[0].mxu0
        %v7077 = vadd.f32 %v6860, %v7076
        %7078 = vmatprep.mubr.bf16.mxu0 0
        %7079 = vmatmul.mubr.bf16.gmra.mrb[0].mxu0 %v7002
        %v7080 = vpop.f32.mrb[0].mxu0
        %v7081 = vadd.f32 %v6864, %v7080
        %v7082 = vpop.f32.mrb[0].mxu0
        %v7083 = vadd.f32 %v6866, %v7082
        %v7084 = vpop.f32.mrb[0].mxu0
        %v7085 = vadd.f32 %v6868, %v7084
        %v7086 = vpop.f32.mrb[0].mxu0
        %v7087 = vadd.f32 %v6870, %v7086
        %7088 = vmatprep.mubr.bf16.mxu0 0
        %7089 = vmatmul.mubr.bf16.gmra.mrb[0].mxu0 %v7005
        %v7090 = vpop.f32.mrb[0].mxu0
        %v7091 = vadd.f32 %v6874, %v7090
        %v7092 = vpop.f32.mrb[0].mxu0
        %v7093 = vadd.f32 %v6876, %v7092
        %v7094 = vpop.f32.mrb[0].mxu0
        %v7095 = vpop.f32.mrb[0].mxu0
        %7096 = vdwg.mxu0
        %7097 = vmatprep.subr.bf16.mxu0 0
        %7098 = vmatpush1.bf16.msra.mxu0 %v7014
        %7099 = vmatprep.subr.bf16.mxu0 0
        %7100 = vmatpush1.bf16.msra.mxu0 0
        %7101 = vmatprep.subr.bf16.mxu0 0
        %7102 = vmatpush1.bf16.msra.mxu0 0
        %7103 = vmatprep.subr.bf16.mxu0 0
        %7104 = vmatpush1.bf16.msra.mxu0 0
        %7105 = vmatprep.subr.bf16.mxu0 0
        %7106 = vmatpush1.bf16.msra.mxu0 0
        %7107 = vmatprep.subr.bf16.mxu0 0
        %7108 = vmatpush1.bf16.msra.mxu0 0
        %7109 = vmatprep.subr.bf16.mxu0 0
        %7110 = vmatpush1.bf16.msra.mxu0 0
        %7111 = vmatprep.subr.bf16.mxu0 0
        %7112 = vmatpush1.bf16.msra.mxu0 0
        %7113 = vmatprep.subr.bf16.mxu0 0
        %7114 = vmatpush1.bf16.msra.mxu0 0
        %7115 = vmatprep.subr.bf16.mxu0 0
        %7116 = vmatpush1.bf16.msra.mxu0 0
        %7117 = vmatprep.subr.bf16.mxu0 0
        %7118 = vmatpush1.bf16.msra.mxu0 0
        %7119 = vmatprep.subr.bf16.mxu0 0
        %7120 = vmatpush1.bf16.msra.mxu0 0
        %7121 = vmatprep.subr.bf16.mxu0 0
        %7122 = vmatpush1.bf16.msra.mxu0 0
        %7123 = vmatprep.subr.bf16.mxu0 0
        %7124 = vmatpush1.bf16.msra.mxu0 0
        %7125 = vmatprep.subr.bf16.mxu0 0
        %7126 = vmatpush1.bf16.msra.mxu0 0
        %7127 = vmatprep.subr.bf16.mxu0 0
        %7128 = vmatpush1.bf16.msra.mxu0 0
        %7129 = vmatprep.mubr.bf16.mxu0 0
        %7130 = vmatmul.mubr.bf16.gmra.mrb[0].mxu0 %v6993
        %v7131 = vpop.f32.mrb[0].mxu0
        %v7132 = vadd.f32 %v6915, %v7131
        %v7133 = vpop.f32.mrb[0].mxu0
        %v7134 = vpop.f32.mrb[0].mxu0
        %v7135 = vadd.f32 %v6918, %v7134
        %v7136 = vpop.f32.mrb[0].mxu0
        %7137 = vmatprep.mubr.bf16.mxu0 0
        %7138 = vmatmul.mubr.bf16.gmra.mrb[0].mxu0 %v6996
        %v7139 = vpop.f32.mrb[0].mxu0
        %v7140 = vadd.f32 %v6923, %v7139
        %v7141 = vpop.f32.mrb[0].mxu0
        %v7142 = vpop.f32.mrb[0].mxu0
        %v7143 = vadd.f32 %v6926, %v7142
        %v7144 = vpop.f32.mrb[0].mxu0
        %7145 = vmatprep.mubr.bf16.mxu0 0
        %7146 = vmatmul.mubr.bf16.gmra.mrb[0].mxu0 %v6999
        %v7147 = vpop.f32.mrb[0].mxu0
        %v7148 = vadd.f32 %v6931, %v7147
        %v7149 = vpop.f32.mrb[0].mxu0
        %v7150 = vpop.f32.mrb[0].mxu0
        %v7151 = vadd.f32 %v6934, %v7150
        %v7152 = vpop.f32.mrb[0].mxu0
        %7153 = vmatprep.mubr.bf16.mxu0 0
        %7154 = vmatmul.mubr.bf16.gmra.mrb[0].mxu0 %v7002
        %v7155 = vpop.f32.mrb[0].mxu0
        %v7156 = vadd.f32 %v6939, %v7155
        %v7157 = vpop.f32.mrb[0].mxu0
        %v7158 = vpop.f32.mrb[0].mxu0
        %v7159 = vadd.f32 %v6942, %v7158
        %v7160 = vpop.f32.mrb[0].mxu0
        %7161 = vmatprep.mubr.bf16.mxu0 0
        %7162 = vmatmul.mubr.bf16.gmra.mrb[0].mxu0 %v7005
        %v7163 = vpop.f32.mrb[0].mxu0
        %v7164 = vadd.f32 %v6947, %v7163
        %v7165 = vpop.f32.mrb[0].mxu0
        %v7166 = vpop.f32.mrb[0].mxu0
        %v7167 = vpop.f32.mrb[0].mxu0
        %7168 = vdwg.mxu0
        %v7169 = vmax.bf16 %v6714, %v6724
        %v7170 = vmax.bf16 %v6715, %v6725
        %v7171 = vmax.bf16 %v6716, %v6726
        %v7172 = vmax.bf16 %v6717, %v6727
        %v7173 = vmax.bf16 %v6718, %v6728
        %v7174 = vmax.bf16 %v6719, %v6729
        %v7175 = vmax.bf16 %v6720, %v6730
        %v7176 = vmax.bf16 %v6721, %v6731
        %v7177 = vmax.bf16 %v6722, %v6732
        %v7178 = vld [vmem:[%s384] sm:$0xf]
        %v7179 = vld [vmem:[%s384 + $0x4] sm:$0xf]
        %v7180 = vld [vmem:[%s384 + $0x8] sm:$0xf]
        %v7181 = vld [vmem:[%s384 + $0xc] sm:$0xf]
        %v7182 = vld [vmem:[%s384 + $0x10] sm:$0xf]
        %v7183 = vld [vmem:[%s384 + $0x14] sm:$0xf]
        %v7184 = vld [vmem:[%s384 + $0x18] sm:$0xf]
        %v7185 = vld [vmem:[%s384 + $0x1c] sm:$0xf]
        %v7186 = vld [vmem:[%s384 + $0x20] sm:$0xf]
        %s7187 = scalar_lea.vmem %s2, 12
        %v7188 = vld [vmem:[%s7187] sm:$0x3f]
        %v7198 = vunpack.c.l.b16 %v7178
        %v7199 = vunpack.c.l.b16 %v7179
        %v7200 = vunpack.c.l.b16 %v7180
        %v7201 = vunpack.c.l.b16 %v7181
        %v7202 = vunpack.c.l.b16 %v7182
        %v7203 = vunpack.c.l.b16 %v7183
        %v7204 = vunpack.c.l.b16 %v7184
        %v7205 = vunpack.c.l.b16 %v7185
        %v7206 = vunpack.c.l.b16 %v7186
        %v7207 = vpack.c.b16 %v7199, %v7198
        %v7208 = vpack.c.b16 %v7201, %v7200
        %v7209 = vpack.c.b16 %v7203, %v7202
        %v7210 = vpack.c.b16 %v7205, %v7204
        %v7211 = vpack.c.b16 %v7206, %v7206
        %v7213 = vshrl.u32 %v7207, 16
        %v7215 = vshll.u32 %v7207, 16
        %v7217 = vrot.slane %v7215, 1
        %v7218 = vor.u32 %v7213, %v7217
        %v7220 = vshll.u32 %v7208, 16
        %v7222 = vrot.slane %v7220, 1
        %v7223 = vsel %vm1777, %v7218, %v7222
        %v7224 = vshrl.u32 %v7208, 16
        %v7226 = vor.u32 %v7224, %v7222
        %v7228 = vshll.u32 %v7209, 16
        %v7230 = vrot.slane %v7228, 1
        %v7231 = vsel %vm1777, %v7226, %v7230
        %v7232 = vshrl.u32 %v7209, 16
        %v7234 = vor.u32 %v7232, %v7230
        %v7236 = vshll.u32 %v7210, 16
        %v7238 = vrot.slane %v7236, 1
        %v7239 = vsel %vm1777, %v7234, %v7238
        %v7240 = vshrl.u32 %v7210, 16
        %v7242 = vor.u32 %v7240, %v7238
        %v7244 = vshll.u32 %v7211, 16
        %v7246 = vrot.slane %v7244, 1
        %v7247 = vsel %vm1777, %v7242, %v7246
        %v7248 = vshrl.u32 %v7211, 16
        %v7250 = vor.u32 %v7248, %v7246
        %v7252 = vcombine.high %v7188, %v7188
        %v7254 = vunpack.c.l.s4 1983009808
        %v7255 = vunpack.c.0.s8 %v7254
        %v7256 = vlaneseq
        %v7257 = vshrl.u32 %v7256, 7
        %v7258 = vsub.s32 %v7255, %v7257
        %v7259 = vrot.slane %v7188, %v7258
        %v7261 = vunpack.c.l.s4 1983009808
        %v7262 = vunpack.c.0.s8 %v7261
        %v7263 = vlaneseq
        %v7264 = vshrl.u32 %v7263, 7
        %v7265 = vsub.s32 %v7262, %v7264
        %v7266 = vrot.slane %v7252, %v7265
        %v7267 = vcombine.high %v7259, %v7259
        %v7269 = vsel %vm444, %v7223, 0
        %v7272 = vsel %vm444, %v7231, 0
        %v7275 = vsel %vm444, %v7239, 0
        %v7278 = vsel %vm444, %v7247, 0
        %v7281 = vsel %vm444, %v7250, 0
        %v7284 = vsel %vm460, %v7259, 0
        %v7287 = vsel %vm460, %v7267, 0
        %v7290 = vsel %vm460, %v7266, 0
        %7292 = vmatprep.subr.bf16.mxu0 %v7287
        %7293 = vmatpush1.bf16.msra.mxu0 %v7284
        %7294 = vmatprep.subr.bf16.mxu0 0
        %7295 = vmatpush1.bf16.msra.mxu0 0
        %7296 = vmatprep.subr.bf16.mxu0 0
        %7297 = vmatpush1.bf16.msra.mxu0 0
        %7298 = vmatprep.subr.bf16.mxu0 0
        %7299 = vmatpush1.bf16.msra.mxu0 0
        %7300 = vmatprep.subr.bf16.mxu0 0
        %7301 = vmatpush1.bf16.msra.mxu0 0
        %7302 = vmatprep.subr.bf16.mxu0 0
        %7303 = vmatpush1.bf16.msra.mxu0 0
        %7304 = vmatprep.subr.bf16.mxu0 0
        %7305 = vmatpush1.bf16.msra.mxu0 0
        %7306 = vmatprep.subr.bf16.mxu0 0
        %7307 = vmatpush1.bf16.msra.mxu0 0
        %7308 = vmatprep.subr.bf16.mxu0 0
        %7309 = vmatpush1.bf16.msra.mxu0 0
        %7310 = vmatprep.subr.bf16.mxu0 0
        %7311 = vmatpush1.bf16.msra.mxu0 0
        %7312 = vmatprep.subr.bf16.mxu0 0
        %7313 = vmatpush1.bf16.msra.mxu0 0
        %7314 = vmatprep.subr.bf16.mxu0 0
        %7315 = vmatpush1.bf16.msra.mxu0 0
        %7316 = vmatprep.subr.bf16.mxu0 0
        %7317 = vmatpush1.bf16.msra.mxu0 0
        %7318 = vmatprep.subr.bf16.mxu0 0
        %7319 = vmatpush1.bf16.msra.mxu0 0
        %7320 = vmatprep.subr.bf16.mxu0 0
        %7321 = vmatpush1.bf16.msra.mxu0 0
        %7322 = vmatprep.subr.bf16.mxu0 0
        %7323 = vmatpush1.bf16.msra.mxu0 0
        %7324 = vmatprep.mubr.bf16.mxu0 0
        %7325 = vmatmul.mubr.bf16.gmra.mrb[0].mxu0 %v7269
        %v7326 = vpop.f32.mrb[0].mxu0
        %v7327 = vadd.f32 0.0, %v7326
        %v7328 = vpop.f32.mrb[0].mxu0
        %v7329 = vadd.f32 0.0, %v7328
        %v7330 = vpop.f32.mrb[0].mxu0
        %v7331 = vadd.f32 0.0, %v7330
        %v7332 = vpop.f32.mrb[0].mxu0
        %v7333 = vadd.f32 0.0, %v7332
        %7334 = vmatprep.mubr.bf16.mxu0 0
        %7335 = vmatmul.mubr.bf16.gmra.mrb[0].mxu0 %v7272
        %v7336 = vpop.f32.mrb[0].mxu0
        %v7337 = vadd.f32 0.0, %v7336
        %v7338 = vpop.f32.mrb[0].mxu0
        %v7339 = vadd.f32 0.0, %v7338
        %v7340 = vpop.f32.mrb[0].mxu0
        %v7341 = vadd.f32 0.0, %v7340
        %v7342 = vpop.f32.mrb[0].mxu0
        %v7343 = vadd.f32 0.0, %v7342
        %7344 = vmatprep.mubr.bf16.mxu0 0
        %7345 = vmatmul.mubr.bf16.gmra.mrb[0].mxu0 %v7275
        %v7346 = vpop.f32.mrb[0].mxu0
        %v7347 = vadd.f32 0.0, %v7346
        %v7348 = vpop.f32.mrb[0].mxu0
        %v7349 = vadd.f32 0.0, %v7348
        %v7350 = vpop.f32.mrb[0].mxu0
        %v7351 = vadd.f32 0.0, %v7350
        %v7352 = vpop.f32.mrb[0].mxu0
        %v7353 = vadd.f32 0.0, %v7352
        %7354 = vmatprep.mubr.bf16.mxu0 0
        %7355 = vmatmul.mubr.bf16.gmra.mrb[0].mxu0 %v7278
        %v7356 = vpop.f32.mrb[0].mxu0
        %v7357 = vadd.f32 0.0, %v7356
        %v7358 = vpop.f32.mrb[0].mxu0
        %v7359 = vadd.f32 0.0, %v7358
        %v7360 = vpop.f32.mrb[0].mxu0
        %v7361 = vadd.f32 0.0, %v7360
        %v7362 = vpop.f32.mrb[0].mxu0
        %v7363 = vadd.f32 0.0, %v7362
        %7364 = vmatprep.mubr.bf16.mxu0 0
        %7365 = vmatmul.mubr.bf16.gmra.mrb[0].mxu0 %v7281
        %v7366 = vpop.f32.mrb[0].mxu0
        %v7367 = vadd.f32 0.0, %v7366
        %v7368 = vpop.f32.mrb[0].mxu0
        %v7369 = vadd.f32 0.0, %v7368
        %v7370 = vpop.f32.mrb[0].mxu0
        %v7371 = vpop.f32.mrb[0].mxu0
        %7372 = vdwg.mxu0
        %7373 = vmatprep.subr.bf16.mxu0 0
        %7374 = vmatpush1.bf16.msra.mxu0 %v7290
        %7375 = vmatprep.subr.bf16.mxu0 0
        %7376 = vmatpush1.bf16.msra.mxu0 0
        %7377 = vmatprep.subr.bf16.mxu0 0
        %7378 = vmatpush1.bf16.msra.mxu0 0
        %7379 = vmatprep.subr.bf16.mxu0 0
        %7380 = vmatpush1.bf16.msra.mxu0 0
        %7381 = vmatprep.subr.bf16.mxu0 0
        %7382 = vmatpush1.bf16.msra.mxu0 0
        %7383 = vmatprep.subr.bf16.mxu0 0
        %7384 = vmatpush1.bf16.msra.mxu0 0
        %7385 = vmatprep.subr.bf16.mxu0 0
        %7386 = vmatpush1.bf16.msra.mxu0 0
        %7387 = vmatprep.subr.bf16.mxu0 0
        %7388 = vmatpush1.bf16.msra.mxu0 0
        %7389 = vmatprep.subr.bf16.mxu0 0
        %7390 = vmatpush1.bf16.msra.mxu0 0
        %7391 = vmatprep.subr.bf16.mxu0 0
        %7392 = vmatpush1.bf16.msra.mxu0 0
        %7393 = vmatprep.subr.bf16.mxu0 0
        %7394 = vmatpush1.bf16.msra.mxu0 0
        %7395 = vmatprep.subr.bf16.mxu0 0
        %7396 = vmatpush1.bf16.msra.mxu0 0
        %7397 = vmatprep.subr.bf16.mxu0 0
        %7398 = vmatpush1.bf16.msra.mxu0 0
        %7399 = vmatprep.subr.bf16.mxu0 0
        %7400 = vmatpush1.bf16.msra.mxu0 0
        %7401 = vmatprep.subr.bf16.mxu0 0
        %7402 = vmatpush1.bf16.msra.mxu0 0
        %7403 = vmatprep.subr.bf16.mxu0 0
        %7404 = vmatpush1.bf16.msra.mxu0 0
        %7405 = vmatprep.mubr.bf16.mxu0 0
        %7406 = vmatmul.mubr.bf16.gmra.mrb[0].mxu0 %v7269
        %v7407 = vpop.f32.mrb[0].mxu0
        %v7408 = vadd.f32 0.0, %v7407
        %v7409 = vpop.f32.mrb[0].mxu0
        %v7410 = vpop.f32.mrb[0].mxu0
        %v7411 = vadd.f32 0.0, %v7410
        %v7412 = vpop.f32.mrb[0].mxu0
        %7413 = vmatprep.mubr.bf16.mxu0 0
        %7414 = vmatmul.mubr.bf16.gmra.mrb[0].mxu0 %v7272
        %v7415 = vpop.f32.mrb[0].mxu0
        %v7416 = vadd.f32 0.0, %v7415
        %v7417 = vpop.f32.mrb[0].mxu0
        %v7418 = vpop.f32.mrb[0].mxu0
        %v7419 = vadd.f32 0.0, %v7418
        %v7420 = vpop.f32.mrb[0].mxu0
        %7421 = vmatprep.mubr.bf16.mxu0 0
        %7422 = vmatmul.mubr.bf16.gmra.mrb[0].mxu0 %v7275
        %v7423 = vpop.f32.mrb[0].mxu0
        %v7424 = vadd.f32 0.0, %v7423
        %v7425 = vpop.f32.mrb[0].mxu0
        %v7426 = vpop.f32.mrb[0].mxu0
        %v7427 = vadd.f32 0.0, %v7426
        %v7428 = vpop.f32.mrb[0].mxu0
        %7429 = vmatprep.mubr.bf16.mxu0 0
        %7430 = vmatmul.mubr.bf16.gmra.mrb[0].mxu0 %v7278
        %v7431 = vpop.f32.mrb[0].mxu0
        %v7432 = vadd.f32 0.0, %v7431
        %v7433 = vpop.f32.mrb[0].mxu0
        %v7434 = vpop.f32.mrb[0].mxu0
        %v7435 = vadd.f32 0.0, %v7434
        %v7436 = vpop.f32.mrb[0].mxu0
        %7437 = vmatprep.mubr.bf16.mxu0 0
        %7438 = vmatmul.mubr.bf16.gmra.mrb[0].mxu0 %v7281
        %v7439 = vpop.f32.mrb[0].mxu0
        %v7440 = vadd.f32 0.0, %v7439
        %v7441 = vpop.f32.mrb[0].mxu0
        %v7442 = vpop.f32.mrb[0].mxu0
        %v7443 = vpop.f32.mrb[0].mxu0
        %7444 = vdwg.mxu0
        %v7445 = vadd.f32 %v7051, %v7327
        %v7446 = vadd.f32 %v7053, %v7329
        %v7447 = vadd.f32 %v7132, %v7408
        %v7448 = vadd.f32 %v7055, %v7331
        %v7449 = vadd.f32 %v7057, %v7333
        %v7450 = vadd.f32 %v7135, %v7411
        %v7451 = vadd.f32 %v7061, %v7337
        %v7452 = vadd.f32 %v7063, %v7339
        %v7453 = vadd.f32 %v7140, %v7416
        %v7454 = vadd.f32 %v7065, %v7341
        %v7455 = vadd.f32 %v7067, %v7343
        %v7456 = vadd.f32 %v7143, %v7419
        %v7457 = vadd.f32 %v7071, %v7347
        %v7458 = vadd.f32 %v7073, %v7349
        %v7459 = vadd.f32 %v7148, %v7424
        %v7460 = vadd.f32 %v7075, %v7351
        %v7461 = vadd.f32 %v7077, %v7353
        %v7462 = vadd.f32 %v7151, %v7427
        %v7463 = vadd.f32 %v7081, %v7357
        %v7464 = vadd.f32 %v7083, %v7359
        %v7465 = vadd.f32 %v7156, %v7432
        %v7466 = vadd.f32 %v7085, %v7361
        %v7467 = vadd.f32 %v7087, %v7363
        %v7468 = vadd.f32 %v7159, %v7435
        %v7469 = vadd.f32 %v7091, %v7367
        %v7470 = vadd.f32 %v7093, %v7369
        %v7471 = vadd.f32 %v7164, %v7440
        %vm7472 = vsmask.f32 3328
        %vm7473 = vsmask.f32 7440
        %vm7474 = vmor %vm7472, %vm7473
        %v7476 = vshrl.u32 %v7178, 16
        %v7478 = vrot.slane %v7476, 4
        %v7479 = vshll.u32 %v7178, 16
        %v7481 = vrot.slane %v7479, 5
        %v7482 = vor.u32 %v7478, %v7481
        %v7483 = vrot.slane %v7482, 4
        %v7485 = vshll.u32 %v7179, 16
        %v7487 = vrot.slane %v7485, 5
        %v7488 = vsel %vm7474, %v7483, %v7487
        %v7489 = vshrl.u32 %v7179, 16
        %v7491 = vrot.slane %v7489, 4
        %v7492 = vor.u32 %v7491, %v7487
        %v7493 = vrot.slane %v7492, 4
        %v7495 = vshll.u32 %v7180, 16
        %v7497 = vrot.slane %v7495, 5
        %v7498 = vsel %vm7474, %v7493, %v7497
        %v7499 = vshrl.u32 %v7180, 16
        %v7501 = vrot.slane %v7499, 4
        %v7502 = vor.u32 %v7501, %v7497
        %v7503 = vrot.slane %v7502, 4
        %v7505 = vshll.u32 %v7181, 16
        %v7507 = vrot.slane %v7505, 5
        %v7508 = vsel %vm7474, %v7503, %v7507
        %v7509 = vshrl.u32 %v7181, 16
        %v7511 = vrot.slane %v7509, 4
        %v7512 = vor.u32 %v7511, %v7507
        %v7513 = vrot.slane %v7512, 4
        %v7515 = vshll.u32 %v7182, 16
        %v7517 = vrot.slane %v7515, 5
        %v7518 = vsel %vm7474, %v7513, %v7517
        %v7519 = vshrl.u32 %v7182, 16
        %v7521 = vrot.slane %v7519, 4
        %v7522 = vor.u32 %v7521, %v7517
        %v7523 = vrot.slane %v7522, 4
        %v7525 = vshll.u32 %v7183, 16
        %v7527 = vrot.slane %v7525, 5
        %v7528 = vsel %vm7474, %v7523, %v7527
        %v7529 = vshrl.u32 %v7183, 16
        %v7531 = vrot.slane %v7529, 4
        %v7532 = vor.u32 %v7531, %v7527
        %v7533 = vrot.slane %v7532, 4
        %v7535 = vshll.u32 %v7184, 16
        %v7537 = vrot.slane %v7535, 5
        %v7538 = vsel %vm7474, %v7533, %v7537
        %v7539 = vshrl.u32 %v7184, 16
        %v7541 = vrot.slane %v7539, 4
        %v7542 = vor.u32 %v7541, %v7537
        %v7543 = vrot.slane %v7542, 4
        %v7545 = vshll.u32 %v7185, 16
        %v7547 = vrot.slane %v7545, 5
        %v7548 = vsel %vm7474, %v7543, %v7547
        %v7549 = vshrl.u32 %v7185, 16
        %v7551 = vrot.slane %v7549, 4
        %v7552 = vor.u32 %v7551, %v7547
        %v7553 = vrot.slane %v7552, 4
        %v7555 = vshll.u32 %v7186, 16
        %v7557 = vrot.slane %v7555, 5
        %v7558 = vsel %vm7474, %v7553, %v7557
        %v7559 = vshrl.u32 %v7186, 16
        %v7561 = vrot.slane %v7559, 4
        %v7562 = vor.u32 %v7561, %v7557
        %v7563 = vrot.slane %v7562, 4
        %v7573 = vmax.bf16 %v7169, %v7488
        %v7574 = vmax.bf16 %v7170, %v7498
        %v7575 = vmax.bf16 %v7171, %v7508
        %v7576 = vmax.bf16 %v7172, %v7518
        %v7577 = vmax.bf16 %v7173, %v7528
        %v7578 = vmax.bf16 %v7174, %v7538
        %v7579 = vmax.bf16 %v7175, %v7548
        %v7580 = vmax.bf16 %v7176, %v7558
        %v7581 = vmax.bf16 %v7177, %v7563
        %v7582 = vld [vmem:[%s852] sm:$0xf]
        %v7583 = vld [vmem:[%s852 + $0x4] sm:$0xf]
        %v7584 = vld [vmem:[%s852 + $0x8] sm:$0xf]
        %v7585 = vld [vmem:[%s852 + $0xc] sm:$0xf]
        %v7586 = vld [vmem:[%s852 + $0x10] sm:$0xf]
        %v7587 = vld [vmem:[%s852 + $0x14] sm:$0xf]
        %v7588 = vld [vmem:[%s852 + $0x18] sm:$0xf]
        %v7589 = vld [vmem:[%s852 + $0x1c] sm:$0xf]
        %v7590 = vld [vmem:[%s852 + $0x20] sm:$0x7]
        %s7591 = scalar_lea.vmem %s2, 18
        %v7592 = vld [vmem:[%s7591] sm:$0x3f]
        %v7602 = vunpack.c.l.b16 %v7582
        %v7603 = vunpack.c.l.b16 %v7583
        %v7604 = vunpack.c.l.b16 %v7584
        %v7605 = vunpack.c.l.b16 %v7585
        %v7606 = vunpack.c.l.b16 %v7586
        %v7607 = vunpack.c.l.b16 %v7587
        %v7608 = vunpack.c.l.b16 %v7588
        %v7609 = vunpack.c.l.b16 %v7589
        %v7610 = vunpack.c.l.b16 %v7590
        %v7611 = vpack.c.b16 %v7603, %v7602
        %v7612 = vpack.c.b16 %v7605, %v7604
        %v7613 = vpack.c.b16 %v7607, %v7606
        %v7614 = vpack.c.b16 %v7609, %v7608
        %v7615 = vpack.c.b16 %v7610, %v7610
        %v7617 = vcombine.high %v7592, %v7592
        %v7619 = vunpack.c.l.s4 1983009808
        %v7620 = vunpack.c.0.s8 %v7619
        %v7621 = vlaneseq
        %v7622 = vshrl.u32 %v7621, 7
        %v7623 = vsub.s32 %v7620, %v7622
        %v7624 = vrot.slane %v7592, %v7623
        %v7626 = vunpack.c.l.s4 1983009808
        %v7627 = vunpack.c.0.s8 %v7626
        %v7628 = vlaneseq
        %v7629 = vshrl.u32 %v7628, 7
        %v7630 = vsub.s32 %v7627, %v7629
        %v7631 = vrot.slane %v7617, %v7630
        %v7632 = vcombine.high %v7624, %v7624
        %v7634 = vsel %vm444, %v7611, 0
        %v7637 = vsel %vm444, %v7612, 0
        %v7640 = vsel %vm444, %v7613, 0
        %v7643 = vsel %vm444, %v7614, 0
        %v7646 = vsel %vm444, %v7615, 0
        %v7649 = vsel %vm460, %v7624, 0
        %v7652 = vsel %vm460, %v7632, 0
        %v7655 = vsel %vm460, %v7631, 0
        %7657 = vmatprep.subr.bf16.mxu0 %v7652
        %7658 = vmatpush1.bf16.msra.mxu0 %v7649
        %7659 = vmatprep.subr.bf16.mxu0 0
        %7660 = vmatpush1.bf16.msra.mxu0 0
        %7661 = vmatprep.subr.bf16.mxu0 0
        %7662 = vmatpush1.bf16.msra.mxu0 0
        %7663 = vmatprep.subr.bf16.mxu0 0
        %7664 = vmatpush1.bf16.msra.mxu0 0
        %7665 = vmatprep.subr.bf16.mxu0 0
        %7666 = vmatpush1.bf16.msra.mxu0 0
        %7667 = vmatprep.subr.bf16.mxu0 0
        %7668 = vmatpush1.bf16.msra.mxu0 0
        %7669 = vmatprep.subr.bf16.mxu0 0
        %7670 = vmatpush1.bf16.msra.mxu0 0
        %7671 = vmatprep.subr.bf16.mxu0 0
        %7672 = vmatpush1.bf16.msra.mxu0 0
        %7673 = vmatprep.subr.bf16.mxu0 0
        %7674 = vmatpush1.bf16.msra.mxu0 0
        %7675 = vmatprep.subr.bf16.mxu0 0
        %7676 = vmatpush1.bf16.msra.mxu0 0
        %7677 = vmatprep.subr.bf16.mxu0 0
        %7678 = vmatpush1.bf16.msra.mxu0 0
        %7679 = vmatprep.subr.bf16.mxu0 0
        %7680 = vmatpush1.bf16.msra.mxu0 0
        %7681 = vmatprep.subr.bf16.mxu0 0
        %7682 = vmatpush1.bf16.msra.mxu0 0
        %7683 = vmatprep.subr.bf16.mxu0 0
        %7684 = vmatpush1.bf16.msra.mxu0 0
        %7685 = vmatprep.subr.bf16.mxu0 0
        %7686 = vmatpush1.bf16.msra.mxu0 0
        %7687 = vmatprep.subr.bf16.mxu0 0
        %7688 = vmatpush1.bf16.msra.mxu0 0
        %7689 = vmatprep.mubr.bf16.mxu0 0
        %7690 = vmatmul.mubr.bf16.gmra.mrb[0].mxu0 %v7634
        %v7691 = vpop.f32.mrb[0].mxu0
        %v7692 = vadd.f32 0.0, %v7691
        %v7693 = vpop.f32.mrb[0].mxu0
        %v7694 = vadd.f32 0.0, %v7693
        %v7695 = vpop.f32.mrb[0].mxu0
        %v7696 = vadd.f32 0.0, %v7695
        %v7697 = vpop.f32.mrb[0].mxu0
        %v7698 = vadd.f32 0.0, %v7697
        %7699 = vmatprep.mubr.bf16.mxu0 0
        %7700 = vmatmul.mubr.bf16.gmra.mrb[0].mxu0 %v7637
        %v7701 = vpop.f32.mrb[0].mxu0
        %v7702 = vadd.f32 0.0, %v7701
        %v7703 = vpop.f32.mrb[0].mxu0
        %v7704 = vadd.f32 0.0, %v7703
        %v7705 = vpop.f32.mrb[0].mxu0
        %v7706 = vadd.f32 0.0, %v7705
        %v7707 = vpop.f32.mrb[0].mxu0
        %v7708 = vadd.f32 0.0, %v7707
        %7709 = vmatprep.mubr.bf16.mxu0 0
        %7710 = vmatmul.mubr.bf16.gmra.mrb[0].mxu0 %v7640
        %v7711 = vpop.f32.mrb[0].mxu0
        %v7712 = vadd.f32 0.0, %v7711
        %v7713 = vpop.f32.mrb[0].mxu0
        %v7714 = vadd.f32 0.0, %v7713
        %v7715 = vpop.f32.mrb[0].mxu0
        %v7716 = vadd.f32 0.0, %v7715
        %v7717 = vpop.f32.mrb[0].mxu0
        %v7718 = vadd.f32 0.0, %v7717
        %7719 = vmatprep.mubr.bf16.mxu0 0
        %7720 = vmatmul.mubr.bf16.gmra.mrb[0].mxu0 %v7643
        %v7721 = vpop.f32.mrb[0].mxu0
        %v7722 = vadd.f32 0.0, %v7721
        %v7723 = vpop.f32.mrb[0].mxu0
        %v7724 = vadd.f32 0.0, %v7723
        %v7725 = vpop.f32.mrb[0].mxu0
        %v7726 = vadd.f32 0.0, %v7725
        %v7727 = vpop.f32.mrb[0].mxu0
        %v7728 = vadd.f32 0.0, %v7727
        %7729 = vmatprep.mubr.bf16.mxu0 0
        %7730 = vmatmul.mubr.bf16.gmra.mrb[0].mxu0 %v7646
        %v7731 = vpop.f32.mrb[0].mxu0
        %v7732 = vadd.f32 0.0, %v7731
        %v7733 = vpop.f32.mrb[0].mxu0
        %v7734 = vadd.f32 0.0, %v7733
        %v7735 = vpop.f32.mrb[0].mxu0
        %v7736 = vpop.f32.mrb[0].mxu0
        %7737 = vdwg.mxu0
        %7738 = vmatprep.subr.bf16.mxu0 0
        %7739 = vmatpush1.bf16.msra.mxu0 %v7655
        %7740 = vmatprep.subr.bf16.mxu0 0
        %7741 = vmatpush1.bf16.msra.mxu0 0
        %7742 = vmatprep.subr.bf16.mxu0 0
        %7743 = vmatpush1.bf16.msra.mxu0 0
        %7744 = vmatprep.subr.bf16.mxu0 0
        %7745 = vmatpush1.bf16.msra.mxu0 0
        %7746 = vmatprep.subr.bf16.mxu0 0
        %7747 = vmatpush1.bf16.msra.mxu0 0
        %7748 = vmatprep.subr.bf16.mxu0 0
        %7749 = vmatpush1.bf16.msra.mxu0 0
        %7750 = vmatprep.subr.bf16.mxu0 0
        %7751 = vmatpush1.bf16.msra.mxu0 0
        %7752 = vmatprep.subr.bf16.mxu0 0
        %7753 = vmatpush1.bf16.msra.mxu0 0
        %7754 = vmatprep.subr.bf16.mxu0 0
        %7755 = vmatpush1.bf16.msra.mxu0 0
        %7756 = vmatprep.subr.bf16.mxu0 0
        %7757 = vmatpush1.bf16.msra.mxu0 0
        %7758 = vmatprep.subr.bf16.mxu0 0
        %7759 = vmatpush1.bf16.msra.mxu0 0
        %7760 = vmatprep.subr.bf16.mxu0 0
        %7761 = vmatpush1.bf16.msra.mxu0 0
        %7762 = vmatprep.subr.bf16.mxu0 0
        %7763 = vmatpush1.bf16.msra.mxu0 0
        %7764 = vmatprep.subr.bf16.mxu0 0
        %7765 = vmatpush1.bf16.msra.mxu0 0
        %7766 = vmatprep.subr.bf16.mxu0 0
        %7767 = vmatpush1.bf16.msra.mxu0 0
        %7768 = vmatprep.subr.bf16.mxu0 0
        %7769 = vmatpush1.bf16.msra.mxu0 0
        %7770 = vmatprep.mubr.bf16.mxu0 0
        %7771 = vmatmul.mubr.bf16.gmra.mrb[0].mxu0 %v7634
        %v7772 = vpop.f32.mrb[0].mxu0
        %v7773 = vadd.f32 0.0, %v7772
        %v7774 = vpop.f32.mrb[0].mxu0
        %v7775 = vpop.f32.mrb[0].mxu0
        %v7776 = vadd.f32 0.0, %v7775
        %v7777 = vpop.f32.mrb[0].mxu0
        %7778 = vmatprep.mubr.bf16.mxu0 0
        %7779 = vmatmul.mubr.bf16.gmra.mrb[0].mxu0 %v7637
        %v7780 = vpop.f32.mrb[0].mxu0
        %v7781 = vadd.f32 0.0, %v7780
        %v7782 = vpop.f32.mrb[0].mxu0
        %v7783 = vpop.f32.mrb[0].mxu0
        %v7784 = vadd.f32 0.0, %v7783
        %v7785 = vpop.f32.mrb[0].mxu0
        %7786 = vmatprep.mubr.bf16.mxu0 0
        %7787 = vmatmul.mubr.bf16.gmra.mrb[0].mxu0 %v7640
        %v7788 = vpop.f32.mrb[0].mxu0
        %v7789 = vadd.f32 0.0, %v7788
        %v7790 = vpop.f32.mrb[0].mxu0
        %v7791 = vpop.f32.mrb[0].mxu0
        %v7792 = vadd.f32 0.0, %v7791
        %v7793 = vpop.f32.mrb[0].mxu0
        %7794 = vmatprep.mubr.bf16.mxu0 0
        %7795 = vmatmul.mubr.bf16.gmra.mrb[0].mxu0 %v7643
        %v7796 = vpop.f32.mrb[0].mxu0
        %v7797 = vadd.f32 0.0, %v7796
        %v7798 = vpop.f32.mrb[0].mxu0
        %v7799 = vpop.f32.mrb[0].mxu0
        %v7800 = vadd.f32 0.0, %v7799
        %v7801 = vpop.f32.mrb[0].mxu0
        %7802 = vmatprep.mubr.bf16.mxu0 0
        %7803 = vmatmul.mubr.bf16.gmra.mrb[0].mxu0 %v7646
        %v7804 = vpop.f32.mrb[0].mxu0
        %v7805 = vadd.f32 0.0, %v7804
        %v7806 = vpop.f32.mrb[0].mxu0
        %v7807 = vpop.f32.mrb[0].mxu0
        %v7808 = vpop.f32.mrb[0].mxu0
        %7809 = vdwg.mxu0
        %v7810 = vadd.f32 %v7445, %v7692
        %v7811 = vadd.f32 %v7446, %v7694
        %v7812 = vadd.f32 %v7447, %v7773
        %v7813 = vadd.f32 %v7448, %v7696
        %v7814 = vadd.f32 %v7449, %v7698
        %v7815 = vadd.f32 %v7450, %v7776
        %v7816 = vadd.f32 %v7451, %v7702
        %v7817 = vadd.f32 %v7452, %v7704
        %v7818 = vadd.f32 %v7453, %v7781
        %v7819 = vadd.f32 %v7454, %v7706
        %v7820 = vadd.f32 %v7455, %v7708
        %v7821 = vadd.f32 %v7456, %v7784
        %v7822 = vadd.f32 %v7457, %v7712
        %v7823 = vadd.f32 %v7458, %v7714
        %v7824 = vadd.f32 %v7459, %v7789
        %v7825 = vadd.f32 %v7460, %v7716
        %v7826 = vadd.f32 %v7461, %v7718
        %v7827 = vadd.f32 %v7462, %v7792
        %v7828 = vadd.f32 %v7463, %v7722
        %v7829 = vadd.f32 %v7464, %v7724
        %v7830 = vadd.f32 %v7465, %v7797
        %v7831 = vadd.f32 %v7466, %v7726
        %v7832 = vadd.f32 %v7467, %v7728
        %v7833 = vadd.f32 %v7468, %v7800
        %v7834 = vadd.f32 %v7469, %v7732
        %v7835 = vadd.f32 %v7470, %v7734
        %v7836 = vadd.f32 %v7471, %v7805
        %v7837 = vmax.bf16 %v7573, %v7582
        %v7838 = vmax.bf16 %v7574, %v7583
        %v7839 = vmax.bf16 %v7575, %v7584
        %v7840 = vmax.bf16 %v7576, %v7585
        %v7841 = vmax.bf16 %v7577, %v7586
        %v7842 = vmax.bf16 %v7578, %v7587
        %v7843 = vmax.bf16 %v7579, %v7588
        %v7844 = vmax.bf16 %v7580, %v7589
        %v7845 = vmax.bf16 %v7581, %v7590
        %v7846 = vld [vmem:[%s1072] sm:$0xf]
        %v7847 = vld [vmem:[%s1072 + $0x4] sm:$0xf]
        %v7848 = vld [vmem:[%s1072 + $0x8] sm:$0xf]
        %v7849 = vld [vmem:[%s1072 + $0xc] sm:$0xf]
        %v7850 = vld [vmem:[%s1072 + $0x10] sm:$0xf]
        %v7851 = vld [vmem:[%s1072 + $0x14] sm:$0xf]
        %v7852 = vld [vmem:[%s1072 + $0x18] sm:$0xf]
        %v7853 = vld [vmem:[%s1072 + $0x1c] sm:$0xf]
        %v7854 = vld [vmem:[%s1072 + $0x20] sm:$0x7]
        %s7855 = scalar_lea.vmem %s2, 24
        %v7856 = vld [vmem:[%s7855] sm:$0x3f]
        %v7866 = vunpack.c.l.b16 %v7846
        %v7867 = vunpack.c.l.b16 %v7847
        %v7868 = vunpack.c.l.b16 %v7848
        %v7869 = vunpack.c.l.b16 %v7849
        %v7870 = vunpack.c.l.b16 %v7850
        %v7871 = vunpack.c.l.b16 %v7851
        %v7872 = vunpack.c.l.b16 %v7852
        %v7873 = vunpack.c.l.b16 %v7853
        %v7874 = vunpack.c.l.b16 %v7854
        %v7875 = vpack.c.b16 %v7867, %v7866
        %v7876 = vpack.c.b16 %v7869, %v7868
        %v7877 = vpack.c.b16 %v7871, %v7870
        %v7878 = vpack.c.b16 %v7873, %v7872
        %v7879 = vpack.c.b16 %v7874, %v7874
        %v7881 = vcombine.high %v7856, %v7856
        %v7883 = vunpack.c.l.s4 1983009808
        %v7884 = vunpack.c.0.s8 %v7883
        %v7885 = vlaneseq
        %v7886 = vshrl.u32 %v7885, 7
        %v7887 = vsub.s32 %v7884, %v7886
        %v7888 = vrot.slane %v7856, %v7887
        %v7890 = vunpack.c.l.s4 1983009808
        %v7891 = vunpack.c.0.s8 %v7890
        %v7892 = vlaneseq
        %v7893 = vshrl.u32 %v7892, 7
        %v7894 = vsub.s32 %v7891, %v7893
        %v7895 = vrot.slane %v7881, %v7894
        %v7896 = vcombine.high %v7888, %v7888
        %v7898 = vsel %vm444, %v7875, 0
        %v7901 = vsel %vm444, %v7876, 0
        %v7904 = vsel %vm444, %v7877, 0
        %v7907 = vsel %vm444, %v7878, 0
        %v7910 = vsel %vm444, %v7879, 0
        %v7913 = vsel %vm460, %v7888, 0
        %v7916 = vsel %vm460, %v7896, 0
        %v7919 = vsel %vm460, %v7895, 0
        %7921 = vmatprep.subr.bf16.mxu0 %v7916
        %7922 = vmatpush1.bf16.msra.mxu0 %v7913
        %7923 = vmatprep.subr.bf16.mxu0 0
        %7924 = vmatpush1.bf16.msra.mxu0 0
        %7925 = vmatprep.subr.bf16.mxu0 0
        %7926 = vmatpush1.bf16.msra.mxu0 0
        %7927 = vmatprep.subr.bf16.mxu0 0
        %7928 = vmatpush1.bf16.msra.mxu0 0
        %7929 = vmatprep.subr.bf16.mxu0 0
        %7930 = vmatpush1.bf16.msra.mxu0 0
        %7931 = vmatprep.subr.bf16.mxu0 0
        %7932 = vmatpush1.bf16.msra.mxu0 0
        %7933 = vmatprep.subr.bf16.mxu0 0
        %7934 = vmatpush1.bf16.msra.mxu0 0
        %7935 = vmatprep.subr.bf16.mxu0 0
        %7936 = vmatpush1.bf16.msra.mxu0 0
        %7937 = vmatprep.subr.bf16.mxu0 0
        %7938 = vmatpush1.bf16.msra.mxu0 0
        %7939 = vmatprep.subr.bf16.mxu0 0
        %7940 = vmatpush1.bf16.msra.mxu0 0
        %7941 = vmatprep.subr.bf16.mxu0 0
        %7942 = vmatpush1.bf16.msra.mxu0 0
        %7943 = vmatprep.subr.bf16.mxu0 0
        %7944 = vmatpush1.bf16.msra.mxu0 0
        %7945 = vmatprep.subr.bf16.mxu0 0
        %7946 = vmatpush1.bf16.msra.mxu0 0
        %7947 = vmatprep.subr.bf16.mxu0 0
        %7948 = vmatpush1.bf16.msra.mxu0 0
        %7949 = vmatprep.subr.bf16.mxu0 0
        %7950 = vmatpush1.bf16.msra.mxu0 0
        %7951 = vmatprep.subr.bf16.mxu0 0
        %7952 = vmatpush1.bf16.msra.mxu0 0
        %7953 = vmatprep.mubr.bf16.mxu0 0
        %7954 = vmatmul.mubr.bf16.gmra.mrb[0].mxu0 %v7898
        %v7955 = vpop.f32.mrb[0].mxu0
        %v7956 = vadd.f32 0.0, %v7955
        %v7957 = vpop.f32.mrb[0].mxu0
        %v7958 = vadd.f32 0.0, %v7957
        %v7959 = vpop.f32.mrb[0].mxu0
        %v7960 = vadd.f32 0.0, %v7959
        %v7961 = vpop.f32.mrb[0].mxu0
        %v7962 = vadd.f32 0.0, %v7961
        %7963 = vmatprep.mubr.bf16.mxu0 0
        %7964 = vmatmul.mubr.bf16.gmra.mrb[0].mxu0 %v7901
        %v7965 = vpop.f32.mrb[0].mxu0
        %v7966 = vadd.f32 0.0, %v7965
        %v7967 = vpop.f32.mrb[0].mxu0
        %v7968 = vadd.f32 0.0, %v7967
        %v7969 = vpop.f32.mrb[0].mxu0
        %v7970 = vadd.f32 0.0, %v7969
        %v7971 = vpop.f32.mrb[0].mxu0
        %v7972 = vadd.f32 0.0, %v7971
        %7973 = vmatprep.mubr.bf16.mxu0 0
        %7974 = vmatmul.mubr.bf16.gmra.mrb[0].mxu0 %v7904
        %v7975 = vpop.f32.mrb[0].mxu0
        %v7976 = vadd.f32 0.0, %v7975
        %v7977 = vpop.f32.mrb[0].mxu0
        %v7978 = vadd.f32 0.0, %v7977
        %v7979 = vpop.f32.mrb[0].mxu0
        %v7980 = vadd.f32 0.0, %v7979
        %v7981 = vpop.f32.mrb[0].mxu0
        %v7982 = vadd.f32 0.0, %v7981
        %7983 = vmatprep.mubr.bf16.mxu0 0
        %7984 = vmatmul.mubr.bf16.gmra.mrb[0].mxu0 %v7907
        %v7985 = vpop.f32.mrb[0].mxu0
        %v7986 = vadd.f32 0.0, %v7985
        %v7987 = vpop.f32.mrb[0].mxu0
        %v7988 = vadd.f32 0.0, %v7987
        %v7989 = vpop.f32.mrb[0].mxu0
        %v7990 = vadd.f32 0.0, %v7989
        %v7991 = vpop.f32.mrb[0].mxu0
        %v7992 = vadd.f32 0.0, %v7991
        %7993 = vmatprep.mubr.bf16.mxu0 0
        %7994 = vmatmul.mubr.bf16.gmra.mrb[0].mxu0 %v7910
        %v7995 = vpop.f32.mrb[0].mxu0
        %v7996 = vadd.f32 0.0, %v7995
        %v7997 = vpop.f32.mrb[0].mxu0
        %v7998 = vadd.f32 0.0, %v7997
        %v7999 = vpop.f32.mrb[0].mxu0
        %v8000 = vpop.f32.mrb[0].mxu0
        %8001 = vdwg.mxu0
        %8002 = vmatprep.subr.bf16.mxu0 0
        %8003 = vmatpush1.bf16.msra.mxu0 %v7919
        %8004 = vmatprep.subr.bf16.mxu0 0
        %8005 = vmatpush1.bf16.msra.mxu0 0
        %8006 = vmatprep.subr.bf16.mxu0 0
        %8007 = vmatpush1.bf16.msra.mxu0 0
        %8008 = vmatprep.subr.bf16.mxu0 0
        %8009 = vmatpush1.bf16.msra.mxu0 0
        %8010 = vmatprep.subr.bf16.mxu0 0
        %8011 = vmatpush1.bf16.msra.mxu0 0
        %8012 = vmatprep.subr.bf16.mxu0 0
        %8013 = vmatpush1.bf16.msra.mxu0 0
        %8014 = vmatprep.subr.bf16.mxu0 0
        %8015 = vmatpush1.bf16.msra.mxu0 0
        %8016 = vmatprep.subr.bf16.mxu0 0
        %8017 = vmatpush1.bf16.msra.mxu0 0
        %8018 = vmatprep.subr.bf16.mxu0 0
        %8019 = vmatpush1.bf16.msra.mxu0 0
        %8020 = vmatprep.subr.bf16.mxu0 0
        %8021 = vmatpush1.bf16.msra.mxu0 0
        %8022 = vmatprep.subr.bf16.mxu0 0
        %8023 = vmatpush1.bf16.msra.mxu0 0
        %8024 = vmatprep.subr.bf16.mxu0 0
        %8025 = vmatpush1.bf16.msra.mxu0 0
        %8026 = vmatprep.subr.bf16.mxu0 0
        %8027 = vmatpush1.bf16.msra.mxu0 0
        %8028 = vmatprep.subr.bf16.mxu0 0
        %8029 = vmatpush1.bf16.msra.mxu0 0
        %8030 = vmatprep.subr.bf16.mxu0 0
        %8031 = vmatpush1.bf16.msra.mxu0 0
        %8032 = vmatprep.subr.bf16.mxu0 0
        %8033 = vmatpush1.bf16.msra.mxu0 0
        %8034 = vmatprep.mubr.bf16.mxu0 0
        %8035 = vmatmul.mubr.bf16.gmra.mrb[0].mxu0 %v7898
        %v8036 = vpop.f32.mrb[0].mxu0
        %v8037 = vadd.f32 0.0, %v8036
        %v8038 = vpop.f32.mrb[0].mxu0
        %v8039 = vpop.f32.mrb[0].mxu0
        %v8040 = vadd.f32 0.0, %v8039
        %v8041 = vpop.f32.mrb[0].mxu0
        %8042 = vmatprep.mubr.bf16.mxu0 0
        %8043 = vmatmul.mubr.bf16.gmra.mrb[0].mxu0 %v7901
        %v8044 = vpop.f32.mrb[0].mxu0
        %v8045 = vadd.f32 0.0, %v8044
        %v8046 = vpop.f32.mrb[0].mxu0
        %v8047 = vpop.f32.mrb[0].mxu0
        %v8048 = vadd.f32 0.0, %v8047
        %v8049 = vpop.f32.mrb[0].mxu0
        %8050 = vmatprep.mubr.bf16.mxu0 0
        %8051 = vmatmul.mubr.bf16.gmra.mrb[0].mxu0 %v7904
        %v8052 = vpop.f32.mrb[0].mxu0
        %v8053 = vadd.f32 0.0, %v8052
        %v8054 = vpop.f32.mrb[0].mxu0
        %v8055 = vpop.f32.mrb[0].mxu0
        %v8056 = vadd.f32 0.0, %v8055
        %v8057 = vpop.f32.mrb[0].mxu0
        %8058 = vmatprep.mubr.bf16.mxu0 0
        %8059 = vmatmul.mubr.bf16.gmra.mrb[0].mxu0 %v7907
        %v8060 = vpop.f32.mrb[0].mxu0
        %v8061 = vadd.f32 0.0, %v8060
        %v8062 = vpop.f32.mrb[0].mxu0
        %v8063 = vpop.f32.mrb[0].mxu0
        %v8064 = vadd.f32 0.0, %v8063
        %v8065 = vpop.f32.mrb[0].mxu0
        %8066 = vmatprep.mubr.bf16.mxu0 0
        %8067 = vmatmul.mubr.bf16.gmra.mrb[0].mxu0 %v7910
        %v8068 = vpop.f32.mrb[0].mxu0
        %v8069 = vadd.f32 0.0, %v8068
        %v8070 = vpop.f32.mrb[0].mxu0
        %v8071 = vpop.f32.mrb[0].mxu0
        %v8072 = vpop.f32.mrb[0].mxu0
        %8073 = vdwg.mxu0
        %v8074 = vadd.f32 %v7810, %v7956
        %v8075 = vadd.f32 %v7811, %v7958
        %v8076 = vadd.f32 %v7812, %v8037
        %v8077 = vadd.f32 %v7813, %v7960
        %v8078 = vadd.f32 %v7814, %v7962
        %v8079 = vadd.f32 %v7815, %v8040
        %v8080 = vadd.f32 %v7816, %v7966
        %v8081 = vadd.f32 %v7817, %v7968
        %v8082 = vadd.f32 %v7818, %v8045
        %v8083 = vadd.f32 %v7819, %v7970
        %v8084 = vadd.f32 %v7820, %v7972
        %v8085 = vadd.f32 %v7821, %v8048
        %v8086 = vadd.f32 %v7822, %v7976
        %v8087 = vadd.f32 %v7823, %v7978
        %v8088 = vadd.f32 %v7824, %v8053
        %v8089 = vadd.f32 %v7825, %v7980
        %v8090 = vadd.f32 %v7826, %v7982
        %v8091 = vadd.f32 %v7827, %v8056
        %v8092 = vadd.f32 %v7828, %v7986
        %v8093 = vadd.f32 %v7829, %v7988
        %v8094 = vadd.f32 %v7830, %v8061
        %v8095 = vadd.f32 %v7831, %v7990
        %v8096 = vadd.f32 %v7832, %v7992
        %v8097 = vadd.f32 %v7833, %v8064
        %v8098 = vadd.f32 %v7834, %v7996
        %v8099 = vadd.f32 %v7835, %v7998
        %v8100 = vadd.f32 %v7836, %v8069
        %v8101 = vmax.bf16 %v7837, %v7846
        %v8102 = vmax.bf16 %v7838, %v7847
        %v8103 = vmax.bf16 %v7839, %v7848
        %v8104 = vmax.bf16 %v7840, %v7849
        %v8105 = vmax.bf16 %v7841, %v7850
        %v8106 = vmax.bf16 %v7842, %v7851
        %v8107 = vmax.bf16 %v7843, %v7852
        %v8108 = vmax.bf16 %v7844, %v7853
        %v8109 = vmax.bf16 %v7845, %v7854
        %v8110 = vld [vmem:[%s852] sm:$0xf]
        %v8111 = vld [vmem:[%s852 + $0x4] sm:$0xf]
        %v8112 = vld [vmem:[%s852 + $0x8] sm:$0xf]
        %v8113 = vld [vmem:[%s852 + $0xc] sm:$0xf]
        %v8114 = vld [vmem:[%s852 + $0x10] sm:$0xf]
        %v8115 = vld [vmem:[%s852 + $0x14] sm:$0xf]
        %v8116 = vld [vmem:[%s852 + $0x18] sm:$0xf]
        %v8117 = vld [vmem:[%s852 + $0x1c] sm:$0xf]
        %v8118 = vld [vmem:[%s852 + $0x20] sm:$0xf]
        %s8119 = scalar_lea.vmem %s2, 30
        %v8120 = vld [vmem:[%s8119] sm:$0x3f]
        %v8130 = vunpack.c.l.b16 %v8110
        %v8131 = vunpack.c.l.b16 %v8111
        %v8132 = vunpack.c.l.b16 %v8112
        %v8133 = vunpack.c.l.b16 %v8113
        %v8134 = vunpack.c.l.b16 %v8114
        %v8135 = vunpack.c.l.b16 %v8115
        %v8136 = vunpack.c.l.b16 %v8116
        %v8137 = vunpack.c.l.b16 %v8117
        %v8138 = vunpack.c.l.b16 %v8118
        %v8139 = vpack.c.b16 %v8131, %v8130
        %v8140 = vpack.c.b16 %v8133, %v8132
        %v8141 = vpack.c.b16 %v8135, %v8134
        %v8142 = vpack.c.b16 %v8137, %v8136
        %v8143 = vpack.c.b16 %v8138, %v8138
        %v8145 = vshrl.u32 %v8139, 16
        %v8147 = vshll.u32 %v8139, 16
        %v8149 = vrot.slane %v8147, 1
        %v8150 = vor.u32 %v8145, %v8149
        %v8152 = vshll.u32 %v8140, 16
        %v8154 = vrot.slane %v8152, 1
        %v8155 = vsel %vm1777, %v8150, %v8154
        %v8156 = vshrl.u32 %v8140, 16
        %v8158 = vor.u32 %v8156, %v8154
        %v8160 = vshll.u32 %v8141, 16
        %v8162 = vrot.slane %v8160, 1
        %v8163 = vsel %vm1777, %v8158, %v8162
        %v8164 = vshrl.u32 %v8141, 16
        %v8166 = vor.u32 %v8164, %v8162
        %v8168 = vshll.u32 %v8142, 16
        %v8170 = vrot.slane %v8168, 1
        %v8171 = vsel %vm1777, %v8166, %v8170
        %v8172 = vshrl.u32 %v8142, 16
        %v8174 = vor.u32 %v8172, %v8170
        %v8176 = vshll.u32 %v8143, 16
        %v8178 = vrot.slane %v8176, 1
        %v8179 = vsel %vm1777, %v8174, %v8178
        %v8180 = vshrl.u32 %v8143, 16
        %v8182 = vor.u32 %v8180, %v8178
        %v8184 = vcombine.high %v8120, %v8120
        %v8186 = vunpack.c.l.s4 1983009808
        %v8187 = vunpack.c.0.s8 %v8186
        %v8188 = vlaneseq
        %v8189 = vshrl.u32 %v8188, 7
        %v8190 = vsub.s32 %v8187, %v8189
        %v8191 = vrot.slane %v8120, %v8190
        %v8193 = vunpack.c.l.s4 1983009808
        %v8194 = vunpack.c.0.s8 %v8193
        %v8195 = vlaneseq
        %v8196 = vshrl.u32 %v8195, 7
        %v8197 = vsub.s32 %v8194, %v8196
        %v8198 = vrot.slane %v8184, %v8197
        %v8199 = vcombine.high %v8191, %v8191
        %v8201 = vsel %vm444, %v8155, 0
        %v8204 = vsel %vm444, %v8163, 0
        %v8207 = vsel %vm444, %v8171, 0
        %v8210 = vsel %vm444, %v8179, 0
        %v8213 = vsel %vm444, %v8182, 0
        %v8216 = vsel %vm460, %v8191, 0
        %v8219 = vsel %vm460, %v8199, 0
        %v8222 = vsel %vm460, %v8198, 0
        %8224 = vmatprep.subr.bf16.mxu0 %v8219
        %8225 = vmatpush1.bf16.msra.mxu0 %v8216
        %8226 = vmatprep.subr.bf16.mxu0 0
        %8227 = vmatpush1.bf16.msra.mxu0 0
        %8228 = vmatprep.subr.bf16.mxu0 0
        %8229 = vmatpush1.bf16.msra.mxu0 0
        %8230 = vmatprep.subr.bf16.mxu0 0
        %8231 = vmatpush1.bf16.msra.mxu0 0
        %8232 = vmatprep.subr.bf16.mxu0 0
        %8233 = vmatpush1.bf16.msra.mxu0 0
        %8234 = vmatprep.subr.bf16.mxu0 0
        %8235 = vmatpush1.bf16.msra.mxu0 0
        %8236 = vmatprep.subr.bf16.mxu0 0
        %8237 = vmatpush1.bf16.msra.mxu0 0
        %8238 = vmatprep.subr.bf16.mxu0 0
        %8239 = vmatpush1.bf16.msra.mxu0 0
        %8240 = vmatprep.subr.bf16.mxu0 0
        %8241 = vmatpush1.bf16.msra.mxu0 0
        %8242 = vmatprep.subr.bf16.mxu0 0
        %8243 = vmatpush1.bf16.msra.mxu0 0
        %8244 = vmatprep.subr.bf16.mxu0 0
        %8245 = vmatpush1.bf16.msra.mxu0 0
        %8246 = vmatprep.subr.bf16.mxu0 0
        %8247 = vmatpush1.bf16.msra.mxu0 0
        %8248 = vmatprep.subr.bf16.mxu0 0
        %8249 = vmatpush1.bf16.msra.mxu0 0
        %8250 = vmatprep.subr.bf16.mxu0 0
        %8251 = vmatpush1.bf16.msra.mxu0 0
        %8252 = vmatprep.subr.bf16.mxu0 0
        %8253 = vmatpush1.bf16.msra.mxu0 0
        %8254 = vmatprep.subr.bf16.mxu0 0
        %8255 = vmatpush1.bf16.msra.mxu0 0
        %8256 = vmatprep.mubr.bf16.mxu0 0
        %8257 = vmatmul.mubr.bf16.gmra.mrb[0].mxu0 %v8201
        %v8258 = vpop.f32.mrb[0].mxu0
        %v8259 = vadd.f32 0.0, %v8258
        %v8260 = vpop.f32.mrb[0].mxu0
        %v8261 = vadd.f32 0.0, %v8260
        %v8262 = vpop.f32.mrb[0].mxu0
        %v8263 = vadd.f32 0.0, %v8262
        %v8264 = vpop.f32.mrb[0].mxu0
        %v8265 = vadd.f32 0.0, %v8264
        %8266 = vmatprep.mubr.bf16.mxu0 0
        %8267 = vmatmul.mubr.bf16.gmra.mrb[0].mxu0 %v8204
        %v8268 = vpop.f32.mrb[0].mxu0
        %v8269 = vadd.f32 0.0, %v8268
        %v8270 = vpop.f32.mrb[0].mxu0
        %v8271 = vadd.f32 0.0, %v8270
        %v8272 = vpop.f32.mrb[0].mxu0
        %v8273 = vadd.f32 0.0, %v8272
        %v8274 = vpop.f32.mrb[0].mxu0
        %v8275 = vadd.f32 0.0, %v8274
        %8276 = vmatprep.mubr.bf16.mxu0 0
        %8277 = vmatmul.mubr.bf16.gmra.mrb[0].mxu0 %v8207
        %v8278 = vpop.f32.mrb[0].mxu0
        %v8279 = vadd.f32 0.0, %v8278
        %v8280 = vpop.f32.mrb[0].mxu0
        %v8281 = vadd.f32 0.0, %v8280
        %v8282 = vpop.f32.mrb[0].mxu0
        %v8283 = vadd.f32 0.0, %v8282
        %v8284 = vpop.f32.mrb[0].mxu0
        %v8285 = vadd.f32 0.0, %v8284
        %8286 = vmatprep.mubr.bf16.mxu0 0
        %8287 = vmatmul.mubr.bf16.gmra.mrb[0].mxu0 %v8210
        %v8288 = vpop.f32.mrb[0].mxu0
        %v8289 = vadd.f32 0.0, %v8288
        %v8290 = vpop.f32.mrb[0].mxu0
        %v8291 = vadd.f32 0.0, %v8290
        %v8292 = vpop.f32.mrb[0].mxu0
        %v8293 = vadd.f32 0.0, %v8292
        %v8294 = vpop.f32.mrb[0].mxu0
        %v8295 = vadd.f32 0.0, %v8294
        %8296 = vmatprep.mubr.bf16.mxu0 0
        %8297 = vmatmul.mubr.bf16.gmra.mrb[0].mxu0 %v8213
        %v8298 = vpop.f32.mrb[0].mxu0
        %v8299 = vadd.f32 0.0, %v8298
        %v8300 = vpop.f32.mrb[0].mxu0
        %v8301 = vadd.f32 0.0, %v8300
        %v8302 = vpop.f32.mrb[0].mxu0
        %v8303 = vpop.f32.mrb[0].mxu0
        %8304 = vdwg.mxu0
        %8305 = vmatprep.subr.bf16.mxu0 0
        %8306 = vmatpush1.bf16.msra.mxu0 %v8222
        %8307 = vmatprep.subr.bf16.mxu0 0
        %8308 = vmatpush1.bf16.msra.mxu0 0
        %8309 = vmatprep.subr.bf16.mxu0 0
        %8310 = vmatpush1.bf16.msra.mxu0 0
        %8311 = vmatprep.subr.bf16.mxu0 0
        %8312 = vmatpush1.bf16.msra.mxu0 0
        %8313 = vmatprep.subr.bf16.mxu0 0
        %8314 = vmatpush1.bf16.msra.mxu0 0
        %8315 = vmatprep.subr.bf16.mxu0 0
        %8316 = vmatpush1.bf16.msra.mxu0 0
        %8317 = vmatprep.subr.bf16.mxu0 0
        %8318 = vmatpush1.bf16.msra.mxu0 0
        %8319 = vmatprep.subr.bf16.mxu0 0
        %8320 = vmatpush1.bf16.msra.mxu0 0
        %8321 = vmatprep.subr.bf16.mxu0 0
        %8322 = vmatpush1.bf16.msra.mxu0 0
        %8323 = vmatprep.subr.bf16.mxu0 0
        %8324 = vmatpush1.bf16.msra.mxu0 0
        %8325 = vmatprep.subr.bf16.mxu0 0
        %8326 = vmatpush1.bf16.msra.mxu0 0
        %8327 = vmatprep.subr.bf16.mxu0 0
        %8328 = vmatpush1.bf16.msra.mxu0 0
        %8329 = vmatprep.subr.bf16.mxu0 0
        %8330 = vmatpush1.bf16.msra.mxu0 0
        %8331 = vmatprep.subr.bf16.mxu0 0
        %8332 = vmatpush1.bf16.msra.mxu0 0
        %8333 = vmatprep.subr.bf16.mxu0 0
        %8334 = vmatpush1.bf16.msra.mxu0 0
        %8335 = vmatprep.subr.bf16.mxu0 0
        %8336 = vmatpush1.bf16.msra.mxu0 0
        %8337 = vmatprep.mubr.bf16.mxu0 0
        %8338 = vmatmul.mubr.bf16.gmra.mrb[0].mxu0 %v8201
        %v8339 = vpop.f32.mrb[0].mxu0
        %v8340 = vadd.f32 0.0, %v8339
        %v8341 = vpop.f32.mrb[0].mxu0
        %v8342 = vpop.f32.mrb[0].mxu0
        %v8343 = vadd.f32 0.0, %v8342
        %v8344 = vpop.f32.mrb[0].mxu0
        %8345 = vmatprep.mubr.bf16.mxu0 0
        %8346 = vmatmul.mubr.bf16.gmra.mrb[0].mxu0 %v8204
        %v8347 = vpop.f32.mrb[0].mxu0
        %v8348 = vadd.f32 0.0, %v8347
        %v8349 = vpop.f32.mrb[0].mxu0
        %v8350 = vpop.f32.mrb[0].mxu0
        %v8351 = vadd.f32 0.0, %v8350
        %v8352 = vpop.f32.mrb[0].mxu0
        %8353 = vmatprep.mubr.bf16.mxu0 0
        %8354 = vmatmul.mubr.bf16.gmra.mrb[0].mxu0 %v8207
        %v8355 = vpop.f32.mrb[0].mxu0
        %v8356 = vadd.f32 0.0, %v8355
        %v8357 = vpop.f32.mrb[0].mxu0
        %v8358 = vpop.f32.mrb[0].mxu0
        %v8359 = vadd.f32 0.0, %v8358
        %v8360 = vpop.f32.mrb[0].mxu0
        %8361 = vmatprep.mubr.bf16.mxu0 0
        %8362 = vmatmul.mubr.bf16.gmra.mrb[0].mxu0 %v8210
        %v8363 = vpop.f32.mrb[0].mxu0
        %v8364 = vadd.f32 0.0, %v8363
        %v8365 = vpop.f32.mrb[0].mxu0
        %v8366 = vpop.f32.mrb[0].mxu0
        %v8367 = vadd.f32 0.0, %v8366
        %v8368 = vpop.f32.mrb[0].mxu0
        %8369 = vmatprep.mubr.bf16.mxu0 0
        %8370 = vmatmul.mubr.bf16.gmra.mrb[0].mxu0 %v8213
        %v8371 = vpop.f32.mrb[0].mxu0
        %v8372 = vadd.f32 0.0, %v8371
        %v8373 = vpop.f32.mrb[0].mxu0
        %v8374 = vpop.f32.mrb[0].mxu0
        %v8375 = vpop.f32.mrb[0].mxu0
        %8376 = vdwg.mxu0
        %v8377 = vadd.f32 %v8074, %v8259
        %v8378 = vadd.f32 %v8075, %v8261
        %v8379 = vadd.f32 %v8076, %v8340
        %v8380 = vadd.f32 %v8077, %v8263
        %v8381 = vadd.f32 %v8078, %v8265
        %v8382 = vadd.f32 %v8079, %v8343
        %v8383 = vadd.f32 %v8080, %v8269
        %v8384 = vadd.f32 %v8081, %v8271
        %v8385 = vadd.f32 %v8082, %v8348
        %v8386 = vadd.f32 %v8083, %v8273
        %v8387 = vadd.f32 %v8084, %v8275
        %v8388 = vadd.f32 %v8085, %v8351
        %v8389 = vadd.f32 %v8086, %v8279
        %v8390 = vadd.f32 %v8087, %v8281
        %v8391 = vadd.f32 %v8088, %v8356
        %v8392 = vadd.f32 %v8089, %v8283
        %v8393 = vadd.f32 %v8090, %v8285
        %v8394 = vadd.f32 %v8091, %v8359
        %v8395 = vadd.f32 %v8092, %v8289
        %v8396 = vadd.f32 %v8093, %v8291
        %v8397 = vadd.f32 %v8094, %v8364
        %v8398 = vadd.f32 %v8095, %v8293
        %v8399 = vadd.f32 %v8096, %v8295
        %v8400 = vadd.f32 %v8097, %v8367
        %v8401 = vadd.f32 %v8098, %v8299
        %v8402 = vadd.f32 %v8099, %v8301
        %v8403 = vadd.f32 %v8100, %v8372
        %v8405 = vshrl.u32 %v8110, 16
        %v8407 = vrot.slane %v8405, 4
        %v8408 = vshll.u32 %v8110, 16
        %v8410 = vrot.slane %v8408, 5
        %v8411 = vor.u32 %v8407, %v8410
        %v8412 = vrot.slane %v8411, 4
        %v8414 = vshll.u32 %v8111, 16
        %v8416 = vrot.slane %v8414, 5
        %v8417 = vsel %vm7474, %v8412, %v8416
        %v8418 = vshrl.u32 %v8111, 16
        %v8420 = vrot.slane %v8418, 4
        %v8421 = vor.u32 %v8420, %v8416
        %v8422 = vrot.slane %v8421, 4
        %v8424 = vshll.u32 %v8112, 16
        %v8426 = vrot.slane %v8424, 5
        %v8427 = vsel %vm7474, %v8422, %v8426
        %v8428 = vshrl.u32 %v8112, 16
        %v8430 = vrot.slane %v8428, 4
        %v8431 = vor.u32 %v8430, %v8426
        %v8432 = vrot.slane %v8431, 4
        %v8434 = vshll.u32 %v8113, 16
        %v8436 = vrot.slane %v8434, 5
        %v8437 = vsel %vm7474, %v8432, %v8436
        %v8438 = vshrl.u32 %v8113, 16
        %v8440 = vrot.slane %v8438, 4
        %v8441 = vor.u32 %v8440, %v8436
        %v8442 = vrot.slane %v8441, 4
        %v8444 = vshll.u32 %v8114, 16
        %v8446 = vrot.slane %v8444, 5
        %v8447 = vsel %vm7474, %v8442, %v8446
        %v8448 = vshrl.u32 %v8114, 16
        %v8450 = vrot.slane %v8448, 4
        %v8451 = vor.u32 %v8450, %v8446
        %v8452 = vrot.slane %v8451, 4
        %v8454 = vshll.u32 %v8115, 16
        %v8456 = vrot.slane %v8454, 5
        %v8457 = vsel %vm7474, %v8452, %v8456
        %v8458 = vshrl.u32 %v8115, 16
        %v8460 = vrot.slane %v8458, 4
        %v8461 = vor.u32 %v8460, %v8456
        %v8462 = vrot.slane %v8461, 4
        %v8464 = vshll.u32 %v8116, 16
        %v8466 = vrot.slane %v8464, 5
        %v8467 = vsel %vm7474, %v8462, %v8466
        %v8468 = vshrl.u32 %v8116, 16
        %v8470 = vrot.slane %v8468, 4
        %v8471 = vor.u32 %v8470, %v8466
        %v8472 = vrot.slane %v8471, 4
        %v8474 = vshll.u32 %v8117, 16
        %v8476 = vrot.slane %v8474, 5
        %v8477 = vsel %vm7474, %v8472, %v8476
        %v8478 = vshrl.u32 %v8117, 16
        %v8480 = vrot.slane %v8478, 4
        %v8481 = vor.u32 %v8480, %v8476
        %v8482 = vrot.slane %v8481, 4
        %v8484 = vshll.u32 %v8118, 16
        %v8486 = vrot.slane %v8484, 5
        %v8487 = vsel %vm7474, %v8482, %v8486
        %v8488 = vshrl.u32 %v8118, 16
        %v8490 = vrot.slane %v8488, 4
        %v8491 = vor.u32 %v8490, %v8486
        %v8492 = vrot.slane %v8491, 4
        %v8502 = vmax.bf16 %v8101, %v8417
        %v8503 = vmax.bf16 %v8102, %v8427
        %v8504 = vmax.bf16 %v8103, %v8437
        %v8505 = vmax.bf16 %v8104, %v8447
        %v8506 = vmax.bf16 %v8105, %v8457
        %v8507 = vmax.bf16 %v8106, %v8467
        %v8508 = vmax.bf16 %v8107, %v8477
        %v8509 = vmax.bf16 %v8108, %v8487
        %v8510 = vmax.bf16 %v8109, %v8492
        %v8511 = vld [vmem:[%s384 + $0x4] sm:$0xe]
        %v8512 = vld [vmem:[%s384 + $0x8] sm:$0xf]
        %v8513 = vld [vmem:[%s384 + $0xc] sm:$0xf]
        %v8514 = vld [vmem:[%s384 + $0x10] sm:$0xf]
        %v8515 = vld [vmem:[%s384 + $0x14] sm:$0xf]
        %v8516 = vld [vmem:[%s384 + $0x18] sm:$0xf]
        %v8517 = vld [vmem:[%s384 + $0x1c] sm:$0xf]
        %v8518 = vld [vmem:[%s384 + $0x20] sm:$0xf]
        %v8519 = vld [vmem:[%s384 + $0x24] sm:$0xf]
        %s8520 = scalar_lea.vmem %s2, 36
        %v8521 = vld [vmem:[%s8520] sm:$0x3f]
        %v8531 = vunpack.c.l.b16 %v8511
        %v8532 = vunpack.c.l.b16 %v8512
        %v8533 = vunpack.c.l.b16 %v8513
        %v8534 = vunpack.c.l.b16 %v8514
        %v8535 = vunpack.c.l.b16 %v8515
        %v8536 = vunpack.c.l.b16 %v8516
        %v8537 = vunpack.c.l.b16 %v8517
        %v8538 = vunpack.c.l.b16 %v8518
        %v8539 = vunpack.c.l.b16 %v8519
        %v8540 = vpack.c.b16 %v8532, %v8531
        %v8541 = vpack.c.b16 %v8534, %v8533
        %v8542 = vpack.c.b16 %v8536, %v8535
        %v8543 = vpack.c.b16 %v8538, %v8537
        %v8544 = vpack.c.b16 %v8539, %v8539
        %v8545 = vrot.slane %v8540, 1
        %v8546 = vrot.slane %v8541, 1
        %v8547 = vsel %vm1570, %v8545, %v8546
        %v8548 = vrot.slane %v8542, 1
        %v8549 = vsel %vm1570, %v8546, %v8548
        %v8550 = vrot.slane %v8543, 1
        %v8551 = vsel %vm1570, %v8548, %v8550
        %v8552 = vrot.slane %v8544, 1
        %v8553 = vsel %vm1570, %v8550, %v8552
        %v8555 = vcombine.high %v8521, %v8521
        %v8557 = vunpack.c.l.s4 1983009808
        %v8558 = vunpack.c.0.s8 %v8557
        %v8559 = vlaneseq
        %v8560 = vshrl.u32 %v8559, 7
        %v8561 = vsub.s32 %v8558, %v8560
        %v8562 = vrot.slane %v8521, %v8561
        %v8564 = vunpack.c.l.s4 1983009808
        %v8565 = vunpack.c.0.s8 %v8564
        %v8566 = vlaneseq
        %v8567 = vshrl.u32 %v8566, 7
        %v8568 = vsub.s32 %v8565, %v8567
        %v8569 = vrot.slane %v8555, %v8568
        %v8570 = vcombine.high %v8562, %v8562
        %v8572 = vsel %vm444, %v8547, 0
        %v8575 = vsel %vm444, %v8549, 0
        %v8578 = vsel %vm444, %v8551, 0
        %v8581 = vsel %vm444, %v8553, 0
        %v8584 = vsel %vm444, %v8552, 0
        %v8587 = vsel %vm460, %v8562, 0
        %v8590 = vsel %vm460, %v8570, 0
        %v8593 = vsel %vm460, %v8569, 0
        %8595 = vmatprep.subr.bf16.mxu0 %v8590
        %8596 = vmatpush1.bf16.msra.mxu0 %v8587
        %8597 = vmatprep.subr.bf16.mxu0 0
        %8598 = vmatpush1.bf16.msra.mxu0 0
        %8599 = vmatprep.subr.bf16.mxu0 0
        %8600 = vmatpush1.bf16.msra.mxu0 0
        %8601 = vmatprep.subr.bf16.mxu0 0
        %8602 = vmatpush1.bf16.msra.mxu0 0
        %8603 = vmatprep.subr.bf16.mxu0 0
        %8604 = vmatpush1.bf16.msra.mxu0 0
        %8605 = vmatprep.subr.bf16.mxu0 0
        %8606 = vmatpush1.bf16.msra.mxu0 0
        %8607 = vmatprep.subr.bf16.mxu0 0
        %8608 = vmatpush1.bf16.msra.mxu0 0
        %8609 = vmatprep.subr.bf16.mxu0 0
        %8610 = vmatpush1.bf16.msra.mxu0 0
        %8611 = vmatprep.subr.bf16.mxu0 0
        %8612 = vmatpush1.bf16.msra.mxu0 0
        %8613 = vmatprep.subr.bf16.mxu0 0
        %8614 = vmatpush1.bf16.msra.mxu0 0
        %8615 = vmatprep.subr.bf16.mxu0 0
        %8616 = vmatpush1.bf16.msra.mxu0 0
        %8617 = vmatprep.subr.bf16.mxu0 0
        %8618 = vmatpush1.bf16.msra.mxu0 0
        %8619 = vmatprep.subr.bf16.mxu0 0
        %8620 = vmatpush1.bf16.msra.mxu0 0
        %8621 = vmatprep.subr.bf16.mxu0 0
        %8622 = vmatpush1.bf16.msra.mxu0 0
        %8623 = vmatprep.subr.bf16.mxu0 0
        %8624 = vmatpush1.bf16.msra.mxu0 0
        %8625 = vmatprep.subr.bf16.mxu0 0
        %8626 = vmatpush1.bf16.msra.mxu0 0
        %8627 = vmatprep.mubr.bf16.mxu0 0
        %8628 = vmatmul.mubr.bf16.gmra.mrb[0].mxu0 %v8572
        %v8629 = vpop.f32.mrb[0].mxu0
        %v8630 = vadd.f32 0.0, %v8629
        %v8631 = vpop.f32.mrb[0].mxu0
        %v8632 = vadd.f32 0.0, %v8631
        %v8633 = vpop.f32.mrb[0].mxu0
        %v8634 = vadd.f32 0.0, %v8633
        %v8635 = vpop.f32.mrb[0].mxu0
        %v8636 = vadd.f32 0.0, %v8635
        %8637 = vmatprep.mubr.bf16.mxu0 0
        %8638 = vmatmul.mubr.bf16.gmra.mrb[0].mxu0 %v8575
        %v8639 = vpop.f32.mrb[0].mxu0
        %v8640 = vadd.f32 0.0, %v8639
        %v8641 = vpop.f32.mrb[0].mxu0
        %v8642 = vadd.f32 0.0, %v8641
        %v8643 = vpop.f32.mrb[0].mxu0
        %v8644 = vadd.f32 0.0, %v8643
        %v8645 = vpop.f32.mrb[0].mxu0
        %v8646 = vadd.f32 0.0, %v8645
        %8647 = vmatprep.mubr.bf16.mxu0 0
        %8648 = vmatmul.mubr.bf16.gmra.mrb[0].mxu0 %v8578
        %v8649 = vpop.f32.mrb[0].mxu0
        %v8650 = vadd.f32 0.0, %v8649
        %v8651 = vpop.f32.mrb[0].mxu0
        %v8652 = vadd.f32 0.0, %v8651
        %v8653 = vpop.f32.mrb[0].mxu0
        %v8654 = vadd.f32 0.0, %v8653
        %v8655 = vpop.f32.mrb[0].mxu0
        %v8656 = vadd.f32 0.0, %v8655
        %8657 = vmatprep.mubr.bf16.mxu0 0
        %8658 = vmatmul.mubr.bf16.gmra.mrb[0].mxu0 %v8581
        %v8659 = vpop.f32.mrb[0].mxu0
        %v8660 = vadd.f32 0.0, %v8659
        %v8661 = vpop.f32.mrb[0].mxu0
        %v8662 = vadd.f32 0.0, %v8661
        %v8663 = vpop.f32.mrb[0].mxu0
        %v8664 = vadd.f32 0.0, %v8663
        %v8665 = vpop.f32.mrb[0].mxu0
        %v8666 = vadd.f32 0.0, %v8665
        %8667 = vmatprep.mubr.bf16.mxu0 0
        %8668 = vmatmul.mubr.bf16.gmra.mrb[0].mxu0 %v8584
        %v8669 = vpop.f32.mrb[0].mxu0
        %v8670 = vadd.f32 0.0, %v8669
        %v8671 = vpop.f32.mrb[0].mxu0
        %v8672 = vadd.f32 0.0, %v8671
        %v8673 = vpop.f32.mrb[0].mxu0
        %v8674 = vpop.f32.mrb[0].mxu0
        %8675 = vdwg.mxu0
        %8676 = vmatprep.subr.bf16.mxu0 0
        %8677 = vmatpush1.bf16.msra.mxu0 %v8593
        %8678 = vmatprep.subr.bf16.mxu0 0
        %8679 = vmatpush1.bf16.msra.mxu0 0
        %8680 = vmatprep.subr.bf16.mxu0 0
        %8681 = vmatpush1.bf16.msra.mxu0 0
        %8682 = vmatprep.subr.bf16.mxu0 0
        %8683 = vmatpush1.bf16.msra.mxu0 0
        %8684 = vmatprep.subr.bf16.mxu0 0
        %8685 = vmatpush1.bf16.msra.mxu0 0
        %8686 = vmatprep.subr.bf16.mxu0 0
        %8687 = vmatpush1.bf16.msra.mxu0 0
        %8688 = vmatprep.subr.bf16.mxu0 0
        %8689 = vmatpush1.bf16.msra.mxu0 0
        %8690 = vmatprep.subr.bf16.mxu0 0
        %8691 = vmatpush1.bf16.msra.mxu0 0
        %8692 = vmatprep.subr.bf16.mxu0 0
        %8693 = vmatpush1.bf16.msra.mxu0 0
        %8694 = vmatprep.subr.bf16.mxu0 0
        %8695 = vmatpush1.bf16.msra.mxu0 0
        %8696 = vmatprep.subr.bf16.mxu0 0
        %8697 = vmatpush1.bf16.msra.mxu0 0
        %8698 = vmatprep.subr.bf16.mxu0 0
        %8699 = vmatpush1.bf16.msra.mxu0 0
        %8700 = vmatprep.subr.bf16.mxu0 0
        %8701 = vmatpush1.bf16.msra.mxu0 0
        %8702 = vmatprep.subr.bf16.mxu0 0
        %8703 = vmatpush1.bf16.msra.mxu0 0
        %8704 = vmatprep.subr.bf16.mxu0 0
        %8705 = vmatpush1.bf16.msra.mxu0 0
        %8706 = vmatprep.subr.bf16.mxu0 0
        %8707 = vmatpush1.bf16.msra.mxu0 0
        %8708 = vmatprep.mubr.bf16.mxu0 0
        %8709 = vmatmul.mubr.bf16.gmra.mrb[0].mxu0 %v8572
        %v8710 = vpop.f32.mrb[0].mxu0
        %v8711 = vadd.f32 0.0, %v8710
        %v8712 = vpop.f32.mrb[0].mxu0
        %v8713 = vpop.f32.mrb[0].mxu0
        %v8714 = vadd.f32 0.0, %v8713
        %v8715 = vpop.f32.mrb[0].mxu0
        %8716 = vmatprep.mubr.bf16.mxu0 0
        %8717 = vmatmul.mubr.bf16.gmra.mrb[0].mxu0 %v8575
        %v8718 = vpop.f32.mrb[0].mxu0
        %v8719 = vadd.f32 0.0, %v8718
        %v8720 = vpop.f32.mrb[0].mxu0
        %v8721 = vpop.f32.mrb[0].mxu0
        %v8722 = vadd.f32 0.0, %v8721
        %v8723 = vpop.f32.mrb[0].mxu0
        %8724 = vmatprep.mubr.bf16.mxu0 0
        %8725 = vmatmul.mubr.bf16.gmra.mrb[0].mxu0 %v8578
        %v8726 = vpop.f32.mrb[0].mxu0
        %v8727 = vadd.f32 0.0, %v8726
        %v8728 = vpop.f32.mrb[0].mxu0
        %v8729 = vpop.f32.mrb[0].mxu0
        %v8730 = vadd.f32 0.0, %v8729
        %v8731 = vpop.f32.mrb[0].mxu0
        %8732 = vmatprep.mubr.bf16.mxu0 0
        %8733 = vmatmul.mubr.bf16.gmra.mrb[0].mxu0 %v8581
        %v8734 = vpop.f32.mrb[0].mxu0
        %v8735 = vadd.f32 0.0, %v8734
        %v8736 = vpop.f32.mrb[0].mxu0
        %v8737 = vpop.f32.mrb[0].mxu0
        %v8738 = vadd.f32 0.0, %v8737
        %v8739 = vpop.f32.mrb[0].mxu0
        %8740 = vmatprep.mubr.bf16.mxu0 0
        %8741 = vmatmul.mubr.bf16.gmra.mrb[0].mxu0 %v8584
        %v8742 = vpop.f32.mrb[0].mxu0
        %v8743 = vadd.f32 0.0, %v8742
        %v8744 = vpop.f32.mrb[0].mxu0
        %v8745 = vpop.f32.mrb[0].mxu0
        %v8746 = vpop.f32.mrb[0].mxu0
        %8747 = vdwg.mxu0
        %v8748 = vadd.f32 %v8377, %v8630
        %v8749 = vadd.f32 %v8378, %v8632
        %v8750 = vadd.f32 %v8379, %v8711
        %v8751 = vadd.f32 %v8380, %v8634
        %v8752 = vadd.f32 %v8381, %v8636
        %v8753 = vadd.f32 %v8382, %v8714
        %v8754 = vadd.f32 %v8383, %v8640
        %v8755 = vadd.f32 %v8384, %v8642
        %v8756 = vadd.f32 %v8385, %v8719
        %v8757 = vadd.f32 %v8386, %v8644
        %v8758 = vadd.f32 %v8387, %v8646
        %v8759 = vadd.f32 %v8388, %v8722
        %v8760 = vadd.f32 %v8389, %v8650
        %v8761 = vadd.f32 %v8390, %v8652
        %v8762 = vadd.f32 %v8391, %v8727
        %v8763 = vadd.f32 %v8392, %v8654
        %v8764 = vadd.f32 %v8393, %v8656
        %v8765 = vadd.f32 %v8394, %v8730
        %v8766 = vadd.f32 %v8395, %v8660
        %v8767 = vadd.f32 %v8396, %v8662
        %v8768 = vadd.f32 %v8397, %v8735
        %v8769 = vadd.f32 %v8398, %v8664
        %v8770 = vadd.f32 %v8399, %v8666
        %v8771 = vadd.f32 %v8400, %v8738
        %v8772 = vadd.f32 %v8401, %v8670
        %v8773 = vadd.f32 %v8402, %v8672
        %v8774 = vadd.f32 %v8403, %v8743
        %vm8775 = vcmask 1042432
        %vm8776 = vcmask 1046532
        %vm8777 = vmor %vm8775, %vm8776
        %v8778 = vrot.slane %v8511, 5
        %v8779 = vrot.slane %v8778, 4
        %v8780 = vrot.slane %v8512, 5
        %v8781 = vsel %vm8777, %v8779, %v8780
        %v8782 = vrot.slane %v8780, 4
        %v8783 = vrot.slane %v8513, 5
        %v8784 = vsel %vm8777, %v8782, %v8783
        %v8785 = vrot.slane %v8783, 4
        %v8786 = vrot.slane %v8514, 5
        %v8787 = vsel %vm8777, %v8785, %v8786
        %v8788 = vrot.slane %v8786, 4
        %v8789 = vrot.slane %v8515, 5
        %v8790 = vsel %vm8777, %v8788, %v8789
        %v8791 = vrot.slane %v8789, 4
        %v8792 = vrot.slane %v8516, 5
        %v8793 = vsel %vm8777, %v8791, %v8792
        %v8794 = vrot.slane %v8792, 4
        %v8795 = vrot.slane %v8517, 5
        %v8796 = vsel %vm8777, %v8794, %v8795
        %v8797 = vrot.slane %v8795, 4
        %v8798 = vrot.slane %v8518, 5
        %v8799 = vsel %vm8777, %v8797, %v8798
        %v8800 = vrot.slane %v8798, 4
        %v8801 = vrot.slane %v8519, 5
        %v8802 = vsel %vm8777, %v8800, %v8801
        %v8803 = vrot.slane %v8801, 4
        %v8813 = vmax.bf16 %v8502, %v8781
        %v8814 = vmax.bf16 %v8503, %v8784
        %v8815 = vmax.bf16 %v8504, %v8787
        %v8816 = vmax.bf16 %v8505, %v8790
        %v8817 = vmax.bf16 %v8506, %v8793
        %v8818 = vmax.bf16 %v8507, %v8796
        %v8819 = vmax.bf16 %v8508, %v8799
        %v8820 = vmax.bf16 %v8509, %v8802
        %v8821 = vmax.bf16 %v8510, %v8803
        %v8822 = vld [vmem:[%s632 + $0x4] sm:$0xe]
        %v8823 = vld [vmem:[%s632 + $0x8] sm:$0xf]
        %v8824 = vld [vmem:[%s632 + $0xc] sm:$0xf]
        %v8825 = vld [vmem:[%s632 + $0x10] sm:$0xf]
        %v8826 = vld [vmem:[%s632 + $0x14] sm:$0xf]
        %v8827 = vld [vmem:[%s632 + $0x18] sm:$0xf]
        %v8828 = vld [vmem:[%s632 + $0x1c] sm:$0xf]
        %v8829 = vld [vmem:[%s632 + $0x20] sm:$0xf]
        %v8830 = vld [vmem:[%s632 + $0x24] sm:$0xf]
        %s8831 = scalar_lea.vmem %s2, 42
        %v8832 = vld [vmem:[%s8831] sm:$0x3f]
        %v8842 = vunpack.c.l.b16 %v8822
        %v8843 = vunpack.c.l.b16 %v8823
        %v8844 = vunpack.c.l.b16 %v8824
        %v8845 = vunpack.c.l.b16 %v8825
        %v8846 = vunpack.c.l.b16 %v8826
        %v8847 = vunpack.c.l.b16 %v8827
        %v8848 = vunpack.c.l.b16 %v8828
        %v8849 = vunpack.c.l.b16 %v8829
        %v8850 = vunpack.c.l.b16 %v8830
        %v8851 = vpack.c.b16 %v8843, %v8842
        %v8852 = vpack.c.b16 %v8845, %v8844
        %v8853 = vpack.c.b16 %v8847, %v8846
        %v8854 = vpack.c.b16 %v8849, %v8848
        %v8855 = vpack.c.b16 %v8850, %v8850
        %v8856 = vrot.slane %v8851, 1
        %v8857 = vrot.slane %v8852, 1
        %v8858 = vsel %vm1570, %v8856, %v8857
        %v8859 = vrot.slane %v8853, 1
        %v8860 = vsel %vm1570, %v8857, %v8859
        %v8861 = vrot.slane %v8854, 1
        %v8862 = vsel %vm1570, %v8859, %v8861
        %v8863 = vrot.slane %v8855, 1
        %v8864 = vsel %vm1570, %v8861, %v8863
        %v8866 = vcombine.high %v8832, %v8832
        %v8868 = vunpack.c.l.s4 1983009808
        %v8869 = vunpack.c.0.s8 %v8868
        %v8870 = vlaneseq
        %v8871 = vshrl.u32 %v8870, 7
        %v8872 = vsub.s32 %v8869, %v8871
        %v8873 = vrot.slane %v8832, %v8872
        %v8875 = vunpack.c.l.s4 1983009808
        %v8876 = vunpack.c.0.s8 %v8875
        %v8877 = vlaneseq
        %v8878 = vshrl.u32 %v8877, 7
        %v8879 = vsub.s32 %v8876, %v8878
        %v8880 = vrot.slane %v8866, %v8879
        %v8881 = vcombine.high %v8873, %v8873
        %v8883 = vsel %vm444, %v8858, 0
        %v8886 = vsel %vm444, %v8860, 0
        %v8889 = vsel %vm444, %v8862, 0
        %v8892 = vsel %vm444, %v8864, 0
        %v8895 = vsel %vm444, %v8863, 0
        %v8898 = vsel %vm460, %v8873, 0
        %v8901 = vsel %vm460, %v8881, 0
        %v8904 = vsel %vm460, %v8880, 0
        %8906 = vmatprep.subr.bf16.mxu0 %v8901
        %8907 = vmatpush1.bf16.msra.mxu0 %v8898
        %8908 = vmatprep.subr.bf16.mxu0 0
        %8909 = vmatpush1.bf16.msra.mxu0 0
        %8910 = vmatprep.subr.bf16.mxu0 0
        %8911 = vmatpush1.bf16.msra.mxu0 0
        %8912 = vmatprep.subr.bf16.mxu0 0
        %8913 = vmatpush1.bf16.msra.mxu0 0
        %8914 = vmatprep.subr.bf16.mxu0 0
        %8915 = vmatpush1.bf16.msra.mxu0 0
        %8916 = vmatprep.subr.bf16.mxu0 0
        %8917 = vmatpush1.bf16.msra.mxu0 0
        %8918 = vmatprep.subr.bf16.mxu0 0
        %8919 = vmatpush1.bf16.msra.mxu0 0
        %8920 = vmatprep.subr.bf16.mxu0 0
        %8921 = vmatpush1.bf16.msra.mxu0 0
        %8922 = vmatprep.subr.bf16.mxu0 0
        %8923 = vmatpush1.bf16.msra.mxu0 0
        %8924 = vmatprep.subr.bf16.mxu0 0
        %8925 = vmatpush1.bf16.msra.mxu0 0
        %8926 = vmatprep.subr.bf16.mxu0 0
        %8927 = vmatpush1.bf16.msra.mxu0 0
        %8928 = vmatprep.subr.bf16.mxu0 0
        %8929 = vmatpush1.bf16.msra.mxu0 0
        %8930 = vmatprep.subr.bf16.mxu0 0
        %8931 = vmatpush1.bf16.msra.mxu0 0
        %8932 = vmatprep.subr.bf16.mxu0 0
        %8933 = vmatpush1.bf16.msra.mxu0 0
        %8934 = vmatprep.subr.bf16.mxu0 0
        %8935 = vmatpush1.bf16.msra.mxu0 0
        %8936 = vmatprep.subr.bf16.mxu0 0
        %8937 = vmatpush1.bf16.msra.mxu0 0
        %8938 = vmatprep.mubr.bf16.mxu0 0
        %8939 = vmatmul.mubr.bf16.gmra.mrb[0].mxu0 %v8883
        %v8940 = vpop.f32.mrb[0].mxu0
        %v8941 = vadd.f32 0.0, %v8940
        %v8942 = vpop.f32.mrb[0].mxu0
        %v8943 = vadd.f32 0.0, %v8942
        %v8944 = vpop.f32.mrb[0].mxu0
        %v8945 = vadd.f32 0.0, %v8944
        %v8946 = vpop.f32.mrb[0].mxu0
        %v8947 = vadd.f32 0.0, %v8946
        %8948 = vmatprep.mubr.bf16.mxu0 0
        %8949 = vmatmul.mubr.bf16.gmra.mrb[0].mxu0 %v8886
        %v8950 = vpop.f32.mrb[0].mxu0
        %v8951 = vadd.f32 0.0, %v8950
        %v8952 = vpop.f32.mrb[0].mxu0
        %v8953 = vadd.f32 0.0, %v8952
        %v8954 = vpop.f32.mrb[0].mxu0
        %v8955 = vadd.f32 0.0, %v8954
        %v8956 = vpop.f32.mrb[0].mxu0
        %v8957 = vadd.f32 0.0, %v8956
        %8958 = vmatprep.mubr.bf16.mxu0 0
        %8959 = vmatmul.mubr.bf16.gmra.mrb[0].mxu0 %v8889
        %v8960 = vpop.f32.mrb[0].mxu0
        %v8961 = vadd.f32 0.0, %v8960
        %v8962 = vpop.f32.mrb[0].mxu0
        %v8963 = vadd.f32 0.0, %v8962
        %v8964 = vpop.f32.mrb[0].mxu0
        %v8965 = vadd.f32 0.0, %v8964
        %v8966 = vpop.f32.mrb[0].mxu0
        %v8967 = vadd.f32 0.0, %v8966
        %8968 = vmatprep.mubr.bf16.mxu0 0
        %8969 = vmatmul.mubr.bf16.gmra.mrb[0].mxu0 %v8892
        %v8970 = vpop.f32.mrb[0].mxu0
        %v8971 = vadd.f32 0.0, %v8970
        %v8972 = vpop.f32.mrb[0].mxu0
        %v8973 = vadd.f32 0.0, %v8972
        %v8974 = vpop.f32.mrb[0].mxu0
        %v8975 = vadd.f32 0.0, %v8974
        %v8976 = vpop.f32.mrb[0].mxu0
        %v8977 = vadd.f32 0.0, %v8976
        %8978 = vmatprep.mubr.bf16.mxu0 0
        %8979 = vmatmul.mubr.bf16.gmra.mrb[0].mxu0 %v8895
        %v8980 = vpop.f32.mrb[0].mxu0
        %v8981 = vadd.f32 0.0, %v8980
        %v8982 = vpop.f32.mrb[0].mxu0
        %v8983 = vadd.f32 0.0, %v8982
        %v8984 = vpop.f32.mrb[0].mxu0
        %v8985 = vpop.f32.mrb[0].mxu0
        %8986 = vdwg.mxu0
        %8987 = vmatprep.subr.bf16.mxu0 0
        %8988 = vmatpush1.bf16.msra.mxu0 %v8904
        %8989 = vmatprep.subr.bf16.mxu0 0
        %8990 = vmatpush1.bf16.msra.mxu0 0
        %8991 = vmatprep.subr.bf16.mxu0 0
        %8992 = vmatpush1.bf16.msra.mxu0 0
        %8993 = vmatprep.subr.bf16.mxu0 0
        %8994 = vmatpush1.bf16.msra.mxu0 0
        %8995 = vmatprep.subr.bf16.mxu0 0
        %8996 = vmatpush1.bf16.msra.mxu0 0
        %8997 = vmatprep.subr.bf16.mxu0 0
        %8998 = vmatpush1.bf16.msra.mxu0 0
        %8999 = vmatprep.subr.bf16.mxu0 0
        %9000 = vmatpush1.bf16.msra.mxu0 0
        %9001 = vmatprep.subr.bf16.mxu0 0
        %9002 = vmatpush1.bf16.msra.mxu0 0
        %9003 = vmatprep.subr.bf16.mxu0 0
        %9004 = vmatpush1.bf16.msra.mxu0 0
        %9005 = vmatprep.subr.bf16.mxu0 0
        %9006 = vmatpush1.bf16.msra.mxu0 0
        %9007 = vmatprep.subr.bf16.mxu0 0
        %9008 = vmatpush1.bf16.msra.mxu0 0
        %9009 = vmatprep.subr.bf16.mxu0 0
        %9010 = vmatpush1.bf16.msra.mxu0 0
        %9011 = vmatprep.subr.bf16.mxu0 0
        %9012 = vmatpush1.bf16.msra.mxu0 0
        %9013 = vmatprep.subr.bf16.mxu0 0
        %9014 = vmatpush1.bf16.msra.mxu0 0
        %9015 = vmatprep.subr.bf16.mxu0 0
        %9016 = vmatpush1.bf16.msra.mxu0 0
        %9017 = vmatprep.subr.bf16.mxu0 0
        %9018 = vmatpush1.bf16.msra.mxu0 0
        %9019 = vmatprep.mubr.bf16.mxu0 0
        %9020 = vmatmul.mubr.bf16.gmra.mrb[0].mxu0 %v8883
        %v9021 = vpop.f32.mrb[0].mxu0
        %v9022 = vadd.f32 0.0, %v9021
        %v9023 = vpop.f32.mrb[0].mxu0
        %v9024 = vpop.f32.mrb[0].mxu0
        %v9025 = vadd.f32 0.0, %v9024
        %v9026 = vpop.f32.mrb[0].mxu0
        %9027 = vmatprep.mubr.bf16.mxu0 0
        %9028 = vmatmul.mubr.bf16.gmra.mrb[0].mxu0 %v8886
        %v9029 = vpop.f32.mrb[0].mxu0
        %v9030 = vadd.f32 0.0, %v9029
        %v9031 = vpop.f32.mrb[0].mxu0
        %v9032 = vpop.f32.mrb[0].mxu0
        %v9033 = vadd.f32 0.0, %v9032
        %v9034 = vpop.f32.mrb[0].mxu0
        %9035 = vmatprep.mubr.bf16.mxu0 0
        %9036 = vmatmul.mubr.bf16.gmra.mrb[0].mxu0 %v8889
        %v9037 = vpop.f32.mrb[0].mxu0
        %v9038 = vadd.f32 0.0, %v9037
        %v9039 = vpop.f32.mrb[0].mxu0
        %v9040 = vpop.f32.mrb[0].mxu0
        %v9041 = vadd.f32 0.0, %v9040
        %v9042 = vpop.f32.mrb[0].mxu0
        %9043 = vmatprep.mubr.bf16.mxu0 0
        %9044 = vmatmul.mubr.bf16.gmra.mrb[0].mxu0 %v8892
        %v9045 = vpop.f32.mrb[0].mxu0
        %v9046 = vadd.f32 0.0, %v9045
        %v9047 = vpop.f32.mrb[0].mxu0
        %v9048 = vpop.f32.mrb[0].mxu0
        %v9049 = vadd.f32 0.0, %v9048
        %v9050 = vpop.f32.mrb[0].mxu0
        %9051 = vmatprep.mubr.bf16.mxu0 0
        %9052 = vmatmul.mubr.bf16.gmra.mrb[0].mxu0 %v8895
        %v9053 = vpop.f32.mrb[0].mxu0
        %v9054 = vadd.f32 0.0, %v9053
        %v9055 = vpop.f32.mrb[0].mxu0
        %v9056 = vpop.f32.mrb[0].mxu0
        %v9057 = vpop.f32.mrb[0].mxu0
        %9058 = vdwg.mxu0
        %v9059 = vadd.f32 %v8748, %v8941
        %v9060 = vadd.f32 %v8749, %v8943
        %v9061 = vadd.f32 %v8750, %v9022
        %v9062 = vadd.f32 %v8751, %v8945
        %v9063 = vadd.f32 %v8752, %v8947
        %v9064 = vadd.f32 %v8753, %v9025
        %v9065 = vadd.f32 %v8754, %v8951
        %v9066 = vadd.f32 %v8755, %v8953
        %v9067 = vadd.f32 %v8756, %v9030
        %v9068 = vadd.f32 %v8757, %v8955
        %v9069 = vadd.f32 %v8758, %v8957
        %v9070 = vadd.f32 %v8759, %v9033
        %v9071 = vadd.f32 %v8760, %v8961
        %v9072 = vadd.f32 %v8761, %v8963
        %v9073 = vadd.f32 %v8762, %v9038
        %v9074 = vadd.f32 %v8763, %v8965
        %v9075 = vadd.f32 %v8764, %v8967
        %v9076 = vadd.f32 %v8765, %v9041
        %v9077 = vadd.f32 %v8766, %v8971
        %v9078 = vadd.f32 %v8767, %v8973
        %v9079 = vadd.f32 %v8768, %v9046
        %v9080 = vadd.f32 %v8769, %v8975
        %v9081 = vadd.f32 %v8770, %v8977
        %v9082 = vadd.f32 %v8771, %v9049
        %v9083 = vadd.f32 %v8772, %v8981
        %v9084 = vadd.f32 %v8773, %v8983
        %v9085 = vadd.f32 %v8774, %v9054
        %v9086 = vrot.slane %v8822, 5
        %v9087 = vrot.slane %v9086, 4
        %v9088 = vrot.slane %v8823, 5
        %v9089 = vsel %vm8777, %v9087, %v9088
        %v9090 = vrot.slane %v9088, 4
        %v9091 = vrot.slane %v8824, 5
        %v9092 = vsel %vm8777, %v9090, %v9091
        %v9093 = vrot.slane %v9091, 4
        %v9094 = vrot.slane %v8825, 5
        %v9095 = vsel %vm8777, %v9093, %v9094
        %v9096 = vrot.slane %v9094, 4
        %v9097 = vrot.slane %v8826, 5
        %v9098 = vsel %vm8777, %v9096, %v9097
        %v9099 = vrot.slane %v9097, 4
        %v9100 = vrot.slane %v8827, 5
        %v9101 = vsel %vm8777, %v9099, %v9100
        %v9102 = vrot.slane %v9100, 4
        %v9103 = vrot.slane %v8828, 5
        %v9104 = vsel %vm8777, %v9102, %v9103
        %v9105 = vrot.slane %v9103, 4
        %v9106 = vrot.slane %v8829, 5
        %v9107 = vsel %vm8777, %v9105, %v9106
        %v9108 = vrot.slane %v9106, 4
        %v9109 = vrot.slane %v8830, 5
        %v9110 = vsel %vm8777, %v9108, %v9109
        %v9111 = vrot.slane %v9109, 4
        %v9121 = vmax.bf16 %v8813, %v9089
        %v9122 = vmax.bf16 %v8814, %v9092
        %v9123 = vmax.bf16 %v8815, %v9095
        %v9124 = vmax.bf16 %v8816, %v9098
        %v9125 = vmax.bf16 %v8817, %v9101
        %v9126 = vmax.bf16 %v8818, %v9104
        %v9127 = vmax.bf16 %v8819, %v9107
        %v9128 = vmax.bf16 %v8820, %v9110
        %v9129 = vmax.bf16 %v8821, %v9111
        %v9130 = vld [vmem:[%s384 + $0x4] sm:$0xe]
        %v9131 = vld [vmem:[%s384 + $0x8] sm:$0xf]
        %v9132 = vld [vmem:[%s384 + $0xc] sm:$0xf]
        %v9133 = vld [vmem:[%s384 + $0x10] sm:$0xf]
        %v9134 = vld [vmem:[%s384 + $0x14] sm:$0xf]
        %v9135 = vld [vmem:[%s384 + $0x18] sm:$0xf]
        %v9136 = vld [vmem:[%s384 + $0x1c] sm:$0xf]
        %v9137 = vld [vmem:[%s384 + $0x20] sm:$0xf]
        %v9138 = vld [vmem:[%s384 + $0x24] sm:$0xf]
        %v9139 = vld [vmem:[%s384 + $0x28] sm:$0x1]
        %s9140 = scalar_lea.vmem %s2, 48
        %v9141 = vld [vmem:[%s9140] sm:$0x3f]
        %v9152 = vunpack.c.l.b16 %v9130
        %v9153 = vunpack.c.l.b16 %v9131
        %v9154 = vunpack.c.l.b16 %v9132
        %v9155 = vunpack.c.l.b16 %v9133
        %v9156 = vunpack.c.l.b16 %v9134
        %v9157 = vunpack.c.l.b16 %v9135
        %v9158 = vunpack.c.l.b16 %v9136
        %v9159 = vunpack.c.l.b16 %v9137
        %v9160 = vunpack.c.l.b16 %v9138
        %v9161 = vunpack.c.l.b16 %v9139
        %v9162 = vpack.c.b16 %v9153, %v9152
        %v9163 = vpack.c.b16 %v9155, %v9154
        %v9164 = vpack.c.b16 %v9157, %v9156
        %v9165 = vpack.c.b16 %v9159, %v9158
        %v9166 = vpack.c.b16 %v9161, %v9160
        %v9168 = vshrl.u32 %v9162, 16
        %v9170 = vrot.slane %v9168, 1
        %v9171 = vshll.u32 %v9162, 16
        %v9173 = vrot.slane %v9171, 2
        %v9174 = vor.u32 %v9170, %v9173
        %v9176 = vshrl.u32 %v9163, 16
        %v9178 = vrot.slane %v9176, 1
        %v9179 = vshll.u32 %v9163, 16
        %v9181 = vrot.slane %v9179, 2
        %v9182 = vor.u32 %v9178, %v9181
        %v9183 = vsel %vm2134, %v9174, %v9182
        %v9185 = vshrl.u32 %v9164, 16
        %v9187 = vrot.slane %v9185, 1
        %v9188 = vshll.u32 %v9164, 16
        %v9190 = vrot.slane %v9188, 2
        %v9191 = vor.u32 %v9187, %v9190
        %v9192 = vsel %vm2134, %v9182, %v9191
        %v9194 = vshrl.u32 %v9165, 16
        %v9196 = vrot.slane %v9194, 1
        %v9197 = vshll.u32 %v9165, 16
        %v9199 = vrot.slane %v9197, 2
        %v9200 = vor.u32 %v9196, %v9199
        %v9201 = vsel %vm2134, %v9191, %v9200
        %v9203 = vshrl.u32 %v9166, 16
        %v9205 = vrot.slane %v9203, 1
        %v9206 = vshll.u32 %v9166, 16
        %v9208 = vrot.slane %v9206, 2
        %v9209 = vor.u32 %v9205, %v9208
        %v9210 = vsel %vm2134, %v9200, %v9209
        %v9212 = vcombine.high %v9141, %v9141
        %v9214 = vunpack.c.l.s4 1983009808
        %v9215 = vunpack.c.0.s8 %v9214
        %v9216 = vlaneseq
        %v9217 = vshrl.u32 %v9216, 7
        %v9218 = vsub.s32 %v9215, %v9217
        %v9219 = vrot.slane %v9141, %v9218
        %v9221 = vunpack.c.l.s4 1983009808
        %v9222 = vunpack.c.0.s8 %v9221
        %v9223 = vlaneseq
        %v9224 = vshrl.u32 %v9223, 7
        %v9225 = vsub.s32 %v9222, %v9224
        %v9226 = vrot.slane %v9212, %v9225
        %v9227 = vcombine.high %v9219, %v9219
        %v9229 = vsel %vm444, %v9183, 0
        %v9232 = vsel %vm444, %v9192, 0
        %v9235 = vsel %vm444, %v9201, 0
        %v9238 = vsel %vm444, %v9210, 0
        %v9241 = vsel %vm444, %v9209, 0
        %v9244 = vsel %vm460, %v9219, 0
        %v9247 = vsel %vm460, %v9227, 0
        %v9250 = vsel %vm460, %v9226, 0
        %9252 = vmatprep.subr.bf16.mxu0 %v9247
        %9253 = vmatpush1.bf16.msra.mxu0 %v9244
        %9254 = vmatprep.subr.bf16.mxu0 0
        %9255 = vmatpush1.bf16.msra.mxu0 0
        %9256 = vmatprep.subr.bf16.mxu0 0
        %9257 = vmatpush1.bf16.msra.mxu0 0
        %9258 = vmatprep.subr.bf16.mxu0 0
        %9259 = vmatpush1.bf16.msra.mxu0 0
        %9260 = vmatprep.subr.bf16.mxu0 0
        %9261 = vmatpush1.bf16.msra.mxu0 0
        %9262 = vmatprep.subr.bf16.mxu0 0
        %9263 = vmatpush1.bf16.msra.mxu0 0
        %9264 = vmatprep.subr.bf16.mxu0 0
        %9265 = vmatpush1.bf16.msra.mxu0 0
        %9266 = vmatprep.subr.bf16.mxu0 0
        %9267 = vmatpush1.bf16.msra.mxu0 0
        %9268 = vmatprep.subr.bf16.mxu0 0
        %9269 = vmatpush1.bf16.msra.mxu0 0
        %9270 = vmatprep.subr.bf16.mxu0 0
        %9271 = vmatpush1.bf16.msra.mxu0 0
        %9272 = vmatprep.subr.bf16.mxu0 0
        %9273 = vmatpush1.bf16.msra.mxu0 0
        %9274 = vmatprep.subr.bf16.mxu0 0
        %9275 = vmatpush1.bf16.msra.mxu0 0
        %9276 = vmatprep.subr.bf16.mxu0 0
        %9277 = vmatpush1.bf16.msra.mxu0 0
        %9278 = vmatprep.subr.bf16.mxu0 0
        %9279 = vmatpush1.bf16.msra.mxu0 0
        %9280 = vmatprep.subr.bf16.mxu0 0
        %9281 = vmatpush1.bf16.msra.mxu0 0
        %9282 = vmatprep.subr.bf16.mxu0 0
        %9283 = vmatpush1.bf16.msra.mxu0 0
        %9284 = vmatprep.mubr.bf16.mxu0 0
        %9285 = vmatmul.mubr.bf16.gmra.mrb[0].mxu0 %v9229
        %v9286 = vpop.f32.mrb[0].mxu0
        %v9287 = vadd.f32 0.0, %v9286
        %v9288 = vpop.f32.mrb[0].mxu0
        %v9289 = vadd.f32 0.0, %v9288
        %v9290 = vpop.f32.mrb[0].mxu0
        %v9291 = vadd.f32 0.0, %v9290
        %v9292 = vpop.f32.mrb[0].mxu0
        %v9293 = vadd.f32 0.0, %v9292
        %9294 = vmatprep.mubr.bf16.mxu0 0
        %9295 = vmatmul.mubr.bf16.gmra.mrb[0].mxu0 %v9232
        %v9296 = vpop.f32.mrb[0].mxu0
        %v9297 = vadd.f32 0.0, %v9296
        %v9298 = vpop.f32.mrb[0].mxu0
        %v9299 = vadd.f32 0.0, %v9298
        %v9300 = vpop.f32.mrb[0].mxu0
        %v9301 = vadd.f32 0.0, %v9300
        %v9302 = vpop.f32.mrb[0].mxu0
        %v9303 = vadd.f32 0.0, %v9302
        %9304 = vmatprep.mubr.bf16.mxu0 0
        %9305 = vmatmul.mubr.bf16.gmra.mrb[0].mxu0 %v9235
        %v9306 = vpop.f32.mrb[0].mxu0
        %v9307 = vadd.f32 0.0, %v9306
        %v9308 = vpop.f32.mrb[0].mxu0
        %v9309 = vadd.f32 0.0, %v9308
        %v9310 = vpop.f32.mrb[0].mxu0
        %v9311 = vadd.f32 0.0, %v9310
        %v9312 = vpop.f32.mrb[0].mxu0
        %v9313 = vadd.f32 0.0, %v9312
        %9314 = vmatprep.mubr.bf16.mxu0 0
        %9315 = vmatmul.mubr.bf16.gmra.mrb[0].mxu0 %v9238
        %v9316 = vpop.f32.mrb[0].mxu0
        %v9317 = vadd.f32 0.0, %v9316
        %v9318 = vpop.f32.mrb[0].mxu0
        %v9319 = vadd.f32 0.0, %v9318
        %v9320 = vpop.f32.mrb[0].mxu0
        %v9321 = vadd.f32 0.0, %v9320
        %v9322 = vpop.f32.mrb[0].mxu0
        %v9323 = vadd.f32 0.0, %v9322
        %9324 = vmatprep.mubr.bf16.mxu0 0
        %9325 = vmatmul.mubr.bf16.gmra.mrb[0].mxu0 %v9241
        %v9326 = vpop.f32.mrb[0].mxu0
        %v9327 = vadd.f32 0.0, %v9326
        %v9328 = vpop.f32.mrb[0].mxu0
        %v9329 = vadd.f32 0.0, %v9328
        %v9330 = vpop.f32.mrb[0].mxu0
        %v9331 = vpop.f32.mrb[0].mxu0
        %9332 = vdwg.mxu0
        %9333 = vmatprep.subr.bf16.mxu0 0
        %9334 = vmatpush1.bf16.msra.mxu0 %v9250
        %9335 = vmatprep.subr.bf16.mxu0 0
        %9336 = vmatpush1.bf16.msra.mxu0 0
        %9337 = vmatprep.subr.bf16.mxu0 0
        %9338 = vmatpush1.bf16.msra.mxu0 0
        %9339 = vmatprep.subr.bf16.mxu0 0
        %9340 = vmatpush1.bf16.msra.mxu0 0
        %9341 = vmatprep.subr.bf16.mxu0 0
        %9342 = vmatpush1.bf16.msra.mxu0 0
        %9343 = vmatprep.subr.bf16.mxu0 0
        %9344 = vmatpush1.bf16.msra.mxu0 0
        %9345 = vmatprep.subr.bf16.mxu0 0
        %9346 = vmatpush1.bf16.msra.mxu0 0
        %9347 = vmatprep.subr.bf16.mxu0 0
        %9348 = vmatpush1.bf16.msra.mxu0 0
        %9349 = vmatprep.subr.bf16.mxu0 0
        %9350 = vmatpush1.bf16.msra.mxu0 0
        %9351 = vmatprep.subr.bf16.mxu0 0
        %9352 = vmatpush1.bf16.msra.mxu0 0
        %9353 = vmatprep.subr.bf16.mxu0 0
        %9354 = vmatpush1.bf16.msra.mxu0 0
        %9355 = vmatprep.subr.bf16.mxu0 0
        %9356 = vmatpush1.bf16.msra.mxu0 0
        %9357 = vmatprep.subr.bf16.mxu0 0
        %9358 = vmatpush1.bf16.msra.mxu0 0
        %9359 = vmatprep.subr.bf16.mxu0 0
        %9360 = vmatpush1.bf16.msra.mxu0 0
        %9361 = vmatprep.subr.bf16.mxu0 0
        %9362 = vmatpush1.bf16.msra.mxu0 0
        %9363 = vmatprep.subr.bf16.mxu0 0
        %9364 = vmatpush1.bf16.msra.mxu0 0
        %9365 = vmatprep.mubr.bf16.mxu0 0
        %9366 = vmatmul.mubr.bf16.gmra.mrb[0].mxu0 %v9229
        %v9367 = vpop.f32.mrb[0].mxu0
        %v9368 = vadd.f32 0.0, %v9367
        %v9369 = vpop.f32.mrb[0].mxu0
        %v9370 = vpop.f32.mrb[0].mxu0
        %v9371 = vadd.f32 0.0, %v9370
        %v9372 = vpop.f32.mrb[0].mxu0
        %9373 = vmatprep.mubr.bf16.mxu0 0
        %9374 = vmatmul.mubr.bf16.gmra.mrb[0].mxu0 %v9232
        %v9375 = vpop.f32.mrb[0].mxu0
        %v9376 = vadd.f32 0.0, %v9375
        %v9377 = vpop.f32.mrb[0].mxu0
        %v9378 = vpop.f32.mrb[0].mxu0
        %v9379 = vadd.f32 0.0, %v9378
        %v9380 = vpop.f32.mrb[0].mxu0
        %9381 = vmatprep.mubr.bf16.mxu0 0
        %9382 = vmatmul.mubr.bf16.gmra.mrb[0].mxu0 %v9235
        %v9383 = vpop.f32.mrb[0].mxu0
        %v9384 = vadd.f32 0.0, %v9383
        %v9385 = vpop.f32.mrb[0].mxu0
        %v9386 = vpop.f32.mrb[0].mxu0
        %v9387 = vadd.f32 0.0, %v9386
        %v9388 = vpop.f32.mrb[0].mxu0
        %9389 = vmatprep.mubr.bf16.mxu0 0
        %9390 = vmatmul.mubr.bf16.gmra.mrb[0].mxu0 %v9238
        %v9391 = vpop.f32.mrb[0].mxu0
        %v9392 = vadd.f32 0.0, %v9391
        %v9393 = vpop.f32.mrb[0].mxu0
        %v9394 = vpop.f32.mrb[0].mxu0
        %v9395 = vadd.f32 0.0, %v9394
        %v9396 = vpop.f32.mrb[0].mxu0
        %9397 = vmatprep.mubr.bf16.mxu0 0
        %9398 = vmatmul.mubr.bf16.gmra.mrb[0].mxu0 %v9241
        %v9399 = vpop.f32.mrb[0].mxu0
        %v9400 = vadd.f32 0.0, %v9399
        %v9401 = vpop.f32.mrb[0].mxu0
        %v9402 = vpop.f32.mrb[0].mxu0
        %v9403 = vpop.f32.mrb[0].mxu0
        %9404 = vdwg.mxu0
        %v9405 = vadd.f32 %v9059, %v9287
        %v9406 = vadd.f32 %v9060, %v9289
        %v9407 = vadd.f32 %v9061, %v9368
        %v9408 = vadd.f32 %v9062, %v9291
        %v9409 = vadd.f32 %v9063, %v9293
        %v9410 = vadd.f32 %v9064, %v9371
        %v9411 = vadd.f32 %v9065, %v9297
        %v9412 = vadd.f32 %v9066, %v9299
        %v9413 = vadd.f32 %v9067, %v9376
        %v9414 = vadd.f32 %v9068, %v9301
        %v9415 = vadd.f32 %v9069, %v9303
        %v9416 = vadd.f32 %v9070, %v9379
        %v9417 = vadd.f32 %v9071, %v9307
        %v9418 = vadd.f32 %v9072, %v9309
        %v9419 = vadd.f32 %v9073, %v9384
        %v9420 = vadd.f32 %v9074, %v9311
        %v9421 = vadd.f32 %v9075, %v9313
        %v9422 = vadd.f32 %v9076, %v9387
        %v9423 = vadd.f32 %v9077, %v9317
        %v9424 = vadd.f32 %v9078, %v9319
        %v9425 = vadd.f32 %v9079, %v9392
        %v9426 = vadd.f32 %v9080, %v9321
        %v9427 = vadd.f32 %v9081, %v9323
        %v9428 = vadd.f32 %v9082, %v9395
        %v9429 = vadd.f32 %v9083, %v9327
        %v9430 = vadd.f32 %v9084, %v9329
        %v9431 = vadd.f32 %v9085, %v9400
        %vm9432 = vsmask.f32 2304
        %vm9433 = vsmask.f32 6416
        %vm9434 = vmor %vm9432, %vm9433
        %v9436 = vshrl.u32 %v9130, 16
        %v9438 = vrot.slane %v9436, 5
        %v9439 = vshll.u32 %v9130, 16
        %v9441 = vrot.slane %v9439, 6
        %v9442 = vor.u32 %v9438, %v9441
        %v9443 = vrot.slane %v9442, 4
        %v9445 = vshrl.u32 %v9131, 16
        %v9447 = vrot.slane %v9445, 5
        %v9448 = vshll.u32 %v9131, 16
        %v9450 = vrot.slane %v9448, 6
        %v9451 = vor.u32 %v9447, %v9450
        %v9452 = vsel %vm9434, %v9443, %v9451
        %v9453 = vrot.slane %v9451, 4
        %v9455 = vshrl.u32 %v9132, 16
        %v9457 = vrot.slane %v9455, 5
        %v9458 = vshll.u32 %v9132, 16
        %v9460 = vrot.slane %v9458, 6
        %v9461 = vor.u32 %v9457, %v9460
        %v9462 = vsel %vm9434, %v9453, %v9461
        %v9463 = vrot.slane %v9461, 4
        %v9465 = vshrl.u32 %v9133, 16
        %v9467 = vrot.slane %v9465, 5
        %v9468 = vshll.u32 %v9133, 16
        %v9470 = vrot.slane %v9468, 6
        %v9471 = vor.u32 %v9467, %v9470
        %v9472 = vsel %vm9434, %v9463, %v9471
        %v9473 = vrot.slane %v9471, 4
        %v9475 = vshrl.u32 %v9134, 16
        %v9477 = vrot.slane %v9475, 5
        %v9478 = vshll.u32 %v9134, 16
        %v9480 = vrot.slane %v9478, 6
        %v9481 = vor.u32 %v9477, %v9480
        %v9482 = vsel %vm9434, %v9473, %v9481
        %v9483 = vrot.slane %v9481, 4
        %v9485 = vshrl.u32 %v9135, 16
        %v9487 = vrot.slane %v9485, 5
        %v9488 = vshll.u32 %v9135, 16
        %v9490 = vrot.slane %v9488, 6
        %v9491 = vor.u32 %v9487, %v9490
        %v9492 = vsel %vm9434, %v9483, %v9491
        %v9493 = vrot.slane %v9491, 4
        %v9495 = vshrl.u32 %v9136, 16
        %v9497 = vrot.slane %v9495, 5
        %v9498 = vshll.u32 %v9136, 16
        %v9500 = vrot.slane %v9498, 6
        %v9501 = vor.u32 %v9497, %v9500
        %v9502 = vsel %vm9434, %v9493, %v9501
        %v9503 = vrot.slane %v9501, 4
        %v9505 = vshrl.u32 %v9137, 16
        %v9507 = vrot.slane %v9505, 5
        %v9508 = vshll.u32 %v9137, 16
        %v9510 = vrot.slane %v9508, 6
        %v9511 = vor.u32 %v9507, %v9510
        %v9512 = vsel %vm9434, %v9503, %v9511
        %v9513 = vrot.slane %v9511, 4
        %v9515 = vshrl.u32 %v9138, 16
        %v9517 = vrot.slane %v9515, 5
        %v9518 = vshll.u32 %v9138, 16
        %v9520 = vrot.slane %v9518, 6
        %v9521 = vor.u32 %v9517, %v9520
        %v9522 = vsel %vm9434, %v9513, %v9521
        %v9523 = vrot.slane %v9521, 4
        %v9525 = vshll.u32 %v9139, 16
        %v9527 = vrot.slane %v9525, 6
        %v9528 = vsel %vm9434, %v9523, %v9527
        %v9538 = vmax.bf16 %v9121, %v9452
        %v9539 = vmax.bf16 %v9122, %v9462
        %v9540 = vmax.bf16 %v9123, %v9472
        %v9541 = vmax.bf16 %v9124, %v9482
        %v9542 = vmax.bf16 %v9125, %v9492
        %v9543 = vmax.bf16 %v9126, %v9502
        %v9544 = vmax.bf16 %v9127, %v9512
        %v9545 = vmax.bf16 %v9128, %v9522
        %v9546 = vmax.bf16 %v9129, %v9528
        %v9547 = vld [vmem:[#allocation3] sm:$0xff]
        %v9548 = vld [vmem:[#allocation3 + $0x8] sm:$0xff]
        %v9549 = vld [vmem:[#allocation3 + $0x10] sm:$0xff]
        %v9550 = vld [vmem:[#allocation3 + $0x18] sm:$0xff]
        %v9551 = vld [vmem:[#allocation3 + $0x20] sm:$0xff]
        %v9552 = vld [vmem:[#allocation3 + $0x28] sm:$0xff]
        %v9553 = vld [vmem:[#allocation3 + $0x30] sm:$0xff]
        %v9554 = vld [vmem:[#allocation3 + $0x38] sm:$0xff]
        %v9555 = vld [vmem:[#allocation3 + $0x40] sm:$0xff]
        %v9556 = vld [vmem:[#allocation3 + $0x48] sm:$0xff]
        %v9557 = vld [vmem:[#allocation3 + $0x50] sm:$0xff]
        %v9558 = vld [vmem:[#allocation3 + $0x58] sm:$0xff]
        %v9559 = vld [vmem:[#allocation3 + $0x60] sm:$0xff]
        %v9560 = vld [vmem:[#allocation3 + $0x68] sm:$0xff]
        %v9561 = vld [vmem:[#allocation3 + $0x70] sm:$0xff]
        %v9562 = vld [vmem:[#allocation3 + $0x78] sm:$0xff]
        %v9563 = vld [vmem:[#allocation3 + $0x80] sm:$0x77]
        %v9564 = vld [vmem:[#allocation3 + $0x88] sm:$0x77]
        %v9565 = vld [vmem:[#allocation6] sm:$0xf]
        %v9566 = vld [vmem:[#allocation6 + $0x4] sm:$0xf]
        %v9567 = vld [vmem:[#allocation6 + $0x8] sm:$0xf]
        %v9568 = vld [vmem:[#allocation6 + $0xc] sm:$0xf]
        %v9569 = vld [vmem:[#allocation6 + $0x10] sm:$0xf]
        %v9570 = vld [vmem:[#allocation6 + $0x14] sm:$0xf]
        %v9571 = vld [vmem:[#allocation6 + $0x18] sm:$0xf]
        %v9572 = vld [vmem:[#allocation6 + $0x1c] sm:$0xf]
        %v9573 = vld [vmem:[#allocation6 + $0x20] sm:$0xf]
        %v9574 = vld [vmem:[#allocation6 + $0x24] sm:$0xf]
        %v9575 = vld [vmem:[#allocation6 + $0x28] sm:$0xf]
        %v9576 = vld [vmem:[#allocation6 + $0x2c] sm:$0xf]
        %v9577 = vld [vmem:[#allocation6 + $0x30] sm:$0xf]
        %v9578 = vld [vmem:[#allocation6 + $0x34] sm:$0xf]
        %v9579 = vld [vmem:[#allocation6 + $0x38] sm:$0xf]
        %v9580 = vld [vmem:[#allocation6 + $0x3c] sm:$0xf]
        %v9581 = vld [vmem:[#allocation6 + $0x40] sm:$0xf]
        %v9582 = vld [vmem:[#allocation6 + $0x44] sm:$0xf]
        %v9583 = vld [vmem:[#allocation6 + $0x48] sm:$0xf]
        %v9584 = vld [vmem:[#allocation6 + $0x4c] sm:$0xf]
        %v9585 = vld [vmem:[#allocation6 + $0x50] sm:$0xf]
        %v9586 = vld [vmem:[#allocation6 + $0x54] sm:$0xf]
        %v9587 = vld [vmem:[#allocation6 + $0x58] sm:$0xf]
        %v9588 = vld [vmem:[#allocation6 + $0x5c] sm:$0xf]
        %v9589 = vld [vmem:[#allocation6 + $0x60] sm:$0xf]
        %v9590 = vld [vmem:[#allocation6 + $0x64] sm:$0xf]
        %v9591 = vld [vmem:[#allocation6 + $0x68] sm:$0xf]
        %v9592 = vld [vmem:[#allocation6 + $0x6c] sm:$0xf]
        %v9593 = vld [vmem:[#allocation6 + $0x70] sm:$0xf]
        %v9594 = vld [vmem:[#allocation6 + $0x74] sm:$0xf]
        %v9595 = vld [vmem:[#allocation6 + $0x78] sm:$0xf]
        %v9596 = vld [vmem:[#allocation6 + $0x7c] sm:$0xf]
        %v9597 = vld [vmem:[#allocation6 + $0x80] sm:$0xf]
        %v9598 = vld [vmem:[#allocation6 + $0x84] sm:$0xf]
        %v9599 = vld [vmem:[#allocation6 + $0x88] sm:$0xf]
        %v9600 = vld [vmem:[#allocation6 + $0x8c] sm:$0xf]
        %v9601 = vld [vmem:[#allocation6 + $0x90] sm:$0xf]
        %v9602 = vld [vmem:[#allocation6 + $0x94] sm:$0xf]
        %v9603 = vld [vmem:[#allocation6 + $0x98] sm:$0xf]
        %v9604 = vld [vmem:[#allocation6 + $0x9c] sm:$0xf]
        %v9605 = vld [vmem:[#allocation6 + $0xa0] sm:$0xf]
        %v9606 = vld [vmem:[#allocation6 + $0xa4] sm:$0xf]
        %v9607 = vld [vmem:[#allocation6 + $0xa8] sm:$0xf]
        %v9608 = vld [vmem:[#allocation6 + $0xac] sm:$0xf]
        %v9609 = vld [vmem:[#allocation6 + $0xb0] sm:$0xf]
        %v9610 = vld [vmem:[#allocation6 + $0xb4] sm:$0xf]
        %v9611 = vld [vmem:[#allocation6 + $0xb8] sm:$0xf]
        %v9612 = vld [vmem:[#allocation6 + $0xbc] sm:$0xf]
        %v9613 = vld [vmem:[#allocation6 + $0xc0] sm:$0xf]
        %v9614 = vld [vmem:[#allocation6 + $0xc4] sm:$0xf]
        %v9615 = vld [vmem:[#allocation6 + $0xc8] sm:$0xf]
        %v9616 = vld [vmem:[#allocation6 + $0xcc] sm:$0xf]
        %v9617 = vld [vmem:[#allocation6 + $0xd0] sm:$0xf]
        %v9618 = vld [vmem:[#allocation6 + $0xd4] sm:$0xf]
        %v9619 = vld [vmem:[#allocation6 + $0xd8] sm:$0xf]
        %v9620 = vld [vmem:[#allocation6 + $0xdc] sm:$0xf]
        %v9621 = vld [vmem:[#allocation6 + $0xe0] sm:$0xf]
        %v9622 = vld [vmem:[#allocation6 + $0xe4] sm:$0xf]
        %v9623 = vld [vmem:[#allocation6 + $0xe8] sm:$0xf]
        %v9624 = vld [vmem:[#allocation6 + $0xec] sm:$0xf]
        %v9625 = vld [vmem:[#allocation6 + $0xf0] sm:$0xf]
        %v9626 = vld [vmem:[#allocation6 + $0xf4] sm:$0xf]
        %v9627 = vld [vmem:[#allocation6 + $0xf8] sm:$0xf]
        %v9628 = vld [vmem:[#allocation6 + $0xfc] sm:$0xf]
        %v9629 = vld [vmem:[#allocation3 + $0x80] sm:$0xff]
        %v9630 = vld [vmem:[#allocation3 + $0x88] sm:$0xff]
        %s9631 = scalar_lea.vmem [#allocation6], 256
        %v9632 = vld [vmem:[%s9631] sm:$0xf]
        %v9633 = vld [vmem:[%s9631 + $0x4] sm:$0xf]
        %v9634 = vld [vmem:[%s9631 + $0x8] sm:$0xf]
        %v9635 = vld [vmem:[%s9631 + $0xc] sm:$0xf]
        %v9636 = vld [vmem:[%s9631 + $0x10] sm:$0xf]
        %v9637 = vld [vmem:[%s9631 + $0x14] sm:$0xf]
        %v9638 = vld [vmem:[%s9631 + $0x18] sm:$0xf]
        %v9639 = vld [vmem:[%s9631 + $0x1c] sm:$0xf]
        %v9640 = vld [vmem:[%s9631 + $0x20] sm:$0xf]
        %v9641 = vld [vmem:[%s9631 + $0x24] sm:$0xf]
        %v9642 = vld [vmem:[%s9631 + $0x28] sm:$0xf]
        %v9643 = vld [vmem:[%s9631 + $0x2c] sm:$0xf]
        %v9644 = vld [vmem:[%s9631 + $0x30] sm:$0xf]
        %v9645 = vld [vmem:[%s9631 + $0x34] sm:$0xf]
        %v9646 = vld [vmem:[%s9631 + $0x38] sm:$0xf]
        %v9647 = vld [vmem:[%s9631 + $0x3c] sm:$0xf]
        %v9648 = vld [vmem:[%s9631 + $0x40] sm:$0xf]
        %v9649 = vld [vmem:[%s9631 + $0x44] sm:$0xf]
        %v9650 = vld [vmem:[%s9631 + $0x48] sm:$0xf]
        %v9651 = vld [vmem:[%s9631 + $0x4c] sm:$0xf]
        %v9652 = vld [vmem:[%s9631 + $0x50] sm:$0xf]
        %v9653 = vld [vmem:[%s9631 + $0x54] sm:$0xf]
        %v9654 = vld [vmem:[%s9631 + $0x58] sm:$0xf]
        %v9655 = vld [vmem:[%s9631 + $0x5c] sm:$0xf]
        %v9656 = vld [vmem:[%s9631 + $0x60] sm:$0xf]
        %v9657 = vld [vmem:[%s9631 + $0x64] sm:$0xf]
        %v9658 = vld [vmem:[%s9631 + $0x68] sm:$0xf]
        %v9659 = vld [vmem:[%s9631 + $0x6c] sm:$0xf]
        %v9660 = vld [vmem:[%s9631 + $0x70] sm:$0xf]
        %v9661 = vld [vmem:[%s9631 + $0x74] sm:$0xf]
        %v9662 = vld [vmem:[%s9631 + $0x78] sm:$0xf]
        %v9663 = vld [vmem:[%s9631 + $0x7c] sm:$0xf]
        %v9664 = vld [vmem:[%s9631 + $0x80] sm:$0xf]
        %v9665 = vld [vmem:[%s9631 + $0x84] sm:$0xf]
        %v9666 = vld [vmem:[%s9631 + $0x88] sm:$0xf]
        %v9667 = vld [vmem:[%s9631 + $0x8c] sm:$0xf]
        %v9668 = vld [vmem:[%s9631 + $0x90] sm:$0xf]
        %v9669 = vld [vmem:[%s9631 + $0x94] sm:$0xf]
        %v9670 = vld [vmem:[%s9631 + $0x98] sm:$0xf]
        %v9671 = vld [vmem:[%s9631 + $0x9c] sm:$0xf]
        %v9672 = vld [vmem:[%s9631 + $0xa0] sm:$0xf]
        %v9673 = vld [vmem:[%s9631 + $0xa4] sm:$0xf]
        %v9674 = vld [vmem:[%s9631 + $0xa8] sm:$0xf]
        %v9675 = vld [vmem:[%s9631 + $0xac] sm:$0xf]
        %v9676 = vld [vmem:[%s9631 + $0xb0] sm:$0xf]
        %v9677 = vld [vmem:[%s9631 + $0xb4] sm:$0xf]
        %v9678 = vld [vmem:[%s9631 + $0xb8] sm:$0xf]
        %v9679 = vld [vmem:[%s9631 + $0xbc] sm:$0xf]
        %v9680 = vld [vmem:[%s9631 + $0xc0] sm:$0xf]
        %v9681 = vld [vmem:[%s9631 + $0xc4] sm:$0xf]
        %v9682 = vld [vmem:[%s9631 + $0xc8] sm:$0xf]
        %v9683 = vld [vmem:[%s9631 + $0xcc] sm:$0xf]
        %v9684 = vld [vmem:[%s9631 + $0xd0] sm:$0xf]
        %v9685 = vld [vmem:[%s9631 + $0xd4] sm:$0xf]
        %v9686 = vld [vmem:[%s9631 + $0xd8] sm:$0xf]
        %v9687 = vld [vmem:[%s9631 + $0xdc] sm:$0xf]
        %v9688 = vld [vmem:[%s9631 + $0xe0] sm:$0xf]
        %v9689 = vld [vmem:[%s9631 + $0xe4] sm:$0xf]
        %v9690 = vld [vmem:[%s9631 + $0xe8] sm:$0xf]
        %v9691 = vld [vmem:[%s9631 + $0xec] sm:$0xf]
        %v9692 = vld [vmem:[%s9631 + $0xf0] sm:$0xf]
        %v9693 = vld [vmem:[%s9631 + $0xf4] sm:$0xf]
        %v9694 = vld [vmem:[%s9631 + $0xf8] sm:$0xf]
        %v9695 = vld [vmem:[%s9631 + $0xfc] sm:$0xf]
        %v9714 = vunpack.c.l.b16 %v9547
        %v9715 = vunpack.c.h.b16 %v9547
        %v9716 = vunpack.c.l.b16 %v9548
        %v9717 = vunpack.c.h.b16 %v9548
        %v9718 = vunpack.c.l.b16 %v9549
        %v9719 = vunpack.c.h.b16 %v9549
        %v9720 = vunpack.c.l.b16 %v9550
        %v9721 = vunpack.c.h.b16 %v9550
        %v9722 = vunpack.c.l.b16 %v9551
        %v9723 = vunpack.c.h.b16 %v9551
        %v9724 = vunpack.c.l.b16 %v9552
        %v9725 = vunpack.c.h.b16 %v9552
        %v9726 = vunpack.c.l.b16 %v9553
        %v9727 = vunpack.c.h.b16 %v9553
        %v9728 = vunpack.c.l.b16 %v9554
        %v9729 = vunpack.c.h.b16 %v9554
        %v9730 = vunpack.c.l.b16 %v9555
        %v9731 = vunpack.c.h.b16 %v9555
        %v9732 = vunpack.c.l.b16 %v9556
        %v9733 = vunpack.c.h.b16 %v9556
        %v9734 = vunpack.c.l.b16 %v9557
        %v9735 = vunpack.c.h.b16 %v9557
        %v9736 = vunpack.c.l.b16 %v9558
        %v9737 = vunpack.c.h.b16 %v9558
        %v9738 = vunpack.c.l.b16 %v9559
        %v9739 = vunpack.c.h.b16 %v9559
        %v9740 = vunpack.c.l.b16 %v9560
        %v9741 = vunpack.c.h.b16 %v9560
        %v9742 = vunpack.c.l.b16 %v9561
        %v9743 = vunpack.c.h.b16 %v9561
        %v9744 = vunpack.c.l.b16 %v9562
        %v9745 = vunpack.c.h.b16 %v9562
        %v9746 = vunpack.c.l.b16 %v9629
        %v9747 = vunpack.c.h.b16 %v9629
        %v9748 = vunpack.c.l.b16 %v9630
        %v9749 = vunpack.c.h.b16 %v9630
        %v9750 = vpack.c.b16 %v9718, %v9714
        %v9751 = vpack.c.b16 %v9719, %v9715
        %v9752 = vpack.c.b16 %v9720, %v9716
        %v9753 = vpack.c.b16 %v9721, %v9717
        %v9754 = vpack.c.b16 %v9726, %v9722
        %v9755 = vpack.c.b16 %v9727, %v9723
        %v9756 = vpack.c.b16 %v9728, %v9724
        %v9757 = vpack.c.b16 %v9729, %v9725
        %v9758 = vpack.c.b16 %v9734, %v9730
        %v9759 = vpack.c.b16 %v9735, %v9731
        %v9760 = vpack.c.b16 %v9736, %v9732
        %v9761 = vpack.c.b16 %v9737, %v9733
        %v9762 = vpack.c.b16 %v9742, %v9738
        %v9763 = vpack.c.b16 %v9743, %v9739
        %v9764 = vpack.c.b16 %v9744, %v9740
        %v9765 = vpack.c.b16 %v9745, %v9741
        %v9766 = vpack.c.b16 %v9746, %v9746
        %v9767 = vpack.c.b16 %v9747, %v9747
        %v9768 = vpack.c.b16 %v9748, %v9748
        %v9769 = vpack.c.b16 %v9749, %v9749
        %v9771 = vshrl.u32 %v9750, 16
        %v9773 = vshll.u32 %v9750, 16
        %v9775 = vrot.slane %v9773, 1
        %v9776 = vor.u32 %v9771, %v9775
        %v9778 = vshll.u32 %v9754, 16
        %v9780 = vrot.slane %v9778, 1
        %v9781 = vsel %vm1777, %v9776, %v9780
        %v9783 = vshrl.u32 %v9751, 16
        %v9785 = vshll.u32 %v9751, 16
        %v9787 = vrot.slane %v9785, 1
        %v9788 = vor.u32 %v9783, %v9787
        %v9790 = vshll.u32 %v9755, 16
        %v9792 = vrot.slane %v9790, 1
        %v9793 = vsel %vm1777, %v9788, %v9792
        %v9795 = vshrl.u32 %v9752, 16
        %v9797 = vshll.u32 %v9752, 16
        %v9799 = vrot.slane %v9797, 1
        %v9800 = vor.u32 %v9795, %v9799
        %v9802 = vshll.u32 %v9756, 16
        %v9804 = vrot.slane %v9802, 1
        %v9805 = vsel %vm1777, %v9800, %v9804
        %v9807 = vshrl.u32 %v9753, 16
        %v9809 = vshll.u32 %v9753, 16
        %v9811 = vrot.slane %v9809, 1
        %v9812 = vor.u32 %v9807, %v9811
        %v9814 = vshll.u32 %v9757, 16
        %v9816 = vrot.slane %v9814, 1
        %v9817 = vsel %vm1777, %v9812, %v9816
        %v9818 = vshrl.u32 %v9754, 16
        %v9820 = vor.u32 %v9818, %v9780
        %v9822 = vshll.u32 %v9758, 16
        %v9824 = vrot.slane %v9822, 1
        %v9825 = vsel %vm1777, %v9820, %v9824
        %v9826 = vshrl.u32 %v9755, 16
        %v9828 = vor.u32 %v9826, %v9792
        %v9830 = vshll.u32 %v9759, 16
        %v9832 = vrot.slane %v9830, 1
        %v9833 = vsel %vm1777, %v9828, %v9832
        %v9834 = vshrl.u32 %v9756, 16
        %v9836 = vor.u32 %v9834, %v9804
        %v9838 = vshll.u32 %v9760, 16
        %v9840 = vrot.slane %v9838, 1
        %v9841 = vsel %vm1777, %v9836, %v9840
        %v9842 = vshrl.u32 %v9757, 16
        %v9844 = vor.u32 %v9842, %v9816
        %v9846 = vshll.u32 %v9761, 16
        %v9848 = vrot.slane %v9846, 1
        %v9849 = vsel %vm1777, %v9844, %v9848
        %v9850 = vshrl.u32 %v9758, 16
        %v9852 = vor.u32 %v9850, %v9824
        %v9854 = vshll.u32 %v9762, 16
        %v9856 = vrot.slane %v9854, 1
        %v9857 = vsel %vm1777, %v9852, %v9856
        %v9858 = vshrl.u32 %v9759, 16
        %v9860 = vor.u32 %v9858, %v9832
        %v9862 = vshll.u32 %v9763, 16
        %v9864 = vrot.slane %v9862, 1
        %v9865 = vsel %vm1777, %v9860, %v9864
        %v9866 = vshrl.u32 %v9760, 16
        %v9868 = vor.u32 %v9866, %v9840
        %v9870 = vshll.u32 %v9764, 16
        %v9872 = vrot.slane %v9870, 1
        %v9873 = vsel %vm1777, %v9868, %v9872
        %v9874 = vshrl.u32 %v9761, 16
        %v9876 = vor.u32 %v9874, %v9848
        %v9878 = vshll.u32 %v9765, 16
        %v9880 = vrot.slane %v9878, 1
        %v9881 = vsel %vm1777, %v9876, %v9880
        %v9882 = vshrl.u32 %v9762, 16
        %v9884 = vor.u32 %v9882, %v9856
        %v9886 = vshll.u32 %v9766, 16
        %v9888 = vrot.slane %v9886, 1
        %v9889 = vsel %vm1777, %v9884, %v9888
        %v9890 = vshrl.u32 %v9763, 16
        %v9892 = vor.u32 %v9890, %v9864
        %v9894 = vshll.u32 %v9767, 16
        %v9896 = vrot.slane %v9894, 1
        %v9897 = vsel %vm1777, %v9892, %v9896
        %v9898 = vshrl.u32 %v9764, 16
        %v9900 = vor.u32 %v9898, %v9872
        %v9902 = vshll.u32 %v9768, 16
        %v9904 = vrot.slane %v9902, 1
        %v9905 = vsel %vm1777, %v9900, %v9904
        %v9906 = vshrl.u32 %v9765, 16
        %v9908 = vor.u32 %v9906, %v9880
        %v9910 = vshll.u32 %v9769, 16
        %v9912 = vrot.slane %v9910, 1
        %v9913 = vsel %vm1777, %v9908, %v9912
        %v9914 = vshrl.u32 %v9766, 16
        %v9916 = vor.u32 %v9914, %v9888
        %v9917 = vshrl.u32 %v9767, 16
        %v9919 = vor.u32 %v9917, %v9896
        %v9920 = vshrl.u32 %v9768, 16
        %v9922 = vor.u32 %v9920, %v9904
        %v9923 = vshrl.u32 %v9769, 16
        %v9925 = vor.u32 %v9923, %v9912
        %v10010 = vunpack.c.l.b16 %v9632
        %v10011 = vunpack.c.l.b16 %v9633
        %v10012 = vunpack.c.l.b16 %v9634
        %v10013 = vunpack.c.l.b16 %v9635
        %v10014 = vunpack.c.l.b16 %v9636
        %v10015 = vunpack.c.l.b16 %v9637
        %v10016 = vunpack.c.l.b16 %v9638
        %v10017 = vunpack.c.l.b16 %v9639
        %v10018 = vunpack.c.l.b16 %v9640
        %v10019 = vunpack.c.l.b16 %v9641
        %v10020 = vunpack.c.l.b16 %v9642
        %v10021 = vunpack.c.l.b16 %v9643
        %v10022 = vunpack.c.l.b16 %v9644
        %v10023 = vunpack.c.l.b16 %v9645
        %v10024 = vunpack.c.l.b16 %v9646
        %v10025 = vunpack.c.l.b16 %v9647
        %v10026 = vunpack.c.l.b16 %v9648
        %v10027 = vunpack.c.l.b16 %v9649
        %v10028 = vunpack.c.l.b16 %v9650
        %v10029 = vunpack.c.l.b16 %v9651
        %v10030 = vunpack.c.l.b16 %v9652
        %v10031 = vunpack.c.l.b16 %v9653
        %v10032 = vunpack.c.l.b16 %v9654
        %v10033 = vunpack.c.l.b16 %v9655
        %v10034 = vunpack.c.l.b16 %v9656
        %v10035 = vunpack.c.l.b16 %v9657
        %v10036 = vunpack.c.l.b16 %v9658
        %v10037 = vunpack.c.l.b16 %v9659
        %v10038 = vunpack.c.l.b16 %v9660
        %v10039 = vunpack.c.l.b16 %v9661
        %v10040 = vunpack.c.l.b16 %v9662
        %v10041 = vunpack.c.l.b16 %v9663
        %v10042 = vunpack.c.l.b16 %v9664
        %v10043 = vunpack.c.l.b16 %v9665
        %v10044 = vunpack.c.l.b16 %v9666
        %v10045 = vunpack.c.l.b16 %v9667
        %v10046 = vunpack.c.l.b16 %v9668
        %v10047 = vunpack.c.l.b16 %v9669
        %v10048 = vunpack.c.l.b16 %v9670
        %v10049 = vunpack.c.l.b16 %v9671
        %v10050 = vunpack.c.l.b16 %v9672
        %v10051 = vunpack.c.l.b16 %v9673
        %v10052 = vunpack.c.l.b16 %v9674
        %v10053 = vunpack.c.l.b16 %v9675
        %v10054 = vunpack.c.l.b16 %v9676
        %v10055 = vunpack.c.l.b16 %v9677
        %v10056 = vunpack.c.l.b16 %v9678
        %v10057 = vunpack.c.l.b16 %v9679
        %v10058 = vunpack.c.l.b16 %v9680
        %v10059 = vunpack.c.l.b16 %v9681
        %v10060 = vunpack.c.l.b16 %v9682
        %v10061 = vunpack.c.l.b16 %v9683
        %v10062 = vunpack.c.l.b16 %v9684
        %v10063 = vunpack.c.l.b16 %v9685
        %v10064 = vunpack.c.l.b16 %v9686
        %v10065 = vunpack.c.l.b16 %v9687
        %v10066 = vunpack.c.l.b16 %v9688
        %v10067 = vunpack.c.l.b16 %v9689
        %v10068 = vunpack.c.l.b16 %v9690
        %v10069 = vunpack.c.l.b16 %v9691
        %v10070 = vunpack.c.l.b16 %v9692
        %v10071 = vunpack.c.l.b16 %v9693
        %v10072 = vunpack.c.l.b16 %v9694
        %v10073 = vunpack.c.l.b16 %v9695
        %v10074 = vpack.c.b16 %v10011, %v10010
        %v10075 = vpack.c.b16 %v10013, %v10012
        %v10076 = vpack.c.b16 %v10015, %v10014
        %v10077 = vpack.c.b16 %v10017, %v10016
        %v10078 = vpack.c.b16 %v10019, %v10018
        %v10079 = vpack.c.b16 %v10021, %v10020
        %v10080 = vpack.c.b16 %v10023, %v10022
        %v10081 = vpack.c.b16 %v10025, %v10024
        %v10082 = vpack.c.b16 %v10027, %v10026
        %v10083 = vpack.c.b16 %v10029, %v10028
        %v10084 = vpack.c.b16 %v10031, %v10030
        %v10085 = vpack.c.b16 %v10033, %v10032
        %v10086 = vpack.c.b16 %v10035, %v10034
        %v10087 = vpack.c.b16 %v10037, %v10036
        %v10088 = vpack.c.b16 %v10039, %v10038
        %v10089 = vpack.c.b16 %v10041, %v10040
        %v10090 = vpack.c.b16 %v10043, %v10042
        %v10091 = vpack.c.b16 %v10045, %v10044
        %v10092 = vpack.c.b16 %v10047, %v10046
        %v10093 = vpack.c.b16 %v10049, %v10048
        %v10094 = vpack.c.b16 %v10051, %v10050
        %v10095 = vpack.c.b16 %v10053, %v10052
        %v10096 = vpack.c.b16 %v10055, %v10054
        %v10097 = vpack.c.b16 %v10057, %v10056
        %v10098 = vpack.c.b16 %v10059, %v10058
        %v10099 = vpack.c.b16 %v10061, %v10060
        %v10100 = vpack.c.b16 %v10063, %v10062
        %v10101 = vpack.c.b16 %v10065, %v10064
        %v10102 = vpack.c.b16 %v10067, %v10066
        %v10103 = vpack.c.b16 %v10069, %v10068
        %v10104 = vpack.c.b16 %v10071, %v10070
        %v10105 = vpack.c.b16 %v10073, %v10072
        %10138 = vmatprep.subr.bf16.mxu0 0
        %10139 = vmatpush1.bf16.msra.mxu0 %v10074
        %10140 = vmatprep.subr.bf16.mxu0 0
        %10141 = vmatpush1.bf16.msra.mxu0 %v10075
        %10142 = vmatprep.subr.bf16.mxu0 0
        %10143 = vmatpush1.bf16.msra.mxu0 %v10076
        %10144 = vmatprep.subr.bf16.mxu0 0
        %10145 = vmatpush1.bf16.msra.mxu0 %v10077
        %10146 = vmatprep.subr.bf16.mxu0 0
        %10147 = vmatpush1.bf16.msra.mxu0 %v10078
        %10148 = vmatprep.subr.bf16.mxu0 0
        %10149 = vmatpush1.bf16.msra.mxu0 %v10079
        %10150 = vmatprep.subr.bf16.mxu0 0
        %10151 = vmatpush1.bf16.msra.mxu0 %v10080
        %10152 = vmatprep.subr.bf16.mxu0 0
        %10153 = vmatpush1.bf16.msra.mxu0 %v10081
        %10154 = vmatprep.subr.bf16.mxu0 0
        %10155 = vmatpush1.bf16.msra.mxu0 %v10082
        %10156 = vmatprep.subr.bf16.mxu0 0
        %10157 = vmatpush1.bf16.msra.mxu0 %v10083
        %10158 = vmatprep.subr.bf16.mxu0 0
        %10159 = vmatpush1.bf16.msra.mxu0 %v10084
        %10160 = vmatprep.subr.bf16.mxu0 0
        %10161 = vmatpush1.bf16.msra.mxu0 %v10085
        %10162 = vmatprep.subr.bf16.mxu0 0
        %10163 = vmatpush1.bf16.msra.mxu0 %v10086
        %10164 = vmatprep.subr.bf16.mxu0 0
        %10165 = vmatpush1.bf16.msra.mxu0 %v10087
        %10166 = vmatprep.subr.bf16.mxu0 0
        %10167 = vmatpush1.bf16.msra.mxu0 %v10088
        %10168 = vmatprep.subr.bf16.mxu0 0
        %10169 = vmatpush1.bf16.msra.mxu0 %v10089
        %10170 = vmatprep.mubr.bf16.mxu0 %v9793
        %10171 = vmatmul.mubr.bf16.gmra.mrb[0].mxu0 %v9781
        %v10172 = vpop.f32.mrb[0].mxu0
        %v10173 = vadd.f32 0.0, %v10172
        %v10174 = vpop.f32.mrb[0].mxu0
        %v10175 = vpop.f32.mrb[0].mxu0
        %v10176 = vadd.f32 0.0, %v10175
        %v10177 = vpop.f32.mrb[0].mxu0
        %10178 = vmatprep.mubr.bf16.mxu0 %v9833
        %10179 = vmatmul.mubr.bf16.gmra.mrb[0].mxu0 %v9825
        %v10180 = vpop.f32.mrb[0].mxu0
        %v10181 = vadd.f32 0.0, %v10180
        %v10182 = vpop.f32.mrb[0].mxu0
        %v10183 = vpop.f32.mrb[0].mxu0
        %v10184 = vadd.f32 0.0, %v10183
        %v10185 = vpop.f32.mrb[0].mxu0
        %10186 = vmatprep.mubr.bf16.mxu0 %v9865
        %10187 = vmatmul.mubr.bf16.gmra.mrb[0].mxu0 %v9857
        %v10188 = vpop.f32.mrb[0].mxu0
        %v10189 = vadd.f32 0.0, %v10188
        %v10190 = vpop.f32.mrb[0].mxu0
        %v10191 = vpop.f32.mrb[0].mxu0
        %v10192 = vadd.f32 0.0, %v10191
        %v10193 = vpop.f32.mrb[0].mxu0
        %10194 = vmatprep.mubr.bf16.mxu0 %v9897
        %10195 = vmatmul.mubr.bf16.gmra.mrb[0].mxu0 %v9889
        %v10196 = vpop.f32.mrb[0].mxu0
        %v10197 = vadd.f32 0.0, %v10196
        %v10198 = vpop.f32.mrb[0].mxu0
        %v10199 = vpop.f32.mrb[0].mxu0
        %v10200 = vadd.f32 0.0, %v10199
        %v10201 = vpop.f32.mrb[0].mxu0
        %10202 = vmatprep.mubr.bf16.mxu0 %v9919
        %10203 = vmatmul.mubr.bf16.gmra.mrb[0].mxu0 %v9916
        %v10204 = vpop.f32.mrb[0].mxu0
        %v10205 = vadd.f32 0.0, %v10204
        %v10206 = vpop.f32.mrb[0].mxu0
        %v10207 = vpop.f32.mrb[0].mxu0
        %v10208 = vpop.f32.mrb[0].mxu0
        %10209 = vdwg.mxu0
        %10210 = vmatprep.subr.bf16.mxu0 0
        %10211 = vmatpush1.bf16.msra.mxu0 %v10090
        %10212 = vmatprep.subr.bf16.mxu0 0
        %10213 = vmatpush1.bf16.msra.mxu0 %v10091
        %10214 = vmatprep.subr.bf16.mxu0 0
        %10215 = vmatpush1.bf16.msra.mxu0 %v10092
        %10216 = vmatprep.subr.bf16.mxu0 0
        %10217 = vmatpush1.bf16.msra.mxu0 %v10093
        %10218 = vmatprep.subr.bf16.mxu0 0
        %10219 = vmatpush1.bf16.msra.mxu0 %v10094
        %10220 = vmatprep.subr.bf16.mxu0 0
        %10221 = vmatpush1.bf16.msra.mxu0 %v10095
        %10222 = vmatprep.subr.bf16.mxu0 0
        %10223 = vmatpush1.bf16.msra.mxu0 %v10096
        %10224 = vmatprep.subr.bf16.mxu0 0
        %10225 = vmatpush1.bf16.msra.mxu0 %v10097
        %10226 = vmatprep.subr.bf16.mxu0 0
        %10227 = vmatpush1.bf16.msra.mxu0 %v10098
        %10228 = vmatprep.subr.bf16.mxu0 0
        %10229 = vmatpush1.bf16.msra.mxu0 %v10099
        %10230 = vmatprep.subr.bf16.mxu0 0
        %10231 = vmatpush1.bf16.msra.mxu0 %v10100
        %10232 = vmatprep.subr.bf16.mxu0 0
        %10233 = vmatpush1.bf16.msra.mxu0 %v10101
        %10234 = vmatprep.subr.bf16.mxu0 0
        %10235 = vmatpush1.bf16.msra.mxu0 %v10102
        %10236 = vmatprep.subr.bf16.mxu0 0
        %10237 = vmatpush1.bf16.msra.mxu0 %v10103
        %10238 = vmatprep.subr.bf16.mxu0 0
        %10239 = vmatpush1.bf16.msra.mxu0 %v10104
        %10240 = vmatprep.subr.bf16.mxu0 0
        %10241 = vmatpush1.bf16.msra.mxu0 %v10105
        %10242 = vmatprep.mubr.bf16.mxu0 %v9817
        %10243 = vmatmul.mubr.bf16.gmra.mrb[0].mxu0 %v9805
        %v10244 = vpop.f32.mrb[0].mxu0
        %v10245 = vadd.f32 %v10173, %v10244
        %v10246 = vpop.f32.mrb[0].mxu0
        %v10247 = vpop.f32.mrb[0].mxu0
        %v10248 = vadd.f32 %v10176, %v10247
        %v10249 = vpop.f32.mrb[0].mxu0
        %10250 = vmatprep.mubr.bf16.mxu0 %v9849
        %10251 = vmatmul.mubr.bf16.gmra.mrb[0].mxu0 %v9841
        %v10252 = vpop.f32.mrb[0].mxu0
        %v10253 = vadd.f32 %v10181, %v10252
        %v10254 = vpop.f32.mrb[0].mxu0
        %v10255 = vpop.f32.mrb[0].mxu0
        %v10256 = vadd.f32 %v10184, %v10255
        %v10257 = vpop.f32.mrb[0].mxu0
        %10258 = vmatprep.mubr.bf16.mxu0 %v9881
        %10259 = vmatmul.mubr.bf16.gmra.mrb[0].mxu0 %v9873
        %v10260 = vpop.f32.mrb[0].mxu0
        %v10261 = vadd.f32 %v10189, %v10260
        %v10262 = vpop.f32.mrb[0].mxu0
        %v10263 = vpop.f32.mrb[0].mxu0
        %v10264 = vadd.f32 %v10192, %v10263
        %v10265 = vpop.f32.mrb[0].mxu0
        %10266 = vmatprep.mubr.bf16.mxu0 %v9913
        %10267 = vmatmul.mubr.bf16.gmra.mrb[0].mxu0 %v9905
        %v10268 = vpop.f32.mrb[0].mxu0
        %v10269 = vadd.f32 %v10197, %v10268
        %v10270 = vpop.f32.mrb[0].mxu0
        %v10271 = vpop.f32.mrb[0].mxu0
        %v10272 = vadd.f32 %v10200, %v10271
        %v10273 = vpop.f32.mrb[0].mxu0
        %10274 = vmatprep.mubr.bf16.mxu0 %v9925
        %10275 = vmatmul.mubr.bf16.gmra.mrb[0].mxu0 %v9922
        %v10276 = vpop.f32.mrb[0].mxu0
        %v10277 = vadd.f32 %v10205, %v10276
        %v10278 = vpop.f32.mrb[0].mxu0
        %v10279 = vpop.f32.mrb[0].mxu0
        %v10280 = vpop.f32.mrb[0].mxu0
        %10281 = vdwg.mxu0
        %v10284 = vunpack.c.l.b16 %v9563
        %v10285 = vunpack.c.h.b16 %v9563
        %v10286 = vunpack.c.l.b16 %v9564
        %v10287 = vunpack.c.h.b16 %v9564
        %v10288 = vpack.c.b16 %v10284, %v10284
        %v10289 = vpack.c.b16 %v10285, %v10285
        %v10290 = vpack.c.b16 %v10286, %v10286
        %v10291 = vpack.c.b16 %v10287, %v10287
        %v10376 = vunpack.c.l.b16 %v9565
        %v10377 = vunpack.c.l.b16 %v9566
        %v10378 = vunpack.c.l.b16 %v9567
        %v10379 = vunpack.c.l.b16 %v9568
        %v10380 = vunpack.c.l.b16 %v9569
        %v10381 = vunpack.c.l.b16 %v9570
        %v10382 = vunpack.c.l.b16 %v9571
        %v10383 = vunpack.c.l.b16 %v9572
        %v10384 = vunpack.c.l.b16 %v9573
        %v10385 = vunpack.c.l.b16 %v9574
        %v10386 = vunpack.c.l.b16 %v9575
        %v10387 = vunpack.c.l.b16 %v9576
        %v10388 = vunpack.c.l.b16 %v9577
        %v10389 = vunpack.c.l.b16 %v9578
        %v10390 = vunpack.c.l.b16 %v9579
        %v10391 = vunpack.c.l.b16 %v9580
        %v10392 = vunpack.c.l.b16 %v9581
        %v10393 = vunpack.c.l.b16 %v9582
        %v10394 = vunpack.c.l.b16 %v9583
        %v10395 = vunpack.c.l.b16 %v9584
        %v10396 = vunpack.c.l.b16 %v9585
        %v10397 = vunpack.c.l.b16 %v9586
        %v10398 = vunpack.c.l.b16 %v9587
        %v10399 = vunpack.c.l.b16 %v9588
        %v10400 = vunpack.c.l.b16 %v9589
        %v10401 = vunpack.c.l.b16 %v9590
        %v10402 = vunpack.c.l.b16 %v9591
        %v10403 = vunpack.c.l.b16 %v9592
        %v10404 = vunpack.c.l.b16 %v9593
        %v10405 = vunpack.c.l.b16 %v9594
        %v10406 = vunpack.c.l.b16 %v9595
        %v10407 = vunpack.c.l.b16 %v9596
        %v10408 = vunpack.c.l.b16 %v9597
        %v10409 = vunpack.c.l.b16 %v9598
        %v10410 = vunpack.c.l.b16 %v9599
        %v10411 = vunpack.c.l.b16 %v9600
        %v10412 = vunpack.c.l.b16 %v9601
        %v10413 = vunpack.c.l.b16 %v9602
        %v10414 = vunpack.c.l.b16 %v9603
        %v10415 = vunpack.c.l.b16 %v9604
        %v10416 = vunpack.c.l.b16 %v9605
        %v10417 = vunpack.c.l.b16 %v9606
        %v10418 = vunpack.c.l.b16 %v9607
        %v10419 = vunpack.c.l.b16 %v9608
        %v10420 = vunpack.c.l.b16 %v9609
        %v10421 = vunpack.c.l.b16 %v9610
        %v10422 = vunpack.c.l.b16 %v9611
        %v10423 = vunpack.c.l.b16 %v9612
        %v10424 = vunpack.c.l.b16 %v9613
        %v10425 = vunpack.c.l.b16 %v9614
        %v10426 = vunpack.c.l.b16 %v9615
        %v10427 = vunpack.c.l.b16 %v9616
        %v10428 = vunpack.c.l.b16 %v9617
        %v10429 = vunpack.c.l.b16 %v9618
        %v10430 = vunpack.c.l.b16 %v9619
        %v10431 = vunpack.c.l.b16 %v9620
        %v10432 = vunpack.c.l.b16 %v9621
        %v10433 = vunpack.c.l.b16 %v9622
        %v10434 = vunpack.c.l.b16 %v9623
        %v10435 = vunpack.c.l.b16 %v9624
        %v10436 = vunpack.c.l.b16 %v9625
        %v10437 = vunpack.c.l.b16 %v9626
        %v10438 = vunpack.c.l.b16 %v9627
        %v10439 = vunpack.c.l.b16 %v9628
        %v10440 = vpack.c.b16 %v10377, %v10376
        %v10441 = vpack.c.b16 %v10379, %v10378
        %v10442 = vpack.c.b16 %v10381, %v10380
        %v10443 = vpack.c.b16 %v10383, %v10382
        %v10444 = vpack.c.b16 %v10385, %v10384
        %v10445 = vpack.c.b16 %v10387, %v10386
        %v10446 = vpack.c.b16 %v10389, %v10388
        %v10447 = vpack.c.b16 %v10391, %v10390
        %v10448 = vpack.c.b16 %v10393, %v10392
        %v10449 = vpack.c.b16 %v10395, %v10394
        %v10450 = vpack.c.b16 %v10397, %v10396
        %v10451 = vpack.c.b16 %v10399, %v10398
        %v10452 = vpack.c.b16 %v10401, %v10400
        %v10453 = vpack.c.b16 %v10403, %v10402
        %v10454 = vpack.c.b16 %v10405, %v10404
        %v10455 = vpack.c.b16 %v10407, %v10406
        %v10456 = vpack.c.b16 %v10409, %v10408
        %v10457 = vpack.c.b16 %v10411, %v10410
        %v10458 = vpack.c.b16 %v10413, %v10412
        %v10459 = vpack.c.b16 %v10415, %v10414
        %v10460 = vpack.c.b16 %v10417, %v10416
        %v10461 = vpack.c.b16 %v10419, %v10418
        %v10462 = vpack.c.b16 %v10421, %v10420
        %v10463 = vpack.c.b16 %v10423, %v10422
        %v10464 = vpack.c.b16 %v10425, %v10424
        %v10465 = vpack.c.b16 %v10427, %v10426
        %v10466 = vpack.c.b16 %v10429, %v10428
        %v10467 = vpack.c.b16 %v10431, %v10430
        %v10468 = vpack.c.b16 %v10433, %v10432
        %v10469 = vpack.c.b16 %v10435, %v10434
        %v10470 = vpack.c.b16 %v10437, %v10436
        %v10471 = vpack.c.b16 %v10439, %v10438
        %10504 = vmatprep.subr.bf16.mxu0 0
        %10505 = vmatpush1.bf16.msra.mxu0 %v10440
        %10506 = vmatprep.subr.bf16.mxu0 0
        %10507 = vmatpush1.bf16.msra.mxu0 %v10441
        %10508 = vmatprep.subr.bf16.mxu0 0
        %10509 = vmatpush1.bf16.msra.mxu0 %v10442
        %10510 = vmatprep.subr.bf16.mxu0 0
        %10511 = vmatpush1.bf16.msra.mxu0 %v10443
        %10512 = vmatprep.subr.bf16.mxu0 0
        %10513 = vmatpush1.bf16.msra.mxu0 %v10444
        %10514 = vmatprep.subr.bf16.mxu0 0
        %10515 = vmatpush1.bf16.msra.mxu0 %v10445
        %10516 = vmatprep.subr.bf16.mxu0 0
        %10517 = vmatpush1.bf16.msra.mxu0 %v10446
        %10518 = vmatprep.subr.bf16.mxu0 0
        %10519 = vmatpush1.bf16.msra.mxu0 %v10447
        %10520 = vmatprep.subr.bf16.mxu0 0
        %10521 = vmatpush1.bf16.msra.mxu0 %v10448
        %10522 = vmatprep.subr.bf16.mxu0 0
        %10523 = vmatpush1.bf16.msra.mxu0 %v10449
        %10524 = vmatprep.subr.bf16.mxu0 0
        %10525 = vmatpush1.bf16.msra.mxu0 %v10450
        %10526 = vmatprep.subr.bf16.mxu0 0
        %10527 = vmatpush1.bf16.msra.mxu0 %v10451
        %10528 = vmatprep.subr.bf16.mxu0 0
        %10529 = vmatpush1.bf16.msra.mxu0 %v10452
        %10530 = vmatprep.subr.bf16.mxu0 0
        %10531 = vmatpush1.bf16.msra.mxu0 %v10453
        %10532 = vmatprep.subr.bf16.mxu0 0
        %10533 = vmatpush1.bf16.msra.mxu0 %v10454
        %10534 = vmatprep.subr.bf16.mxu0 0
        %10535 = vmatpush1.bf16.msra.mxu0 %v10455
        %10536 = vmatprep.mubr.bf16.mxu0 %v9751
        %10537 = vmatmul.mubr.bf16.gmra.mrb[0].mxu0 %v9750
        %v10538 = vpop.f32.mrb[0].mxu0
        %v10539 = vadd.f32 %v10245, %v10538
        %v10540 = vpop.f32.mrb[0].mxu0
        %v10541 = vpop.f32.mrb[0].mxu0
        %v10542 = vadd.f32 %v10248, %v10541
        %v10543 = vpop.f32.mrb[0].mxu0
        %10544 = vmatprep.mubr.bf16.mxu0 %v9755
        %10545 = vmatmul.mubr.bf16.gmra.mrb[0].mxu0 %v9754
        %v10546 = vpop.f32.mrb[0].mxu0
        %v10547 = vadd.f32 %v10253, %v10546
        %v10548 = vpop.f32.mrb[0].mxu0
        %v10549 = vpop.f32.mrb[0].mxu0
        %v10550 = vadd.f32 %v10256, %v10549
        %v10551 = vpop.f32.mrb[0].mxu0
        %10552 = vmatprep.mubr.bf16.mxu0 %v9759
        %10553 = vmatmul.mubr.bf16.gmra.mrb[0].mxu0 %v9758
        %v10554 = vpop.f32.mrb[0].mxu0
        %v10555 = vadd.f32 %v10261, %v10554
        %v10556 = vpop.f32.mrb[0].mxu0
        %v10557 = vpop.f32.mrb[0].mxu0
        %v10558 = vadd.f32 %v10264, %v10557
        %v10559 = vpop.f32.mrb[0].mxu0
        %10560 = vmatprep.mubr.bf16.mxu0 %v9763
        %10561 = vmatmul.mubr.bf16.gmra.mrb[0].mxu0 %v9762
        %v10562 = vpop.f32.mrb[0].mxu0
        %v10563 = vadd.f32 %v10269, %v10562
        %v10564 = vpop.f32.mrb[0].mxu0
        %v10565 = vpop.f32.mrb[0].mxu0
        %v10566 = vadd.f32 %v10272, %v10565
        %v10567 = vpop.f32.mrb[0].mxu0
        %10568 = vmatprep.mubr.bf16.mxu0 %v10289
        %10569 = vmatmul.mubr.bf16.gmra.mrb[0].mxu0 %v10288
        %v10570 = vpop.f32.mrb[0].mxu0
        %v10571 = vadd.f32 %v10277, %v10570
        %v10572 = vpop.f32.mrb[0].mxu0
        %v10573 = vpop.f32.mrb[0].mxu0
        %v10574 = vpop.f32.mrb[0].mxu0
        %10575 = vdwg.mxu0
        %10576 = vmatprep.subr.bf16.mxu0 0
        %10577 = vmatpush1.bf16.msra.mxu0 %v10456
        %10578 = vmatprep.subr.bf16.mxu0 0
        %10579 = vmatpush1.bf16.msra.mxu0 %v10457
        %10580 = vmatprep.subr.bf16.mxu0 0
        %10581 = vmatpush1.bf16.msra.mxu0 %v10458
        %10582 = vmatprep.subr.bf16.mxu0 0
        %10583 = vmatpush1.bf16.msra.mxu0 %v10459
        %10584 = vmatprep.subr.bf16.mxu0 0
        %10585 = vmatpush1.bf16.msra.mxu0 %v10460
        %10586 = vmatprep.subr.bf16.mxu0 0
        %10587 = vmatpush1.bf16.msra.mxu0 %v10461
        %10588 = vmatprep.subr.bf16.mxu0 0
        %10589 = vmatpush1.bf16.msra.mxu0 %v10462
        %10590 = vmatprep.subr.bf16.mxu0 0
        %10591 = vmatpush1.bf16.msra.mxu0 %v10463
        %10592 = vmatprep.subr.bf16.mxu0 0
        %10593 = vmatpush1.bf16.msra.mxu0 %v10464
        %10594 = vmatprep.subr.bf16.mxu0 0
        %10595 = vmatpush1.bf16.msra.mxu0 %v10465
        %10596 = vmatprep.subr.bf16.mxu0 0
        %10597 = vmatpush1.bf16.msra.mxu0 %v10466
        %10598 = vmatprep.subr.bf16.mxu0 0
        %10599 = vmatpush1.bf16.msra.mxu0 %v10467
        %10600 = vmatprep.subr.bf16.mxu0 0
        %10601 = vmatpush1.bf16.msra.mxu0 %v10468
        %10602 = vmatprep.subr.bf16.mxu0 0
        %10603 = vmatpush1.bf16.msra.mxu0 %v10469
        %10604 = vmatprep.subr.bf16.mxu0 0
        %10605 = vmatpush1.bf16.msra.mxu0 %v10470
        %10606 = vmatprep.subr.bf16.mxu0 0
        %10607 = vmatpush1.bf16.msra.mxu0 %v10471
        %10608 = vmatprep.mubr.bf16.mxu0 %v9753
        %10609 = vmatmul.mubr.bf16.gmra.mrb[0].mxu0 %v9752
        %v10610 = vpop.f32.mrb[0].mxu0
        %v10611 = vadd.f32 %v10539, %v10610
        %v10612 = vpop.f32.mrb[0].mxu0
        %v10613 = vpop.f32.mrb[0].mxu0
        %v10614 = vadd.f32 %v10542, %v10613
        %v10615 = vpop.f32.mrb[0].mxu0
        %10616 = vmatprep.mubr.bf16.mxu0 %v9757
        %10617 = vmatmul.mubr.bf16.gmra.mrb[0].mxu0 %v9756
        %v10618 = vpop.f32.mrb[0].mxu0
        %v10619 = vadd.f32 %v10547, %v10618
        %v10620 = vpop.f32.mrb[0].mxu0
        %v10621 = vpop.f32.mrb[0].mxu0
        %v10622 = vadd.f32 %v10550, %v10621
        %v10623 = vpop.f32.mrb[0].mxu0
        %10624 = vmatprep.mubr.bf16.mxu0 %v9761
        %10625 = vmatmul.mubr.bf16.gmra.mrb[0].mxu0 %v9760
        %v10626 = vpop.f32.mrb[0].mxu0
        %v10627 = vadd.f32 %v10555, %v10626
        %v10628 = vpop.f32.mrb[0].mxu0
        %v10629 = vpop.f32.mrb[0].mxu0
        %v10630 = vadd.f32 %v10558, %v10629
        %v10631 = vpop.f32.mrb[0].mxu0
        %10632 = vmatprep.mubr.bf16.mxu0 %v9765
        %10633 = vmatmul.mubr.bf16.gmra.mrb[0].mxu0 %v9764
        %v10634 = vpop.f32.mrb[0].mxu0
        %v10635 = vadd.f32 %v10563, %v10634
        %v10636 = vpop.f32.mrb[0].mxu0
        %v10637 = vpop.f32.mrb[0].mxu0
        %v10638 = vadd.f32 %v10566, %v10637
        %v10639 = vpop.f32.mrb[0].mxu0
        %10640 = vmatprep.mubr.bf16.mxu0 %v10291
        %10641 = vmatmul.mubr.bf16.gmra.mrb[0].mxu0 %v10290
        %v10642 = vpop.f32.mrb[0].mxu0
        %v10643 = vadd.f32 %v10571, %v10642
        %v10644 = vpop.f32.mrb[0].mxu0
        %v10645 = vpop.f32.mrb[0].mxu0
        %v10646 = vpop.f32.mrb[0].mxu0
        %10647 = vdwg.mxu0
        %v10648 = vld [vmem:[#allocation3 + $0x10] sm:$0xee]
        %v10649 = vld [vmem:[#allocation3 + $0x18] sm:$0xee]
        %v10650 = vld [vmem:[#allocation3 + $0x20] sm:$0xff]
        %v10651 = vld [vmem:[#allocation3 + $0x28] sm:$0xff]
        %v10652 = vld [vmem:[#allocation3 + $0x30] sm:$0xff]
        %v10653 = vld [vmem:[#allocation3 + $0x38] sm:$0xff]
        %v10654 = vld [vmem:[#allocation3 + $0x40] sm:$0xff]
        %v10655 = vld [vmem:[#allocation3 + $0x48] sm:$0xff]
        %v10656 = vld [vmem:[#allocation3 + $0x50] sm:$0xff]
        %v10657 = vld [vmem:[#allocation3 + $0x58] sm:$0xff]
        %v10658 = vld [vmem:[#allocation3 + $0x60] sm:$0xff]
        %v10659 = vld [vmem:[#allocation3 + $0x68] sm:$0xff]
        %v10660 = vld [vmem:[#allocation3 + $0x70] sm:$0xff]
        %v10661 = vld [vmem:[#allocation3 + $0x78] sm:$0xff]
        %v10662 = vld [vmem:[#allocation3 + $0x80] sm:$0xff]
        %v10663 = vld [vmem:[#allocation3 + $0x88] sm:$0xff]
        %v10664 = vld [vmem:[#allocation3 + $0x90] sm:$0xff]
        %v10665 = vld [vmem:[#allocation3 + $0x98] sm:$0xff]
        %s10666 = scalar_lea.vmem [#allocation6], 512
        %v10667 = vld [vmem:[%s10666] sm:$0xf]
        %v10668 = vld [vmem:[%s10666 + $0x4] sm:$0xf]
        %v10669 = vld [vmem:[%s10666 + $0x8] sm:$0xf]
        %v10670 = vld [vmem:[%s10666 + $0xc] sm:$0xf]
        %v10671 = vld [vmem:[%s10666 + $0x10] sm:$0xf]
        %v10672 = vld [vmem:[%s10666 + $0x14] sm:$0xf]
        %v10673 = vld [vmem:[%s10666 + $0x18] sm:$0xf]
        %v10674 = vld [vmem:[%s10666 + $0x1c] sm:$0xf]
        %v10675 = vld [vmem:[%s10666 + $0x20] sm:$0xf]
        %v10676 = vld [vmem:[%s10666 + $0x24] sm:$0xf]
        %v10677 = vld [vmem:[%s10666 + $0x28] sm:$0xf]
        %v10678 = vld [vmem:[%s10666 + $0x2c] sm:$0xf]
        %v10679 = vld [vmem:[%s10666 + $0x30] sm:$0xf]
        %v10680 = vld [vmem:[%s10666 + $0x34] sm:$0xf]
        %v10681 = vld [vmem:[%s10666 + $0x38] sm:$0xf]
        %v10682 = vld [vmem:[%s10666 + $0x3c] sm:$0xf]
        %v10683 = vld [vmem:[%s10666 + $0x40] sm:$0xf]
        %v10684 = vld [vmem:[%s10666 + $0x44] sm:$0xf]
        %v10685 = vld [vmem:[%s10666 + $0x48] sm:$0xf]
        %v10686 = vld [vmem:[%s10666 + $0x4c] sm:$0xf]
        %v10687 = vld [vmem:[%s10666 + $0x50] sm:$0xf]
        %v10688 = vld [vmem:[%s10666 + $0x54] sm:$0xf]
        %v10689 = vld [vmem:[%s10666 + $0x58] sm:$0xf]
        %v10690 = vld [vmem:[%s10666 + $0x5c] sm:$0xf]
        %v10691 = vld [vmem:[%s10666 + $0x60] sm:$0xf]
        %v10692 = vld [vmem:[%s10666 + $0x64] sm:$0xf]
        %v10693 = vld [vmem:[%s10666 + $0x68] sm:$0xf]
        %v10694 = vld [vmem:[%s10666 + $0x6c] sm:$0xf]
        %v10695 = vld [vmem:[%s10666 + $0x70] sm:$0xf]
        %v10696 = vld [vmem:[%s10666 + $0x74] sm:$0xf]
        %v10697 = vld [vmem:[%s10666 + $0x78] sm:$0xf]
        %v10698 = vld [vmem:[%s10666 + $0x7c] sm:$0xf]
        %v10699 = vld [vmem:[%s10666 + $0x80] sm:$0xf]
        %v10700 = vld [vmem:[%s10666 + $0x84] sm:$0xf]
        %v10701 = vld [vmem:[%s10666 + $0x88] sm:$0xf]
        %v10702 = vld [vmem:[%s10666 + $0x8c] sm:$0xf]
        %v10703 = vld [vmem:[%s10666 + $0x90] sm:$0xf]
        %v10704 = vld [vmem:[%s10666 + $0x94] sm:$0xf]
        %v10705 = vld [vmem:[%s10666 + $0x98] sm:$0xf]
        %v10706 = vld [vmem:[%s10666 + $0x9c] sm:$0xf]
        %v10707 = vld [vmem:[%s10666 + $0xa0] sm:$0xf]
        %v10708 = vld [vmem:[%s10666 + $0xa4] sm:$0xf]
        %v10709 = vld [vmem:[%s10666 + $0xa8] sm:$0xf]
        %v10710 = vld [vmem:[%s10666 + $0xac] sm:$0xf]
        %v10711 = vld [vmem:[%s10666 + $0xb0] sm:$0xf]
        %v10712 = vld [vmem:[%s10666 + $0xb4] sm:$0xf]
        %v10713 = vld [vmem:[%s10666 + $0xb8] sm:$0xf]
        %v10714 = vld [vmem:[%s10666 + $0xbc] sm:$0xf]
        %v10715 = vld [vmem:[%s10666 + $0xc0] sm:$0xf]
        %v10716 = vld [vmem:[%s10666 + $0xc4] sm:$0xf]
        %v10717 = vld [vmem:[%s10666 + $0xc8] sm:$0xf]
        %v10718 = vld [vmem:[%s10666 + $0xcc] sm:$0xf]
        %v10719 = vld [vmem:[%s10666 + $0xd0] sm:$0xf]
        %v10720 = vld [vmem:[%s10666 + $0xd4] sm:$0xf]
        %v10721 = vld [vmem:[%s10666 + $0xd8] sm:$0xf]
        %v10722 = vld [vmem:[%s10666 + $0xdc] sm:$0xf]
        %v10723 = vld [vmem:[%s10666 + $0xe0] sm:$0xf]
        %v10724 = vld [vmem:[%s10666 + $0xe4] sm:$0xf]
        %v10725 = vld [vmem:[%s10666 + $0xe8] sm:$0xf]
        %v10726 = vld [vmem:[%s10666 + $0xec] sm:$0xf]
        %v10727 = vld [vmem:[%s10666 + $0xf0] sm:$0xf]
        %v10728 = vld [vmem:[%s10666 + $0xf4] sm:$0xf]
        %v10729 = vld [vmem:[%s10666 + $0xf8] sm:$0xf]
        %v10730 = vld [vmem:[%s10666 + $0xfc] sm:$0xf]
        %v10749 = vunpack.c.l.b16 %v10648
        %v10750 = vunpack.c.h.b16 %v10648
        %v10751 = vunpack.c.l.b16 %v10649
        %v10752 = vunpack.c.h.b16 %v10649
        %v10753 = vunpack.c.l.b16 %v10650
        %v10754 = vunpack.c.h.b16 %v10650
        %v10755 = vunpack.c.l.b16 %v10651
        %v10756 = vunpack.c.h.b16 %v10651
        %v10757 = vunpack.c.l.b16 %v10652
        %v10758 = vunpack.c.h.b16 %v10652
        %v10759 = vunpack.c.l.b16 %v10653
        %v10760 = vunpack.c.h.b16 %v10653
        %v10761 = vunpack.c.l.b16 %v10654
        %v10762 = vunpack.c.h.b16 %v10654
        %v10763 = vunpack.c.l.b16 %v10655
        %v10764 = vunpack.c.h.b16 %v10655
        %v10765 = vunpack.c.l.b16 %v10656
        %v10766 = vunpack.c.h.b16 %v10656
        %v10767 = vunpack.c.l.b16 %v10657
        %v10768 = vunpack.c.h.b16 %v10657
        %v10769 = vunpack.c.l.b16 %v10658
        %v10770 = vunpack.c.h.b16 %v10658
        %v10771 = vunpack.c.l.b16 %v10659
        %v10772 = vunpack.c.h.b16 %v10659
        %v10773 = vunpack.c.l.b16 %v10660
        %v10774 = vunpack.c.h.b16 %v10660
        %v10775 = vunpack.c.l.b16 %v10661
        %v10776 = vunpack.c.h.b16 %v10661
        %v10777 = vunpack.c.l.b16 %v10662
        %v10778 = vunpack.c.h.b16 %v10662
        %v10779 = vunpack.c.l.b16 %v10663
        %v10780 = vunpack.c.h.b16 %v10663
        %v10781 = vunpack.c.l.b16 %v10664
        %v10782 = vunpack.c.h.b16 %v10664
        %v10783 = vunpack.c.l.b16 %v10665
        %v10784 = vunpack.c.h.b16 %v10665
        %v10785 = vpack.c.b16 %v10753, %v10749
        %v10786 = vpack.c.b16 %v10754, %v10750
        %v10787 = vpack.c.b16 %v10755, %v10751
        %v10788 = vpack.c.b16 %v10756, %v10752
        %v10789 = vpack.c.b16 %v10761, %v10757
        %v10790 = vpack.c.b16 %v10762, %v10758
        %v10791 = vpack.c.b16 %v10763, %v10759
        %v10792 = vpack.c.b16 %v10764, %v10760
        %v10793 = vpack.c.b16 %v10769, %v10765
        %v10794 = vpack.c.b16 %v10770, %v10766
        %v10795 = vpack.c.b16 %v10771, %v10767
        %v10796 = vpack.c.b16 %v10772, %v10768
        %v10797 = vpack.c.b16 %v10777, %v10773
        %v10798 = vpack.c.b16 %v10778, %v10774
        %v10799 = vpack.c.b16 %v10779, %v10775
        %v10800 = vpack.c.b16 %v10780, %v10776
        %v10801 = vpack.c.b16 %v10781, %v10781
        %v10802 = vpack.c.b16 %v10782, %v10782
        %v10803 = vpack.c.b16 %v10783, %v10783
        %v10804 = vpack.c.b16 %v10784, %v10784
        %v10805 = vrot.slane %v10785, 1
        %v10806 = vrot.slane %v10789, 1
        %v10807 = vsel %vm1570, %v10805, %v10806
        %v10808 = vrot.slane %v10786, 1
        %v10809 = vrot.slane %v10790, 1
        %v10810 = vsel %vm1570, %v10808, %v10809
        %v10811 = vrot.slane %v10787, 1
        %v10812 = vrot.slane %v10791, 1
        %v10813 = vsel %vm1570, %v10811, %v10812
        %v10814 = vrot.slane %v10788, 1
        %v10815 = vrot.slane %v10792, 1
        %v10816 = vsel %vm1570, %v10814, %v10815
        %v10817 = vrot.slane %v10793, 1
        %v10818 = vsel %vm1570, %v10806, %v10817
        %v10819 = vrot.slane %v10794, 1
        %v10820 = vsel %vm1570, %v10809, %v10819
        %v10821 = vrot.slane %v10795, 1
        %v10822 = vsel %vm1570, %v10812, %v10821
        %v10823 = vrot.slane %v10796, 1
        %v10824 = vsel %vm1570, %v10815, %v10823
        %v10825 = vrot.slane %v10797, 1
        %v10826 = vsel %vm1570, %v10817, %v10825
        %v10827 = vrot.slane %v10798, 1
        %v10828 = vsel %vm1570, %v10819, %v10827
        %v10829 = vrot.slane %v10799, 1
        %v10830 = vsel %vm1570, %v10821, %v10829
        %v10831 = vrot.slane %v10800, 1
        %v10832 = vsel %vm1570, %v10823, %v10831
        %v10833 = vrot.slane %v10801, 1
        %v10834 = vsel %vm1570, %v10825, %v10833
        %v10835 = vrot.slane %v10802, 1
        %v10836 = vsel %vm1570, %v10827, %v10835
        %v10837 = vrot.slane %v10803, 1
        %v10838 = vsel %vm1570, %v10829, %v10837
        %v10839 = vrot.slane %v10804, 1
        %v10840 = vsel %vm1570, %v10831, %v10839
        %v10925 = vunpack.c.l.b16 %v10667
        %v10926 = vunpack.c.l.b16 %v10668
        %v10927 = vunpack.c.l.b16 %v10669
        %v10928 = vunpack.c.l.b16 %v10670
        %v10929 = vunpack.c.l.b16 %v10671
        %v10930 = vunpack.c.l.b16 %v10672
        %v10931 = vunpack.c.l.b16 %v10673
        %v10932 = vunpack.c.l.b16 %v10674
        %v10933 = vunpack.c.l.b16 %v10675
        %v10934 = vunpack.c.l.b16 %v10676
        %v10935 = vunpack.c.l.b16 %v10677
        %v10936 = vunpack.c.l.b16 %v10678
        %v10937 = vunpack.c.l.b16 %v10679
        %v10938 = vunpack.c.l.b16 %v10680
        %v10939 = vunpack.c.l.b16 %v10681
        %v10940 = vunpack.c.l.b16 %v10682
        %v10941 = vunpack.c.l.b16 %v10683
        %v10942 = vunpack.c.l.b16 %v10684
        %v10943 = vunpack.c.l.b16 %v10685
        %v10944 = vunpack.c.l.b16 %v10686
        %v10945 = vunpack.c.l.b16 %v10687
        %v10946 = vunpack.c.l.b16 %v10688
        %v10947 = vunpack.c.l.b16 %v10689
        %v10948 = vunpack.c.l.b16 %v10690
        %v10949 = vunpack.c.l.b16 %v10691
        %v10950 = vunpack.c.l.b16 %v10692
        %v10951 = vunpack.c.l.b16 %v10693
        %v10952 = vunpack.c.l.b16 %v10694
        %v10953 = vunpack.c.l.b16 %v10695
        %v10954 = vunpack.c.l.b16 %v10696
        %v10955 = vunpack.c.l.b16 %v10697
        %v10956 = vunpack.c.l.b16 %v10698
        %v10957 = vunpack.c.l.b16 %v10699
        %v10958 = vunpack.c.l.b16 %v10700
        %v10959 = vunpack.c.l.b16 %v10701
        %v10960 = vunpack.c.l.b16 %v10702
        %v10961 = vunpack.c.l.b16 %v10703
        %v10962 = vunpack.c.l.b16 %v10704
        %v10963 = vunpack.c.l.b16 %v10705
        %v10964 = vunpack.c.l.b16 %v10706
        %v10965 = vunpack.c.l.b16 %v10707
        %v10966 = vunpack.c.l.b16 %v10708
        %v10967 = vunpack.c.l.b16 %v10709
        %v10968 = vunpack.c.l.b16 %v10710
        %v10969 = vunpack.c.l.b16 %v10711
        %v10970 = vunpack.c.l.b16 %v10712
        %v10971 = vunpack.c.l.b16 %v10713
        %v10972 = vunpack.c.l.b16 %v10714
        %v10973 = vunpack.c.l.b16 %v10715
        %v10974 = vunpack.c.l.b16 %v10716
        %v10975 = vunpack.c.l.b16 %v10717
        %v10976 = vunpack.c.l.b16 %v10718
        %v10977 = vunpack.c.l.b16 %v10719
        %v10978 = vunpack.c.l.b16 %v10720
        %v10979 = vunpack.c.l.b16 %v10721
        %v10980 = vunpack.c.l.b16 %v10722
        %v10981 = vunpack.c.l.b16 %v10723
        %v10982 = vunpack.c.l.b16 %v10724
        %v10983 = vunpack.c.l.b16 %v10725
        %v10984 = vunpack.c.l.b16 %v10726
        %v10985 = vunpack.c.l.b16 %v10727
        %v10986 = vunpack.c.l.b16 %v10728
        %v10987 = vunpack.c.l.b16 %v10729
        %v10988 = vunpack.c.l.b16 %v10730
        %v10989 = vpack.c.b16 %v10926, %v10925
        %v10990 = vpack.c.b16 %v10928, %v10927
        %v10991 = vpack.c.b16 %v10930, %v10929
        %v10992 = vpack.c.b16 %v10932, %v10931
        %v10993 = vpack.c.b16 %v10934, %v10933
        %v10994 = vpack.c.b16 %v10936, %v10935
        %v10995 = vpack.c.b16 %v10938, %v10937
        %v10996 = vpack.c.b16 %v10940, %v10939
        %v10997 = vpack.c.b16 %v10942, %v10941
        %v10998 = vpack.c.b16 %v10944, %v10943
        %v10999 = vpack.c.b16 %v10946, %v10945
        %v11000 = vpack.c.b16 %v10948, %v10947
        %v11001 = vpack.c.b16 %v10950, %v10949
        %v11002 = vpack.c.b16 %v10952, %v10951
        %v11003 = vpack.c.b16 %v10954, %v10953
        %v11004 = vpack.c.b16 %v10956, %v10955
        %v11005 = vpack.c.b16 %v10958, %v10957
        %v11006 = vpack.c.b16 %v10960, %v10959
        %v11007 = vpack.c.b16 %v10962, %v10961
        %v11008 = vpack.c.b16 %v10964, %v10963
        %v11009 = vpack.c.b16 %v10966, %v10965
        %v11010 = vpack.c.b16 %v10968, %v10967
        %v11011 = vpack.c.b16 %v10970, %v10969
        %v11012 = vpack.c.b16 %v10972, %v10971
        %v11013 = vpack.c.b16 %v10974, %v10973
        %v11014 = vpack.c.b16 %v10976, %v10975
        %v11015 = vpack.c.b16 %v10978, %v10977
        %v11016 = vpack.c.b16 %v10980, %v10979
        %v11017 = vpack.c.b16 %v10982, %v10981
        %v11018 = vpack.c.b16 %v10984, %v10983
        %v11019 = vpack.c.b16 %v10986, %v10985
        %v11020 = vpack.c.b16 %v10988, %v10987
        %11053 = vmatprep.subr.bf16.mxu0 0
        %11054 = vmatpush1.bf16.msra.mxu0 %v10989
        %11055 = vmatprep.subr.bf16.mxu0 0
        %11056 = vmatpush1.bf16.msra.mxu0 %v10990
        %11057 = vmatprep.subr.bf16.mxu0 0
        %11058 = vmatpush1.bf16.msra.mxu0 %v10991
        %11059 = vmatprep.subr.bf16.mxu0 0
        %11060 = vmatpush1.bf16.msra.mxu0 %v10992
        %11061 = vmatprep.subr.bf16.mxu0 0
        %11062 = vmatpush1.bf16.msra.mxu0 %v10993
        %11063 = vmatprep.subr.bf16.mxu0 0
        %11064 = vmatpush1.bf16.msra.mxu0 %v10994
        %11065 = vmatprep.subr.bf16.mxu0 0
        %11066 = vmatpush1.bf16.msra.mxu0 %v10995
        %11067 = vmatprep.subr.bf16.mxu0 0
        %11068 = vmatpush1.bf16.msra.mxu0 %v10996
        %11069 = vmatprep.subr.bf16.mxu0 0
        %11070 = vmatpush1.bf16.msra.mxu0 %v10997
        %11071 = vmatprep.subr.bf16.mxu0 0
        %11072 = vmatpush1.bf16.msra.mxu0 %v10998
        %11073 = vmatprep.subr.bf16.mxu0 0
        %11074 = vmatpush1.bf16.msra.mxu0 %v10999
        %11075 = vmatprep.subr.bf16.mxu0 0
        %11076 = vmatpush1.bf16.msra.mxu0 %v11000
        %11077 = vmatprep.subr.bf16.mxu0 0
        %11078 = vmatpush1.bf16.msra.mxu0 %v11001
        %11079 = vmatprep.subr.bf16.mxu0 0
        %11080 = vmatpush1.bf16.msra.mxu0 %v11002
        %11081 = vmatprep.subr.bf16.mxu0 0
        %11082 = vmatpush1.bf16.msra.mxu0 %v11003
        %11083 = vmatprep.subr.bf16.mxu0 0
        %11084 = vmatpush1.bf16.msra.mxu0 %v11004
        %11085 = vmatprep.mubr.bf16.mxu0 %v10810
        %11086 = vmatmul.mubr.bf16.gmra.mrb[0].mxu0 %v10807
        %v11087 = vpop.f32.mrb[0].mxu0
        %v11088 = vadd.f32 0.0, %v11087
        %v11089 = vpop.f32.mrb[0].mxu0
        %v11090 = vpop.f32.mrb[0].mxu0
        %v11091 = vadd.f32 0.0, %v11090
        %v11092 = vpop.f32.mrb[0].mxu0
        %11093 = vmatprep.mubr.bf16.mxu0 %v10820
        %11094 = vmatmul.mubr.bf16.gmra.mrb[0].mxu0 %v10818
        %v11095 = vpop.f32.mrb[0].mxu0
        %v11096 = vadd.f32 0.0, %v11095
        %v11097 = vpop.f32.mrb[0].mxu0
        %v11098 = vpop.f32.mrb[0].mxu0
        %v11099 = vadd.f32 0.0, %v11098
        %v11100 = vpop.f32.mrb[0].mxu0
        %11101 = vmatprep.mubr.bf16.mxu0 %v10828
        %11102 = vmatmul.mubr.bf16.gmra.mrb[0].mxu0 %v10826
        %v11103 = vpop.f32.mrb[0].mxu0
        %v11104 = vadd.f32 0.0, %v11103
        %v11105 = vpop.f32.mrb[0].mxu0
        %v11106 = vpop.f32.mrb[0].mxu0
        %v11107 = vadd.f32 0.0, %v11106
        %v11108 = vpop.f32.mrb[0].mxu0
        %11109 = vmatprep.mubr.bf16.mxu0 %v10836
        %11110 = vmatmul.mubr.bf16.gmra.mrb[0].mxu0 %v10834
        %v11111 = vpop.f32.mrb[0].mxu0
        %v11112 = vadd.f32 0.0, %v11111
        %v11113 = vpop.f32.mrb[0].mxu0
        %v11114 = vpop.f32.mrb[0].mxu0
        %v11115 = vadd.f32 0.0, %v11114
        %v11116 = vpop.f32.mrb[0].mxu0
        %11117 = vmatprep.mubr.bf16.mxu0 %v10835
        %11118 = vmatmul.mubr.bf16.gmra.mrb[0].mxu0 %v10833
        %v11119 = vpop.f32.mrb[0].mxu0
        %v11120 = vadd.f32 0.0, %v11119
        %v11121 = vpop.f32.mrb[0].mxu0
        %v11122 = vpop.f32.mrb[0].mxu0
        %v11123 = vpop.f32.mrb[0].mxu0
        %11124 = vdwg.mxu0
        %11125 = vmatprep.subr.bf16.mxu0 0
        %11126 = vmatpush1.bf16.msra.mxu0 %v11005
        %11127 = vmatprep.subr.bf16.mxu0 0
        %11128 = vmatpush1.bf16.msra.mxu0 %v11006
        %11129 = vmatprep.subr.bf16.mxu0 0
        %11130 = vmatpush1.bf16.msra.mxu0 %v11007
        %11131 = vmatprep.subr.bf16.mxu0 0
        %11132 = vmatpush1.bf16.msra.mxu0 %v11008
        %11133 = vmatprep.subr.bf16.mxu0 0
        %11134 = vmatpush1.bf16.msra.mxu0 %v11009
        %11135 = vmatprep.subr.bf16.mxu0 0
        %11136 = vmatpush1.bf16.msra.mxu0 %v11010
        %11137 = vmatprep.subr.bf16.mxu0 0
        %11138 = vmatpush1.bf16.msra.mxu0 %v11011
        %11139 = vmatprep.subr.bf16.mxu0 0
        %11140 = vmatpush1.bf16.msra.mxu0 %v11012
        %11141 = vmatprep.subr.bf16.mxu0 0
        %11142 = vmatpush1.bf16.msra.mxu0 %v11013
        %11143 = vmatprep.subr.bf16.mxu0 0
        %11144 = vmatpush1.bf16.msra.mxu0 %v11014
        %11145 = vmatprep.subr.bf16.mxu0 0
        %11146 = vmatpush1.bf16.msra.mxu0 %v11015
        %11147 = vmatprep.subr.bf16.mxu0 0
        %11148 = vmatpush1.bf16.msra.mxu0 %v11016
        %11149 = vmatprep.subr.bf16.mxu0 0
        %11150 = vmatpush1.bf16.msra.mxu0 %v11017
        %11151 = vmatprep.subr.bf16.mxu0 0
        %11152 = vmatpush1.bf16.msra.mxu0 %v11018
        %11153 = vmatprep.subr.bf16.mxu0 0
        %11154 = vmatpush1.bf16.msra.mxu0 %v11019
        %11155 = vmatprep.subr.bf16.mxu0 0
        %11156 = vmatpush1.bf16.msra.mxu0 %v11020
        %11157 = vmatprep.mubr.bf16.mxu0 %v10816
        %11158 = vmatmul.mubr.bf16.gmra.mrb[0].mxu0 %v10813
        %v11159 = vpop.f32.mrb[0].mxu0
        %v11160 = vadd.f32 %v11088, %v11159
        %v11161 = vpop.f32.mrb[0].mxu0
        %v11162 = vpop.f32.mrb[0].mxu0
        %v11163 = vadd.f32 %v11091, %v11162
        %v11164 = vpop.f32.mrb[0].mxu0
        %11165 = vmatprep.mubr.bf16.mxu0 %v10824
        %11166 = vmatmul.mubr.bf16.gmra.mrb[0].mxu0 %v10822
        %v11167 = vpop.f32.mrb[0].mxu0
        %v11168 = vadd.f32 %v11096, %v11167
        %v11169 = vpop.f32.mrb[0].mxu0
        %v11170 = vpop.f32.mrb[0].mxu0
        %v11171 = vadd.f32 %v11099, %v11170
        %v11172 = vpop.f32.mrb[0].mxu0
        %11173 = vmatprep.mubr.bf16.mxu0 %v10832
        %11174 = vmatmul.mubr.bf16.gmra.mrb[0].mxu0 %v10830
        %v11175 = vpop.f32.mrb[0].mxu0
        %v11176 = vadd.f32 %v11104, %v11175
        %v11177 = vpop.f32.mrb[0].mxu0
        %v11178 = vpop.f32.mrb[0].mxu0
        %v11179 = vadd.f32 %v11107, %v11178
        %v11180 = vpop.f32.mrb[0].mxu0
        %11181 = vmatprep.mubr.bf16.mxu0 %v10840
        %11182 = vmatmul.mubr.bf16.gmra.mrb[0].mxu0 %v10838
        %v11183 = vpop.f32.mrb[0].mxu0
        %v11184 = vadd.f32 %v11112, %v11183
        %v11185 = vpop.f32.mrb[0].mxu0
        %v11186 = vpop.f32.mrb[0].mxu0
        %v11187 = vadd.f32 %v11115, %v11186
        %v11188 = vpop.f32.mrb[0].mxu0
        %11189 = vmatprep.mubr.bf16.mxu0 %v10839
        %11190 = vmatmul.mubr.bf16.gmra.mrb[0].mxu0 %v10837
        %v11191 = vpop.f32.mrb[0].mxu0
        %v11192 = vadd.f32 %v11120, %v11191
        %v11193 = vpop.f32.mrb[0].mxu0
        %v11194 = vpop.f32.mrb[0].mxu0
        %v11195 = vpop.f32.mrb[0].mxu0
        %11196 = vdwg.mxu0
        %v11197 = vadd.f32 %v10611, %v11160
        %v11198 = vadd.f32 %v10614, %v11163
        %v11199 = vadd.f32 %v10619, %v11168
        %v11200 = vadd.f32 %v10622, %v11171
        %v11201 = vadd.f32 %v10627, %v11176
        %v11202 = vadd.f32 %v10630, %v11179
        %v11203 = vadd.f32 %v10635, %v11184
        %v11204 = vadd.f32 %v10638, %v11187
        %v11205 = vadd.f32 %v10643, %v11192
        %v11206 = vld [vmem:[#allocation3 + $0x10] sm:$0xee]
        %v11207 = vld [vmem:[#allocation3 + $0x18] sm:$0xee]
        %v11208 = vld [vmem:[#allocation3 + $0x20] sm:$0xff]
        %v11209 = vld [vmem:[#allocation3 + $0x28] sm:$0xff]
        %v11210 = vld [vmem:[#allocation3 + $0x30] sm:$0xff]
        %v11211 = vld [vmem:[#allocation3 + $0x38] sm:$0xff]
        %v11212 = vld [vmem:[#allocation3 + $0x40] sm:$0xff]
        %v11213 = vld [vmem:[#allocation3 + $0x48] sm:$0xff]
        %v11214 = vld [vmem:[#allocation3 + $0x50] sm:$0xff]
        %v11215 = vld [vmem:[#allocation3 + $0x58] sm:$0xff]
        %v11216 = vld [vmem:[#allocation3 + $0x60] sm:$0xff]
        %v11217 = vld [vmem:[#allocation3 + $0x68] sm:$0xff]
        %v11218 = vld [vmem:[#allocation3 + $0x70] sm:$0xff]
        %v11219 = vld [vmem:[#allocation3 + $0x78] sm:$0xff]
        %v11220 = vld [vmem:[#allocation3 + $0x80] sm:$0xff]
        %v11221 = vld [vmem:[#allocation3 + $0x88] sm:$0xff]
        %v11222 = vld [vmem:[#allocation3 + $0x90] sm:$0xff]
        %v11223 = vld [vmem:[#allocation3 + $0x98] sm:$0xff]
        %v11224 = vld [vmem:[#allocation3 + $0xa0] sm:$0x11]
        %v11225 = vld [vmem:[#allocation3 + $0xa8] sm:$0x11]
        %s11226 = scalar_lea.vmem [#allocation6], 768
        %v11227 = vld [vmem:[%s11226] sm:$0xf]
        %v11228 = vld [vmem:[%s11226 + $0x4] sm:$0xf]
        %v11229 = vld [vmem:[%s11226 + $0x8] sm:$0xf]
        %v11230 = vld [vmem:[%s11226 + $0xc] sm:$0xf]
        %v11231 = vld [vmem:[%s11226 + $0x10] sm:$0xf]
        %v11232 = vld [vmem:[%s11226 + $0x14] sm:$0xf]
        %v11233 = vld [vmem:[%s11226 + $0x18] sm:$0xf]
        %v11234 = vld [vmem:[%s11226 + $0x1c] sm:$0xf]
        %v11235 = vld [vmem:[%s11226 + $0x20] sm:$0xf]
        %v11236 = vld [vmem:[%s11226 + $0x24] sm:$0xf]
        %v11237 = vld [vmem:[%s11226 + $0x28] sm:$0xf]
        %v11238 = vld [vmem:[%s11226 + $0x2c] sm:$0xf]
        %v11239 = vld [vmem:[%s11226 + $0x30] sm:$0xf]
        %v11240 = vld [vmem:[%s11226 + $0x34] sm:$0xf]
        %v11241 = vld [vmem:[%s11226 + $0x38] sm:$0xf]
        %v11242 = vld [vmem:[%s11226 + $0x3c] sm:$0xf]
        %v11243 = vld [vmem:[%s11226 + $0x40] sm:$0xf]
        %v11244 = vld [vmem:[%s11226 + $0x44] sm:$0xf]
        %v11245 = vld [vmem:[%s11226 + $0x48] sm:$0xf]
        %v11246 = vld [vmem:[%s11226 + $0x4c] sm:$0xf]
        %v11247 = vld [vmem:[%s11226 + $0x50] sm:$0xf]
        %v11248 = vld [vmem:[%s11226 + $0x54] sm:$0xf]
        %v11249 = vld [vmem:[%s11226 + $0x58] sm:$0xf]
        %v11250 = vld [vmem:[%s11226 + $0x5c] sm:$0xf]
        %v11251 = vld [vmem:[%s11226 + $0x60] sm:$0xf]
        %v11252 = vld [vmem:[%s11226 + $0x64] sm:$0xf]
        %v11253 = vld [vmem:[%s11226 + $0x68] sm:$0xf]
        %v11254 = vld [vmem:[%s11226 + $0x6c] sm:$0xf]
        %v11255 = vld [vmem:[%s11226 + $0x70] sm:$0xf]
        %v11256 = vld [vmem:[%s11226 + $0x74] sm:$0xf]
        %v11257 = vld [vmem:[%s11226 + $0x78] sm:$0xf]
        %v11258 = vld [vmem:[%s11226 + $0x7c] sm:$0xf]
        %v11259 = vld [vmem:[%s11226 + $0x80] sm:$0xf]
        %v11260 = vld [vmem:[%s11226 + $0x84] sm:$0xf]
        %v11261 = vld [vmem:[%s11226 + $0x88] sm:$0xf]
        %v11262 = vld [vmem:[%s11226 + $0x8c] sm:$0xf]
        %v11263 = vld [vmem:[%s11226 + $0x90] sm:$0xf]
        %v11264 = vld [vmem:[%s11226 + $0x94] sm:$0xf]
        %v11265 = vld [vmem:[%s11226 + $0x98] sm:$0xf]
        %v11266 = vld [vmem:[%s11226 + $0x9c] sm:$0xf]
        %v11267 = vld [vmem:[%s11226 + $0xa0] sm:$0xf]
        %v11268 = vld [vmem:[%s11226 + $0xa4] sm:$0xf]
        %v11269 = vld [vmem:[%s11226 + $0xa8] sm:$0xf]
        %v11270 = vld [vmem:[%s11226 + $0xac] sm:$0xf]
        %v11271 = vld [vmem:[%s11226 + $0xb0] sm:$0xf]
        %v11272 = vld [vmem:[%s11226 + $0xb4] sm:$0xf]
        %v11273 = vld [vmem:[%s11226 + $0xb8] sm:$0xf]
        %v11274 = vld [vmem:[%s11226 + $0xbc] sm:$0xf]
        %v11275 = vld [vmem:[%s11226 + $0xc0] sm:$0xf]
        %v11276 = vld [vmem:[%s11226 + $0xc4] sm:$0xf]
        %v11277 = vld [vmem:[%s11226 + $0xc8] sm:$0xf]
        %v11278 = vld [vmem:[%s11226 + $0xcc] sm:$0xf]
        %v11279 = vld [vmem:[%s11226 + $0xd0] sm:$0xf]
        %v11280 = vld [vmem:[%s11226 + $0xd4] sm:$0xf]
        %v11281 = vld [vmem:[%s11226 + $0xd8] sm:$0xf]
        %v11282 = vld [vmem:[%s11226 + $0xdc] sm:$0xf]
        %v11283 = vld [vmem:[%s11226 + $0xe0] sm:$0xf]
        %v11284 = vld [vmem:[%s11226 + $0xe4] sm:$0xf]
        %v11285 = vld [vmem:[%s11226 + $0xe8] sm:$0xf]
        %v11286 = vld [vmem:[%s11226 + $0xec] sm:$0xf]
        %v11287 = vld [vmem:[%s11226 + $0xf0] sm:$0xf]
        %v11288 = vld [vmem:[%s11226 + $0xf4] sm:$0xf]
        %v11289 = vld [vmem:[%s11226 + $0xf8] sm:$0xf]
        %v11290 = vld [vmem:[%s11226 + $0xfc] sm:$0xf]
        %v11311 = vunpack.c.l.b16 %v11206
        %v11312 = vunpack.c.h.b16 %v11206
        %v11313 = vunpack.c.l.b16 %v11207
        %v11314 = vunpack.c.h.b16 %v11207
        %v11315 = vunpack.c.l.b16 %v11208
        %v11316 = vunpack.c.h.b16 %v11208
        %v11317 = vunpack.c.l.b16 %v11209
        %v11318 = vunpack.c.h.b16 %v11209
        %v11319 = vunpack.c.l.b16 %v11210
        %v11320 = vunpack.c.h.b16 %v11210
        %v11321 = vunpack.c.l.b16 %v11211
        %v11322 = vunpack.c.h.b16 %v11211
        %v11323 = vunpack.c.l.b16 %v11212
        %v11324 = vunpack.c.h.b16 %v11212
        %v11325 = vunpack.c.l.b16 %v11213
        %v11326 = vunpack.c.h.b16 %v11213
        %v11327 = vunpack.c.l.b16 %v11214
        %v11328 = vunpack.c.h.b16 %v11214
        %v11329 = vunpack.c.l.b16 %v11215
        %v11330 = vunpack.c.h.b16 %v11215
        %v11331 = vunpack.c.l.b16 %v11216
        %v11332 = vunpack.c.h.b16 %v11216
        %v11333 = vunpack.c.l.b16 %v11217
        %v11334 = vunpack.c.h.b16 %v11217
        %v11335 = vunpack.c.l.b16 %v11218
        %v11336 = vunpack.c.h.b16 %v11218
        %v11337 = vunpack.c.l.b16 %v11219
        %v11338 = vunpack.c.h.b16 %v11219
        %v11339 = vunpack.c.l.b16 %v11220
        %v11340 = vunpack.c.h.b16 %v11220
        %v11341 = vunpack.c.l.b16 %v11221
        %v11342 = vunpack.c.h.b16 %v11221
        %v11343 = vunpack.c.l.b16 %v11222
        %v11344 = vunpack.c.h.b16 %v11222
        %v11345 = vunpack.c.l.b16 %v11223
        %v11346 = vunpack.c.h.b16 %v11223
        %v11347 = vunpack.c.l.b16 %v11224
        %v11348 = vunpack.c.h.b16 %v11224
        %v11349 = vunpack.c.l.b16 %v11225
        %v11350 = vunpack.c.h.b16 %v11225
        %v11351 = vpack.c.b16 %v11315, %v11311
        %v11352 = vpack.c.b16 %v11316, %v11312
        %v11353 = vpack.c.b16 %v11317, %v11313
        %v11354 = vpack.c.b16 %v11318, %v11314
        %v11355 = vpack.c.b16 %v11323, %v11319
        %v11356 = vpack.c.b16 %v11324, %v11320
        %v11357 = vpack.c.b16 %v11325, %v11321
        %v11358 = vpack.c.b16 %v11326, %v11322
        %v11359 = vpack.c.b16 %v11331, %v11327
        %v11360 = vpack.c.b16 %v11332, %v11328
        %v11361 = vpack.c.b16 %v11333, %v11329
        %v11362 = vpack.c.b16 %v11334, %v11330
        %v11363 = vpack.c.b16 %v11339, %v11335
        %v11364 = vpack.c.b16 %v11340, %v11336
        %v11365 = vpack.c.b16 %v11341, %v11337
        %v11366 = vpack.c.b16 %v11342, %v11338
        %v11367 = vpack.c.b16 %v11347, %v11343
        %v11368 = vpack.c.b16 %v11348, %v11344
        %v11369 = vpack.c.b16 %v11349, %v11345
        %v11370 = vpack.c.b16 %v11350, %v11346
        %v11372 = vshrl.u32 %v11351, 16
        %v11374 = vrot.slane %v11372, 1
        %v11375 = vshll.u32 %v11351, 16
        %v11377 = vrot.slane %v11375, 2
        %v11378 = vor.u32 %v11374, %v11377
        %v11380 = vshrl.u32 %v11355, 16
        %v11382 = vrot.slane %v11380, 1
        %v11383 = vshll.u32 %v11355, 16
        %v11385 = vrot.slane %v11383, 2
        %v11386 = vor.u32 %v11382, %v11385
        %v11387 = vsel %vm2134, %v11378, %v11386
        %v11389 = vshrl.u32 %v11352, 16
        %v11391 = vrot.slane %v11389, 1
        %v11392 = vshll.u32 %v11352, 16
        %v11394 = vrot.slane %v11392, 2
        %v11395 = vor.u32 %v11391, %v11394
        %v11397 = vshrl.u32 %v11356, 16
        %v11399 = vrot.slane %v11397, 1
        %v11400 = vshll.u32 %v11356, 16
        %v11402 = vrot.slane %v11400, 2
        %v11403 = vor.u32 %v11399, %v11402
        %v11404 = vsel %vm2134, %v11395, %v11403
        %v11406 = vshrl.u32 %v11353, 16
        %v11408 = vrot.slane %v11406, 1
        %v11409 = vshll.u32 %v11353, 16
        %v11411 = vrot.slane %v11409, 2
        %v11412 = vor.u32 %v11408, %v11411
        %v11414 = vshrl.u32 %v11357, 16
        %v11416 = vrot.slane %v11414, 1
        %v11417 = vshll.u32 %v11357, 16
        %v11419 = vrot.slane %v11417, 2
        %v11420 = vor.u32 %v11416, %v11419
        %v11421 = vsel %vm2134, %v11412, %v11420
        %v11423 = vshrl.u32 %v11354, 16
        %v11425 = vrot.slane %v11423, 1
        %v11426 = vshll.u32 %v11354, 16
        %v11428 = vrot.slane %v11426, 2
        %v11429 = vor.u32 %v11425, %v11428
        %v11431 = vshrl.u32 %v11358, 16
        %v11433 = vrot.slane %v11431, 1
        %v11434 = vshll.u32 %v11358, 16
        %v11436 = vrot.slane %v11434, 2
        %v11437 = vor.u32 %v11433, %v11436
        %v11438 = vsel %vm2134, %v11429, %v11437
        %v11440 = vshrl.u32 %v11359, 16
        %v11442 = vrot.slane %v11440, 1
        %v11443 = vshll.u32 %v11359, 16
        %v11445 = vrot.slane %v11443, 2
        %v11446 = vor.u32 %v11442, %v11445
        %v11447 = vsel %vm2134, %v11386, %v11446
        %v11449 = vshrl.u32 %v11360, 16
        %v11451 = vrot.slane %v11449, 1
        %v11452 = vshll.u32 %v11360, 16
        %v11454 = vrot.slane %v11452, 2
        %v11455 = vor.u32 %v11451, %v11454
        %v11456 = vsel %vm2134, %v11403, %v11455
        %v11458 = vshrl.u32 %v11361, 16
        %v11460 = vrot.slane %v11458, 1
        %v11461 = vshll.u32 %v11361, 16
        %v11463 = vrot.slane %v11461, 2
        %v11464 = vor.u32 %v11460, %v11463
        %v11465 = vsel %vm2134, %v11420, %v11464
        %v11467 = vshrl.u32 %v11362, 16
        %v11469 = vrot.slane %v11467, 1
        %v11470 = vshll.u32 %v11362, 16
        %v11472 = vrot.slane %v11470, 2
        %v11473 = vor.u32 %v11469, %v11472
        %v11474 = vsel %vm2134, %v11437, %v11473
        %v11476 = vshrl.u32 %v11363, 16
        %v11478 = vrot.slane %v11476, 1
        %v11479 = vshll.u32 %v11363, 16
        %v11481 = vrot.slane %v11479, 2
        %v11482 = vor.u32 %v11478, %v11481
        %v11483 = vsel %vm2134, %v11446, %v11482
        %v11485 = vshrl.u32 %v11364, 16
        %v11487 = vrot.slane %v11485, 1
        %v11488 = vshll.u32 %v11364, 16
        %v11490 = vrot.slane %v11488, 2
        %v11491 = vor.u32 %v11487, %v11490
        %v11492 = vsel %vm2134, %v11455, %v11491
        %v11494 = vshrl.u32 %v11365, 16
        %v11496 = vrot.slane %v11494, 1
        %v11497 = vshll.u32 %v11365, 16
        %v11499 = vrot.slane %v11497, 2
        %v11500 = vor.u32 %v11496, %v11499
        %v11501 = vsel %vm2134, %v11464, %v11500
        %v11503 = vshrl.u32 %v11366, 16
        %v11505 = vrot.slane %v11503, 1
        %v11506 = vshll.u32 %v11366, 16
        %v11508 = vrot.slane %v11506, 2
        %v11509 = vor.u32 %v11505, %v11508
        %v11510 = vsel %vm2134, %v11473, %v11509
        %v11512 = vshrl.u32 %v11367, 16
        %v11514 = vrot.slane %v11512, 1
        %v11515 = vshll.u32 %v11367, 16
        %v11517 = vrot.slane %v11515, 2
        %v11518 = vor.u32 %v11514, %v11517
        %v11519 = vsel %vm2134, %v11482, %v11518
        %v11521 = vshrl.u32 %v11368, 16
        %v11523 = vrot.slane %v11521, 1
        %v11524 = vshll.u32 %v11368, 16
        %v11526 = vrot.slane %v11524, 2
        %v11527 = vor.u32 %v11523, %v11526
        %v11528 = vsel %vm2134, %v11491, %v11527
        %v11530 = vshrl.u32 %v11369, 16
        %v11532 = vrot.slane %v11530, 1
        %v11533 = vshll.u32 %v11369, 16
        %v11535 = vrot.slane %v11533, 2
        %v11536 = vor.u32 %v11532, %v11535
        %v11537 = vsel %vm2134, %v11500, %v11536
        %v11539 = vshrl.u32 %v11370, 16
        %v11541 = vrot.slane %v11539, 1
        %v11542 = vshll.u32 %v11370, 16
        %v11544 = vrot.slane %v11542, 2
        %v11545 = vor.u32 %v11541, %v11544
        %v11546 = vsel %vm2134, %v11509, %v11545
        %v11631 = vunpack.c.l.b16 %v11227
        %v11632 = vunpack.c.l.b16 %v11228
        %v11633 = vunpack.c.l.b16 %v11229
        %v11634 = vunpack.c.l.b16 %v11230
        %v11635 = vunpack.c.l.b16 %v11231
        %v11636 = vunpack.c.l.b16 %v11232
        %v11637 = vunpack.c.l.b16 %v11233
        %v11638 = vunpack.c.l.b16 %v11234
        %v11639 = vunpack.c.l.b16 %v11235
        %v11640 = vunpack.c.l.b16 %v11236
        %v11641 = vunpack.c.l.b16 %v11237
        %v11642 = vunpack.c.l.b16 %v11238
        %v11643 = vunpack.c.l.b16 %v11239
        %v11644 = vunpack.c.l.b16 %v11240
        %v11645 = vunpack.c.l.b16 %v11241
        %v11646 = vunpack.c.l.b16 %v11242
        %v11647 = vunpack.c.l.b16 %v11243
        %v11648 = vunpack.c.l.b16 %v11244
        %v11649 = vunpack.c.l.b16 %v11245
        %v11650 = vunpack.c.l.b16 %v11246
        %v11651 = vunpack.c.l.b16 %v11247
        %v11652 = vunpack.c.l.b16 %v11248
        %v11653 = vunpack.c.l.b16 %v11249
        %v11654 = vunpack.c.l.b16 %v11250
        %v11655 = vunpack.c.l.b16 %v11251
        %v11656 = vunpack.c.l.b16 %v11252
        %v11657 = vunpack.c.l.b16 %v11253
        %v11658 = vunpack.c.l.b16 %v11254
        %v11659 = vunpack.c.l.b16 %v11255
        %v11660 = vunpack.c.l.b16 %v11256
        %v11661 = vunpack.c.l.b16 %v11257
        %v11662 = vunpack.c.l.b16 %v11258
        %v11663 = vunpack.c.l.b16 %v11259
        %v11664 = vunpack.c.l.b16 %v11260
        %v11665 = vunpack.c.l.b16 %v11261
        %v11666 = vunpack.c.l.b16 %v11262
        %v11667 = vunpack.c.l.b16 %v11263
        %v11668 = vunpack.c.l.b16 %v11264
        %v11669 = vunpack.c.l.b16 %v11265
        %v11670 = vunpack.c.l.b16 %v11266
        %v11671 = vunpack.c.l.b16 %v11267
        %v11672 = vunpack.c.l.b16 %v11268
        %v11673 = vunpack.c.l.b16 %v11269
        %v11674 = vunpack.c.l.b16 %v11270
        %v11675 = vunpack.c.l.b16 %v11271
        %v11676 = vunpack.c.l.b16 %v11272
        %v11677 = vunpack.c.l.b16 %v11273
        %v11678 = vunpack.c.l.b16 %v11274
        %v11679 = vunpack.c.l.b16 %v11275
        %v11680 = vunpack.c.l.b16 %v11276
        %v11681 = vunpack.c.l.b16 %v11277
        %v11682 = vunpack.c.l.b16 %v11278
        %v11683 = vunpack.c.l.b16 %v11279
        %v11684 = vunpack.c.l.b16 %v11280
        %v11685 = vunpack.c.l.b16 %v11281
        %v11686 = vunpack.c.l.b16 %v11282
        %v11687 = vunpack.c.l.b16 %v11283
        %v11688 = vunpack.c.l.b16 %v11284
        %v11689 = vunpack.c.l.b16 %v11285
        %v11690 = vunpack.c.l.b16 %v11286
        %v11691 = vunpack.c.l.b16 %v11287
        %v11692 = vunpack.c.l.b16 %v11288
        %v11693 = vunpack.c.l.b16 %v11289
        %v11694 = vunpack.c.l.b16 %v11290
        %v11695 = vpack.c.b16 %v11632, %v11631
        %v11696 = vpack.c.b16 %v11634, %v11633
        %v11697 = vpack.c.b16 %v11636, %v11635
        %v11698 = vpack.c.b16 %v11638, %v11637
        %v11699 = vpack.c.b16 %v11640, %v11639
        %v11700 = vpack.c.b16 %v11642, %v11641
        %v11701 = vpack.c.b16 %v11644, %v11643
        %v11702 = vpack.c.b16 %v11646, %v11645
        %v11703 = vpack.c.b16 %v11648, %v11647
        %v11704 = vpack.c.b16 %v11650, %v11649
        %v11705 = vpack.c.b16 %v11652, %v11651
        %v11706 = vpack.c.b16 %v11654, %v11653
        %v11707 = vpack.c.b16 %v11656, %v11655
        %v11708 = vpack.c.b16 %v11658, %v11657
        %v11709 = vpack.c.b16 %v11660, %v11659
        %v11710 = vpack.c.b16 %v11662, %v11661
        %v11711 = vpack.c.b16 %v11664, %v11663
        %v11712 = vpack.c.b16 %v11666, %v11665
        %v11713 = vpack.c.b16 %v11668, %v11667
        %v11714 = vpack.c.b16 %v11670, %v11669
        %v11715 = vpack.c.b16 %v11672, %v11671
        %v11716 = vpack.c.b16 %v11674, %v11673
        %v11717 = vpack.c.b16 %v11676, %v11675
        %v11718 = vpack.c.b16 %v11678, %v11677
        %v11719 = vpack.c.b16 %v11680, %v11679
        %v11720 = vpack.c.b16 %v11682, %v11681
        %v11721 = vpack.c.b16 %v11684, %v11683
        %v11722 = vpack.c.b16 %v11686, %v11685
        %v11723 = vpack.c.b16 %v11688, %v11687
        %v11724 = vpack.c.b16 %v11690, %v11689
        %v11725 = vpack.c.b16 %v11692, %v11691
        %v11726 = vpack.c.b16 %v11694, %v11693
        %11759 = vmatprep.subr.bf16.mxu0 0
        %11760 = vmatpush1.bf16.msra.mxu0 %v11695
        %11761 = vmatprep.subr.bf16.mxu0 0
        %11762 = vmatpush1.bf16.msra.mxu0 %v11696
        %11763 = vmatprep.subr.bf16.mxu0 0
        %11764 = vmatpush1.bf16.msra.mxu0 %v11697
        %11765 = vmatprep.subr.bf16.mxu0 0
        %11766 = vmatpush1.bf16.msra.mxu0 %v11698
        %11767 = vmatprep.subr.bf16.mxu0 0
        %11768 = vmatpush1.bf16.msra.mxu0 %v11699
        %11769 = vmatprep.subr.bf16.mxu0 0
        %11770 = vmatpush1.bf16.msra.mxu0 %v11700
        %11771 = vmatprep.subr.bf16.mxu0 0
        %11772 = vmatpush1.bf16.msra.mxu0 %v11701
        %11773 = vmatprep.subr.bf16.mxu0 0
        %11774 = vmatpush1.bf16.msra.mxu0 %v11702
        %11775 = vmatprep.subr.bf16.mxu0 0
        %11776 = vmatpush1.bf16.msra.mxu0 %v11703
        %11777 = vmatprep.subr.bf16.mxu0 0
        %11778 = vmatpush1.bf16.msra.mxu0 %v11704
        %11779 = vmatprep.subr.bf16.mxu0 0
        %11780 = vmatpush1.bf16.msra.mxu0 %v11705
        %11781 = vmatprep.subr.bf16.mxu0 0
        %11782 = vmatpush1.bf16.msra.mxu0 %v11706
        %11783 = vmatprep.subr.bf16.mxu0 0
        %11784 = vmatpush1.bf16.msra.mxu0 %v11707
        %11785 = vmatprep.subr.bf16.mxu0 0
        %11786 = vmatpush1.bf16.msra.mxu0 %v11708
        %11787 = vmatprep.subr.bf16.mxu0 0
        %11788 = vmatpush1.bf16.msra.mxu0 %v11709
        %11789 = vmatprep.subr.bf16.mxu0 0
        %11790 = vmatpush1.bf16.msra.mxu0 %v11710
        %11791 = vmatprep.mubr.bf16.mxu0 %v11404
        %11792 = vmatmul.mubr.bf16.gmra.mrb[0].mxu0 %v11387
        %v11793 = vpop.f32.mrb[0].mxu0
        %v11794 = vadd.f32 0.0, %v11793
        %v11795 = vpop.f32.mrb[0].mxu0
        %v11796 = vpop.f32.mrb[0].mxu0
        %v11797 = vadd.f32 0.0, %v11796
        %v11798 = vpop.f32.mrb[0].mxu0
        %11799 = vmatprep.mubr.bf16.mxu0 %v11456
        %11800 = vmatmul.mubr.bf16.gmra.mrb[0].mxu0 %v11447
        %v11801 = vpop.f32.mrb[0].mxu0
        %v11802 = vadd.f32 0.0, %v11801
        %v11803 = vpop.f32.mrb[0].mxu0
        %v11804 = vpop.f32.mrb[0].mxu0
        %v11805 = vadd.f32 0.0, %v11804
        %v11806 = vpop.f32.mrb[0].mxu0
        %11807 = vmatprep.mubr.bf16.mxu0 %v11492
        %11808 = vmatmul.mubr.bf16.gmra.mrb[0].mxu0 %v11483
        %v11809 = vpop.f32.mrb[0].mxu0
        %v11810 = vadd.f32 0.0, %v11809
        %v11811 = vpop.f32.mrb[0].mxu0
        %v11812 = vpop.f32.mrb[0].mxu0
        %v11813 = vadd.f32 0.0, %v11812
        %v11814 = vpop.f32.mrb[0].mxu0
        %11815 = vmatprep.mubr.bf16.mxu0 %v11528
        %11816 = vmatmul.mubr.bf16.gmra.mrb[0].mxu0 %v11519
        %v11817 = vpop.f32.mrb[0].mxu0
        %v11818 = vadd.f32 0.0, %v11817
        %v11819 = vpop.f32.mrb[0].mxu0
        %v11820 = vpop.f32.mrb[0].mxu0
        %v11821 = vadd.f32 0.0, %v11820
        %v11822 = vpop.f32.mrb[0].mxu0
        %11823 = vmatprep.mubr.bf16.mxu0 %v11527
        %11824 = vmatmul.mubr.bf16.gmra.mrb[0].mxu0 %v11518
        %v11825 = vpop.f32.mrb[0].mxu0
        %v11826 = vadd.f32 0.0, %v11825
        %v11827 = vpop.f32.mrb[0].mxu0
        %v11828 = vpop.f32.mrb[0].mxu0
        %v11829 = vpop.f32.mrb[0].mxu0
        %11830 = vdwg.mxu0
        %11831 = vmatprep.subr.bf16.mxu0 0
        %11832 = vmatpush1.bf16.msra.mxu0 %v11711
        %11833 = vmatprep.subr.bf16.mxu0 0
        %11834 = vmatpush1.bf16.msra.mxu0 %v11712
        %11835 = vmatprep.subr.bf16.mxu0 0
        %11836 = vmatpush1.bf16.msra.mxu0 %v11713
        %11837 = vmatprep.subr.bf16.mxu0 0
        %11838 = vmatpush1.bf16.msra.mxu0 %v11714
        %11839 = vmatprep.subr.bf16.mxu0 0
        %11840 = vmatpush1.bf16.msra.mxu0 %v11715
        %11841 = vmatprep.subr.bf16.mxu0 0
        %11842 = vmatpush1.bf16.msra.mxu0 %v11716
        %11843 = vmatprep.subr.bf16.mxu0 0
        %11844 = vmatpush1.bf16.msra.mxu0 %v11717
        %11845 = vmatprep.subr.bf16.mxu0 0
        %11846 = vmatpush1.bf16.msra.mxu0 %v11718
        %11847 = vmatprep.subr.bf16.mxu0 0
        %11848 = vmatpush1.bf16.msra.mxu0 %v11719
        %11849 = vmatprep.subr.bf16.mxu0 0
        %11850 = vmatpush1.bf16.msra.mxu0 %v11720
        %11851 = vmatprep.subr.bf16.mxu0 0
        %11852 = vmatpush1.bf16.msra.mxu0 %v11721
        %11853 = vmatprep.subr.bf16.mxu0 0
        %11854 = vmatpush1.bf16.msra.mxu0 %v11722
        %11855 = vmatprep.subr.bf16.mxu0 0
        %11856 = vmatpush1.bf16.msra.mxu0 %v11723
        %11857 = vmatprep.subr.bf16.mxu0 0
        %11858 = vmatpush1.bf16.msra.mxu0 %v11724
        %11859 = vmatprep.subr.bf16.mxu0 0
        %11860 = vmatpush1.bf16.msra.mxu0 %v11725
        %11861 = vmatprep.subr.bf16.mxu0 0
        %11862 = vmatpush1.bf16.msra.mxu0 %v11726
        %11863 = vmatprep.mubr.bf16.mxu0 %v11438
        %11864 = vmatmul.mubr.bf16.gmra.mrb[0].mxu0 %v11421
        %v11865 = vpop.f32.mrb[0].mxu0
        %v11866 = vadd.f32 %v11794, %v11865
        %v11867 = vpop.f32.mrb[0].mxu0
        %v11868 = vpop.f32.mrb[0].mxu0
        %v11869 = vadd.f32 %v11797, %v11868
        %v11870 = vpop.f32.mrb[0].mxu0
        %11871 = vmatprep.mubr.bf16.mxu0 %v11474
        %11872 = vmatmul.mubr.bf16.gmra.mrb[0].mxu0 %v11465
        %v11873 = vpop.f32.mrb[0].mxu0
        %v11874 = vadd.f32 %v11802, %v11873
        %v11875 = vpop.f32.mrb[0].mxu0
        %v11876 = vpop.f32.mrb[0].mxu0
        %v11877 = vadd.f32 %v11805, %v11876
        %v11878 = vpop.f32.mrb[0].mxu0
        %11879 = vmatprep.mubr.bf16.mxu0 %v11510
        %11880 = vmatmul.mubr.bf16.gmra.mrb[0].mxu0 %v11501
        %v11881 = vpop.f32.mrb[0].mxu0
        %v11882 = vadd.f32 %v11810, %v11881
        %v11883 = vpop.f32.mrb[0].mxu0
        %v11884 = vpop.f32.mrb[0].mxu0
        %v11885 = vadd.f32 %v11813, %v11884
        %v11886 = vpop.f32.mrb[0].mxu0
        %11887 = vmatprep.mubr.bf16.mxu0 %v11546
        %11888 = vmatmul.mubr.bf16.gmra.mrb[0].mxu0 %v11537
        %v11889 = vpop.f32.mrb[0].mxu0
        %v11890 = vadd.f32 %v11818, %v11889
        %v11891 = vpop.f32.mrb[0].mxu0
        %v11892 = vpop.f32.mrb[0].mxu0
        %v11893 = vadd.f32 %v11821, %v11892
        %v11894 = vpop.f32.mrb[0].mxu0
        %11895 = vmatprep.mubr.bf16.mxu0 %v11545
        %11896 = vmatmul.mubr.bf16.gmra.mrb[0].mxu0 %v11536
        %v11897 = vpop.f32.mrb[0].mxu0
        %v11898 = vadd.f32 %v11826, %v11897
        %v11899 = vpop.f32.mrb[0].mxu0
        %v11900 = vpop.f32.mrb[0].mxu0
        %v11901 = vpop.f32.mrb[0].mxu0
        %11902 = vdwg.mxu0
        %v11903 = vadd.f32 %v11197, %v11866
        %v11904 = vadd.f32 %v11198, %v11869
        %v11905 = vadd.f32 %v11199, %v11874
        %v11906 = vadd.f32 %v11200, %v11877
        %v11907 = vadd.f32 %v11201, %v11882
        %v11908 = vadd.f32 %v11202, %v11885
        %v11909 = vadd.f32 %v11203, %v11890
        %v11910 = vadd.f32 %v11204, %v11893
        %v11911 = vadd.f32 %v11205, %v11898
        %v11912 = vld [vmem:[%s3] sm:$0x7]
        %v11914 = vlaneseq
        %v11915 = vshrl.u32 %v11914, 7
        %v11916 = vsub.s32 0, %v11915
        %v11917 = vrot.slane %v11912, %v11916
        %v11918 = vlaneseq
        %v11919 = vshrl.u32 %v11918, 7
        %v11920 = vsub.s32 1, %v11919
        %v11921 = vrot.slane %v11912, %v11920
        %v11922 = vlaneseq
        %v11923 = vshrl.u32 %v11922, 7
        %v11924 = vsub.s32 2, %v11923
        %v11925 = vrot.slane %v11912, %v11924
        %v11929 = vadd.f32 %v9405, %v11917
        %v11930 = vadd.f32 %v9406, %v11921
        %v11931 = vadd.f32 %v9407, %v11925
        %v11932 = vadd.f32 %v9408, %v11917
        %v11933 = vadd.f32 %v9409, %v11921
        %v11934 = vadd.f32 %v9410, %v11925
        %v11935 = vadd.f32 %v9411, %v11917
        %v11936 = vadd.f32 %v9412, %v11921
        %v11937 = vadd.f32 %v9413, %v11925
        %v11938 = vadd.f32 %v9414, %v11917
        %v11939 = vadd.f32 %v9415, %v11921
        %v11940 = vadd.f32 %v9416, %v11925
        %v11941 = vadd.f32 %v9417, %v11917
        %v11942 = vadd.f32 %v9418, %v11921
        %v11943 = vadd.f32 %v9419, %v11925
        %v11944 = vadd.f32 %v9420, %v11917
        %v11945 = vadd.f32 %v9421, %v11921
        %v11946 = vadd.f32 %v9422, %v11925
        %v11947 = vadd.f32 %v9423, %v11917
        %v11948 = vadd.f32 %v9424, %v11921
        %v11949 = vadd.f32 %v9425, %v11925
        %v11950 = vadd.f32 %v9426, %v11917
        %v11951 = vadd.f32 %v9427, %v11921
        %v11952 = vadd.f32 %v9428, %v11925
        %v11953 = vadd.f32 %v9429, %v11917
        %v11954 = vadd.f32 %v9430, %v11921
        %v11955 = vadd.f32 %v9431, %v11925
        %v11956 = vmax.f32 %v11929, 0.0
        %v11957 = vmax.f32 %v11930, 0.0
        %v11958 = vmax.f32 %v11931, 0.0
        %v11959 = vmax.f32 %v11932, 0.0
        %v11960 = vmax.f32 %v11933, 0.0
        %v11961 = vmax.f32 %v11934, 0.0
        %v11962 = vmax.f32 %v11935, 0.0
        %v11963 = vmax.f32 %v11936, 0.0
        %v11964 = vmax.f32 %v11937, 0.0
        %v11965 = vmax.f32 %v11938, 0.0
        %v11966 = vmax.f32 %v11939, 0.0
        %v11967 = vmax.f32 %v11940, 0.0
        %v11968 = vmax.f32 %v11941, 0.0
        %v11969 = vmax.f32 %v11942, 0.0
        %v11970 = vmax.f32 %v11943, 0.0
        %v11971 = vmax.f32 %v11944, 0.0
        %v11972 = vmax.f32 %v11945, 0.0
        %v11973 = vmax.f32 %v11946, 0.0
        %v11974 = vmax.f32 %v11947, 0.0
        %v11975 = vmax.f32 %v11948, 0.0
        %v11976 = vmax.f32 %v11949, 0.0
        %v11977 = vmax.f32 %v11950, 0.0
        %v11978 = vmax.f32 %v11951, 0.0
        %v11979 = vmax.f32 %v11952, 0.0
        %v11980 = vmax.f32 %v11953, 0.0
        %v11981 = vmax.f32 %v11954, 0.0
        %v11982 = vmax.f32 %v11955, 0.0
        %v11983 = vld [vmem:[%s9] sm:$0x1]
        %v11985 = vlaneseq
        %v11986 = vshrl.u32 %v11985, 7
        %v11987 = vsub.s32 0, %v11986
        %v11988 = vrot.slane %v11983, %v11987
        %v11990 = vadd.f32 %v11903, %v11988
        %v11991 = vadd.f32 %v11904, %v11988
        %v11992 = vadd.f32 %v11905, %v11988
        %v11993 = vadd.f32 %v11906, %v11988
        %v11994 = vadd.f32 %v11907, %v11988
        %v11995 = vadd.f32 %v11908, %v11988
        %v11996 = vadd.f32 %v11909, %v11988
        %v11997 = vadd.f32 %v11910, %v11988
        %v11998 = vadd.f32 %v11911, %v11988
        %v11999 = vmax.f32 %v11990, 0.0
        %v12000 = vmax.f32 %v11991, 0.0
        %v12001 = vmax.f32 %v11992, 0.0
        %v12002 = vmax.f32 %v11993, 0.0
        %v12003 = vmax.f32 %v11994, 0.0
        %v12004 = vmax.f32 %v11995, 0.0
        %v12005 = vmax.f32 %v11996, 0.0
        %v12006 = vmax.f32 %v11997, 0.0
        %v12007 = vmax.f32 %v11998, 0.0
        %v12008 = vpack.c.bf16 %v11959, %v11956
        %v12009 = vpack.c.bf16 %v11960, %v11957
        %v12010 = vpack.c.bf16 %v11961, %v11958
        %v12011 = vpack.c.bf16 %v11965, %v11962
        %v12012 = vpack.c.bf16 %v11966, %v11963
        %v12013 = vpack.c.bf16 %v11967, %v11964
        %v12014 = vpack.c.bf16 %v11971, %v11968
        %v12015 = vpack.c.bf16 %v11972, %v11969
        %v12016 = vpack.c.bf16 %v11973, %v11970
        %v12017 = vpack.c.bf16 %v11977, %v11974
        %v12018 = vpack.c.bf16 %v11978, %v11975
        %v12019 = vpack.c.bf16 %v11979, %v11976
        %v12020 = vpack.c.bf16 %v11980, %v11980
        %v12021 = vpack.c.bf16 %v11981, %v11981
        %v12022 = vpack.c.bf16 %v11982, %v11982
        %v12038 = vunpack.c.l.b16 %v12008
        %v12039 = vunpack.c.l.b16 %v12009
        %v12040 = vunpack.c.l.b16 %v12010
        %v12041 = vunpack.c.h.b16 %v12008
        %v12042 = vunpack.c.h.b16 %v12009
        %v12043 = vunpack.c.h.b16 %v12010
        %v12044 = vunpack.c.l.b16 %v12011
        %v12045 = vunpack.c.l.b16 %v12012
        %v12046 = vunpack.c.l.b16 %v12013
        %v12047 = vunpack.c.h.b16 %v12011
        %v12048 = vunpack.c.h.b16 %v12012
        %v12049 = vunpack.c.h.b16 %v12013
        %v12050 = vunpack.c.l.b16 %v12014
        %v12051 = vunpack.c.l.b16 %v12015
        %v12052 = vunpack.c.l.b16 %v12016
        %v12053 = vunpack.c.h.b16 %v12014
        %v12054 = vunpack.c.h.b16 %v12015
        %v12055 = vunpack.c.h.b16 %v12016
        %v12056 = vunpack.c.l.b16 %v12017
        %v12057 = vunpack.c.l.b16 %v12018
        %v12058 = vunpack.c.l.b16 %v12019
        %v12059 = vunpack.c.h.b16 %v12017
        %v12060 = vunpack.c.h.b16 %v12018
        %v12061 = vunpack.c.h.b16 %v12019
        %v12062 = vunpack.c.l.b16 %v12020
        %v12063 = vunpack.c.l.b16 %v12021
        %v12064 = vunpack.c.l.b16 %v12022
        %v12065 = vpack.c.b16 %v12039, %v12038
        %v12066 = vpack.c.b16 %v12040, %v12040
        %v12067 = vpack.c.b16 %v12042, %v12041
        %v12068 = vpack.c.b16 %v12043, %v12043
        %v12069 = vpack.c.b16 %v12045, %v12044
        %v12070 = vpack.c.b16 %v12046, %v12046
        %v12071 = vpack.c.b16 %v12048, %v12047
        %v12072 = vpack.c.b16 %v12049, %v12049
        %v12073 = vpack.c.b16 %v12051, %v12050
        %v12074 = vpack.c.b16 %v12052, %v12052
        %v12075 = vpack.c.b16 %v12054, %v12053
        %v12076 = vpack.c.b16 %v12055, %v12055
        %v12077 = vpack.c.b16 %v12057, %v12056
        %v12078 = vpack.c.b16 %v12058, %v12058
        %v12079 = vpack.c.b16 %v12060, %v12059
        %v12080 = vpack.c.b16 %v12061, %v12061
        %v12081 = vpack.c.b16 %v12063, %v12062
        %v12082 = vpack.c.b16 %v12064, %v12064
        %12101 = vst [vmem:[%s389] sm:$0xff] %v12065
        %12102 = vst [vmem:[%s389 + $0x8] sm:$0xf] %v12066
        %12103 = vst [vmem:[%s389 + $0x14] sm:$0xff] %v12067
        %12104 = vst [vmem:[%s389 + $0x1c] sm:$0xf] %v12068
        %12105 = vst [vmem:[%s389 + $0x28] sm:$0xff] %v12069
        %12106 = vst [vmem:[%s389 + $0x30] sm:$0xf] %v12070
        %12107 = vst [vmem:[%s389 + $0x3c] sm:$0xff] %v12071
        %12108 = vst [vmem:[%s389 + $0x44] sm:$0xf] %v12072
        %12109 = vst [vmem:[%s389 + $0x50] sm:$0xff] %v12073
        %12110 = vst [vmem:[%s389 + $0x58] sm:$0xf] %v12074
        %12111 = vst [vmem:[%s389 + $0x64] sm:$0xff] %v12075
        %12112 = vst [vmem:[%s389 + $0x6c] sm:$0xf] %v12076
        %12113 = vst [vmem:[%s389 + $0x78] sm:$0xff] %v12077
        %12114 = vst [vmem:[%s389 + $0x80] sm:$0xf] %v12078
        %12115 = vst [vmem:[%s389 + $0x8c] sm:$0xff] %v12079
        %12116 = vst [vmem:[%s389 + $0x94] sm:$0xf] %v12080
        %12117 = vst [vmem:[%s389 + $0xa0] sm:$0x77] %v12081
        %12118 = vst [vmem:[%s389 + $0xa8] sm:$0x7] %v12082
        %v12119 = vpack.c.bf16 %v12000, %v11999
        %v12120 = vpack.c.bf16 %v12002, %v12001
        %v12121 = vpack.c.bf16 %v12004, %v12003
        %v12122 = vpack.c.bf16 %v12006, %v12005
        %v12123 = vpack.c.bf16 %v12007, %v12007
        %v12129 = vunpack.c.l.b16 %v12119
        %v12130 = vunpack.c.h.b16 %v12119
        %v12131 = vunpack.c.l.b16 %v12120
        %v12132 = vunpack.c.h.b16 %v12120
        %v12133 = vunpack.c.l.b16 %v12121
        %v12134 = vunpack.c.h.b16 %v12121
        %v12135 = vunpack.c.l.b16 %v12122
        %v12136 = vunpack.c.h.b16 %v12122
        %v12137 = vunpack.c.l.b16 %v12123
        %v12138 = vpack.c.b16 %v12129, %v12129
        %v12139 = vpack.c.b16 %v12130, %v12130
        %v12140 = vpack.c.b16 %v12131, %v12131
        %v12141 = vpack.c.b16 %v12132, %v12132
        %v12142 = vpack.c.b16 %v12133, %v12133
        %v12143 = vpack.c.b16 %v12134, %v12134
        %v12144 = vpack.c.b16 %v12135, %v12135
        %v12145 = vpack.c.b16 %v12136, %v12136
        %v12146 = vpack.c.b16 %v12137, %v12137
        %12156 = vst [vmem:[%s389 + $0xc] sm:$0xf] %v12138
        %12157 = vst [vmem:[%s389 + $0x20] sm:$0xf] %v12139
        %12158 = vst [vmem:[%s389 + $0x34] sm:$0xf] %v12140
        %12159 = vst [vmem:[%s389 + $0x48] sm:$0xf] %v12141
        %12160 = vst [vmem:[%s389 + $0x5c] sm:$0xf] %v12142
        %12161 = vst [vmem:[%s389 + $0x70] sm:$0xf] %v12143
        %12162 = vst [vmem:[%s389 + $0x84] sm:$0xf] %v12144
        %12163 = vst [vmem:[%s389 + $0x98] sm:$0xf] %v12145
        %12164 = vst [vmem:[%s389 + $0xac] sm:$0x7] %v12146
        %vm12165 = vcmask 27648
        %12166 = vst.msk [vmem:[%s389 + $0x10] sm:$0xf] %vm12165, %v9538
        %12167 = vst.msk [vmem:[%s389 + $0x24] sm:$0xf] %vm12165, %v9539
        %12168 = vst.msk [vmem:[%s389 + $0x38] sm:$0xf] %vm12165, %v9540
        %12169 = vst.msk [vmem:[%s389 + $0x4c] sm:$0xf] %vm12165, %v9541
        %12170 = vst.msk [vmem:[%s389 + $0x60] sm:$0xf] %vm12165, %v9542
        %12171 = vst.msk [vmem:[%s389 + $0x74] sm:$0xf] %vm12165, %v9543
        %12172 = vst.msk [vmem:[%s389 + $0x88] sm:$0xf] %vm12165, %v9544
        %12173 = vst.msk [vmem:[%s389 + $0x9c] sm:$0xf] %vm12165, %v9545
        %vm12174 = vcmask 26624
        %12175 = vst.msk [vmem:[%s389 + $0xb0] sm:$0x7] %vm12174, %v9546
        %p12176 = scmp.lt.s32.totalorder %s23, 1
        %s12177 = scalar_select %p12176, %s23, 1
        %s12178 = smul.addr %s12177, 45
        %s12179 = smul.addr %s12178, 4
        %s12180 = scalar_lea.vmem %s10, %s12179
        // Predicated region
        $region69: #{tpu_custom_call.1} parent=59 // pred_check
          %p12181 = pneg %p256
        $region70: #{tpu_custom_call.1} parent=59 // pred_check_branch
          %12183 = sbr.rel (%p12181) target = $region72
        $region71: #{tpu_custom_call.1} parent=59 // pred_region
          _
        $region72: #{tpu_custom_call.1} parent=59 // pred_fallthru
          _
      $region60: #{tpu_custom_call.1} parent=5 // pred_fallthru
        _
      %p12184 = scmp.le.s32.totalorder 2, %s18
      // Predicated region
      $region73: #{tpu_custom_call.1} parent=5 // pred_check
        %p12185 = pneg %p12184
      $region74: #{tpu_custom_call.1} parent=5 // pred_check_branch
        %12187 = sbr.rel (%p12185) target = $region76
      $region75: #{tpu_custom_call.1} parent=5 // pred_region
        %s12188 = ssub.s32 %s18, 2
        // Predicated region
        $region77: #{tpu_custom_call.1} parent=75 // pred_check
          %p12189 = pneg %p262
        $region78: #{tpu_custom_call.1} parent=75 // pred_check_branch
          %12191 = sbr.rel (%p12189) target = $region80
        $region79: #{tpu_custom_call.1} parent=75 // pred_region
          %p12192 = scmp.lt.s32.totalorder %s24, 1
          %s12193 = scalar_select %p12192, %s24, 1
          %s12194 = smul.addr %s12193, 45
          %s12195 = smul.addr %s12194, 4
          %s12196 = scalar_lea.vmem %s10, %s12195
        $region80: #{tpu_custom_call.1} parent=75 // pred_fallthru
          _
      $region76: #{tpu_custom_call.1} parent=5 // pred_fallthru
        _
    $region6: #{tpu_custom_call.1} parent=1 // loop_footer
      %s22 = sadd.s32 1, %s18
    $region7: #{tpu_custom_call.1} parent=1 // loop_footer_branch
      %17 = sbr.rel target = $region3
    $region8: #{tpu_custom_call.1} parent=1 // loop_exit
      _
    %12197 = vsyncpa [#allocation5], 1
    %s12198 = scalar_lea.sflag [#allocation5], 1
    %12199 = vsyncpa %s12198, 1
    %12200 = vsyncpa [#allocation7], 1

</llo_original>
